<compile_context>
chip_gen: v7x
topology: tpu7x:2x2x1
jax: 0.10.0
libtpu: 0.0.40
codegen_flags: <defaults>
</compile_context>

<pallas_src>
import jax
import jax.numpy as jnp
import numpy as np
from jax import lax
from jax.experimental import pallas as pl
from jax.experimental.pallas import tpu as pltpu

HIDDEN = 64          # LSTM hidden size
IN_DIM = 768         # description / tweet feature size
PRO_DIM = 10         # profile feature size
LEAKY_SLOPE = 0.01   # nn.LeakyReLU default


# ----------------------------------------------------------------------------
# Weight packing (done once, outside the kernel).
# Per-direction weights are stored transposed for right-multiplication, gate
# order [i, f, g, o]; LSTM biases are b_ih + b_hh.
# Packed layout along the 8H = 512 gate axis: [i_f,i_b, f_f,f_b, g_f,g_b, o_f,o_b]
# so every gate group is a full 128-lane vreg. W_hh is packed block-diagonally:
# rows 0:64 (fwd hidden) feed only fwd gate columns, rows 64:128 only bwd columns.
# ----------------------------------------------------------------------------
def _interleave_gates(w_f, w_b, h):
    parts = []
    for g in range(4):
        parts.append(w_f[..., g * h:(g + 1) * h])
        parts.append(w_b[..., g * h:(g + 1) * h])
    return jnp.concatenate(parts, axis=-1)


def _pack_bidir_layer(wih_f, whh_f, b_f, wih_b, whh_b, b_b):
    h = whh_f.shape[0]
    wih_pk = _interleave_gates(wih_f, wih_b, h)           # (I, 8H)
    b_pk = _interleave_gates(b_f, b_b, h)                 # (1, 8H)
    zf = jnp.zeros_like(whh_f)
    whh_pk = jnp.concatenate(
        [_interleave_gates(whh_f, zf, h),                 # rows 0:H  (fwd hidden)
         _interleave_gates(zf, whh_b, h)],                # rows H:2H (bwd hidden)
        axis=0)                                           # (2H, 8H)
    return wih_pk, whh_pk, b_pk


# ----------------------------------------------------------------------------
# Fused kernel: BB sequences per grid program.
#   x_ref  : (T, BB, 768)   time-major description features (inner-batch 0)
#   tw_ref : (BB, 768), pr_ref: (BB, 10)
#   packed LSTM weights, head weights, out_ref: (BB, 2)
#   scratch (all time-major):
#     proj_ref (T, BB, 512)  raw x @ W_ih projections          (reused both layers)
#     gin_ref  (T, BB, 512)  fwd/bwd-merged gate pre-activations (reused both layers)
#     hs_ref   (T, BB, 128)  layer-0 step outputs in scan order
#     u_ref    (T, BB, 128)  layer-0 bidirectional output in time order
# ----------------------------------------------------------------------------
def _robot_kernel(x_ref, tw_ref, pr_ref,
                  wih0_ref, whh0_ref, b0_ref,
                  wih1_ref, whh1_ref, b1_ref,
                  wd_ref, bd_ref, wt_ref, bt_ref, wp_ref, bp_ref,
                  wod_ref, wot_ref, wop_ref, bo_ref,
                  out_ref,
                  proj_ref, gin_ref, hs_ref, u_ref):
    T, BB, I = x_ref.shape
    H = HIDDEN
    H2 = 2 * H                     # 128 lanes: [fwd | bwd]
    G = 8 * H                      # 512 gate lanes
    f32 = jnp.float32

    # Lane masks, hoisted: fwd lanes are the low 64 lanes of every 128-lane group.
    gate_lane = lax.broadcasted_iota(jnp.int32, (1, G), 1)
    fwd_gate_mask = (gate_lane % H2) < H                   # (1, 512)
    h_lane = lax.broadcasted_iota(jnp.int32, (1, H2), 1)
    fwd_h_mask = h_lane < H                                # (1, 128)

    def sig(v):
        # sigmoid via a single EUP tanh instead of exp + reciprocal
        return 0.5 * jnp.tanh(0.5 * v) + 0.5

    def cell(gates, c):
        # interleaved layout: each 128-lane group = [gate_fwd(64) | gate_bwd(64)]
        i_g = sig(gates[:, 0:H2])
        f_g = sig(gates[:, H2:2 * H2])
        g_g = jnp.tanh(gates[:, 2 * H2:3 * H2])
        o_g = sig(gates[:, 3 * H2:4 * H2])
        c_new = f_g * c + i_g * g_g
        h_new = o_g * jnp.tanh(c_new)
        return h_new, c_new

    zero = jnp.zeros((BB, H2), f32)

    def project_and_merge(x2d, wih_ref, b_ref):
        # Dense input projection on the MXU (hoisted out of the recurrence), then
        # one bulk fwd/bwd time-reversal merge OUTSIDE the serial chain:
        #   gin[s] = [proj[s] on fwd gate lanes | proj[T-1-s] on bwd gate lanes]
        p = jnp.dot(x2d, wih_ref[...], preferred_element_type=f32) + b_ref[...]
        proj_ref[...] = p.reshape(T, BB, G)
        for s in range(T):
            gin_ref[s] = jnp.where(fwd_gate_mask, proj_ref[s], proj_ref[T - 1 - s])

    # ---- layer 0 ----
    project_and_merge(x_ref[...].reshape(T * BB, I), wih0_ref, b0_ref)

    h, c = zero, zero
    for s in range(T):
        gates = gin_ref[s] + jnp.dot(h, whh0_ref[...], preferred_element_type=f32)
        h, c = cell(gates, c)
        hs_ref[s] = h                               # one full 128-lane store per step

    # Re-order into time order (bulk, off the dependency chain):
    #   u[t] = [h_fwd(t) | h_bwd(t)]
    for s in range(T):
        u_ref[s] = jnp.where(fwd_h_mask, hs_ref[s], hs_ref[T - 1 - s])

    # ---- layer 1: only t = 0 of the output is consumed ----
    project_and_merge(u_ref[...].reshape(T * BB, H2), wih1_ref, b1_ref)

    h, c = zero, zero
    for s in range(T):
        gates = gin_ref[s] + jnp.dot(h, whh1_ref[...], preferred_element_type=f32)
        h, c = cell(gates, c)
    # fwd output at t=0: one cell step from the zero state (Whh term vanishes);
    # bwd output at t=0: final state of the backward scan (bwd lanes of h).
    h_fwd_t0, _ = cell(gin_ref[0], zero)
    h128 = jnp.where(fwd_h_mask, h_fwd_t0, h)              # (BB, 128) = [fwd | bwd]

    # ---- heads, fused (Dropout = identity in eval mode) ----
    def lrelu(v):
        return jnp.where(v >= 0, v, LEAKY_SLOPE * v)

    d = lrelu(jnp.dot(h128, wd_ref[...], preferred_element_type=f32) + bd_ref[...])
    t = lrelu(jnp.dot(tw_ref[...], wt_ref[...], preferred_element_type=f32) + bt_ref[...])
    p = lrelu(jnp.dot(pr_ref[...], wp_ref[...], preferred_element_type=f32) + bp_ref[...])
    logits = (jnp.dot(d, wod_ref[...], preferred_element_type=f32)
              + jnp.dot(t, wot_ref[...], preferred_element_type=f32)
              + jnp.dot(p, wop_ref[...], preferred_element_type=f32)
              + bo_ref[...])
    out_ref[...] = sig(logits)


def robot_classify_pallas(des, tweet, profile, params, block_b=8):
    B, T, _, I = des.shape
    H = HIDDEN
    H2, G = 2 * H, 8 * H
    f32 = jnp.float32

    BB = block_b
    assert BB % 8 == 0, "block_b must be a multiple of 8 (sublane tiling)"
    nprog = pl.cdiv(B, BB)
    Bpad = nprog * BB

    # Fold the inner-batch Select + desT[0,:] and go time-major (layout plumbing
    # in the wrapper, not compute).
    x = des[:, :, 0, :].astype(f32)                        # (B, T, 768)
    tw = tweet.astype(f32)
    pr = profile.astype(f32)
    if Bpad != B:
        padn = Bpad - B
        x = jnp.pad(x, ((0, padn), (0, 0), (0, 0)))
        tw = jnp.pad(tw, ((0, padn), (0, 0)))
        pr = jnp.pad(pr, ((0, padn), (0, 0)))
    x_tm = jnp.transpose(x, (1, 0, 2))                     # (T, Bpad, 768)

    wih0, whh0, b0 = _pack_bidir_layer(
        params["wih_l0f"], params["whh_l0f"], params["b_l0f"],
        params["wih_l0b"], params["whh_l0b"], params["b_l0b"])
    wih1, whh1, b1 = _pack_bidir_layer(
        params["wih_l1f"], params["whh_l1f"], params["b_l1f"],
        params["wih_l1b"], params["whh_l1b"], params["b_l1b"])

    def wspec(shape):
        return pl.BlockSpec(shape, lambda b: (0, 0))       # resident weights

    out = pl.pallas_call(
        _robot_kernel,
        out_shape=jax.ShapeDtypeStruct((Bpad, 2), f32),
        grid_spec=pltpu.PrefetchScalarGridSpec(
            num_scalar_prefetch=0,
            grid=(nprog,),
            in_specs=[
                pl.BlockSpec((T, BB, I), lambda b: (0, b, 0)),      # des, time-major
                pl.BlockSpec((BB, I), lambda b: (b, 0)),            # tweet rows
                pl.BlockSpec((BB, PRO_DIM), lambda b: (b, 0)),      # profile rows
                wspec((I, G)), wspec((H2, G)), wspec((1, G)),       # layer-0 packed
                wspec((H2, G)), wspec((H2, G)), wspec((1, G)),      # layer-1 packed
                wspec((H2, 8)), wspec((1, 8)),                      # Linear(128, 8)
                wspec((I, 8)), wspec((1, 8)),                       # Linear(768, 8)
                wspec((PRO_DIM, 8)), wspec((1, 8)),                 # Linear(10, 8)
                wspec((8, 2)), wspec((8, 2)), wspec((8, 2)),        # Linear(24, 2) split
                wspec((1, 2)),
            ],
            out_specs=pl.BlockSpec((BB, 2), lambda b: (b, 0)),
            scratch_shapes=[
                pltpu.VMEM((T, BB, G), f32),    # raw input projections
                pltpu.VMEM((T, BB, G), f32),    # merged gate pre-activations
                pltpu.VMEM((T, BB, H2), f32),   # layer-0 outputs, scan order
                pltpu.VMEM((T, BB, H2), f32),   # layer-0 outputs, time order
            ],
        ),
        compiler_params=pltpu.CompilerParams(
            dimension_semantics=("parallel",)),             # v7x: both TensorCores
    )(x_tm, tw, pr,
      wih0, whh0, b0, wih1, whh1, b1,
      params["wd"], params["bd"], params["wt"], params["bt"],
      params["wp"], params["bp"],
      params["wod"], params["wot"], params["wop"], params["bo"])
    return out[:B]


robot_classify = jax.jit(robot_classify_pallas, static_argnames=("block_b",))


# ----------------------------------------------------------------------------
# Pure-JAX reference (same parameterization) for self-validation.
# ----------------------------------------------------------------------------
def _ref_lstm_dir(x, wih, whh, b):
    B, T, _ = x.shape
    H = whh.shape[0]

    def cell(carry, x_t):
        h, c = carry
        gates = x_t @ wih + h @ whh + b
        i_g = jax.nn.sigmoid(gates[:, :H])
        f_g = jax.nn.sigmoid(gates[:, H:2 * H])
        g_g = jnp.tanh(gates[:, 2 * H:3 * H])
        o_g = jax.nn.sigmoid(gates[:, 3 * H:])
        c_n = f_g * c + i_g * g_g
        h_n = o_g * jnp.tanh(c_n)
        return (h_n, c_n), h_n

    h0 = jnp.zeros((B, H), jnp.float32)
    c0 = jnp.zeros((B, H), jnp.float32)
    _, ys = lax.scan(cell, (h0, c0), jnp.swapaxes(x, 0, 1))
    return jnp.swapaxes(ys, 0, 1)


def ref_forward(des, tweet, profile, p):
    def lrelu(v):
        return jnp.where(v >= 0, v, LEAKY_SLOPE * v)

    x = des[:, :, 0, :]
    f0 = _ref_lstm_dir(x, p["wih_l0f"], p["whh_l0f"], p["b_l0f"])
    b0 = _ref_lstm_dir(x[:, ::-1, :], p["wih_l0b"], p["whh_l0b"], p["b_l0b"])[:, ::-1, :]
    h0 = jnp.concatenate([f0, b0], axis=-1)
    f1 = _ref_lstm_dir(h0, p["wih_l1f"], p["whh_l1f"], p["b_l1f"])
    b1 = _ref_lstm_dir(h0[:, ::-1, :], p["wih_l1b"], p["whh_l1b"], p["b_l1b"])[:, ::-1, :]
    h128 = jnp.concatenate([f1[:, 0, :], b1[:, 0, :]], axis=-1)

    d = lrelu(h128 @ p["wd"] + p["bd"])
    t = lrelu(tweet @ p["wt"] + p["bt"])
    pr = lrelu(profile @ p["wp"] + p["bp"])
    logits = d @ p["wod"] + t @ p["wot"] + pr @ p["wop"] + p["bo"]
    return jax.nn.sigmoid(logits)


# ----------------------------------------------------------------------------
# Deterministic parameter init (shapes follow nn.LSTM(768,64,2,bidir) + heads).
# Weights are pre-transposed for right-multiplication; LSTM biases = b_ih + b_hh.
# ----------------------------------------------------------------------------
def init_params(key):
    names_shapes = [
        ("wih_l0f", (IN_DIM, 4 * HIDDEN)), ("whh_l0f", (HIDDEN, 4 * HIDDEN)), ("b_l0f", (1, 4 * HIDDEN)),
        ("wih_l0b", (IN_DIM, 4 * HIDDEN)), ("whh_l0b", (HIDDEN, 4 * HIDDEN)), ("b_l0b", (1, 4 * HIDDEN)),
        ("wih_l1f", (2 * HIDDEN, 4 * HIDDEN)), ("whh_l1f", (HIDDEN, 4 * HIDDEN)), ("b_l1f", (1, 4 * HIDDEN)),
        ("wih_l1b", (2 * HIDDEN, 4 * HIDDEN)), ("whh_l1b", (HIDDEN, 4 * HIDDEN)), ("b_l1b", (1, 4 * HIDDEN)),
        ("wd", (2 * HIDDEN, 8)), ("bd", (1, 8)),
        ("wt", (IN_DIM, 8)), ("bt", (1, 8)),
        ("wp", (PRO_DIM, 8)), ("bp", (1, 8)),
        ("wod", (8, 2)), ("wot", (8, 2)), ("wop", (8, 2)), ("bo", (1, 2)),
    ]
    keys = jax.random.split(key, len(names_shapes))
    return {name: 0.05 * jax.random.normal(k, shape, dtype=jnp.float32)
            for (name, shape), k in zip(names_shapes, keys)}


if __name__ == "__main__":
    root = jax.random.PRNGKey(0)
    kp, kd, kt, kpr = jax.random.split(root, 4)
    params = init_params(kp)

    # B=16 with block_b=8 -> grid of 2 "parallel" programs (even, for v7x's 2 TCs).
    B, T = 16, 8
    # des mirrors the list of per-user description tensors: (B, seq, inner_batch, 768)
    des = jax.random.normal(kd, (B, T, 1, IN_DIM), dtype=jnp.float32)
    tweet = jax.random.normal(kt, (B, IN_DIM), dtype=jnp.float32)
    profile = jax.random.normal(kpr, (B, PRO_DIM), dtype=jnp.float32)

    out = robot_classify(des, tweet, profile, params)
    out = jax.block_until_ready(out)

    ref = ref_forward(des, tweet, profile, params)
    np.testing.assert_allclose(np.asarray(out), np.asarray(ref), atol=1e-4, rtol=1e-4)

    print("KERNEL_OK")
</pallas_src>

<mosaic_0001>
module attributes {stable_mosaic.version = 11 : i64} {
  func.func @_robot_kernel(%arg0: i32, %arg1: memref<8x8x768xf32, #tpu.memory_space<vmem>>, %arg2: memref<8x768xf32, #tpu.memory_space<vmem>>, %arg3: memref<8x10xf32, #tpu.memory_space<vmem>>, %arg4: memref<768x512xf32, #tpu.memory_space<vmem>>, %arg5: memref<128x512xf32, #tpu.memory_space<vmem>>, %arg6: memref<1x512xf32, #tpu.memory_space<vmem>>, %arg7: memref<128x512xf32, #tpu.memory_space<vmem>>, %arg8: memref<128x512xf32, #tpu.memory_space<vmem>>, %arg9: memref<1x512xf32, #tpu.memory_space<vmem>>, %arg10: memref<128x8xf32, #tpu.memory_space<vmem>>, %arg11: memref<1x8xf32, #tpu.memory_space<vmem>>, %arg12: memref<768x8xf32, #tpu.memory_space<vmem>>, %arg13: memref<1x8xf32, #tpu.memory_space<vmem>>, %arg14: memref<10x8xf32, #tpu.memory_space<vmem>>, %arg15: memref<1x8xf32, #tpu.memory_space<vmem>>, %arg16: memref<8x2xf32, #tpu.memory_space<vmem>>, %arg17: memref<8x2xf32, #tpu.memory_space<vmem>>, %arg18: memref<8x2xf32, #tpu.memory_space<vmem>>, %arg19: memref<1x2xf32, #tpu.memory_space<vmem>>, %arg20: memref<8x2xf32, #tpu.memory_space<vmem>>, %arg21: memref<8x8x512xf32, #tpu.memory_space<vmem>>, %arg22: memref<8x8x512xf32, #tpu.memory_space<vmem>>, %arg23: memref<8x8x128xf32, #tpu.memory_space<vmem>>, %arg24: memref<8x8x128xf32, #tpu.memory_space<vmem>>) attributes {dimension_semantics = [#tpu.dimension_semantics<parallel>], iteration_bounds = array<i64: 2>, scalar_prefetch = 0 : i64, scratch_operands = 4 : i64, tpu.core_type = #tpu.core_type<tc>, window_params = [{transform_indices = @transform_0, window_bounds = array<i64: 8, 8, 768>}, {transform_indices = @transform_1, window_bounds = array<i64: 8, 768>}, {transform_indices = @transform_2, window_bounds = array<i64: 8, 10>}, {pipeline_mode = #tpu.pipeline_mode<synchronous>, transform_indices = @transform_3, window_bounds = array<i64: 768, 512>}, {pipeline_mode = #tpu.pipeline_mode<synchronous>, transform_indices = @transform_4, window_bounds = array<i64: 128, 512>}, {pipeline_mode = #tpu.pipeline_mode<synchronous>, transform_indices = @transform_5, window_bounds = array<i64: 1, 512>}, {pipeline_mode = #tpu.pipeline_mode<synchronous>, transform_indices = @transform_6, window_bounds = array<i64: 128, 512>}, {pipeline_mode = #tpu.pipeline_mode<synchronous>, transform_indices = @transform_7, window_bounds = array<i64: 128, 512>}, {pipeline_mode = #tpu.pipeline_mode<synchronous>, transform_indices = @transform_8, window_bounds = array<i64: 1, 512>}, {pipeline_mode = #tpu.pipeline_mode<synchronous>, transform_indices = @transform_9, window_bounds = array<i64: 128, 8>}, {pipeline_mode = #tpu.pipeline_mode<synchronous>, transform_indices = @transform_10, window_bounds = array<i64: 1, 8>}, {pipeline_mode = #tpu.pipeline_mode<synchronous>, transform_indices = @transform_11, window_bounds = array<i64: 768, 8>}, {pipeline_mode = #tpu.pipeline_mode<synchronous>, transform_indices = @transform_12, window_bounds = array<i64: 1, 8>}, {pipeline_mode = #tpu.pipeline_mode<synchronous>, transform_indices = @transform_13, window_bounds = array<i64: 10, 8>}, {pipeline_mode = #tpu.pipeline_mode<synchronous>, transform_indices = @transform_14, window_bounds = array<i64: 1, 8>}, {pipeline_mode = #tpu.pipeline_mode<synchronous>, transform_indices = @transform_15, window_bounds = array<i64: 8, 2>}, {pipeline_mode = #tpu.pipeline_mode<synchronous>, transform_indices = @transform_16, window_bounds = array<i64: 8, 2>}, {pipeline_mode = #tpu.pipeline_mode<synchronous>, transform_indices = @transform_17, window_bounds = array<i64: 8, 2>}, {pipeline_mode = #tpu.pipeline_mode<synchronous>, transform_indices = @transform_18, window_bounds = array<i64: 1, 2>}, {transform_indices = @transform_19, window_bounds = array<i64: 8, 2>}]} {
    %0 = tpu.iota {dimensions = array<i32: 1>} : vector<1x512xi32>
    %c128_i32 = arith.constant 128 : i32
    %c0_i32 = arith.constant 0 : i32
    %1 = arith.cmpi eq, %c128_i32, %c0_i32 : i32
    %c1_i32 = arith.constant 1 : i32
    %2 = arith.select %1, %c1_i32, %c128_i32 : i32
    %3 = vector.broadcast %2 : i32 to vector<1x512xi32>
    %4 = arith.remsi %0, %3 : vector<1x512xi32>
    %c0_i32_0 = arith.constant 0 : i32
    %5 = vector.broadcast %c0_i32_0 : i32 to vector<1x512xi32>
    %6 = arith.cmpi ne, %4, %5 : vector<1x512xi32>
    %c0_i32_1 = arith.constant 0 : i32
    %7 = vector.broadcast %c0_i32_1 : i32 to vector<1x512xi32>
    %8 = arith.cmpi slt, %4, %7 : vector<1x512xi32>
    %c0_i32_2 = arith.constant 0 : i32
    %9 = arith.cmpi slt, %2, %c0_i32_2 : i32
    %10 = vector.broadcast %9 : i1 to vector<1x512xi1>
    %11 = vector.broadcast %10 : vector<1x512xi1> to vector<1x512xi1>
    %12 = arith.xori %8, %11 : vector<1x512xi1>
    %13 = arith.andi %12, %6 : vector<1x512xi1>
    %14 = vector.broadcast %2 : i32 to vector<1x512xi32>
    %15 = arith.addi %4, %14 : vector<1x512xi32>
    %16 = arith.select %13, %15, %4 : vector<1x512xi1>, vector<1x512xi32>
    %c64_i32 = arith.constant 64 : i32
    %17 = vector.broadcast %c64_i32 : i32 to vector<1x512xi32>
    %18 = arith.cmpi slt, %16, %17 : vector<1x512xi32>
    %19 = tpu.iota {dimensions = array<i32: 1>} : vector<1x128xi32>
    %c64_i32_3 = arith.constant 64 : i32
    %20 = vector.broadcast %c64_i32_3 : i32 to vector<1x128xi32>
    %21 = arith.cmpi slt, %19, %20 : vector<1x128xi32>
    %cst = arith.constant 0.000000e+00 : f32
    %22 = vector.broadcast %cst : f32 to vector<8x128xf32>
    %c0 = arith.constant 0 : index
    %c0_4 = arith.constant 0 : index
    %c0_5 = arith.constant 0 : index
    %23 = vector.load %arg1[%c0, %c0_4, %c0_5] : memref<8x8x768xf32, #tpu.memory_space<vmem>>, vector<8x8x768xf32>
    %24 = vector.shape_cast %23 : vector<8x8x768xf32> to vector<64x768xf32>
    %c0_6 = arith.constant 0 : index
    %c0_7 = arith.constant 0 : index
    %25 = vector.load %arg4[%c0_6, %c0_7] : memref<768x512xf32, #tpu.memory_space<vmem>>, vector<768x512xf32>
    %cst_8 = arith.constant dense<0.000000e+00> : vector<64x512xf32>
    %26 = tpu.matmul %24, %25, %cst_8 {dimension_numbers = #tpu.dot_dimension_numbers<[1], [0], [0], [1], [0, 0, 1, 1], [], []>} : vector<64x768xf32>, vector<768x512xf32>, vector<64x512xf32> -> vector<64x512xf32>
    %c0_9 = arith.constant 0 : index
    %c0_10 = arith.constant 0 : index
    %27 = vector.load %arg6[%c0_9, %c0_10] : memref<1x512xf32, #tpu.memory_space<vmem>>, vector<1x512xf32>
    %28 = vector.broadcast %27 : vector<1x512xf32> to vector<64x512xf32>
    %29 = arith.addf %26, %28 : vector<64x512xf32>
    %30 = vector.shape_cast %29 : vector<64x512xf32> to vector<8x8x512xf32>
    %c0_11 = arith.constant 0 : index
    %c0_12 = arith.constant 0 : index
    %c0_13 = arith.constant 0 : index
    %31 = vector.load %arg21[%c0_11, %c0_12, %c0_13] : memref<8x8x512xf32, #tpu.memory_space<vmem>>, vector<8x8x512xf32>
    tpu.vector_store %arg21[%c0_11, %c0_12, %c0_13], %30 {strides = array<i32>} : memref<8x8x512xf32, #tpu.memory_space<vmem>>, vector<8x8x512xf32>,
    %c0_14 = arith.constant 0 : index
    %c0_15 = arith.constant 0 : index
    %c0_16 = arith.constant 0 : index
    %32 = vector.load %arg21[%c0_14, %c0_15, %c0_16] : memref<8x8x512xf32, #tpu.memory_space<vmem>>, vector<1x8x512xf32>
    %33 = vector.shape_cast %32 : vector<1x8x512xf32> to vector<8x512xf32>
    %c7 = arith.constant 7 : index
    %c0_17 = arith.constant 0 : index
    %c0_18 = arith.constant 0 : index
    %34 = vector.load %arg21[%c7, %c0_17, %c0_18] : memref<8x8x512xf32, #tpu.memory_space<vmem>>, vector<1x8x512xf32>
    %35 = vector.shape_cast %34 : vector<1x8x512xf32> to vector<8x512xf32>
    %36 = vector.shape_cast %18 : vector<1x512xi1> to vector<1x512xi1>
    %37 = vector.broadcast %36 : vector<1x512xi1> to vector<8x512xi1>
    %38 = arith.select %37, %33, %35 : vector<8x512xi1>, vector<8x512xf32>
    %c0_19 = arith.constant 0 : index
    %c0_20 = arith.constant 0 : index
    %c0_21 = arith.constant 0 : index
    %39 = vector.load %arg22[%c0_19, %c0_20, %c0_21] : memref<8x8x512xf32, #tpu.memory_space<vmem>>, vector<1x8x512xf32>
    %40 = vector.shape_cast %39 : vector<1x8x512xf32> to vector<8x512xf32>
    %41 = vector.shape_cast %38 : vector<8x512xf32> to vector<1x8x512xf32>
    tpu.vector_store %arg22[%c0_19, %c0_20, %c0_21], %41 {strides = array<i32>} : memref<8x8x512xf32, #tpu.memory_space<vmem>>, vector<1x8x512xf32>,
    %c1 = arith.constant 1 : index
    %c0_22 = arith.constant 0 : index
    %c0_23 = arith.constant 0 : index
    %42 = vector.load %arg21[%c1, %c0_22, %c0_23] : memref<8x8x512xf32, #tpu.memory_space<vmem>>, vector<1x8x512xf32>
    %43 = vector.shape_cast %42 : vector<1x8x512xf32> to vector<8x512xf32>
    %c6 = arith.constant 6 : index
    %c0_24 = arith.constant 0 : index
    %c0_25 = arith.constant 0 : index
    %44 = vector.load %arg21[%c6, %c0_24, %c0_25] : memref<8x8x512xf32, #tpu.memory_space<vmem>>, vector<1x8x512xf32>
    %45 = vector.shape_cast %44 : vector<1x8x512xf32> to vector<8x512xf32>
    %46 = vector.shape_cast %18 : vector<1x512xi1> to vector<1x512xi1>
    %47 = vector.broadcast %46 : vector<1x512xi1> to vector<8x512xi1>
    %48 = arith.select %47, %43, %45 : vector<8x512xi1>, vector<8x512xf32>
    %c1_26 = arith.constant 1 : index
    %c0_27 = arith.constant 0 : index
    %c0_28 = arith.constant 0 : index
    %49 = vector.load %arg22[%c1_26, %c0_27, %c0_28] : memref<8x8x512xf32, #tpu.memory_space<vmem>>, vector<1x8x512xf32>
    %50 = vector.shape_cast %49 : vector<1x8x512xf32> to vector<8x512xf32>
    %51 = vector.shape_cast %48 : vector<8x512xf32> to vector<1x8x512xf32>
    tpu.vector_store %arg22[%c1_26, %c0_27, %c0_28], %51 {strides = array<i32>} : memref<8x8x512xf32, #tpu.memory_space<vmem>>, vector<1x8x512xf32>,
    %c2 = arith.constant 2 : index
    %c0_29 = arith.constant 0 : index
    %c0_30 = arith.constant 0 : index
    %52 = vector.load %arg21[%c2, %c0_29, %c0_30] : memref<8x8x512xf32, #tpu.memory_space<vmem>>, vector<1x8x512xf32>
    %53 = vector.shape_cast %52 : vector<1x8x512xf32> to vector<8x512xf32>
    %c5 = arith.constant 5 : index
    %c0_31 = arith.constant 0 : index
    %c0_32 = arith.constant 0 : index
    %54 = vector.load %arg21[%c5, %c0_31, %c0_32] : memref<8x8x512xf32, #tpu.memory_space<vmem>>, vector<1x8x512xf32>
    %55 = vector.shape_cast %54 : vector<1x8x512xf32> to vector<8x512xf32>
    %56 = vector.shape_cast %18 : vector<1x512xi1> to vector<1x512xi1>
    %57 = vector.broadcast %56 : vector<1x512xi1> to vector<8x512xi1>
    %58 = arith.select %57, %53, %55 : vector<8x512xi1>, vector<8x512xf32>
    %c2_33 = arith.constant 2 : index
    %c0_34 = arith.constant 0 : index
    %c0_35 = arith.constant 0 : index
    %59 = vector.load %arg22[%c2_33, %c0_34, %c0_35] : memref<8x8x512xf32, #tpu.memory_space<vmem>>, vector<1x8x512xf32>
    %60 = vector.shape_cast %59 : vector<1x8x512xf32> to vector<8x512xf32>
    %61 = vector.shape_cast %58 : vector<8x512xf32> to vector<1x8x512xf32>
    tpu.vector_store %arg22[%c2_33, %c0_34, %c0_35], %61 {strides = array<i32>} : memref<8x8x512xf32, #tpu.memory_space<vmem>>, vector<1x8x512xf32>,
    %c3 = arith.constant 3 : index
    %c0_36 = arith.constant 0 : index
    %c0_37 = arith.constant 0 : index
    %62 = vector.load %arg21[%c3, %c0_36, %c0_37] : memref<8x8x512xf32, #tpu.memory_space<vmem>>, vector<1x8x512xf32>
    %63 = vector.shape_cast %62 : vector<1x8x512xf32> to vector<8x512xf32>
    %c4 = arith.constant 4 : index
    %c0_38 = arith.constant 0 : index
    %c0_39 = arith.constant 0 : index
    %64 = vector.load %arg21[%c4, %c0_38, %c0_39] : memref<8x8x512xf32, #tpu.memory_space<vmem>>, vector<1x8x512xf32>
    %65 = vector.shape_cast %64 : vector<1x8x512xf32> to vector<8x512xf32>
    %66 = vector.shape_cast %18 : vector<1x512xi1> to vector<1x512xi1>
    %67 = vector.broadcast %66 : vector<1x512xi1> to vector<8x512xi1>
    %68 = arith.select %67, %63, %65 : vector<8x512xi1>, vector<8x512xf32>
    %c3_40 = arith.constant 3 : index
    %c0_41 = arith.constant 0 : index
    %c0_42 = arith.constant 0 : index
    %69 = vector.load %arg22[%c3_40, %c0_41, %c0_42] : memref<8x8x512xf32, #tpu.memory_space<vmem>>, vector<1x8x512xf32>
    %70 = vector.shape_cast %69 : vector<1x8x512xf32> to vector<8x512xf32>
    %71 = vector.shape_cast %68 : vector<8x512xf32> to vector<1x8x512xf32>
    tpu.vector_store %arg22[%c3_40, %c0_41, %c0_42], %71 {strides = array<i32>} : memref<8x8x512xf32, #tpu.memory_space<vmem>>, vector<1x8x512xf32>,
    %c4_43 = arith.constant 4 : index
    %c0_44 = arith.constant 0 : index
    %c0_45 = arith.constant 0 : index
    %72 = vector.load %arg21[%c4_43, %c0_44, %c0_45] : memref<8x8x512xf32, #tpu.memory_space<vmem>>, vector<1x8x512xf32>
    %73 = vector.shape_cast %72 : vector<1x8x512xf32> to vector<8x512xf32>
    %c3_46 = arith.constant 3 : index
    %c0_47 = arith.constant 0 : index
    %c0_48 = arith.constant 0 : index
    %74 = vector.load %arg21[%c3_46, %c0_47, %c0_48] : memref<8x8x512xf32, #tpu.memory_space<vmem>>, vector<1x8x512xf32>
    %75 = vector.shape_cast %74 : vector<1x8x512xf32> to vector<8x512xf32>
    %76 = vector.shape_cast %18 : vector<1x512xi1> to vector<1x512xi1>
    %77 = vector.broadcast %76 : vector<1x512xi1> to vector<8x512xi1>
    %78 = arith.select %77, %73, %75 : vector<8x512xi1>, vector<8x512xf32>
    %c4_49 = arith.constant 4 : index
    %c0_50 = arith.constant 0 : index
    %c0_51 = arith.constant 0 : index
    %79 = vector.load %arg22[%c4_49, %c0_50, %c0_51] : memref<8x8x512xf32, #tpu.memory_space<vmem>>, vector<1x8x512xf32>
    %80 = vector.shape_cast %79 : vector<1x8x512xf32> to vector<8x512xf32>
    %81 = vector.shape_cast %78 : vector<8x512xf32> to vector<1x8x512xf32>
    tpu.vector_store %arg22[%c4_49, %c0_50, %c0_51], %81 {strides = array<i32>} : memref<8x8x512xf32, #tpu.memory_space<vmem>>, vector<1x8x512xf32>,
    %c5_52 = arith.constant 5 : index
    %c0_53 = arith.constant 0 : index
    %c0_54 = arith.constant 0 : index
    %82 = vector.load %arg21[%c5_52, %c0_53, %c0_54] : memref<8x8x512xf32, #tpu.memory_space<vmem>>, vector<1x8x512xf32>
    %83 = vector.shape_cast %82 : vector<1x8x512xf32> to vector<8x512xf32>
    %c2_55 = arith.constant 2 : index
    %c0_56 = arith.constant 0 : index
    %c0_57 = arith.constant 0 : index
    %84 = vector.load %arg21[%c2_55, %c0_56, %c0_57] : memref<8x8x512xf32, #tpu.memory_space<vmem>>, vector<1x8x512xf32>
    %85 = vector.shape_cast %84 : vector<1x8x512xf32> to vector<8x512xf32>
    %86 = vector.shape_cast %18 : vector<1x512xi1> to vector<1x512xi1>
    %87 = vector.broadcast %86 : vector<1x512xi1> to vector<8x512xi1>
    %88 = arith.select %87, %83, %85 : vector<8x512xi1>, vector<8x512xf32>
    %c5_58 = arith.constant 5 : index
    %c0_59 = arith.constant 0 : index
    %c0_60 = arith.constant 0 : index
    %89 = vector.load %arg22[%c5_58, %c0_59, %c0_60] : memref<8x8x512xf32, #tpu.memory_space<vmem>>, vector<1x8x512xf32>
    %90 = vector.shape_cast %89 : vector<1x8x512xf32> to vector<8x512xf32>
    %91 = vector.shape_cast %88 : vector<8x512xf32> to vector<1x8x512xf32>
    tpu.vector_store %arg22[%c5_58, %c0_59, %c0_60], %91 {strides = array<i32>} : memref<8x8x512xf32, #tpu.memory_space<vmem>>, vector<1x8x512xf32>,
    %c6_61 = arith.constant 6 : index
    %c0_62 = arith.constant 0 : index
    %c0_63 = arith.constant 0 : index
    %92 = vector.load %arg21[%c6_61, %c0_62, %c0_63] : memref<8x8x512xf32, #tpu.memory_space<vmem>>, vector<1x8x512xf32>
    %93 = vector.shape_cast %92 : vector<1x8x512xf32> to vector<8x512xf32>
    %c1_64 = arith.constant 1 : index
    %c0_65 = arith.constant 0 : index
    %c0_66 = arith.constant 0 : index
    %94 = vector.load %arg21[%c1_64, %c0_65, %c0_66] : memref<8x8x512xf32, #tpu.memory_space<vmem>>, vector<1x8x512xf32>
    %95 = vector.shape_cast %94 : vector<1x8x512xf32> to vector<8x512xf32>
    %96 = vector.shape_cast %18 : vector<1x512xi1> to vector<1x512xi1>
    %97 = vector.broadcast %96 : vector<1x512xi1> to vector<8x512xi1>
    %98 = arith.select %97, %93, %95 : vector<8x512xi1>, vector<8x512xf32>
    %c6_67 = arith.constant 6 : index
    %c0_68 = arith.constant 0 : index
    %c0_69 = arith.constant 0 : index
    %99 = vector.load %arg22[%c6_67, %c0_68, %c0_69] : memref<8x8x512xf32, #tpu.memory_space<vmem>>, vector<1x8x512xf32>
    %100 = vector.shape_cast %99 : vector<1x8x512xf32> to vector<8x512xf32>
    %101 = vector.shape_cast %98 : vector<8x512xf32> to vector<1x8x512xf32>
    tpu.vector_store %arg22[%c6_67, %c0_68, %c0_69], %101 {strides = array<i32>} : memref<8x8x512xf32, #tpu.memory_space<vmem>>, vector<1x8x512xf32>,
    %c7_70 = arith.constant 7 : index
    %c0_71 = arith.constant 0 : index
    %c0_72 = arith.constant 0 : index
    %102 = vector.load %arg21[%c7_70, %c0_71, %c0_72] : memref<8x8x512xf32, #tpu.memory_space<vmem>>, vector<1x8x512xf32>
    %103 = vector.shape_cast %102 : vector<1x8x512xf32> to vector<8x512xf32>
    %c0_73 = arith.constant 0 : index
    %c0_74 = arith.constant 0 : index
    %c0_75 = arith.constant 0 : index
    %104 = vector.load %arg21[%c0_73, %c0_74, %c0_75] : memref<8x8x512xf32, #tpu.memory_space<vmem>>, vector<1x8x512xf32>
    %105 = vector.shape_cast %104 : vector<1x8x512xf32> to vector<8x512xf32>
    %106 = vector.shape_cast %18 : vector<1x512xi1> to vector<1x512xi1>
    %107 = vector.broadcast %106 : vector<1x512xi1> to vector<8x512xi1>
    %108 = arith.select %107, %103, %105 : vector<8x512xi1>, vector<8x512xf32>
    %c7_76 = arith.constant 7 : index
    %c0_77 = arith.constant 0 : index
    %c0_78 = arith.constant 0 : index
    %109 = vector.load %arg22[%c7_76, %c0_77, %c0_78] : memref<8x8x512xf32, #tpu.memory_space<vmem>>, vector<1x8x512xf32>
    %110 = vector.shape_cast %109 : vector<1x8x512xf32> to vector<8x512xf32>
    %111 = vector.shape_cast %108 : vector<8x512xf32> to vector<1x8x512xf32>
    tpu.vector_store %arg22[%c7_76, %c0_77, %c0_78], %111 {strides = array<i32>} : memref<8x8x512xf32, #tpu.memory_space<vmem>>, vector<1x8x512xf32>,
    %c0_79 = arith.constant 0 : index
    %c0_80 = arith.constant 0 : index
    %c0_81 = arith.constant 0 : index
    %112 = vector.load %arg22[%c0_79, %c0_80, %c0_81] : memref<8x8x512xf32, #tpu.memory_space<vmem>>, vector<1x8x512xf32>
    %113 = vector.shape_cast %112 : vector<1x8x512xf32> to vector<8x512xf32>
    %c0_82 = arith.constant 0 : index
    %c0_83 = arith.constant 0 : index
    %114 = vector.load %arg5[%c0_82, %c0_83] : memref<128x512xf32, #tpu.memory_space<vmem>>, vector<128x512xf32>
    %cst_84 = arith.constant dense<0.000000e+00> : vector<8x512xf32>
    %115 = tpu.matmul %22, %114, %cst_84 {dimension_numbers = #tpu.dot_dimension_numbers<[1], [0], [0], [1], [0, 0, 1, 1], [], []>} : vector<8x128xf32>, vector<128x512xf32>, vector<8x512xf32> -> vector<8x512xf32>
    %116 = arith.addf %113, %115 : vector<8x512xf32>
    %117 = vector.extract_strided_slice %116 {offsets = [0, 0], sizes = [8, 128], strides = [1, 1]} : vector<8x512xf32> to vector<8x128xf32>
    %cst_85 = arith.constant 5.000000e-01 : f32
    %118 = vector.broadcast %cst_85 : f32 to vector<8x128xf32>
    %119 = arith.mulf %118, %117 : vector<8x128xf32>
    %120 = math.tanh %119 : vector<8x128xf32>
    %cst_86 = arith.constant 5.000000e-01 : f32
    %121 = vector.broadcast %cst_86 : f32 to vector<8x128xf32>
    %122 = arith.mulf %121, %120 : vector<8x128xf32>
    %cst_87 = arith.constant 5.000000e-01 : f32
    %123 = vector.broadcast %cst_87 : f32 to vector<8x128xf32>
    %124 = arith.addf %122, %123 : vector<8x128xf32>
    %125 = vector.extract_strided_slice %116 {offsets = [0, 128], sizes = [8, 128], strides = [1, 1]} : vector<8x512xf32> to vector<8x128xf32>
    %cst_88 = arith.constant 5.000000e-01 : f32
    %126 = vector.broadcast %cst_88 : f32 to vector<8x128xf32>
    %127 = arith.mulf %126, %125 : vector<8x128xf32>
    %128 = math.tanh %127 : vector<8x128xf32>
    %cst_89 = arith.constant 5.000000e-01 : f32
    %129 = vector.broadcast %cst_89 : f32 to vector<8x128xf32>
    %130 = arith.mulf %129, %128 : vector<8x128xf32>
    %cst_90 = arith.constant 5.000000e-01 : f32
    %131 = vector.broadcast %cst_90 : f32 to vector<8x128xf32>
    %132 = arith.addf %130, %131 : vector<8x128xf32>
    %133 = vector.extract_strided_slice %116 {offsets = [0, 256], sizes = [8, 128], strides = [1, 1]} : vector<8x512xf32> to vector<8x128xf32>
    %134 = math.tanh %133 : vector<8x128xf32>
    %135 = vector.extract_strided_slice %116 {offsets = [0, 384], sizes = [8, 128], strides = [1, 1]} : vector<8x512xf32> to vector<8x128xf32>
    %cst_91 = arith.constant 5.000000e-01 : f32
    %136 = vector.broadcast %cst_91 : f32 to vector<8x128xf32>
    %137 = arith.mulf %136, %135 : vector<8x128xf32>
    %138 = math.tanh %137 : vector<8x128xf32>
    %cst_92 = arith.constant 5.000000e-01 : f32
    %139 = vector.broadcast %cst_92 : f32 to vector<8x128xf32>
    %140 = arith.mulf %139, %138 : vector<8x128xf32>
    %cst_93 = arith.constant 5.000000e-01 : f32
    %141 = vector.broadcast %cst_93 : f32 to vector<8x128xf32>
    %142 = arith.addf %140, %141 : vector<8x128xf32>
    %143 = arith.mulf %132, %22 : vector<8x128xf32>
    %144 = arith.mulf %124, %134 : vector<8x128xf32>
    %145 = arith.addf %143, %144 : vector<8x128xf32>
    %146 = math.tanh %145 : vector<8x128xf32>
    %147 = arith.mulf %142, %146 : vector<8x128xf32>
    %c0_94 = arith.constant 0 : index
    %c0_95 = arith.constant 0 : index
    %c0_96 = arith.constant 0 : index
    %148 = vector.load %arg23[%c0_94, %c0_95, %c0_96] : memref<8x8x128xf32, #tpu.memory_space<vmem>>, vector<1x8x128xf32>
    %149 = vector.shape_cast %148 : vector<1x8x128xf32> to vector<8x128xf32>
    %150 = vector.shape_cast %147 : vector<8x128xf32> to vector<1x8x128xf32>
    tpu.vector_store %arg23[%c0_94, %c0_95, %c0_96], %150 {strides = array<i32>} : memref<8x8x128xf32, #tpu.memory_space<vmem>>, vector<1x8x128xf32>,
    %c1_97 = arith.constant 1 : index
    %c0_98 = arith.constant 0 : index
    %c0_99 = arith.constant 0 : index
    %151 = vector.load %arg22[%c1_97, %c0_98, %c0_99] : memref<8x8x512xf32, #tpu.memory_space<vmem>>, vector<1x8x512xf32>
    %152 = vector.shape_cast %151 : vector<1x8x512xf32> to vector<8x512xf32>
    %c0_100 = arith.constant 0 : index
    %c0_101 = arith.constant 0 : index
    %153 = vector.load %arg5[%c0_100, %c0_101] : memref<128x512xf32, #tpu.memory_space<vmem>>, vector<128x512xf32>
    %cst_102 = arith.constant dense<0.000000e+00> : vector<8x512xf32>
    %154 = tpu.matmul %147, %153, %cst_102 {dimension_numbers = #tpu.dot_dimension_numbers<[1], [0], [0], [1], [0, 0, 1, 1], [], []>} : vector<8x128xf32>, vector<128x512xf32>, vector<8x512xf32> -> vector<8x512xf32>
    %155 = arith.addf %152, %154 : vector<8x512xf32>
    %156 = vector.extract_strided_slice %155 {offsets = [0, 0], sizes = [8, 128], strides = [1, 1]} : vector<8x512xf32> to vector<8x128xf32>
    %cst_103 = arith.constant 5.000000e-01 : f32
    %157 = vector.broadcast %cst_103 : f32 to vector<8x128xf32>
    %158 = arith.mulf %157, %156 : vector<8x128xf32>
    %159 = math.tanh %158 : vector<8x128xf32>
    %cst_104 = arith.constant 5.000000e-01 : f32
    %160 = vector.broadcast %cst_104 : f32 to vector<8x128xf32>
    %161 = arith.mulf %160, %159 : vector<8x128xf32>
    %cst_105 = arith.constant 5.000000e-01 : f32
    %162 = vector.broadcast %cst_105 : f32 to vector<8x128xf32>
    %163 = arith.addf %161, %162 : vector<8x128xf32>
    %164 = vector.extract_strided_slice %155 {offsets = [0, 128], sizes = [8, 128], strides = [1, 1]} : vector<8x512xf32> to vector<8x128xf32>
    %cst_106 = arith.constant 5.000000e-01 : f32
    %165 = vector.broadcast %cst_106 : f32 to vector<8x128xf32>
    %166 = arith.mulf %165, %164 : vector<8x128xf32>
    %167 = math.tanh %166 : vector<8x128xf32>
    %cst_107 = arith.constant 5.000000e-01 : f32
    %168 = vector.broadcast %cst_107 : f32 to vector<8x128xf32>
    %169 = arith.mulf %168, %167 : vector<8x128xf32>
    %cst_108 = arith.constant 5.000000e-01 : f32
    %170 = vector.broadcast %cst_108 : f32 to vector<8x128xf32>
    %171 = arith.addf %169, %170 : vector<8x128xf32>
    %172 = vector.extract_strided_slice %155 {offsets = [0, 256], sizes = [8, 128], strides = [1, 1]} : vector<8x512xf32> to vector<8x128xf32>
    %173 = math.tanh %172 : vector<8x128xf32>
    %174 = vector.extract_strided_slice %155 {offsets = [0, 384], sizes = [8, 128], strides = [1, 1]} : vector<8x512xf32> to vector<8x128xf32>
    %cst_109 = arith.constant 5.000000e-01 : f32
    %175 = vector.broadcast %cst_109 : f32 to vector<8x128xf32>
    %176 = arith.mulf %175, %174 : vector<8x128xf32>
    %177 = math.tanh %176 : vector<8x128xf32>
    %cst_110 = arith.constant 5.000000e-01 : f32
    %178 = vector.broadcast %cst_110 : f32 to vector<8x128xf32>
    %179 = arith.mulf %178, %177 : vector<8x128xf32>
    %cst_111 = arith.constant 5.000000e-01 : f32
    %180 = vector.broadcast %cst_111 : f32 to vector<8x128xf32>
    %181 = arith.addf %179, %180 : vector<8x128xf32>
    %182 = arith.mulf %171, %145 : vector<8x128xf32>
    %183 = arith.mulf %163, %173 : vector<8x128xf32>
    %184 = arith.addf %182, %183 : vector<8x128xf32>
    %185 = math.tanh %184 : vector<8x128xf32>
    %186 = arith.mulf %181, %185 : vector<8x128xf32>
    %c1_112 = arith.constant 1 : index
    %c0_113 = arith.constant 0 : index
    %c0_114 = arith.constant 0 : index
    %187 = vector.load %arg23[%c1_112, %c0_113, %c0_114] : memref<8x8x128xf32, #tpu.memory_space<vmem>>, vector<1x8x128xf32>
    %188 = vector.shape_cast %187 : vector<1x8x128xf32> to vector<8x128xf32>
    %189 = vector.shape_cast %186 : vector<8x128xf32> to vector<1x8x128xf32>
    tpu.vector_store %arg23[%c1_112, %c0_113, %c0_114], %189 {strides = array<i32>} : memref<8x8x128xf32, #tpu.memory_space<vmem>>, vector<1x8x128xf32>,
    %c2_115 = arith.constant 2 : index
    %c0_116 = arith.constant 0 : index
    %c0_117 = arith.constant 0 : index
    %190 = vector.load %arg22[%c2_115, %c0_116, %c0_117] : memref<8x8x512xf32, #tpu.memory_space<vmem>>, vector<1x8x512xf32>
    %191 = vector.shape_cast %190 : vector<1x8x512xf32> to vector<8x512xf32>
    %c0_118 = arith.constant 0 : index
    %c0_119 = arith.constant 0 : index
    %192 = vector.load %arg5[%c0_118, %c0_119] : memref<128x512xf32, #tpu.memory_space<vmem>>, vector<128x512xf32>
    %cst_120 = arith.constant dense<0.000000e+00> : vector<8x512xf32>
    %193 = tpu.matmul %186, %192, %cst_120 {dimension_numbers = #tpu.dot_dimension_numbers<[1], [0], [0], [1], [0, 0, 1, 1], [], []>} : vector<8x128xf32>, vector<128x512xf32>, vector<8x512xf32> -> vector<8x512xf32>
    %194 = arith.addf %191, %193 : vector<8x512xf32>
    %195 = vector.extract_strided_slice %194 {offsets = [0, 0], sizes = [8, 128], strides = [1, 1]} : vector<8x512xf32> to vector<8x128xf32>
    %cst_121 = arith.constant 5.000000e-01 : f32
    %196 = vector.broadcast %cst_121 : f32 to vector<8x128xf32>
    %197 = arith.mulf %196, %195 : vector<8x128xf32>
    %198 = math.tanh %197 : vector<8x128xf32>
    %cst_122 = arith.constant 5.000000e-01 : f32
    %199 = vector.broadcast %cst_122 : f32 to vector<8x128xf32>
    %200 = arith.mulf %199, %198 : vector<8x128xf32>
    %cst_123 = arith.constant 5.000000e-01 : f32
    %201 = vector.broadcast %cst_123 : f32 to vector<8x128xf32>
    %202 = arith.addf %200, %201 : vector<8x128xf32>
    %203 = vector.extract_strided_slice %194 {offsets = [0, 128], sizes = [8, 128], strides = [1, 1]} : vector<8x512xf32> to vector<8x128xf32>
    %cst_124 = arith.constant 5.000000e-01 : f32
    %204 = vector.broadcast %cst_124 : f32 to vector<8x128xf32>
    %205 = arith.mulf %204, %203 : vector<8x128xf32>
    %206 = math.tanh %205 : vector<8x128xf32>
    %cst_125 = arith.constant 5.000000e-01 : f32
    %207 = vector.broadcast %cst_125 : f32 to vector<8x128xf32>
    %208 = arith.mulf %207, %206 : vector<8x128xf32>
    %cst_126 = arith.constant 5.000000e-01 : f32
    %209 = vector.broadcast %cst_126 : f32 to vector<8x128xf32>
    %210 = arith.addf %208, %209 : vector<8x128xf32>
    %211 = vector.extract_strided_slice %194 {offsets = [0, 256], sizes = [8, 128], strides = [1, 1]} : vector<8x512xf32> to vector<8x128xf32>
    %212 = math.tanh %211 : vector<8x128xf32>
    %213 = vector.extract_strided_slice %194 {offsets = [0, 384], sizes = [8, 128], strides = [1, 1]} : vector<8x512xf32> to vector<8x128xf32>
    %cst_127 = arith.constant 5.000000e-01 : f32
    %214 = vector.broadcast %cst_127 : f32 to vector<8x128xf32>
    %215 = arith.mulf %214, %213 : vector<8x128xf32>
    %216 = math.tanh %215 : vector<8x128xf32>
    %cst_128 = arith.constant 5.000000e-01 : f32
    %217 = vector.broadcast %cst_128 : f32 to vector<8x128xf32>
    %218 = arith.mulf %217, %216 : vector<8x128xf32>
    %cst_129 = arith.constant 5.000000e-01 : f32
    %219 = vector.broadcast %cst_129 : f32 to vector<8x128xf32>
    %220 = arith.addf %218, %219 : vector<8x128xf32>
    %221 = arith.mulf %210, %184 : vector<8x128xf32>
    %222 = arith.mulf %202, %212 : vector<8x128xf32>
    %223 = arith.addf %221, %222 : vector<8x128xf32>
    %224 = math.tanh %223 : vector<8x128xf32>
    %225 = arith.mulf %220, %224 : vector<8x128xf32>
    %c2_130 = arith.constant 2 : index
    %c0_131 = arith.constant 0 : index
    %c0_132 = arith.constant 0 : index
    %226 = vector.load %arg23[%c2_130, %c0_131, %c0_132] : memref<8x8x128xf32, #tpu.memory_space<vmem>>, vector<1x8x128xf32>
    %227 = vector.shape_cast %226 : vector<1x8x128xf32> to vector<8x128xf32>
    %228 = vector.shape_cast %225 : vector<8x128xf32> to vector<1x8x128xf32>
    tpu.vector_store %arg23[%c2_130, %c0_131, %c0_132], %228 {strides = array<i32>} : memref<8x8x128xf32, #tpu.memory_space<vmem>>, vector<1x8x128xf32>,
    %c3_133 = arith.constant 3 : index
    %c0_134 = arith.constant 0 : index
    %c0_135 = arith.constant 0 : index
    %229 = vector.load %arg22[%c3_133, %c0_134, %c0_135] : memref<8x8x512xf32, #tpu.memory_space<vmem>>, vector<1x8x512xf32>
    %230 = vector.shape_cast %229 : vector<1x8x512xf32> to vector<8x512xf32>
    %c0_136 = arith.constant 0 : index
    %c0_137 = arith.constant 0 : index
    %231 = vector.load %arg5[%c0_136, %c0_137] : memref<128x512xf32, #tpu.memory_space<vmem>>, vector<128x512xf32>
    %cst_138 = arith.constant dense<0.000000e+00> : vector<8x512xf32>
    %232 = tpu.matmul %225, %231, %cst_138 {dimension_numbers = #tpu.dot_dimension_numbers<[1], [0], [0], [1], [0, 0, 1, 1], [], []>} : vector<8x128xf32>, vector<128x512xf32>, vector<8x512xf32> -> vector<8x512xf32>
    %233 = arith.addf %230, %232 : vector<8x512xf32>
    %234 = vector.extract_strided_slice %233 {offsets = [0, 0], sizes = [8, 128], strides = [1, 1]} : vector<8x512xf32> to vector<8x128xf32>
    %cst_139 = arith.constant 5.000000e-01 : f32
    %235 = vector.broadcast %cst_139 : f32 to vector<8x128xf32>
    %236 = arith.mulf %235, %234 : vector<8x128xf32>
    %237 = math.tanh %236 : vector<8x128xf32>
    %cst_140 = arith.constant 5.000000e-01 : f32
    %238 = vector.broadcast %cst_140 : f32 to vector<8x128xf32>
    %239 = arith.mulf %238, %237 : vector<8x128xf32>
    %cst_141 = arith.constant 5.000000e-01 : f32
    %240 = vector.broadcast %cst_141 : f32 to vector<8x128xf32>
    %241 = arith.addf %239, %240 : vector<8x128xf32>
    %242 = vector.extract_strided_slice %233 {offsets = [0, 128], sizes = [8, 128], strides = [1, 1]} : vector<8x512xf32> to vector<8x128xf32>
    %cst_142 = arith.constant 5.000000e-01 : f32
    %243 = vector.broadcast %cst_142 : f32 to vector<8x128xf32>
    %244 = arith.mulf %243, %242 : vector<8x128xf32>
    %245 = math.tanh %244 : vector<8x128xf32>
    %cst_143 = arith.constant 5.000000e-01 : f32
    %246 = vector.broadcast %cst_143 : f32 to vector<8x128xf32>
    %247 = arith.mulf %246, %245 : vector<8x128xf32>
    %cst_144 = arith.constant 5.000000e-01 : f32
    %248 = vector.broadcast %cst_144 : f32 to vector<8x128xf32>
    %249 = arith.addf %247, %248 : vector<8x128xf32>
    %250 = vector.extract_strided_slice %233 {offsets = [0, 256], sizes = [8, 128], strides = [1, 1]} : vector<8x512xf32> to vector<8x128xf32>
    %251 = math.tanh %250 : vector<8x128xf32>
    %252 = vector.extract_strided_slice %233 {offsets = [0, 384], sizes = [8, 128], strides = [1, 1]} : vector<8x512xf32> to vector<8x128xf32>
    %cst_145 = arith.constant 5.000000e-01 : f32
    %253 = vector.broadcast %cst_145 : f32 to vector<8x128xf32>
    %254 = arith.mulf %253, %252 : vector<8x128xf32>
    %255 = math.tanh %254 : vector<8x128xf32>
    %cst_146 = arith.constant 5.000000e-01 : f32
    %256 = vector.broadcast %cst_146 : f32 to vector<8x128xf32>
    %257 = arith.mulf %256, %255 : vector<8x128xf32>
    %cst_147 = arith.constant 5.000000e-01 : f32
    %258 = vector.broadcast %cst_147 : f32 to vector<8x128xf32>
    %259 = arith.addf %257, %258 : vector<8x128xf32>
    %260 = arith.mulf %249, %223 : vector<8x128xf32>
    %261 = arith.mulf %241, %251 : vector<8x128xf32>
    %262 = arith.addf %260, %261 : vector<8x128xf32>
    %263 = math.tanh %262 : vector<8x128xf32>
    %264 = arith.mulf %259, %263 : vector<8x128xf32>
    %c3_148 = arith.constant 3 : index
    %c0_149 = arith.constant 0 : index
    %c0_150 = arith.constant 0 : index
    %265 = vector.load %arg23[%c3_148, %c0_149, %c0_150] : memref<8x8x128xf32, #tpu.memory_space<vmem>>, vector<1x8x128xf32>
    %266 = vector.shape_cast %265 : vector<1x8x128xf32> to vector<8x128xf32>
    %267 = vector.shape_cast %264 : vector<8x128xf32> to vector<1x8x128xf32>
    tpu.vector_store %arg23[%c3_148, %c0_149, %c0_150], %267 {strides = array<i32>} : memref<8x8x128xf32, #tpu.memory_space<vmem>>, vector<1x8x128xf32>,
    %c4_151 = arith.constant 4 : index
    %c0_152 = arith.constant 0 : index
    %c0_153 = arith.constant 0 : index
    %268 = vector.load %arg22[%c4_151, %c0_152, %c0_153] : memref<8x8x512xf32, #tpu.memory_space<vmem>>, vector<1x8x512xf32>
    %269 = vector.shape_cast %268 : vector<1x8x512xf32> to vector<8x512xf32>
    %c0_154 = arith.constant 0 : index
    %c0_155 = arith.constant 0 : index
    %270 = vector.load %arg5[%c0_154, %c0_155] : memref<128x512xf32, #tpu.memory_space<vmem>>, vector<128x512xf32>
    %cst_156 = arith.constant dense<0.000000e+00> : vector<8x512xf32>
    %271 = tpu.matmul %264, %270, %cst_156 {dimension_numbers = #tpu.dot_dimension_numbers<[1], [0], [0], [1], [0, 0, 1, 1], [], []>} : vector<8x128xf32>, vector<128x512xf32>, vector<8x512xf32> -> vector<8x512xf32>
    %272 = arith.addf %269, %271 : vector<8x512xf32>
    %273 = vector.extract_strided_slice %272 {offsets = [0, 0], sizes = [8, 128], strides = [1, 1]} : vector<8x512xf32> to vector<8x128xf32>
    %cst_157 = arith.constant 5.000000e-01 : f32
    %274 = vector.broadcast %cst_157 : f32 to vector<8x128xf32>
    %275 = arith.mulf %274, %273 : vector<8x128xf32>
    %276 = math.tanh %275 : vector<8x128xf32>
    %cst_158 = arith.constant 5.000000e-01 : f32
    %277 = vector.broadcast %cst_158 : f32 to vector<8x128xf32>
    %278 = arith.mulf %277, %276 : vector<8x128xf32>
    %cst_159 = arith.constant 5.000000e-01 : f32
    %279 = vector.broadcast %cst_159 : f32 to vector<8x128xf32>
    %280 = arith.addf %278, %279 : vector<8x128xf32>
    %281 = vector.extract_strided_slice %272 {offsets = [0, 128], sizes = [8, 128], strides = [1, 1]} : vector<8x512xf32> to vector<8x128xf32>
    %cst_160 = arith.constant 5.000000e-01 : f32
    %282 = vector.broadcast %cst_160 : f32 to vector<8x128xf32>
    %283 = arith.mulf %282, %281 : vector<8x128xf32>
    %284 = math.tanh %283 : vector<8x128xf32>
    %cst_161 = arith.constant 5.000000e-01 : f32
    %285 = vector.broadcast %cst_161 : f32 to vector<8x128xf32>
    %286 = arith.mulf %285, %284 : vector<8x128xf32>
    %cst_162 = arith.constant 5.000000e-01 : f32
    %287 = vector.broadcast %cst_162 : f32 to vector<8x128xf32>
    %288 = arith.addf %286, %287 : vector<8x128xf32>
    %289 = vector.extract_strided_slice %272 {offsets = [0, 256], sizes = [8, 128], strides = [1, 1]} : vector<8x512xf32> to vector<8x128xf32>
    %290 = math.tanh %289 : vector<8x128xf32>
    %291 = vector.extract_strided_slice %272 {offsets = [0, 384], sizes = [8, 128], strides = [1, 1]} : vector<8x512xf32> to vector<8x128xf32>
    %cst_163 = arith.constant 5.000000e-01 : f32
    %292 = vector.broadcast %cst_163 : f32 to vector<8x128xf32>
    %293 = arith.mulf %292, %291 : vector<8x128xf32>
    %294 = math.tanh %293 : vector<8x128xf32>
    %cst_164 = arith.constant 5.000000e-01 : f32
    %295 = vector.broadcast %cst_164 : f32 to vector<8x128xf32>
    %296 = arith.mulf %295, %294 : vector<8x128xf32>
    %cst_165 = arith.constant 5.000000e-01 : f32
    %297 = vector.broadcast %cst_165 : f32 to vector<8x128xf32>
    %298 = arith.addf %296, %297 : vector<8x128xf32>
    %299 = arith.mulf %288, %262 : vector<8x128xf32>
    %300 = arith.mulf %280, %290 : vector<8x128xf32>
    %301 = arith.addf %299, %300 : vector<8x128xf32>
    %302 = math.tanh %301 : vector<8x128xf32>
    %303 = arith.mulf %298, %302 : vector<8x128xf32>
    %c4_166 = arith.constant 4 : index
    %c0_167 = arith.constant 0 : index
    %c0_168 = arith.constant 0 : index
    %304 = vector.load %arg23[%c4_166, %c0_167, %c0_168] : memref<8x8x128xf32, #tpu.memory_space<vmem>>, vector<1x8x128xf32>
    %305 = vector.shape_cast %304 : vector<1x8x128xf32> to vector<8x128xf32>
    %306 = vector.shape_cast %303 : vector<8x128xf32> to vector<1x8x128xf32>
    tpu.vector_store %arg23[%c4_166, %c0_167, %c0_168], %306 {strides = array<i32>} : memref<8x8x128xf32, #tpu.memory_space<vmem>>, vector<1x8x128xf32>,
    %c5_169 = arith.constant 5 : index
    %c0_170 = arith.constant 0 : index
    %c0_171 = arith.constant 0 : index
    %307 = vector.load %arg22[%c5_169, %c0_170, %c0_171] : memref<8x8x512xf32, #tpu.memory_space<vmem>>, vector<1x8x512xf32>
    %308 = vector.shape_cast %307 : vector<1x8x512xf32> to vector<8x512xf32>
    %c0_172 = arith.constant 0 : index
    %c0_173 = arith.constant 0 : index
    %309 = vector.load %arg5[%c0_172, %c0_173] : memref<128x512xf32, #tpu.memory_space<vmem>>, vector<128x512xf32>
    %cst_174 = arith.constant dense<0.000000e+00> : vector<8x512xf32>
    %310 = tpu.matmul %303, %309, %cst_174 {dimension_numbers = #tpu.dot_dimension_numbers<[1], [0], [0], [1], [0, 0, 1, 1], [], []>} : vector<8x128xf32>, vector<128x512xf32>, vector<8x512xf32> -> vector<8x512xf32>
    %311 = arith.addf %308, %310 : vector<8x512xf32>
    %312 = vector.extract_strided_slice %311 {offsets = [0, 0], sizes = [8, 128], strides = [1, 1]} : vector<8x512xf32> to vector<8x128xf32>
    %cst_175 = arith.constant 5.000000e-01 : f32
    %313 = vector.broadcast %cst_175 : f32 to vector<8x128xf32>
    %314 = arith.mulf %313, %312 : vector<8x128xf32>
    %315 = math.tanh %314 : vector<8x128xf32>
    %cst_176 = arith.constant 5.000000e-01 : f32
    %316 = vector.broadcast %cst_176 : f32 to vector<8x128xf32>
    %317 = arith.mulf %316, %315 : vector<8x128xf32>
    %cst_177 = arith.constant 5.000000e-01 : f32
    %318 = vector.broadcast %cst_177 : f32 to vector<8x128xf32>
    %319 = arith.addf %317, %318 : vector<8x128xf32>
    %320 = vector.extract_strided_slice %311 {offsets = [0, 128], sizes = [8, 128], strides = [1, 1]} : vector<8x512xf32> to vector<8x128xf32>
    %cst_178 = arith.constant 5.000000e-01 : f32
    %321 = vector.broadcast %cst_178 : f32 to vector<8x128xf32>
    %322 = arith.mulf %321, %320 : vector<8x128xf32>
    %323 = math.tanh %322 : vector<8x128xf32>
    %cst_179 = arith.constant 5.000000e-01 : f32
    %324 = vector.broadcast %cst_179 : f32 to vector<8x128xf32>
    %325 = arith.mulf %324, %323 : vector<8x128xf32>
    %cst_180 = arith.constant 5.000000e-01 : f32
    %326 = vector.broadcast %cst_180 : f32 to vector<8x128xf32>
    %327 = arith.addf %325, %326 : vector<8x128xf32>
    %328 = vector.extract_strided_slice %311 {offsets = [0, 256], sizes = [8, 128], strides = [1, 1]} : vector<8x512xf32> to vector<8x128xf32>
    %329 = math.tanh %328 : vector<8x128xf32>
    %330 = vector.extract_strided_slice %311 {offsets = [0, 384], sizes = [8, 128], strides = [1, 1]} : vector<8x512xf32> to vector<8x128xf32>
    %cst_181 = arith.constant 5.000000e-01 : f32
    %331 = vector.broadcast %cst_181 : f32 to vector<8x128xf32>
    %332 = arith.mulf %331, %330 : vector<8x128xf32>
    %333 = math.tanh %332 : vector<8x128xf32>
    %cst_182 = arith.constant 5.000000e-01 : f32
    %334 = vector.broadcast %cst_182 : f32 to vector<8x128xf32>
    %335 = arith.mulf %334, %333 : vector<8x128xf32>
    %cst_183 = arith.constant 5.000000e-01 : f32
    %336 = vector.broadcast %cst_183 : f32 to vector<8x128xf32>
    %337 = arith.addf %335, %336 : vector<8x128xf32>
    %338 = arith.mulf %327, %301 : vector<8x128xf32>
    %339 = arith.mulf %319, %329 : vector<8x128xf32>
    %340 = arith.addf %338, %339 : vector<8x128xf32>
    %341 = math.tanh %340 : vector<8x128xf32>
    %342 = arith.mulf %337, %341 : vector<8x128xf32>
    %c5_184 = arith.constant 5 : index
    %c0_185 = arith.constant 0 : index
    %c0_186 = arith.constant 0 : index
    %343 = vector.load %arg23[%c5_184, %c0_185, %c0_186] : memref<8x8x128xf32, #tpu.memory_space<vmem>>, vector<1x8x128xf32>
    %344 = vector.shape_cast %343 : vector<1x8x128xf32> to vector<8x128xf32>
    %345 = vector.shape_cast %342 : vector<8x128xf32> to vector<1x8x128xf32>
    tpu.vector_store %arg23[%c5_184, %c0_185, %c0_186], %345 {strides = array<i32>} : memref<8x8x128xf32, #tpu.memory_space<vmem>>, vector<1x8x128xf32>,
    %c6_187 = arith.constant 6 : index
    %c0_188 = arith.constant 0 : index
    %c0_189 = arith.constant 0 : index
    %346 = vector.load %arg22[%c6_187, %c0_188, %c0_189] : memref<8x8x512xf32, #tpu.memory_space<vmem>>, vector<1x8x512xf32>
    %347 = vector.shape_cast %346 : vector<1x8x512xf32> to vector<8x512xf32>
    %c0_190 = arith.constant 0 : index
    %c0_191 = arith.constant 0 : index
    %348 = vector.load %arg5[%c0_190, %c0_191] : memref<128x512xf32, #tpu.memory_space<vmem>>, vector<128x512xf32>
    %cst_192 = arith.constant dense<0.000000e+00> : vector<8x512xf32>
    %349 = tpu.matmul %342, %348, %cst_192 {dimension_numbers = #tpu.dot_dimension_numbers<[1], [0], [0], [1], [0, 0, 1, 1], [], []>} : vector<8x128xf32>, vector<128x512xf32>, vector<8x512xf32> -> vector<8x512xf32>
    %350 = arith.addf %347, %349 : vector<8x512xf32>
    %351 = vector.extract_strided_slice %350 {offsets = [0, 0], sizes = [8, 128], strides = [1, 1]} : vector<8x512xf32> to vector<8x128xf32>
    %cst_193 = arith.constant 5.000000e-01 : f32
    %352 = vector.broadcast %cst_193 : f32 to vector<8x128xf32>
    %353 = arith.mulf %352, %351 : vector<8x128xf32>
    %354 = math.tanh %353 : vector<8x128xf32>
    %cst_194 = arith.constant 5.000000e-01 : f32
    %355 = vector.broadcast %cst_194 : f32 to vector<8x128xf32>
    %356 = arith.mulf %355, %354 : vector<8x128xf32>
    %cst_195 = arith.constant 5.000000e-01 : f32
    %357 = vector.broadcast %cst_195 : f32 to vector<8x128xf32>
    %358 = arith.addf %356, %357 : vector<8x128xf32>
    %359 = vector.extract_strided_slice %350 {offsets = [0, 128], sizes = [8, 128], strides = [1, 1]} : vector<8x512xf32> to vector<8x128xf32>
    %cst_196 = arith.constant 5.000000e-01 : f32
    %360 = vector.broadcast %cst_196 : f32 to vector<8x128xf32>
    %361 = arith.mulf %360, %359 : vector<8x128xf32>
    %362 = math.tanh %361 : vector<8x128xf32>
    %cst_197 = arith.constant 5.000000e-01 : f32
    %363 = vector.broadcast %cst_197 : f32 to vector<8x128xf32>
    %364 = arith.mulf %363, %362 : vector<8x128xf32>
    %cst_198 = arith.constant 5.000000e-01 : f32
    %365 = vector.broadcast %cst_198 : f32 to vector<8x128xf32>
    %366 = arith.addf %364, %365 : vector<8x128xf32>
    %367 = vector.extract_strided_slice %350 {offsets = [0, 256], sizes = [8, 128], strides = [1, 1]} : vector<8x512xf32> to vector<8x128xf32>
    %368 = math.tanh %367 : vector<8x128xf32>
    %369 = vector.extract_strided_slice %350 {offsets = [0, 384], sizes = [8, 128], strides = [1, 1]} : vector<8x512xf32> to vector<8x128xf32>
    %cst_199 = arith.constant 5.000000e-01 : f32
    %370 = vector.broadcast %cst_199 : f32 to vector<8x128xf32>
    %371 = arith.mulf %370, %369 : vector<8x128xf32>
    %372 = math.tanh %371 : vector<8x128xf32>
    %cst_200 = arith.constant 5.000000e-01 : f32
    %373 = vector.broadcast %cst_200 : f32 to vector<8x128xf32>
    %374 = arith.mulf %373, %372 : vector<8x128xf32>
    %cst_201 = arith.constant 5.000000e-01 : f32
    %375 = vector.broadcast %cst_201 : f32 to vector<8x128xf32>
    %376 = arith.addf %374, %375 : vector<8x128xf32>
    %377 = arith.mulf %366, %340 : vector<8x128xf32>
    %378 = arith.mulf %358, %368 : vector<8x128xf32>
    %379 = arith.addf %377, %378 : vector<8x128xf32>
    %380 = math.tanh %379 : vector<8x128xf32>
    %381 = arith.mulf %376, %380 : vector<8x128xf32>
    %c6_202 = arith.constant 6 : index
    %c0_203 = arith.constant 0 : index
    %c0_204 = arith.constant 0 : index
    %382 = vector.load %arg23[%c6_202, %c0_203, %c0_204] : memref<8x8x128xf32, #tpu.memory_space<vmem>>, vector<1x8x128xf32>
    %383 = vector.shape_cast %382 : vector<1x8x128xf32> to vector<8x128xf32>
    %384 = vector.shape_cast %381 : vector<8x128xf32> to vector<1x8x128xf32>
    tpu.vector_store %arg23[%c6_202, %c0_203, %c0_204], %384 {strides = array<i32>} : memref<8x8x128xf32, #tpu.memory_space<vmem>>, vector<1x8x128xf32>,
    %c7_205 = arith.constant 7 : index
    %c0_206 = arith.constant 0 : index
    %c0_207 = arith.constant 0 : index
    %385 = vector.load %arg22[%c7_205, %c0_206, %c0_207] : memref<8x8x512xf32, #tpu.memory_space<vmem>>, vector<1x8x512xf32>
    %386 = vector.shape_cast %385 : vector<1x8x512xf32> to vector<8x512xf32>
    %c0_208 = arith.constant 0 : index
    %c0_209 = arith.constant 0 : index
    %387 = vector.load %arg5[%c0_208, %c0_209] : memref<128x512xf32, #tpu.memory_space<vmem>>, vector<128x512xf32>
    %cst_210 = arith.constant dense<0.000000e+00> : vector<8x512xf32>
    %388 = tpu.matmul %381, %387, %cst_210 {dimension_numbers = #tpu.dot_dimension_numbers<[1], [0], [0], [1], [0, 0, 1, 1], [], []>} : vector<8x128xf32>, vector<128x512xf32>, vector<8x512xf32> -> vector<8x512xf32>
    %389 = arith.addf %386, %388 : vector<8x512xf32>
    %390 = vector.extract_strided_slice %389 {offsets = [0, 0], sizes = [8, 128], strides = [1, 1]} : vector<8x512xf32> to vector<8x128xf32>
    %cst_211 = arith.constant 5.000000e-01 : f32
    %391 = vector.broadcast %cst_211 : f32 to vector<8x128xf32>
    %392 = arith.mulf %391, %390 : vector<8x128xf32>
    %393 = math.tanh %392 : vector<8x128xf32>
    %cst_212 = arith.constant 5.000000e-01 : f32
    %394 = vector.broadcast %cst_212 : f32 to vector<8x128xf32>
    %395 = arith.mulf %394, %393 : vector<8x128xf32>
    %cst_213 = arith.constant 5.000000e-01 : f32
    %396 = vector.broadcast %cst_213 : f32 to vector<8x128xf32>
    %397 = arith.addf %395, %396 : vector<8x128xf32>
    %398 = vector.extract_strided_slice %389 {offsets = [0, 128], sizes = [8, 128], strides = [1, 1]} : vector<8x512xf32> to vector<8x128xf32>
    %cst_214 = arith.constant 5.000000e-01 : f32
    %399 = vector.broadcast %cst_214 : f32 to vector<8x128xf32>
    %400 = arith.mulf %399, %398 : vector<8x128xf32>
    %401 = math.tanh %400 : vector<8x128xf32>
    %cst_215 = arith.constant 5.000000e-01 : f32
    %402 = vector.broadcast %cst_215 : f32 to vector<8x128xf32>
    %403 = arith.mulf %402, %401 : vector<8x128xf32>
    %cst_216 = arith.constant 5.000000e-01 : f32
    %404 = vector.broadcast %cst_216 : f32 to vector<8x128xf32>
    %405 = arith.addf %403, %404 : vector<8x128xf32>
    %406 = vector.extract_strided_slice %389 {offsets = [0, 256], sizes = [8, 128], strides = [1, 1]} : vector<8x512xf32> to vector<8x128xf32>
    %407 = math.tanh %406 : vector<8x128xf32>
    %408 = vector.extract_strided_slice %389 {offsets = [0, 384], sizes = [8, 128], strides = [1, 1]} : vector<8x512xf32> to vector<8x128xf32>
    %cst_217 = arith.constant 5.000000e-01 : f32
    %409 = vector.broadcast %cst_217 : f32 to vector<8x128xf32>
    %410 = arith.mulf %409, %408 : vector<8x128xf32>
    %411 = math.tanh %410 : vector<8x128xf32>
    %cst_218 = arith.constant 5.000000e-01 : f32
    %412 = vector.broadcast %cst_218 : f32 to vector<8x128xf32>
    %413 = arith.mulf %412, %411 : vector<8x128xf32>
    %cst_219 = arith.constant 5.000000e-01 : f32
    %414 = vector.broadcast %cst_219 : f32 to vector<8x128xf32>
    %415 = arith.addf %413, %414 : vector<8x128xf32>
    %416 = arith.mulf %405, %379 : vector<8x128xf32>
    %417 = arith.mulf %397, %407 : vector<8x128xf32>
    %418 = arith.addf %416, %417 : vector<8x128xf32>
    %419 = math.tanh %418 : vector<8x128xf32>
    %420 = arith.mulf %415, %419 : vector<8x128xf32>
    %c7_220 = arith.constant 7 : index
    %c0_221 = arith.constant 0 : index
    %c0_222 = arith.constant 0 : index
    %421 = vector.load %arg23[%c7_220, %c0_221, %c0_222] : memref<8x8x128xf32, #tpu.memory_space<vmem>>, vector<1x8x128xf32>
    %422 = vector.shape_cast %421 : vector<1x8x128xf32> to vector<8x128xf32>
    %423 = vector.shape_cast %420 : vector<8x128xf32> to vector<1x8x128xf32>
    tpu.vector_store %arg23[%c7_220, %c0_221, %c0_222], %423 {strides = array<i32>} : memref<8x8x128xf32, #tpu.memory_space<vmem>>, vector<1x8x128xf32>,
    %c0_223 = arith.constant 0 : index
    %c0_224 = arith.constant 0 : index
    %c0_225 = arith.constant 0 : index
    %424 = vector.load %arg23[%c0_223, %c0_224, %c0_225] : memref<8x8x128xf32, #tpu.memory_space<vmem>>, vector<1x8x128xf32>
    %425 = vector.shape_cast %424 : vector<1x8x128xf32> to vector<8x128xf32>
    %c7_226 = arith.constant 7 : index
    %c0_227 = arith.constant 0 : index
    %c0_228 = arith.constant 0 : index
    %426 = vector.load %arg23[%c7_226, %c0_227, %c0_228] : memref<8x8x128xf32, #tpu.memory_space<vmem>>, vector<1x8x128xf32>
    %427 = vector.shape_cast %426 : vector<1x8x128xf32> to vector<8x128xf32>
    %428 = vector.shape_cast %21 : vector<1x128xi1> to vector<1x128xi1>
    %429 = vector.broadcast %428 : vector<1x128xi1> to vector<8x128xi1>
    %430 = arith.select %429, %425, %427 : vector<8x128xi1>, vector<8x128xf32>
    %c0_229 = arith.constant 0 : index
    %c0_230 = arith.constant 0 : index
    %c0_231 = arith.constant 0 : index
    %431 = vector.load %arg24[%c0_229, %c0_230, %c0_231] : memref<8x8x128xf32, #tpu.memory_space<vmem>>, vector<1x8x128xf32>
    %432 = vector.shape_cast %431 : vector<1x8x128xf32> to vector<8x128xf32>
    %433 = vector.shape_cast %430 : vector<8x128xf32> to vector<1x8x128xf32>
    tpu.vector_store %arg24[%c0_229, %c0_230, %c0_231], %433 {strides = array<i32>} : memref<8x8x128xf32, #tpu.memory_space<vmem>>, vector<1x8x128xf32>,
    %c1_232 = arith.constant 1 : index
    %c0_233 = arith.constant 0 : index
    %c0_234 = arith.constant 0 : index
    %434 = vector.load %arg23[%c1_232, %c0_233, %c0_234] : memref<8x8x128xf32, #tpu.memory_space<vmem>>, vector<1x8x128xf32>
    %435 = vector.shape_cast %434 : vector<1x8x128xf32> to vector<8x128xf32>
    %c6_235 = arith.constant 6 : index
    %c0_236 = arith.constant 0 : index
    %c0_237 = arith.constant 0 : index
    %436 = vector.load %arg23[%c6_235, %c0_236, %c0_237] : memref<8x8x128xf32, #tpu.memory_space<vmem>>, vector<1x8x128xf32>
    %437 = vector.shape_cast %436 : vector<1x8x128xf32> to vector<8x128xf32>
    %438 = vector.shape_cast %21 : vector<1x128xi1> to vector<1x128xi1>
    %439 = vector.broadcast %438 : vector<1x128xi1> to vector<8x128xi1>
    %440 = arith.select %439, %435, %437 : vector<8x128xi1>, vector<8x128xf32>
    %c1_238 = arith.constant 1 : index
    %c0_239 = arith.constant 0 : index
    %c0_240 = arith.constant 0 : index
    %441 = vector.load %arg24[%c1_238, %c0_239, %c0_240] : memref<8x8x128xf32, #tpu.memory_space<vmem>>, vector<1x8x128xf32>
    %442 = vector.shape_cast %441 : vector<1x8x128xf32> to vector<8x128xf32>
    %443 = vector.shape_cast %440 : vector<8x128xf32> to vector<1x8x128xf32>
    tpu.vector_store %arg24[%c1_238, %c0_239, %c0_240], %443 {strides = array<i32>} : memref<8x8x128xf32, #tpu.memory_space<vmem>>, vector<1x8x128xf32>,
    %c2_241 = arith.constant 2 : index
    %c0_242 = arith.constant 0 : index
    %c0_243 = arith.constant 0 : index
    %444 = vector.load %arg23[%c2_241, %c0_242, %c0_243] : memref<8x8x128xf32, #tpu.memory_space<vmem>>, vector<1x8x128xf32>
    %445 = vector.shape_cast %444 : vector<1x8x128xf32> to vector<8x128xf32>
    %c5_244 = arith.constant 5 : index
    %c0_245 = arith.constant 0 : index
    %c0_246 = arith.constant 0 : index
    %446 = vector.load %arg23[%c5_244, %c0_245, %c0_246] : memref<8x8x128xf32, #tpu.memory_space<vmem>>, vector<1x8x128xf32>
    %447 = vector.shape_cast %446 : vector<1x8x128xf32> to vector<8x128xf32>
    %448 = vector.shape_cast %21 : vector<1x128xi1> to vector<1x128xi1>
    %449 = vector.broadcast %448 : vector<1x128xi1> to vector<8x128xi1>
    %450 = arith.select %449, %445, %447 : vector<8x128xi1>, vector<8x128xf32>
    %c2_247 = arith.constant 2 : index
    %c0_248 = arith.constant 0 : index
    %c0_249 = arith.constant 0 : index
    %451 = vector.load %arg24[%c2_247, %c0_248, %c0_249] : memref<8x8x128xf32, #tpu.memory_space<vmem>>, vector<1x8x128xf32>
    %452 = vector.shape_cast %451 : vector<1x8x128xf32> to vector<8x128xf32>
    %453 = vector.shape_cast %450 : vector<8x128xf32> to vector<1x8x128xf32>
    tpu.vector_store %arg24[%c2_247, %c0_248, %c0_249], %453 {strides = array<i32>} : memref<8x8x128xf32, #tpu.memory_space<vmem>>, vector<1x8x128xf32>,
    %c3_250 = arith.constant 3 : index
    %c0_251 = arith.constant 0 : index
    %c0_252 = arith.constant 0 : index
    %454 = vector.load %arg23[%c3_250, %c0_251, %c0_252] : memref<8x8x128xf32, #tpu.memory_space<vmem>>, vector<1x8x128xf32>
    %455 = vector.shape_cast %454 : vector<1x8x128xf32> to vector<8x128xf32>
    %c4_253 = arith.constant 4 : index
    %c0_254 = arith.constant 0 : index
    %c0_255 = arith.constant 0 : index
    %456 = vector.load %arg23[%c4_253, %c0_254, %c0_255] : memref<8x8x128xf32, #tpu.memory_space<vmem>>, vector<1x8x128xf32>
    %457 = vector.shape_cast %456 : vector<1x8x128xf32> to vector<8x128xf32>
    %458 = vector.shape_cast %21 : vector<1x128xi1> to vector<1x128xi1>
    %459 = vector.broadcast %458 : vector<1x128xi1> to vector<8x128xi1>
    %460 = arith.select %459, %455, %457 : vector<8x128xi1>, vector<8x128xf32>
    %c3_256 = arith.constant 3 : index
    %c0_257 = arith.constant 0 : index
    %c0_258 = arith.constant 0 : index
    %461 = vector.load %arg24[%c3_256, %c0_257, %c0_258] : memref<8x8x128xf32, #tpu.memory_space<vmem>>, vector<1x8x128xf32>
    %462 = vector.shape_cast %461 : vector<1x8x128xf32> to vector<8x128xf32>
    %463 = vector.shape_cast %460 : vector<8x128xf32> to vector<1x8x128xf32>
    tpu.vector_store %arg24[%c3_256, %c0_257, %c0_258], %463 {strides = array<i32>} : memref<8x8x128xf32, #tpu.memory_space<vmem>>, vector<1x8x128xf32>,
    %c4_259 = arith.constant 4 : index
    %c0_260 = arith.constant 0 : index
    %c0_261 = arith.constant 0 : index
    %464 = vector.load %arg23[%c4_259, %c0_260, %c0_261] : memref<8x8x128xf32, #tpu.memory_space<vmem>>, vector<1x8x128xf32>
    %465 = vector.shape_cast %464 : vector<1x8x128xf32> to vector<8x128xf32>
    %c3_262 = arith.constant 3 : index
    %c0_263 = arith.constant 0 : index
    %c0_264 = arith.constant 0 : index
    %466 = vector.load %arg23[%c3_262, %c0_263, %c0_264] : memref<8x8x128xf32, #tpu.memory_space<vmem>>, vector<1x8x128xf32>
    %467 = vector.shape_cast %466 : vector<1x8x128xf32> to vector<8x128xf32>
    %468 = vector.shape_cast %21 : vector<1x128xi1> to vector<1x128xi1>
    %469 = vector.broadcast %468 : vector<1x128xi1> to vector<8x128xi1>
    %470 = arith.select %469, %465, %467 : vector<8x128xi1>, vector<8x128xf32>
    %c4_265 = arith.constant 4 : index
    %c0_266 = arith.constant 0 : index
    %c0_267 = arith.constant 0 : index
    %471 = vector.load %arg24[%c4_265, %c0_266, %c0_267] : memref<8x8x128xf32, #tpu.memory_space<vmem>>, vector<1x8x128xf32>
    %472 = vector.shape_cast %471 : vector<1x8x128xf32> to vector<8x128xf32>
    %473 = vector.shape_cast %470 : vector<8x128xf32> to vector<1x8x128xf32>
    tpu.vector_store %arg24[%c4_265, %c0_266, %c0_267], %473 {strides = array<i32>} : memref<8x8x128xf32, #tpu.memory_space<vmem>>, vector<1x8x128xf32>,
    %c5_268 = arith.constant 5 : index
    %c0_269 = arith.constant 0 : index
    %c0_270 = arith.constant 0 : index
    %474 = vector.load %arg23[%c5_268, %c0_269, %c0_270] : memref<8x8x128xf32, #tpu.memory_space<vmem>>, vector<1x8x128xf32>
    %475 = vector.shape_cast %474 : vector<1x8x128xf32> to vector<8x128xf32>
    %c2_271 = arith.constant 2 : index
    %c0_272 = arith.constant 0 : index
    %c0_273 = arith.constant 0 : index
    %476 = vector.load %arg23[%c2_271, %c0_272, %c0_273] : memref<8x8x128xf32, #tpu.memory_space<vmem>>, vector<1x8x128xf32>
    %477 = vector.shape_cast %476 : vector<1x8x128xf32> to vector<8x128xf32>
    %478 = vector.shape_cast %21 : vector<1x128xi1> to vector<1x128xi1>
    %479 = vector.broadcast %478 : vector<1x128xi1> to vector<8x128xi1>
    %480 = arith.select %479, %475, %477 : vector<8x128xi1>, vector<8x128xf32>
    %c5_274 = arith.constant 5 : index
    %c0_275 = arith.constant 0 : index
    %c0_276 = arith.constant 0 : index
    %481 = vector.load %arg24[%c5_274, %c0_275, %c0_276] : memref<8x8x128xf32, #tpu.memory_space<vmem>>, vector<1x8x128xf32>
    %482 = vector.shape_cast %481 : vector<1x8x128xf32> to vector<8x128xf32>
    %483 = vector.shape_cast %480 : vector<8x128xf32> to vector<1x8x128xf32>
    tpu.vector_store %arg24[%c5_274, %c0_275, %c0_276], %483 {strides = array<i32>} : memref<8x8x128xf32, #tpu.memory_space<vmem>>, vector<1x8x128xf32>,
    %c6_277 = arith.constant 6 : index
    %c0_278 = arith.constant 0 : index
    %c0_279 = arith.constant 0 : index
    %484 = vector.load %arg23[%c6_277, %c0_278, %c0_279] : memref<8x8x128xf32, #tpu.memory_space<vmem>>, vector<1x8x128xf32>
    %485 = vector.shape_cast %484 : vector<1x8x128xf32> to vector<8x128xf32>
    %c1_280 = arith.constant 1 : index
    %c0_281 = arith.constant 0 : index
    %c0_282 = arith.constant 0 : index
    %486 = vector.load %arg23[%c1_280, %c0_281, %c0_282] : memref<8x8x128xf32, #tpu.memory_space<vmem>>, vector<1x8x128xf32>
    %487 = vector.shape_cast %486 : vector<1x8x128xf32> to vector<8x128xf32>
    %488 = vector.shape_cast %21 : vector<1x128xi1> to vector<1x128xi1>
    %489 = vector.broadcast %488 : vector<1x128xi1> to vector<8x128xi1>
    %490 = arith.select %489, %485, %487 : vector<8x128xi1>, vector<8x128xf32>
    %c6_283 = arith.constant 6 : index
    %c0_284 = arith.constant 0 : index
    %c0_285 = arith.constant 0 : index
    %491 = vector.load %arg24[%c6_283, %c0_284, %c0_285] : memref<8x8x128xf32, #tpu.memory_space<vmem>>, vector<1x8x128xf32>
    %492 = vector.shape_cast %491 : vector<1x8x128xf32> to vector<8x128xf32>
    %493 = vector.shape_cast %490 : vector<8x128xf32> to vector<1x8x128xf32>
    tpu.vector_store %arg24[%c6_283, %c0_284, %c0_285], %493 {strides = array<i32>} : memref<8x8x128xf32, #tpu.memory_space<vmem>>, vector<1x8x128xf32>,
    %c7_286 = arith.constant 7 : index
    %c0_287 = arith.constant 0 : index
    %c0_288 = arith.constant 0 : index
    %494 = vector.load %arg23[%c7_286, %c0_287, %c0_288] : memref<8x8x128xf32, #tpu.memory_space<vmem>>, vector<1x8x128xf32>
    %495 = vector.shape_cast %494 : vector<1x8x128xf32> to vector<8x128xf32>
    %c0_289 = arith.constant 0 : index
    %c0_290 = arith.constant 0 : index
    %c0_291 = arith.constant 0 : index
    %496 = vector.load %arg23[%c0_289, %c0_290, %c0_291] : memref<8x8x128xf32, #tpu.memory_space<vmem>>, vector<1x8x128xf32>
    %497 = vector.shape_cast %496 : vector<1x8x128xf32> to vector<8x128xf32>
    %498 = vector.shape_cast %21 : vector<1x128xi1> to vector<1x128xi1>
    %499 = vector.broadcast %498 : vector<1x128xi1> to vector<8x128xi1>
    %500 = arith.select %499, %495, %497 : vector<8x128xi1>, vector<8x128xf32>
    %c7_292 = arith.constant 7 : index
    %c0_293 = arith.constant 0 : index
    %c0_294 = arith.constant 0 : index
    %501 = vector.load %arg24[%c7_292, %c0_293, %c0_294] : memref<8x8x128xf32, #tpu.memory_space<vmem>>, vector<1x8x128xf32>
    %502 = vector.shape_cast %501 : vector<1x8x128xf32> to vector<8x128xf32>
    %503 = vector.shape_cast %500 : vector<8x128xf32> to vector<1x8x128xf32>
    tpu.vector_store %arg24[%c7_292, %c0_293, %c0_294], %503 {strides = array<i32>} : memref<8x8x128xf32, #tpu.memory_space<vmem>>, vector<1x8x128xf32>,
    %c0_295 = arith.constant 0 : index
    %c0_296 = arith.constant 0 : index
    %c0_297 = arith.constant 0 : index
    %504 = vector.load %arg24[%c0_295, %c0_296, %c0_297] : memref<8x8x128xf32, #tpu.memory_space<vmem>>, vector<8x8x128xf32>
    %505 = vector.shape_cast %504 : vector<8x8x128xf32> to vector<64x128xf32>
    %c0_298 = arith.constant 0 : index
    %c0_299 = arith.constant 0 : index
    %506 = vector.load %arg7[%c0_298, %c0_299] : memref<128x512xf32, #tpu.memory_space<vmem>>, vector<128x512xf32>
    %cst_300 = arith.constant dense<0.000000e+00> : vector<64x512xf32>
    %507 = tpu.matmul %505, %506, %cst_300 {dimension_numbers = #tpu.dot_dimension_numbers<[1], [0], [0], [1], [0, 0, 1, 1], [], []>} : vector<64x128xf32>, vector<128x512xf32>, vector<64x512xf32> -> vector<64x512xf32>
    %c0_301 = arith.constant 0 : index
    %c0_302 = arith.constant 0 : index
    %508 = vector.load %arg9[%c0_301, %c0_302] : memref<1x512xf32, #tpu.memory_space<vmem>>, vector<1x512xf32>
    %509 = vector.broadcast %508 : vector<1x512xf32> to vector<64x512xf32>
    %510 = arith.addf %507, %509 : vector<64x512xf32>
    %511 = vector.shape_cast %510 : vector<64x512xf32> to vector<8x8x512xf32>
    %c0_303 = arith.constant 0 : index
    %c0_304 = arith.constant 0 : index
    %c0_305 = arith.constant 0 : index
    %512 = vector.load %arg21[%c0_303, %c0_304, %c0_305] : memref<8x8x512xf32, #tpu.memory_space<vmem>>, vector<8x8x512xf32>
    tpu.vector_store %arg21[%c0_303, %c0_304, %c0_305], %511 {strides = array<i32>} : memref<8x8x512xf32, #tpu.memory_space<vmem>>, vector<8x8x512xf32>,
    %c0_306 = arith.constant 0 : index
    %c0_307 = arith.constant 0 : index
    %c0_308 = arith.constant 0 : index
    %513 = vector.load %arg21[%c0_306, %c0_307, %c0_308] : memref<8x8x512xf32, #tpu.memory_space<vmem>>, vector<1x8x512xf32>
    %514 = vector.shape_cast %513 : vector<1x8x512xf32> to vector<8x512xf32>
    %c7_309 = arith.constant 7 : index
    %c0_310 = arith.constant 0 : index
    %c0_311 = arith.constant 0 : index
    %515 = vector.load %arg21[%c7_309, %c0_310, %c0_311] : memref<8x8x512xf32, #tpu.memory_space<vmem>>, vector<1x8x512xf32>
    %516 = vector.shape_cast %515 : vector<1x8x512xf32> to vector<8x512xf32>
    %517 = vector.shape_cast %18 : vector<1x512xi1> to vector<1x512xi1>
    %518 = vector.broadcast %517 : vector<1x512xi1> to vector<8x512xi1>
    %519 = arith.select %518, %514, %516 : vector<8x512xi1>, vector<8x512xf32>
    %c0_312 = arith.constant 0 : index
    %c0_313 = arith.constant 0 : index
    %c0_314 = arith.constant 0 : index
    %520 = vector.load %arg22[%c0_312, %c0_313, %c0_314] : memref<8x8x512xf32, #tpu.memory_space<vmem>>, vector<1x8x512xf32>
    %521 = vector.shape_cast %520 : vector<1x8x512xf32> to vector<8x512xf32>
    %522 = vector.shape_cast %519 : vector<8x512xf32> to vector<1x8x512xf32>
    tpu.vector_store %arg22[%c0_312, %c0_313, %c0_314], %522 {strides = array<i32>} : memref<8x8x512xf32, #tpu.memory_space<vmem>>, vector<1x8x512xf32>,
    %c1_315 = arith.constant 1 : index
    %c0_316 = arith.constant 0 : index
    %c0_317 = arith.constant 0 : index
    %523 = vector.load %arg21[%c1_315, %c0_316, %c0_317] : memref<8x8x512xf32, #tpu.memory_space<vmem>>, vector<1x8x512xf32>
    %524 = vector.shape_cast %523 : vector<1x8x512xf32> to vector<8x512xf32>
    %c6_318 = arith.constant 6 : index
    %c0_319 = arith.constant 0 : index
    %c0_320 = arith.constant 0 : index
    %525 = vector.load %arg21[%c6_318, %c0_319, %c0_320] : memref<8x8x512xf32, #tpu.memory_space<vmem>>, vector<1x8x512xf32>
    %526 = vector.shape_cast %525 : vector<1x8x512xf32> to vector<8x512xf32>
    %527 = vector.shape_cast %18 : vector<1x512xi1> to vector<1x512xi1>
    %528 = vector.broadcast %527 : vector<1x512xi1> to vector<8x512xi1>
    %529 = arith.select %528, %524, %526 : vector<8x512xi1>, vector<8x512xf32>
    %c1_321 = arith.constant 1 : index
    %c0_322 = arith.constant 0 : index
    %c0_323 = arith.constant 0 : index
    %530 = vector.load %arg22[%c1_321, %c0_322, %c0_323] : memref<8x8x512xf32, #tpu.memory_space<vmem>>, vector<1x8x512xf32>
    %531 = vector.shape_cast %530 : vector<1x8x512xf32> to vector<8x512xf32>
    %532 = vector.shape_cast %529 : vector<8x512xf32> to vector<1x8x512xf32>
    tpu.vector_store %arg22[%c1_321, %c0_322, %c0_323], %532 {strides = array<i32>} : memref<8x8x512xf32, #tpu.memory_space<vmem>>, vector<1x8x512xf32>,
    %c2_324 = arith.constant 2 : index
    %c0_325 = arith.constant 0 : index
    %c0_326 = arith.constant 0 : index
    %533 = vector.load %arg21[%c2_324, %c0_325, %c0_326] : memref<8x8x512xf32, #tpu.memory_space<vmem>>, vector<1x8x512xf32>
    %534 = vector.shape_cast %533 : vector<1x8x512xf32> to vector<8x512xf32>
    %c5_327 = arith.constant 5 : index
    %c0_328 = arith.constant 0 : index
    %c0_329 = arith.constant 0 : index
    %535 = vector.load %arg21[%c5_327, %c0_328, %c0_329] : memref<8x8x512xf32, #tpu.memory_space<vmem>>, vector<1x8x512xf32>
    %536 = vector.shape_cast %535 : vector<1x8x512xf32> to vector<8x512xf32>
    %537 = vector.shape_cast %18 : vector<1x512xi1> to vector<1x512xi1>
    %538 = vector.broadcast %537 : vector<1x512xi1> to vector<8x512xi1>
    %539 = arith.select %538, %534, %536 : vector<8x512xi1>, vector<8x512xf32>
    %c2_330 = arith.constant 2 : index
    %c0_331 = arith.constant 0 : index
    %c0_332 = arith.constant 0 : index
    %540 = vector.load %arg22[%c2_330, %c0_331, %c0_332] : memref<8x8x512xf32, #tpu.memory_space<vmem>>, vector<1x8x512xf32>
    %541 = vector.shape_cast %540 : vector<1x8x512xf32> to vector<8x512xf32>
    %542 = vector.shape_cast %539 : vector<8x512xf32> to vector<1x8x512xf32>
    tpu.vector_store %arg22[%c2_330, %c0_331, %c0_332], %542 {strides = array<i32>} : memref<8x8x512xf32, #tpu.memory_space<vmem>>, vector<1x8x512xf32>,
    %c3_333 = arith.constant 3 : index
    %c0_334 = arith.constant 0 : index
    %c0_335 = arith.constant 0 : index
    %543 = vector.load %arg21[%c3_333, %c0_334, %c0_335] : memref<8x8x512xf32, #tpu.memory_space<vmem>>, vector<1x8x512xf32>
    %544 = vector.shape_cast %543 : vector<1x8x512xf32> to vector<8x512xf32>
    %c4_336 = arith.constant 4 : index
    %c0_337 = arith.constant 0 : index
    %c0_338 = arith.constant 0 : index
    %545 = vector.load %arg21[%c4_336, %c0_337, %c0_338] : memref<8x8x512xf32, #tpu.memory_space<vmem>>, vector<1x8x512xf32>
    %546 = vector.shape_cast %545 : vector<1x8x512xf32> to vector<8x512xf32>
    %547 = vector.shape_cast %18 : vector<1x512xi1> to vector<1x512xi1>
    %548 = vector.broadcast %547 : vector<1x512xi1> to vector<8x512xi1>
    %549 = arith.select %548, %544, %546 : vector<8x512xi1>, vector<8x512xf32>
    %c3_339 = arith.constant 3 : index
    %c0_340 = arith.constant 0 : index
    %c0_341 = arith.constant 0 : index
    %550 = vector.load %arg22[%c3_339, %c0_340, %c0_341] : memref<8x8x512xf32, #tpu.memory_space<vmem>>, vector<1x8x512xf32>
    %551 = vector.shape_cast %550 : vector<1x8x512xf32> to vector<8x512xf32>
    %552 = vector.shape_cast %549 : vector<8x512xf32> to vector<1x8x512xf32>
    tpu.vector_store %arg22[%c3_339, %c0_340, %c0_341], %552 {strides = array<i32>} : memref<8x8x512xf32, #tpu.memory_space<vmem>>, vector<1x8x512xf32>,
    %c4_342 = arith.constant 4 : index
    %c0_343 = arith.constant 0 : index
    %c0_344 = arith.constant 0 : index
    %553 = vector.load %arg21[%c4_342, %c0_343, %c0_344] : memref<8x8x512xf32, #tpu.memory_space<vmem>>, vector<1x8x512xf32>
    %554 = vector.shape_cast %553 : vector<1x8x512xf32> to vector<8x512xf32>
    %c3_345 = arith.constant 3 : index
    %c0_346 = arith.constant 0 : index
    %c0_347 = arith.constant 0 : index
    %555 = vector.load %arg21[%c3_345, %c0_346, %c0_347] : memref<8x8x512xf32, #tpu.memory_space<vmem>>, vector<1x8x512xf32>
    %556 = vector.shape_cast %555 : vector<1x8x512xf32> to vector<8x512xf32>
    %557 = vector.shape_cast %18 : vector<1x512xi1> to vector<1x512xi1>
    %558 = vector.broadcast %557 : vector<1x512xi1> to vector<8x512xi1>
    %559 = arith.select %558, %554, %556 : vector<8x512xi1>, vector<8x512xf32>
    %c4_348 = arith.constant 4 : index
    %c0_349 = arith.constant 0 : index
    %c0_350 = arith.constant 0 : index
    %560 = vector.load %arg22[%c4_348, %c0_349, %c0_350] : memref<8x8x512xf32, #tpu.memory_space<vmem>>, vector<1x8x512xf32>
    %561 = vector.shape_cast %560 : vector<1x8x512xf32> to vector<8x512xf32>
    %562 = vector.shape_cast %559 : vector<8x512xf32> to vector<1x8x512xf32>
    tpu.vector_store %arg22[%c4_348, %c0_349, %c0_350], %562 {strides = array<i32>} : memref<8x8x512xf32, #tpu.memory_space<vmem>>, vector<1x8x512xf32>,
    %c5_351 = arith.constant 5 : index
    %c0_352 = arith.constant 0 : index
    %c0_353 = arith.constant 0 : index
    %563 = vector.load %arg21[%c5_351, %c0_352, %c0_353] : memref<8x8x512xf32, #tpu.memory_space<vmem>>, vector<1x8x512xf32>
    %564 = vector.shape_cast %563 : vector<1x8x512xf32> to vector<8x512xf32>
    %c2_354 = arith.constant 2 : index
    %c0_355 = arith.constant 0 : index
    %c0_356 = arith.constant 0 : index
    %565 = vector.load %arg21[%c2_354, %c0_355, %c0_356] : memref<8x8x512xf32, #tpu.memory_space<vmem>>, vector<1x8x512xf32>
    %566 = vector.shape_cast %565 : vector<1x8x512xf32> to vector<8x512xf32>
    %567 = vector.shape_cast %18 : vector<1x512xi1> to vector<1x512xi1>
    %568 = vector.broadcast %567 : vector<1x512xi1> to vector<8x512xi1>
    %569 = arith.select %568, %564, %566 : vector<8x512xi1>, vector<8x512xf32>
    %c5_357 = arith.constant 5 : index
    %c0_358 = arith.constant 0 : index
    %c0_359 = arith.constant 0 : index
    %570 = vector.load %arg22[%c5_357, %c0_358, %c0_359] : memref<8x8x512xf32, #tpu.memory_space<vmem>>, vector<1x8x512xf32>
    %571 = vector.shape_cast %570 : vector<1x8x512xf32> to vector<8x512xf32>
    %572 = vector.shape_cast %569 : vector<8x512xf32> to vector<1x8x512xf32>
    tpu.vector_store %arg22[%c5_357, %c0_358, %c0_359], %572 {strides = array<i32>} : memref<8x8x512xf32, #tpu.memory_space<vmem>>, vector<1x8x512xf32>,
    %c6_360 = arith.constant 6 : index
    %c0_361 = arith.constant 0 : index
    %c0_362 = arith.constant 0 : index
    %573 = vector.load %arg21[%c6_360, %c0_361, %c0_362] : memref<8x8x512xf32, #tpu.memory_space<vmem>>, vector<1x8x512xf32>
    %574 = vector.shape_cast %573 : vector<1x8x512xf32> to vector<8x512xf32>
    %c1_363 = arith.constant 1 : index
    %c0_364 = arith.constant 0 : index
    %c0_365 = arith.constant 0 : index
    %575 = vector.load %arg21[%c1_363, %c0_364, %c0_365] : memref<8x8x512xf32, #tpu.memory_space<vmem>>, vector<1x8x512xf32>
    %576 = vector.shape_cast %575 : vector<1x8x512xf32> to vector<8x512xf32>
    %577 = vector.shape_cast %18 : vector<1x512xi1> to vector<1x512xi1>
    %578 = vector.broadcast %577 : vector<1x512xi1> to vector<8x512xi1>
    %579 = arith.select %578, %574, %576 : vector<8x512xi1>, vector<8x512xf32>
    %c6_366 = arith.constant 6 : index
    %c0_367 = arith.constant 0 : index
    %c0_368 = arith.constant 0 : index
    %580 = vector.load %arg22[%c6_366, %c0_367, %c0_368] : memref<8x8x512xf32, #tpu.memory_space<vmem>>, vector<1x8x512xf32>
    %581 = vector.shape_cast %580 : vector<1x8x512xf32> to vector<8x512xf32>
    %582 = vector.shape_cast %579 : vector<8x512xf32> to vector<1x8x512xf32>
    tpu.vector_store %arg22[%c6_366, %c0_367, %c0_368], %582 {strides = array<i32>} : memref<8x8x512xf32, #tpu.memory_space<vmem>>, vector<1x8x512xf32>,
    %c7_369 = arith.constant 7 : index
    %c0_370 = arith.constant 0 : index
    %c0_371 = arith.constant 0 : index
    %583 = vector.load %arg21[%c7_369, %c0_370, %c0_371] : memref<8x8x512xf32, #tpu.memory_space<vmem>>, vector<1x8x512xf32>
    %584 = vector.shape_cast %583 : vector<1x8x512xf32> to vector<8x512xf32>
    %c0_372 = arith.constant 0 : index
    %c0_373 = arith.constant 0 : index
    %c0_374 = arith.constant 0 : index
    %585 = vector.load %arg21[%c0_372, %c0_373, %c0_374] : memref<8x8x512xf32, #tpu.memory_space<vmem>>, vector<1x8x512xf32>
    %586 = vector.shape_cast %585 : vector<1x8x512xf32> to vector<8x512xf32>
    %587 = vector.shape_cast %18 : vector<1x512xi1> to vector<1x512xi1>
    %588 = vector.broadcast %587 : vector<1x512xi1> to vector<8x512xi1>
    %589 = arith.select %588, %584, %586 : vector<8x512xi1>, vector<8x512xf32>
    %c7_375 = arith.constant 7 : index
    %c0_376 = arith.constant 0 : index
    %c0_377 = arith.constant 0 : index
    %590 = vector.load %arg22[%c7_375, %c0_376, %c0_377] : memref<8x8x512xf32, #tpu.memory_space<vmem>>, vector<1x8x512xf32>
    %591 = vector.shape_cast %590 : vector<1x8x512xf32> to vector<8x512xf32>
    %592 = vector.shape_cast %589 : vector<8x512xf32> to vector<1x8x512xf32>
    tpu.vector_store %arg22[%c7_375, %c0_376, %c0_377], %592 {strides = array<i32>} : memref<8x8x512xf32, #tpu.memory_space<vmem>>, vector<1x8x512xf32>,
    %c0_378 = arith.constant 0 : index
    %c0_379 = arith.constant 0 : index
    %c0_380 = arith.constant 0 : index
    %593 = vector.load %arg22[%c0_378, %c0_379, %c0_380] : memref<8x8x512xf32, #tpu.memory_space<vmem>>, vector<1x8x512xf32>
    %594 = vector.shape_cast %593 : vector<1x8x512xf32> to vector<8x512xf32>
    %c0_381 = arith.constant 0 : index
    %c0_382 = arith.constant 0 : index
    %595 = vector.load %arg8[%c0_381, %c0_382] : memref<128x512xf32, #tpu.memory_space<vmem>>, vector<128x512xf32>
    %cst_383 = arith.constant dense<0.000000e+00> : vector<8x512xf32>
    %596 = tpu.matmul %22, %595, %cst_383 {dimension_numbers = #tpu.dot_dimension_numbers<[1], [0], [0], [1], [0, 0, 1, 1], [], []>} : vector<8x128xf32>, vector<128x512xf32>, vector<8x512xf32> -> vector<8x512xf32>
    %597 = arith.addf %594, %596 : vector<8x512xf32>
    %598 = vector.extract_strided_slice %597 {offsets = [0, 0], sizes = [8, 128], strides = [1, 1]} : vector<8x512xf32> to vector<8x128xf32>
    %cst_384 = arith.constant 5.000000e-01 : f32
    %599 = vector.broadcast %cst_384 : f32 to vector<8x128xf32>
    %600 = arith.mulf %599, %598 : vector<8x128xf32>
    %601 = math.tanh %600 : vector<8x128xf32>
    %cst_385 = arith.constant 5.000000e-01 : f32
    %602 = vector.broadcast %cst_385 : f32 to vector<8x128xf32>
    %603 = arith.mulf %602, %601 : vector<8x128xf32>
    %cst_386 = arith.constant 5.000000e-01 : f32
    %604 = vector.broadcast %cst_386 : f32 to vector<8x128xf32>
    %605 = arith.addf %603, %604 : vector<8x128xf32>
    %606 = vector.extract_strided_slice %597 {offsets = [0, 128], sizes = [8, 128], strides = [1, 1]} : vector<8x512xf32> to vector<8x128xf32>
    %cst_387 = arith.constant 5.000000e-01 : f32
    %607 = vector.broadcast %cst_387 : f32 to vector<8x128xf32>
    %608 = arith.mulf %607, %606 : vector<8x128xf32>
    %609 = math.tanh %608 : vector<8x128xf32>
    %cst_388 = arith.constant 5.000000e-01 : f32
    %610 = vector.broadcast %cst_388 : f32 to vector<8x128xf32>
    %611 = arith.mulf %610, %609 : vector<8x128xf32>
    %cst_389 = arith.constant 5.000000e-01 : f32
    %612 = vector.broadcast %cst_389 : f32 to vector<8x128xf32>
    %613 = arith.addf %611, %612 : vector<8x128xf32>
    %614 = vector.extract_strided_slice %597 {offsets = [0, 256], sizes = [8, 128], strides = [1, 1]} : vector<8x512xf32> to vector<8x128xf32>
    %615 = math.tanh %614 : vector<8x128xf32>
    %616 = vector.extract_strided_slice %597 {offsets = [0, 384], sizes = [8, 128], strides = [1, 1]} : vector<8x512xf32> to vector<8x128xf32>
    %cst_390 = arith.constant 5.000000e-01 : f32
    %617 = vector.broadcast %cst_390 : f32 to vector<8x128xf32>
    %618 = arith.mulf %617, %616 : vector<8x128xf32>
    %619 = math.tanh %618 : vector<8x128xf32>
    %cst_391 = arith.constant 5.000000e-01 : f32
    %620 = vector.broadcast %cst_391 : f32 to vector<8x128xf32>
    %621 = arith.mulf %620, %619 : vector<8x128xf32>
    %cst_392 = arith.constant 5.000000e-01 : f32
    %622 = vector.broadcast %cst_392 : f32 to vector<8x128xf32>
    %623 = arith.addf %621, %622 : vector<8x128xf32>
    %624 = arith.mulf %613, %22 : vector<8x128xf32>
    %625 = arith.mulf %605, %615 : vector<8x128xf32>
    %626 = arith.addf %624, %625 : vector<8x128xf32>
    %627 = math.tanh %626 : vector<8x128xf32>
    %628 = arith.mulf %623, %627 : vector<8x128xf32>
    %c1_393 = arith.constant 1 : index
    %c0_394 = arith.constant 0 : index
    %c0_395 = arith.constant 0 : index
    %629 = vector.load %arg22[%c1_393, %c0_394, %c0_395] : memref<8x8x512xf32, #tpu.memory_space<vmem>>, vector<1x8x512xf32>
    %630 = vector.shape_cast %629 : vector<1x8x512xf32> to vector<8x512xf32>
    %c0_396 = arith.constant 0 : index
    %c0_397 = arith.constant 0 : index
    %631 = vector.load %arg8[%c0_396, %c0_397] : memref<128x512xf32, #tpu.memory_space<vmem>>, vector<128x512xf32>
    %cst_398 = arith.constant dense<0.000000e+00> : vector<8x512xf32>
    %632 = tpu.matmul %628, %631, %cst_398 {dimension_numbers = #tpu.dot_dimension_numbers<[1], [0], [0], [1], [0, 0, 1, 1], [], []>} : vector<8x128xf32>, vector<128x512xf32>, vector<8x512xf32> -> vector<8x512xf32>
    %633 = arith.addf %630, %632 : vector<8x512xf32>
    %634 = vector.extract_strided_slice %633 {offsets = [0, 0], sizes = [8, 128], strides = [1, 1]} : vector<8x512xf32> to vector<8x128xf32>
    %cst_399 = arith.constant 5.000000e-01 : f32
    %635 = vector.broadcast %cst_399 : f32 to vector<8x128xf32>
    %636 = arith.mulf %635, %634 : vector<8x128xf32>
    %637 = math.tanh %636 : vector<8x128xf32>
    %cst_400 = arith.constant 5.000000e-01 : f32
    %638 = vector.broadcast %cst_400 : f32 to vector<8x128xf32>
    %639 = arith.mulf %638, %637 : vector<8x128xf32>
    %cst_401 = arith.constant 5.000000e-01 : f32
    %640 = vector.broadcast %cst_401 : f32 to vector<8x128xf32>
    %641 = arith.addf %639, %640 : vector<8x128xf32>
    %642 = vector.extract_strided_slice %633 {offsets = [0, 128], sizes = [8, 128], strides = [1, 1]} : vector<8x512xf32> to vector<8x128xf32>
    %cst_402 = arith.constant 5.000000e-01 : f32
    %643 = vector.broadcast %cst_402 : f32 to vector<8x128xf32>
    %644 = arith.mulf %643, %642 : vector<8x128xf32>
    %645 = math.tanh %644 : vector<8x128xf32>
    %cst_403 = arith.constant 5.000000e-01 : f32
    %646 = vector.broadcast %cst_403 : f32 to vector<8x128xf32>
    %647 = arith.mulf %646, %645 : vector<8x128xf32>
    %cst_404 = arith.constant 5.000000e-01 : f32
    %648 = vector.broadcast %cst_404 : f32 to vector<8x128xf32>
    %649 = arith.addf %647, %648 : vector<8x128xf32>
    %650 = vector.extract_strided_slice %633 {offsets = [0, 256], sizes = [8, 128], strides = [1, 1]} : vector<8x512xf32> to vector<8x128xf32>
    %651 = math.tanh %650 : vector<8x128xf32>
    %652 = vector.extract_strided_slice %633 {offsets = [0, 384], sizes = [8, 128], strides = [1, 1]} : vector<8x512xf32> to vector<8x128xf32>
    %cst_405 = arith.constant 5.000000e-01 : f32
    %653 = vector.broadcast %cst_405 : f32 to vector<8x128xf32>
    %654 = arith.mulf %653, %652 : vector<8x128xf32>
    %655 = math.tanh %654 : vector<8x128xf32>
    %cst_406 = arith.constant 5.000000e-01 : f32
    %656 = vector.broadcast %cst_406 : f32 to vector<8x128xf32>
    %657 = arith.mulf %656, %655 : vector<8x128xf32>
    %cst_407 = arith.constant 5.000000e-01 : f32
    %658 = vector.broadcast %cst_407 : f32 to vector<8x128xf32>
    %659 = arith.addf %657, %658 : vector<8x128xf32>
    %660 = arith.mulf %649, %626 : vector<8x128xf32>
    %661 = arith.mulf %641, %651 : vector<8x128xf32>
    %662 = arith.addf %660, %661 : vector<8x128xf32>
    %663 = math.tanh %662 : vector<8x128xf32>
    %664 = arith.mulf %659, %663 : vector<8x128xf32>
    %c2_408 = arith.constant 2 : index
    %c0_409 = arith.constant 0 : index
    %c0_410 = arith.constant 0 : index
    %665 = vector.load %arg22[%c2_408, %c0_409, %c0_410] : memref<8x8x512xf32, #tpu.memory_space<vmem>>, vector<1x8x512xf32>
    %666 = vector.shape_cast %665 : vector<1x8x512xf32> to vector<8x512xf32>
    %c0_411 = arith.constant 0 : index
    %c0_412 = arith.constant 0 : index
    %667 = vector.load %arg8[%c0_411, %c0_412] : memref<128x512xf32, #tpu.memory_space<vmem>>, vector<128x512xf32>
    %cst_413 = arith.constant dense<0.000000e+00> : vector<8x512xf32>
    %668 = tpu.matmul %664, %667, %cst_413 {dimension_numbers = #tpu.dot_dimension_numbers<[1], [0], [0], [1], [0, 0, 1, 1], [], []>} : vector<8x128xf32>, vector<128x512xf32>, vector<8x512xf32> -> vector<8x512xf32>
    %669 = arith.addf %666, %668 : vector<8x512xf32>
    %670 = vector.extract_strided_slice %669 {offsets = [0, 0], sizes = [8, 128], strides = [1, 1]} : vector<8x512xf32> to vector<8x128xf32>
    %cst_414 = arith.constant 5.000000e-01 : f32
    %671 = vector.broadcast %cst_414 : f32 to vector<8x128xf32>
    %672 = arith.mulf %671, %670 : vector<8x128xf32>
    %673 = math.tanh %672 : vector<8x128xf32>
    %cst_415 = arith.constant 5.000000e-01 : f32
    %674 = vector.broadcast %cst_415 : f32 to vector<8x128xf32>
    %675 = arith.mulf %674, %673 : vector<8x128xf32>
    %cst_416 = arith.constant 5.000000e-01 : f32
    %676 = vector.broadcast %cst_416 : f32 to vector<8x128xf32>
    %677 = arith.addf %675, %676 : vector<8x128xf32>
    %678 = vector.extract_strided_slice %669 {offsets = [0, 128], sizes = [8, 128], strides = [1, 1]} : vector<8x512xf32> to vector<8x128xf32>
    %cst_417 = arith.constant 5.000000e-01 : f32
    %679 = vector.broadcast %cst_417 : f32 to vector<8x128xf32>
    %680 = arith.mulf %679, %678 : vector<8x128xf32>
    %681 = math.tanh %680 : vector<8x128xf32>
    %cst_418 = arith.constant 5.000000e-01 : f32
    %682 = vector.broadcast %cst_418 : f32 to vector<8x128xf32>
    %683 = arith.mulf %682, %681 : vector<8x128xf32>
    %cst_419 = arith.constant 5.000000e-01 : f32
    %684 = vector.broadcast %cst_419 : f32 to vector<8x128xf32>
    %685 = arith.addf %683, %684 : vector<8x128xf32>
    %686 = vector.extract_strided_slice %669 {offsets = [0, 256], sizes = [8, 128], strides = [1, 1]} : vector<8x512xf32> to vector<8x128xf32>
    %687 = math.tanh %686 : vector<8x128xf32>
    %688 = vector.extract_strided_slice %669 {offsets = [0, 384], sizes = [8, 128], strides = [1, 1]} : vector<8x512xf32> to vector<8x128xf32>
    %cst_420 = arith.constant 5.000000e-01 : f32
    %689 = vector.broadcast %cst_420 : f32 to vector<8x128xf32>
    %690 = arith.mulf %689, %688 : vector<8x128xf32>
    %691 = math.tanh %690 : vector<8x128xf32>
    %cst_421 = arith.constant 5.000000e-01 : f32
    %692 = vector.broadcast %cst_421 : f32 to vector<8x128xf32>
    %693 = arith.mulf %692, %691 : vector<8x128xf32>
    %cst_422 = arith.constant 5.000000e-01 : f32
    %694 = vector.broadcast %cst_422 : f32 to vector<8x128xf32>
    %695 = arith.addf %693, %694 : vector<8x128xf32>
    %696 = arith.mulf %685, %662 : vector<8x128xf32>
    %697 = arith.mulf %677, %687 : vector<8x128xf32>
    %698 = arith.addf %696, %697 : vector<8x128xf32>
    %699 = math.tanh %698 : vector<8x128xf32>
    %700 = arith.mulf %695, %699 : vector<8x128xf32>
    %c3_423 = arith.constant 3 : index
    %c0_424 = arith.constant 0 : index
    %c0_425 = arith.constant 0 : index
    %701 = vector.load %arg22[%c3_423, %c0_424, %c0_425] : memref<8x8x512xf32, #tpu.memory_space<vmem>>, vector<1x8x512xf32>
    %702 = vector.shape_cast %701 : vector<1x8x512xf32> to vector<8x512xf32>
    %c0_426 = arith.constant 0 : index
    %c0_427 = arith.constant 0 : index
    %703 = vector.load %arg8[%c0_426, %c0_427] : memref<128x512xf32, #tpu.memory_space<vmem>>, vector<128x512xf32>
    %cst_428 = arith.constant dense<0.000000e+00> : vector<8x512xf32>
    %704 = tpu.matmul %700, %703, %cst_428 {dimension_numbers = #tpu.dot_dimension_numbers<[1], [0], [0], [1], [0, 0, 1, 1], [], []>} : vector<8x128xf32>, vector<128x512xf32>, vector<8x512xf32> -> vector<8x512xf32>
    %705 = arith.addf %702, %704 : vector<8x512xf32>
    %706 = vector.extract_strided_slice %705 {offsets = [0, 0], sizes = [8, 128], strides = [1, 1]} : vector<8x512xf32> to vector<8x128xf32>
    %cst_429 = arith.constant 5.000000e-01 : f32
    %707 = vector.broadcast %cst_429 : f32 to vector<8x128xf32>
    %708 = arith.mulf %707, %706 : vector<8x128xf32>
    %709 = math.tanh %708 : vector<8x128xf32>
    %cst_430 = arith.constant 5.000000e-01 : f32
    %710 = vector.broadcast %cst_430 : f32 to vector<8x128xf32>
    %711 = arith.mulf %710, %709 : vector<8x128xf32>
    %cst_431 = arith.constant 5.000000e-01 : f32
    %712 = vector.broadcast %cst_431 : f32 to vector<8x128xf32>
    %713 = arith.addf %711, %712 : vector<8x128xf32>
    %714 = vector.extract_strided_slice %705 {offsets = [0, 128], sizes = [8, 128], strides = [1, 1]} : vector<8x512xf32> to vector<8x128xf32>
    %cst_432 = arith.constant 5.000000e-01 : f32
    %715 = vector.broadcast %cst_432 : f32 to vector<8x128xf32>
    %716 = arith.mulf %715, %714 : vector<8x128xf32>
    %717 = math.tanh %716 : vector<8x128xf32>
    %cst_433 = arith.constant 5.000000e-01 : f32
    %718 = vector.broadcast %cst_433 : f32 to vector<8x128xf32>
    %719 = arith.mulf %718, %717 : vector<8x128xf32>
    %cst_434 = arith.constant 5.000000e-01 : f32
    %720 = vector.broadcast %cst_434 : f32 to vector<8x128xf32>
    %721 = arith.addf %719, %720 : vector<8x128xf32>
    %722 = vector.extract_strided_slice %705 {offsets = [0, 256], sizes = [8, 128], strides = [1, 1]} : vector<8x512xf32> to vector<8x128xf32>
    %723 = math.tanh %722 : vector<8x128xf32>
    %724 = vector.extract_strided_slice %705 {offsets = [0, 384], sizes = [8, 128], strides = [1, 1]} : vector<8x512xf32> to vector<8x128xf32>
    %cst_435 = arith.constant 5.000000e-01 : f32
    %725 = vector.broadcast %cst_435 : f32 to vector<8x128xf32>
    %726 = arith.mulf %725, %724 : vector<8x128xf32>
    %727 = math.tanh %726 : vector<8x128xf32>
    %cst_436 = arith.constant 5.000000e-01 : f32
    %728 = vector.broadcast %cst_436 : f32 to vector<8x128xf32>
    %729 = arith.mulf %728, %727 : vector<8x128xf32>
    %cst_437 = arith.constant 5.000000e-01 : f32
    %730 = vector.broadcast %cst_437 : f32 to vector<8x128xf32>
    %731 = arith.addf %729, %730 : vector<8x128xf32>
    %732 = arith.mulf %721, %698 : vector<8x128xf32>
    %733 = arith.mulf %713, %723 : vector<8x128xf32>
    %734 = arith.addf %732, %733 : vector<8x128xf32>
    %735 = math.tanh %734 : vector<8x128xf32>
    %736 = arith.mulf %731, %735 : vector<8x128xf32>
    %c4_438 = arith.constant 4 : index
    %c0_439 = arith.constant 0 : index
    %c0_440 = arith.constant 0 : index
    %737 = vector.load %arg22[%c4_438, %c0_439, %c0_440] : memref<8x8x512xf32, #tpu.memory_space<vmem>>, vector<1x8x512xf32>
    %738 = vector.shape_cast %737 : vector<1x8x512xf32> to vector<8x512xf32>
    %c0_441 = arith.constant 0 : index
    %c0_442 = arith.constant 0 : index
    %739 = vector.load %arg8[%c0_441, %c0_442] : memref<128x512xf32, #tpu.memory_space<vmem>>, vector<128x512xf32>
    %cst_443 = arith.constant dense<0.000000e+00> : vector<8x512xf32>
    %740 = tpu.matmul %736, %739, %cst_443 {dimension_numbers = #tpu.dot_dimension_numbers<[1], [0], [0], [1], [0, 0, 1, 1], [], []>} : vector<8x128xf32>, vector<128x512xf32>, vector<8x512xf32> -> vector<8x512xf32>
    %741 = arith.addf %738, %740 : vector<8x512xf32>
    %742 = vector.extract_strided_slice %741 {offsets = [0, 0], sizes = [8, 128], strides = [1, 1]} : vector<8x512xf32> to vector<8x128xf32>
    %cst_444 = arith.constant 5.000000e-01 : f32
    %743 = vector.broadcast %cst_444 : f32 to vector<8x128xf32>
    %744 = arith.mulf %743, %742 : vector<8x128xf32>
    %745 = math.tanh %744 : vector<8x128xf32>
    %cst_445 = arith.constant 5.000000e-01 : f32
    %746 = vector.broadcast %cst_445 : f32 to vector<8x128xf32>
    %747 = arith.mulf %746, %745 : vector<8x128xf32>
    %cst_446 = arith.constant 5.000000e-01 : f32
    %748 = vector.broadcast %cst_446 : f32 to vector<8x128xf32>
    %749 = arith.addf %747, %748 : vector<8x128xf32>
    %750 = vector.extract_strided_slice %741 {offsets = [0, 128], sizes = [8, 128], strides = [1, 1]} : vector<8x512xf32> to vector<8x128xf32>
    %cst_447 = arith.constant 5.000000e-01 : f32
    %751 = vector.broadcast %cst_447 : f32 to vector<8x128xf32>
    %752 = arith.mulf %751, %750 : vector<8x128xf32>
    %753 = math.tanh %752 : vector<8x128xf32>
    %cst_448 = arith.constant 5.000000e-01 : f32
    %754 = vector.broadcast %cst_448 : f32 to vector<8x128xf32>
    %755 = arith.mulf %754, %753 : vector<8x128xf32>
    %cst_449 = arith.constant 5.000000e-01 : f32
    %756 = vector.broadcast %cst_449 : f32 to vector<8x128xf32>
    %757 = arith.addf %755, %756 : vector<8x128xf32>
    %758 = vector.extract_strided_slice %741 {offsets = [0, 256], sizes = [8, 128], strides = [1, 1]} : vector<8x512xf32> to vector<8x128xf32>
    %759 = math.tanh %758 : vector<8x128xf32>
    %760 = vector.extract_strided_slice %741 {offsets = [0, 384], sizes = [8, 128], strides = [1, 1]} : vector<8x512xf32> to vector<8x128xf32>
    %cst_450 = arith.constant 5.000000e-01 : f32
    %761 = vector.broadcast %cst_450 : f32 to vector<8x128xf32>
    %762 = arith.mulf %761, %760 : vector<8x128xf32>
    %763 = math.tanh %762 : vector<8x128xf32>
    %cst_451 = arith.constant 5.000000e-01 : f32
    %764 = vector.broadcast %cst_451 : f32 to vector<8x128xf32>
    %765 = arith.mulf %764, %763 : vector<8x128xf32>
    %cst_452 = arith.constant 5.000000e-01 : f32
    %766 = vector.broadcast %cst_452 : f32 to vector<8x128xf32>
    %767 = arith.addf %765, %766 : vector<8x128xf32>
    %768 = arith.mulf %757, %734 : vector<8x128xf32>
    %769 = arith.mulf %749, %759 : vector<8x128xf32>
    %770 = arith.addf %768, %769 : vector<8x128xf32>
    %771 = math.tanh %770 : vector<8x128xf32>
    %772 = arith.mulf %767, %771 : vector<8x128xf32>
    %c5_453 = arith.constant 5 : index
    %c0_454 = arith.constant 0 : index
    %c0_455 = arith.constant 0 : index
    %773 = vector.load %arg22[%c5_453, %c0_454, %c0_455] : memref<8x8x512xf32, #tpu.memory_space<vmem>>, vector<1x8x512xf32>
    %774 = vector.shape_cast %773 : vector<1x8x512xf32> to vector<8x512xf32>
    %c0_456 = arith.constant 0 : index
    %c0_457 = arith.constant 0 : index
    %775 = vector.load %arg8[%c0_456, %c0_457] : memref<128x512xf32, #tpu.memory_space<vmem>>, vector<128x512xf32>
    %cst_458 = arith.constant dense<0.000000e+00> : vector<8x512xf32>
    %776 = tpu.matmul %772, %775, %cst_458 {dimension_numbers = #tpu.dot_dimension_numbers<[1], [0], [0], [1], [0, 0, 1, 1], [], []>} : vector<8x128xf32>, vector<128x512xf32>, vector<8x512xf32> -> vector<8x512xf32>
    %777 = arith.addf %774, %776 : vector<8x512xf32>
    %778 = vector.extract_strided_slice %777 {offsets = [0, 0], sizes = [8, 128], strides = [1, 1]} : vector<8x512xf32> to vector<8x128xf32>
    %cst_459 = arith.constant 5.000000e-01 : f32
    %779 = vector.broadcast %cst_459 : f32 to vector<8x128xf32>
    %780 = arith.mulf %779, %778 : vector<8x128xf32>
    %781 = math.tanh %780 : vector<8x128xf32>
    %cst_460 = arith.constant 5.000000e-01 : f32
    %782 = vector.broadcast %cst_460 : f32 to vector<8x128xf32>
    %783 = arith.mulf %782, %781 : vector<8x128xf32>
    %cst_461 = arith.constant 5.000000e-01 : f32
    %784 = vector.broadcast %cst_461 : f32 to vector<8x128xf32>
    %785 = arith.addf %783, %784 : vector<8x128xf32>
    %786 = vector.extract_strided_slice %777 {offsets = [0, 128], sizes = [8, 128], strides = [1, 1]} : vector<8x512xf32> to vector<8x128xf32>
    %cst_462 = arith.constant 5.000000e-01 : f32
    %787 = vector.broadcast %cst_462 : f32 to vector<8x128xf32>
    %788 = arith.mulf %787, %786 : vector<8x128xf32>
    %789 = math.tanh %788 : vector<8x128xf32>
    %cst_463 = arith.constant 5.000000e-01 : f32
    %790 = vector.broadcast %cst_463 : f32 to vector<8x128xf32>
    %791 = arith.mulf %790, %789 : vector<8x128xf32>
    %cst_464 = arith.constant 5.000000e-01 : f32
    %792 = vector.broadcast %cst_464 : f32 to vector<8x128xf32>
    %793 = arith.addf %791, %792 : vector<8x128xf32>
    %794 = vector.extract_strided_slice %777 {offsets = [0, 256], sizes = [8, 128], strides = [1, 1]} : vector<8x512xf32> to vector<8x128xf32>
    %795 = math.tanh %794 : vector<8x128xf32>
    %796 = vector.extract_strided_slice %777 {offsets = [0, 384], sizes = [8, 128], strides = [1, 1]} : vector<8x512xf32> to vector<8x128xf32>
    %cst_465 = arith.constant 5.000000e-01 : f32
    %797 = vector.broadcast %cst_465 : f32 to vector<8x128xf32>
    %798 = arith.mulf %797, %796 : vector<8x128xf32>
    %799 = math.tanh %798 : vector<8x128xf32>
    %cst_466 = arith.constant 5.000000e-01 : f32
    %800 = vector.broadcast %cst_466 : f32 to vector<8x128xf32>
    %801 = arith.mulf %800, %799 : vector<8x128xf32>
    %cst_467 = arith.constant 5.000000e-01 : f32
    %802 = vector.broadcast %cst_467 : f32 to vector<8x128xf32>
    %803 = arith.addf %801, %802 : vector<8x128xf32>
    %804 = arith.mulf %793, %770 : vector<8x128xf32>
    %805 = arith.mulf %785, %795 : vector<8x128xf32>
    %806 = arith.addf %804, %805 : vector<8x128xf32>
    %807 = math.tanh %806 : vector<8x128xf32>
    %808 = arith.mulf %803, %807 : vector<8x128xf32>
    %c6_468 = arith.constant 6 : index
    %c0_469 = arith.constant 0 : index
    %c0_470 = arith.constant 0 : index
    %809 = vector.load %arg22[%c6_468, %c0_469, %c0_470] : memref<8x8x512xf32, #tpu.memory_space<vmem>>, vector<1x8x512xf32>
    %810 = vector.shape_cast %809 : vector<1x8x512xf32> to vector<8x512xf32>
    %c0_471 = arith.constant 0 : index
    %c0_472 = arith.constant 0 : index
    %811 = vector.load %arg8[%c0_471, %c0_472] : memref<128x512xf32, #tpu.memory_space<vmem>>, vector<128x512xf32>
    %cst_473 = arith.constant dense<0.000000e+00> : vector<8x512xf32>
    %812 = tpu.matmul %808, %811, %cst_473 {dimension_numbers = #tpu.dot_dimension_numbers<[1], [0], [0], [1], [0, 0, 1, 1], [], []>} : vector<8x128xf32>, vector<128x512xf32>, vector<8x512xf32> -> vector<8x512xf32>
    %813 = arith.addf %810, %812 : vector<8x512xf32>
    %814 = vector.extract_strided_slice %813 {offsets = [0, 0], sizes = [8, 128], strides = [1, 1]} : vector<8x512xf32> to vector<8x128xf32>
    %cst_474 = arith.constant 5.000000e-01 : f32
    %815 = vector.broadcast %cst_474 : f32 to vector<8x128xf32>
    %816 = arith.mulf %815, %814 : vector<8x128xf32>
    %817 = math.tanh %816 : vector<8x128xf32>
    %cst_475 = arith.constant 5.000000e-01 : f32
    %818 = vector.broadcast %cst_475 : f32 to vector<8x128xf32>
    %819 = arith.mulf %818, %817 : vector<8x128xf32>
    %cst_476 = arith.constant 5.000000e-01 : f32
    %820 = vector.broadcast %cst_476 : f32 to vector<8x128xf32>
    %821 = arith.addf %819, %820 : vector<8x128xf32>
    %822 = vector.extract_strided_slice %813 {offsets = [0, 128], sizes = [8, 128], strides = [1, 1]} : vector<8x512xf32> to vector<8x128xf32>
    %cst_477 = arith.constant 5.000000e-01 : f32
    %823 = vector.broadcast %cst_477 : f32 to vector<8x128xf32>
    %824 = arith.mulf %823, %822 : vector<8x128xf32>
    %825 = math.tanh %824 : vector<8x128xf32>
    %cst_478 = arith.constant 5.000000e-01 : f32
    %826 = vector.broadcast %cst_478 : f32 to vector<8x128xf32>
    %827 = arith.mulf %826, %825 : vector<8x128xf32>
    %cst_479 = arith.constant 5.000000e-01 : f32
    %828 = vector.broadcast %cst_479 : f32 to vector<8x128xf32>
    %829 = arith.addf %827, %828 : vector<8x128xf32>
    %830 = vector.extract_strided_slice %813 {offsets = [0, 256], sizes = [8, 128], strides = [1, 1]} : vector<8x512xf32> to vector<8x128xf32>
    %831 = math.tanh %830 : vector<8x128xf32>
    %832 = vector.extract_strided_slice %813 {offsets = [0, 384], sizes = [8, 128], strides = [1, 1]} : vector<8x512xf32> to vector<8x128xf32>
    %cst_480 = arith.constant 5.000000e-01 : f32
    %833 = vector.broadcast %cst_480 : f32 to vector<8x128xf32>
    %834 = arith.mulf %833, %832 : vector<8x128xf32>
    %835 = math.tanh %834 : vector<8x128xf32>
    %cst_481 = arith.constant 5.000000e-01 : f32
    %836 = vector.broadcast %cst_481 : f32 to vector<8x128xf32>
    %837 = arith.mulf %836, %835 : vector<8x128xf32>
    %cst_482 = arith.constant 5.000000e-01 : f32
    %838 = vector.broadcast %cst_482 : f32 to vector<8x128xf32>
    %839 = arith.addf %837, %838 : vector<8x128xf32>
    %840 = arith.mulf %829, %806 : vector<8x128xf32>
    %841 = arith.mulf %821, %831 : vector<8x128xf32>
    %842 = arith.addf %840, %841 : vector<8x128xf32>
    %843 = math.tanh %842 : vector<8x128xf32>
    %844 = arith.mulf %839, %843 : vector<8x128xf32>
    %c7_483 = arith.constant 7 : index
    %c0_484 = arith.constant 0 : index
    %c0_485 = arith.constant 0 : index
    %845 = vector.load %arg22[%c7_483, %c0_484, %c0_485] : memref<8x8x512xf32, #tpu.memory_space<vmem>>, vector<1x8x512xf32>
    %846 = vector.shape_cast %845 : vector<1x8x512xf32> to vector<8x512xf32>
    %c0_486 = arith.constant 0 : index
    %c0_487 = arith.constant 0 : index
    %847 = vector.load %arg8[%c0_486, %c0_487] : memref<128x512xf32, #tpu.memory_space<vmem>>, vector<128x512xf32>
    %cst_488 = arith.constant dense<0.000000e+00> : vector<8x512xf32>
    %848 = tpu.matmul %844, %847, %cst_488 {dimension_numbers = #tpu.dot_dimension_numbers<[1], [0], [0], [1], [0, 0, 1, 1], [], []>} : vector<8x128xf32>, vector<128x512xf32>, vector<8x512xf32> -> vector<8x512xf32>
    %849 = arith.addf %846, %848 : vector<8x512xf32>
    %850 = vector.extract_strided_slice %849 {offsets = [0, 0], sizes = [8, 128], strides = [1, 1]} : vector<8x512xf32> to vector<8x128xf32>
    %cst_489 = arith.constant 5.000000e-01 : f32
    %851 = vector.broadcast %cst_489 : f32 to vector<8x128xf32>
    %852 = arith.mulf %851, %850 : vector<8x128xf32>
    %853 = math.tanh %852 : vector<8x128xf32>
    %cst_490 = arith.constant 5.000000e-01 : f32
    %854 = vector.broadcast %cst_490 : f32 to vector<8x128xf32>
    %855 = arith.mulf %854, %853 : vector<8x128xf32>
    %cst_491 = arith.constant 5.000000e-01 : f32
    %856 = vector.broadcast %cst_491 : f32 to vector<8x128xf32>
    %857 = arith.addf %855, %856 : vector<8x128xf32>
    %858 = vector.extract_strided_slice %849 {offsets = [0, 128], sizes = [8, 128], strides = [1, 1]} : vector<8x512xf32> to vector<8x128xf32>
    %cst_492 = arith.constant 5.000000e-01 : f32
    %859 = vector.broadcast %cst_492 : f32 to vector<8x128xf32>
    %860 = arith.mulf %859, %858 : vector<8x128xf32>
    %861 = math.tanh %860 : vector<8x128xf32>
    %cst_493 = arith.constant 5.000000e-01 : f32
    %862 = vector.broadcast %cst_493 : f32 to vector<8x128xf32>
    %863 = arith.mulf %862, %861 : vector<8x128xf32>
    %cst_494 = arith.constant 5.000000e-01 : f32
    %864 = vector.broadcast %cst_494 : f32 to vector<8x128xf32>
    %865 = arith.addf %863, %864 : vector<8x128xf32>
    %866 = vector.extract_strided_slice %849 {offsets = [0, 256], sizes = [8, 128], strides = [1, 1]} : vector<8x512xf32> to vector<8x128xf32>
    %867 = math.tanh %866 : vector<8x128xf32>
    %868 = vector.extract_strided_slice %849 {offsets = [0, 384], sizes = [8, 128], strides = [1, 1]} : vector<8x512xf32> to vector<8x128xf32>
    %cst_495 = arith.constant 5.000000e-01 : f32
    %869 = vector.broadcast %cst_495 : f32 to vector<8x128xf32>
    %870 = arith.mulf %869, %868 : vector<8x128xf32>
    %871 = math.tanh %870 : vector<8x128xf32>
    %cst_496 = arith.constant 5.000000e-01 : f32
    %872 = vector.broadcast %cst_496 : f32 to vector<8x128xf32>
    %873 = arith.mulf %872, %871 : vector<8x128xf32>
    %cst_497 = arith.constant 5.000000e-01 : f32
    %874 = vector.broadcast %cst_497 : f32 to vector<8x128xf32>
    %875 = arith.addf %873, %874 : vector<8x128xf32>
    %876 = arith.mulf %865, %842 : vector<8x128xf32>
    %877 = arith.mulf %857, %867 : vector<8x128xf32>
    %878 = arith.addf %876, %877 : vector<8x128xf32>
    %879 = math.tanh %878 : vector<8x128xf32>
    %880 = arith.mulf %875, %879 : vector<8x128xf32>
    %c0_498 = arith.constant 0 : index
    %c0_499 = arith.constant 0 : index
    %c0_500 = arith.constant 0 : index
    %881 = vector.load %arg22[%c0_498, %c0_499, %c0_500] : memref<8x8x512xf32, #tpu.memory_space<vmem>>, vector<1x8x512xf32>
    %882 = vector.shape_cast %881 : vector<1x8x512xf32> to vector<8x512xf32>
    %883 = vector.extract_strided_slice %882 {offsets = [0, 0], sizes = [8, 128], strides = [1, 1]} : vector<8x512xf32> to vector<8x128xf32>
    %cst_501 = arith.constant 5.000000e-01 : f32
    %884 = vector.broadcast %cst_501 : f32 to vector<8x128xf32>
    %885 = arith.mulf %884, %883 : vector<8x128xf32>
    %886 = math.tanh %885 : vector<8x128xf32>
    %cst_502 = arith.constant 5.000000e-01 : f32
    %887 = vector.broadcast %cst_502 : f32 to vector<8x128xf32>
    %888 = arith.mulf %887, %886 : vector<8x128xf32>
    %cst_503 = arith.constant 5.000000e-01 : f32
    %889 = vector.broadcast %cst_503 : f32 to vector<8x128xf32>
    %890 = arith.addf %888, %889 : vector<8x128xf32>
    %891 = vector.extract_strided_slice %882 {offsets = [0, 128], sizes = [8, 128], strides = [1, 1]} : vector<8x512xf32> to vector<8x128xf32>
    %cst_504 = arith.constant 5.000000e-01 : f32
    %892 = vector.broadcast %cst_504 : f32 to vector<8x128xf32>
    %893 = arith.mulf %892, %891 : vector<8x128xf32>
    %894 = math.tanh %893 : vector<8x128xf32>
    %cst_505 = arith.constant 5.000000e-01 : f32
    %895 = vector.broadcast %cst_505 : f32 to vector<8x128xf32>
    %896 = arith.mulf %895, %894 : vector<8x128xf32>
    %cst_506 = arith.constant 5.000000e-01 : f32
    %897 = vector.broadcast %cst_506 : f32 to vector<8x128xf32>
    %898 = arith.addf %896, %897 : vector<8x128xf32>
    %899 = vector.extract_strided_slice %882 {offsets = [0, 256], sizes = [8, 128], strides = [1, 1]} : vector<8x512xf32> to vector<8x128xf32>
    %900 = math.tanh %899 : vector<8x128xf32>
    %901 = vector.extract_strided_slice %882 {offsets = [0, 384], sizes = [8, 128], strides = [1, 1]} : vector<8x512xf32> to vector<8x128xf32>
    %cst_507 = arith.constant 5.000000e-01 : f32
    %902 = vector.broadcast %cst_507 : f32 to vector<8x128xf32>
    %903 = arith.mulf %902, %901 : vector<8x128xf32>
    %904 = math.tanh %903 : vector<8x128xf32>
    %cst_508 = arith.constant 5.000000e-01 : f32
    %905 = vector.broadcast %cst_508 : f32 to vector<8x128xf32>
    %906 = arith.mulf %905, %904 : vector<8x128xf32>
    %cst_509 = arith.constant 5.000000e-01 : f32
    %907 = vector.broadcast %cst_509 : f32 to vector<8x128xf32>
    %908 = arith.addf %906, %907 : vector<8x128xf32>
    %909 = arith.mulf %898, %22 : vector<8x128xf32>
    %910 = arith.mulf %890, %900 : vector<8x128xf32>
    %911 = arith.addf %909, %910 : vector<8x128xf32>
    %912 = math.tanh %911 : vector<8x128xf32>
    %913 = arith.mulf %908, %912 : vector<8x128xf32>
    %914 = vector.shape_cast %21 : vector<1x128xi1> to vector<1x128xi1>
    %915 = vector.broadcast %914 : vector<1x128xi1> to vector<8x128xi1>
    %916 = arith.select %915, %913, %880 : vector<8x128xi1>, vector<8x128xf32>
    %c0_510 = arith.constant 0 : index
    %c0_511 = arith.constant 0 : index
    %917 = vector.load %arg10[%c0_510, %c0_511] : memref<128x8xf32, #tpu.memory_space<vmem>>, vector<128x8xf32>
    %cst_512 = arith.constant dense<0.000000e+00> : vector<8x8xf32>
    %918 = tpu.matmul %916, %917, %cst_512 {dimension_numbers = #tpu.dot_dimension_numbers<[1], [0], [0], [1], [0, 0, 1, 1], [], []>} : vector<8x128xf32>, vector<128x8xf32>, vector<8x8xf32> -> vector<8x8xf32>
    %c0_513 = arith.constant 0 : index
    %c0_514 = arith.constant 0 : index
    %919 = vector.load %arg11[%c0_513, %c0_514] : memref<1x8xf32, #tpu.memory_space<vmem>>, vector<1x8xf32>
    %920 = vector.broadcast %919 : vector<1x8xf32> to vector<8x8xf32>
    %921 = arith.addf %918, %920 : vector<8x8xf32>
    %cst_515 = arith.constant 0.000000e+00 : f32
    %922 = vector.broadcast %cst_515 : f32 to vector<8x8xf32>
    %923 = arith.cmpf oge, %921, %922 : vector<8x8xf32>
    %cst_516 = arith.constant 0.00999999977 : f32
    %924 = vector.broadcast %cst_516 : f32 to vector<8x8xf32>
    %925 = arith.mulf %924, %921 : vector<8x8xf32>
    %926 = arith.select %923, %921, %925 : vector<8x8xi1>, vector<8x8xf32>
    %c0_517 = arith.constant 0 : index
    %c0_518 = arith.constant 0 : index
    %927 = vector.load %arg2[%c0_517, %c0_518] : memref<8x768xf32, #tpu.memory_space<vmem>>, vector<8x768xf32>
    %c0_519 = arith.constant 0 : index
    %c0_520 = arith.constant 0 : index
    %928 = vector.load %arg12[%c0_519, %c0_520] : memref<768x8xf32, #tpu.memory_space<vmem>>, vector<768x8xf32>
    %cst_521 = arith.constant dense<0.000000e+00> : vector<8x8xf32>
    %929 = tpu.matmul %927, %928, %cst_521 {dimension_numbers = #tpu.dot_dimension_numbers<[1], [0], [0], [1], [0, 0, 1, 1], [], []>} : vector<8x768xf32>, vector<768x8xf32>, vector<8x8xf32> -> vector<8x8xf32>
    %c0_522 = arith.constant 0 : index
    %c0_523 = arith.constant 0 : index
    %930 = vector.load %arg13[%c0_522, %c0_523] : memref<1x8xf32, #tpu.memory_space<vmem>>, vector<1x8xf32>
    %931 = vector.broadcast %930 : vector<1x8xf32> to vector<8x8xf32>
    %932 = arith.addf %929, %931 : vector<8x8xf32>
    %cst_524 = arith.constant 0.000000e+00 : f32
    %933 = vector.broadcast %cst_524 : f32 to vector<8x8xf32>
    %934 = arith.cmpf oge, %932, %933 : vector<8x8xf32>
    %cst_525 = arith.constant 0.00999999977 : f32
    %935 = vector.broadcast %cst_525 : f32 to vector<8x8xf32>
    %936 = arith.mulf %935, %932 : vector<8x8xf32>
    %937 = arith.select %934, %932, %936 : vector<8x8xi1>, vector<8x8xf32>
    %c0_526 = arith.constant 0 : index
    %c0_527 = arith.constant 0 : index
    %938 = vector.load %arg3[%c0_526, %c0_527] : memref<8x10xf32, #tpu.memory_space<vmem>>, vector<8x10xf32>
    %c0_528 = arith.constant 0 : index
    %c0_529 = arith.constant 0 : index
    %939 = vector.load %arg14[%c0_528, %c0_529] : memref<10x8xf32, #tpu.memory_space<vmem>>, vector<10x8xf32>
    %cst_530 = arith.constant dense<0.000000e+00> : vector<8x8xf32>
    %940 = tpu.matmul %938, %939, %cst_530 {dimension_numbers = #tpu.dot_dimension_numbers<[1], [0], [0], [1], [0, 0, 1, 1], [], []>} : vector<8x10xf32>, vector<10x8xf32>, vector<8x8xf32> -> vector<8x8xf32>
    %c0_531 = arith.constant 0 : index
    %c0_532 = arith.constant 0 : index
    %941 = vector.load %arg15[%c0_531, %c0_532] : memref<1x8xf32, #tpu.memory_space<vmem>>, vector<1x8xf32>
    %942 = vector.broadcast %941 : vector<1x8xf32> to vector<8x8xf32>
    %943 = arith.addf %940, %942 : vector<8x8xf32>
    %cst_533 = arith.constant 0.000000e+00 : f32
    %944 = vector.broadcast %cst_533 : f32 to vector<8x8xf32>
    %945 = arith.cmpf oge, %943, %944 : vector<8x8xf32>
    %cst_534 = arith.constant 0.00999999977 : f32
    %946 = vector.broadcast %cst_534 : f32 to vector<8x8xf32>
    %947 = arith.mulf %946, %943 : vector<8x8xf32>
    %948 = arith.select %945, %943, %947 : vector<8x8xi1>, vector<8x8xf32>
    %c0_535 = arith.constant 0 : index
    %c0_536 = arith.constant 0 : index
    %949 = vector.load %arg16[%c0_535, %c0_536] : memref<8x2xf32, #tpu.memory_space<vmem>>, vector<8x2xf32>
    %cst_537 = arith.constant dense<0.000000e+00> : vector<8x2xf32>
    %950 = tpu.matmul %926, %949, %cst_537 {dimension_numbers = #tpu.dot_dimension_numbers<[1], [0], [0], [1], [0, 0, 1, 1], [], []>} : vector<8x8xf32>, vector<8x2xf32>, vector<8x2xf32> -> vector<8x2xf32>
    %c0_538 = arith.constant 0 : index
    %c0_539 = arith.constant 0 : index
    %951 = vector.load %arg17[%c0_538, %c0_539] : memref<8x2xf32, #tpu.memory_space<vmem>>, vector<8x2xf32>
    %cst_540 = arith.constant dense<0.000000e+00> : vector<8x2xf32>
    %952 = tpu.matmul %937, %951, %cst_540 {dimension_numbers = #tpu.dot_dimension_numbers<[1], [0], [0], [1], [0, 0, 1, 1], [], []>} : vector<8x8xf32>, vector<8x2xf32>, vector<8x2xf32> -> vector<8x2xf32>
    %953 = arith.addf %950, %952 : vector<8x2xf32>
    %c0_541 = arith.constant 0 : index
    %c0_542 = arith.constant 0 : index
    %954 = vector.load %arg18[%c0_541, %c0_542] : memref<8x2xf32, #tpu.memory_space<vmem>>, vector<8x2xf32>
    %cst_543 = arith.constant dense<0.000000e+00> : vector<8x2xf32>
    %955 = tpu.matmul %948, %954, %cst_543 {dimension_numbers = #tpu.dot_dimension_numbers<[1], [0], [0], [1], [0, 0, 1, 1], [], []>} : vector<8x8xf32>, vector<8x2xf32>, vector<8x2xf32> -> vector<8x2xf32>
    %956 = arith.addf %953, %955 : vector<8x2xf32>
    %c0_544 = arith.constant 0 : index
    %c0_545 = arith.constant 0 : index
    %957 = vector.load %arg19[%c0_544, %c0_545] : memref<1x2xf32, #tpu.memory_space<vmem>>, vector<1x2xf32>
    %958 = vector.broadcast %957 : vector<1x2xf32> to vector<8x2xf32>
    %959 = arith.addf %956, %958 : vector<8x2xf32>
    %cst_546 = arith.constant 5.000000e-01 : f32
    %960 = vector.broadcast %cst_546 : f32 to vector<8x2xf32>
    %961 = arith.mulf %960, %959 : vector<8x2xf32>
    %962 = math.tanh %961 : vector<8x2xf32>
    %cst_547 = arith.constant 5.000000e-01 : f32
    %963 = vector.broadcast %cst_547 : f32 to vector<8x2xf32>
    %964 = arith.mulf %963, %962 : vector<8x2xf32>
    %cst_548 = arith.constant 5.000000e-01 : f32
    %965 = vector.broadcast %cst_548 : f32 to vector<8x2xf32>
    %966 = arith.addf %964, %965 : vector<8x2xf32>
    %c0_549 = arith.constant 0 : index
    %c0_550 = arith.constant 0 : index
    %967 = vector.load %arg20[%c0_549, %c0_550] : memref<8x2xf32, #tpu.memory_space<vmem>>, vector<8x2xf32>
    tpu.vector_store %arg20[%c0_549, %c0_550], %966 {strides = array<i32>} : memref<8x2xf32, #tpu.memory_space<vmem>>, vector<8x2xf32>,
    return
  }
  func.func @transform_0(%arg0: i32) -> (i32, i32, i32) {
    %c0_i32 = arith.constant 0 : i32
    %c0_i32_0 = arith.constant 0 : i32
    %c0_i32_1 = arith.constant 0 : i32
    return %c0_i32, %arg0, %c0_i32_0 : i32, i32, i32
  }
  func.func @transform_1(%arg0: i32) -> (i32, i32) {
    %c0_i32 = arith.constant 0 : i32
    %c0_i32_0 = arith.constant 0 : i32
    return %arg0, %c0_i32 : i32, i32
  }
  func.func @transform_2(%arg0: i32) -> (i32, i32) {
    %c0_i32 = arith.constant 0 : i32
    %c0_i32_0 = arith.constant 0 : i32
    return %arg0, %c0_i32 : i32, i32
  }
  func.func @transform_3(%arg0: i32) -> (i32, i32) {
    %c0_i32 = arith.constant 0 : i32
    %c0_i32_0 = arith.constant 0 : i32
    %c0_i32_1 = arith.constant 0 : i32
    return %c0_i32, %c0_i32_0 : i32, i32
  }
  func.func @transform_4(%arg0: i32) -> (i32, i32) {
    %c0_i32 = arith.constant 0 : i32
    %c0_i32_0 = arith.constant 0 : i32
    %c0_i32_1 = arith.constant 0 : i32
    return %c0_i32, %c0_i32_0 : i32, i32
  }
  func.func @transform_5(%arg0: i32) -> (i32, i32) {
    %c0_i32 = arith.constant 0 : i32
    %c0_i32_0 = arith.constant 0 : i32
    %c0_i32_1 = arith.constant 0 : i32
    return %c0_i32, %c0_i32_0 : i32, i32
  }
  func.func @transform_6(%arg0: i32) -> (i32, i32) {
    %c0_i32 = arith.constant 0 : i32
    %c0_i32_0 = arith.constant 0 : i32
    %c0_i32_1 = arith.constant 0 : i32
    return %c0_i32, %c0_i32_0 : i32, i32
  }
  func.func @transform_7(%arg0: i32) -> (i32, i32) {
    %c0_i32 = arith.constant 0 : i32
    %c0_i32_0 = arith.constant 0 : i32
    %c0_i32_1 = arith.constant 0 : i32
    return %c0_i32, %c0_i32_0 : i32, i32
  }
  func.func @transform_8(%arg0: i32) -> (i32, i32) {
    %c0_i32 = arith.constant 0 : i32
    %c0_i32_0 = arith.constant 0 : i32
    %c0_i32_1 = arith.constant 0 : i32
    return %c0_i32, %c0_i32_0 : i32, i32
  }
  func.func @transform_9(%arg0: i32) -> (i32, i32) {
    %c0_i32 = arith.constant 0 : i32
    %c0_i32_0 = arith.constant 0 : i32
    %c0_i32_1 = arith.constant 0 : i32
    return %c0_i32, %c0_i32_0 : i32, i32
  }
  func.func @transform_10(%arg0: i32) -> (i32, i32) {
    %c0_i32 = arith.constant 0 : i32
    %c0_i32_0 = arith.constant 0 : i32
    %c0_i32_1 = arith.constant 0 : i32
    return %c0_i32, %c0_i32_0 : i32, i32
  }
  func.func @transform_11(%arg0: i32) -> (i32, i32) {
    %c0_i32 = arith.constant 0 : i32
    %c0_i32_0 = arith.constant 0 : i32
    %c0_i32_1 = arith.constant 0 : i32
    return %c0_i32, %c0_i32_0 : i32, i32
  }
  func.func @transform_12(%arg0: i32) -> (i32, i32) {
    %c0_i32 = arith.constant 0 : i32
    %c0_i32_0 = arith.constant 0 : i32
    %c0_i32_1 = arith.constant 0 : i32
    return %c0_i32, %c0_i32_0 : i32, i32
  }
  func.func @transform_13(%arg0: i32) -> (i32, i32) {
    %c0_i32 = arith.constant 0 : i32
    %c0_i32_0 = arith.constant 0 : i32
    %c0_i32_1 = arith.constant 0 : i32
    return %c0_i32, %c0_i32_0 : i32, i32
  }
  func.func @transform_14(%arg0: i32) -> (i32, i32) {
    %c0_i32 = arith.constant 0 : i32
    %c0_i32_0 = arith.constant 0 : i32
    %c0_i32_1 = arith.constant 0 : i32
    return %c0_i32, %c0_i32_0 : i32, i32
  }
  func.func @transform_15(%arg0: i32) -> (i32, i32) {
    %c0_i32 = arith.constant 0 : i32
    %c0_i32_0 = arith.constant 0 : i32
    %c0_i32_1 = arith.constant 0 : i32
    return %c0_i32, %c0_i32_0 : i32, i32
  }
  func.func @transform_16(%arg0: i32) -> (i32, i32) {
    %c0_i32 = arith.constant 0 : i32
    %c0_i32_0 = arith.constant 0 : i32
    %c0_i32_1 = arith.constant 0 : i32
    return %c0_i32, %c0_i32_0 : i32, i32
  }
  func.func @transform_17(%arg0: i32) -> (i32, i32) {
    %c0_i32 = arith.constant 0 : i32
    %c0_i32_0 = arith.constant 0 : i32
    %c0_i32_1 = arith.constant 0 : i32
    return %c0_i32, %c0_i32_0 : i32, i32
  }
  func.func @transform_18(%arg0: i32) -> (i32, i32) {
    %c0_i32 = arith.constant 0 : i32
    %c0_i32_0 = arith.constant 0 : i32
    %c0_i32_1 = arith.constant 0 : i32
    return %c0_i32, %c0_i32_0 : i32, i32
  }
  func.func @transform_19(%arg0: i32) -> (i32, i32) {
    %c0_i32 = arith.constant 0 : i32
    %c0_i32_0 = arith.constant 0 : i32
    return %arg0, %c0_i32 : i32, i32
  }
}

</mosaic_0001>

<llo_original>
// kernel: robot_classify_pallas.1
$region0: #{robot_classify_pallas.1}
  #allocation0 [shape = 'u32[]', space=smem, size = 0x4, offset = 0x4, fixed_abs, tag = 'smem constant byte address 0x4 - core index']
  #allocation1 [shape = 'u32[144,128]{1,0:T(1,128)}', space=vmem, size = 0x12000, scoped, tag = 'internal scratch']
  #allocation2 [shape = 'f32[8,8,512]{2,1,0:T(8,128)}', space=vmem, size = 0x20000, scoped, tag = 'scratch operand']
  #allocation3 [shape = 'f32[8,8,512]{2,1,0:T(8,128)}', space=vmem, size = 0x20000, scoped, tag = 'scratch operand']
  #allocation4 [shape = 'f32[8,8,128]{2,1,0:T(8,128)}', space=vmem, size = 0x8000, scoped, tag = 'scratch operand']
  #allocation5 [shape = 'f32[8,8,128]{2,1,0:T(8,128)}', space=vmem, size = 0x8000, scoped, tag = 'scratch operand']
  %s0 = inlined_call_operand.vmem [shape: f32[8,16,768], index: 0, kind: input, shape index: {}]
  %s1 = inlined_call_operand.vmem [shape: f32[16,768], index: 1, kind: input, shape index: {}]
  %s2 = inlined_call_operand.vmem [shape: f32[16,10], index: 2, kind: input, shape index: {}]
  %s3 = inlined_call_operand.vmem [shape: f32[768,512], index: 3, kind: input, shape index: {}]
  %s4 = inlined_call_operand.vmem [shape: f32[128,512], index: 4, kind: input, shape index: {}]
  %s5 = inlined_call_operand.vmem [shape: f32[1,512], index: 5, kind: input, shape index: {}]
  %s6 = inlined_call_operand.vmem [shape: f32[128,512], index: 6, kind: input, shape index: {}]
  %s7 = inlined_call_operand.vmem [shape: f32[128,512], index: 7, kind: input, shape index: {}]
  %s8 = inlined_call_operand.vmem [shape: f32[1,512], index: 8, kind: input, shape index: {}]
  %s9 = inlined_call_operand.vmem [shape: f32[128,8], index: 9, kind: input, shape index: {}]
  %s10 = inlined_call_operand.vmem [shape: f32[1,8], index: 10, kind: input, shape index: {}]
  %s11 = inlined_call_operand.vmem [shape: f32[768,8], index: 11, kind: input, shape index: {}]
  %s12 = inlined_call_operand.vmem [shape: f32[1,8], index: 12, kind: input, shape index: {}]
  %s13 = inlined_call_operand.vmem [shape: f32[10,8], index: 13, kind: input, shape index: {}]
  %s14 = inlined_call_operand.vmem [shape: f32[1,8], index: 14, kind: input, shape index: {}]
  %s15 = inlined_call_operand.vmem [shape: f32[8,2], index: 15, kind: input, shape index: {}]
  %s16 = inlined_call_operand.vmem [shape: f32[8,2], index: 16, kind: input, shape index: {}]
  %s17 = inlined_call_operand.vmem [shape: f32[8,2], index: 17, kind: input, shape index: {}]
  %s18 = inlined_call_operand.vmem [shape: f32[1,2], index: 18, kind: input, shape index: {}]
  %s19 = inlined_call_operand.vmem [shape: f32[16,2], index: 19, kind: output, shape index: {}]
  %s20 = sld [smem:[#allocation0]]
  $region132: #{robot_classify_pallas.1} parent=0
    _
  %s22 = ssub.s32 1, %s20
  %s23 = scalar_select 0, %s22, %s20
  $region1: #{robot_classify_pallas.1} parent=0
    #allocation6 [shape = 'u8[393216]{0}', space=vmem, size = 0x60000, scoped, tag = 'input window, operand 0']
    loop: start=0, step=1, limit=4
    $region2: #{robot_classify_pallas.1} parent=1 // loop_pre_header
      _
    $region3: #{robot_classify_pallas.1} parent=1 // loop_header
      %s25 = sphi 0, %s29
      %p26 = scmp.ge.s32.totalorder %s25, 4
      %s35 = sphi 0, %s37
      %s38 = sphi 0, %s35
      %s39 = sphi 0, %s38
      %s55 = sphi 0, %s39
      %s61 = sphi 0, %s63
      %s64 = sphi 0, %s61
      %s65 = sphi 0, %s64
      %s81 = sphi 0, %s65
      %s87 = sphi 0, %s89
      %s90 = sphi 0, %s87
      %s91 = sphi 0, %s90
      %s107 = sphi 0, %s91
      %s111 = sphi 0, %s111
      %s113 = sphi 0, %s111
      %s114 = sphi 0, %s113
      %s128 = sphi 0, %s114
      %s132 = sphi 0, %s132
      %s134 = sphi 0, %s132
      %s135 = sphi 0, %s134
      %s149 = sphi 0, %s135
      %s153 = sphi 0, %s153
      %s155 = sphi 0, %s153
      %s156 = sphi 0, %s155
      %s170 = sphi 0, %s156
      %s174 = sphi 0, %s174
      %s176 = sphi 0, %s174
      %s177 = sphi 0, %s176
      %s191 = sphi 0, %s177
      %s195 = sphi 0, %s195
      %s197 = sphi 0, %s195
      %s198 = sphi 0, %s197
      %s212 = sphi 0, %s198
      %s216 = sphi 0, %s216
      %s218 = sphi 0, %s216
      %s219 = sphi 0, %s218
      %s233 = sphi 0, %s219
      %s237 = sphi 0, %s237
      %s239 = sphi 0, %s237
      %s240 = sphi 0, %s239
      %s254 = sphi 0, %s240
      %s258 = sphi 0, %s258
      %s260 = sphi 0, %s258
      %s261 = sphi 0, %s260
      %s275 = sphi 0, %s261
      %s279 = sphi 0, %s279
      %s281 = sphi 0, %s279
      %s282 = sphi 0, %s281
      %s296 = sphi 0, %s282
      %s300 = sphi 0, %s300
      %s302 = sphi 0, %s300
      %s303 = sphi 0, %s302
      %s317 = sphi 0, %s303
      %s321 = sphi 0, %s321
      %s323 = sphi 0, %s321
      %s324 = sphi 0, %s323
      %s338 = sphi 0, %s324
      %s342 = sphi 0, %s342
      %s344 = sphi 0, %s342
      %s345 = sphi 0, %s344
      %s359 = sphi 0, %s345
      %s363 = sphi 0, %s363
      %s365 = sphi 0, %s363
      %s366 = sphi 0, %s365
      %s380 = sphi 0, %s366
      %s384 = sphi 0, %s384
      %s386 = sphi 0, %s384
      %s387 = sphi 0, %s386
      %s401 = sphi 0, %s387
      %s405 = sphi 0, %s405
      %s407 = sphi 0, %s405
      %s408 = sphi 0, %s407
      %s422 = sphi 0, %s408
      %s426 = sphi 0, %s426
      %s428 = sphi 0, %s426
      %s429 = sphi 0, %s428
      %s443 = sphi 0, %s429
      %s449 = sphi 0, %s451
      %s452 = sphi 0, %s449
      %s453 = sphi 0, %s452
      %s469 = sphi 0, %s453
    $region4: #{robot_classify_pallas.1} parent=1 // loop_header_branch
      %28 = sbr.rel (%p26) target = $region8
    $region5: #{robot_classify_pallas.1} parent=1 // loop_body
      %s30 = ssub.s32 %s25, 1
      %s31 = ssub.s32 %s25, 2
      %s32 = sadd.s32 %s25, 1
      %s33 = ssub.s32 %s25, %s32
      %p34 = scmp.eq.s32.totalorder %s33, 0
      %s36 = sadd.s32 %s35, 1
      %s37 = scalar_select %p34, %s35, %s36
      %p40 = pneg %p34
      %p41 = scmp.eq.s32.totalorder %s25, 1
      %p42 = por %p40, %p41
      %p43 = scmp.ne.s32.totalorder %s35, %s38
      %p44 = scmp.eq.s32.totalorder %s25, 0
      %p45 = por %p43, %p44
      %p46 = scmp.ne.s32.totalorder %s35, %s38
      %p47 = scmp.eq.s32.totalorder %s30, 1
      %p48 = por %p46, %p47
      %p49 = scmp.ne.s32.totalorder %s38, %s39
      %p50 = scmp.eq.s32.totalorder %s30, 0
      %p51 = por %p49, %p50
      %p52 = scmp.ne.s32.totalorder %s38, %s39
      %p53 = scmp.eq.s32.totalorder %s31, 1
      %p54 = por %p52, %p53
      %p56 = scmp.ne.s32.totalorder %s39, %s55
      %p57 = scmp.eq.s32.totalorder %s31, 0
      %p58 = por %p56, %p57
      %s59 = ssub.s32 %s25, %s32
      %p60 = scmp.eq.s32.totalorder %s59, 0
      %s62 = sadd.s32 %s61, 1
      %s63 = scalar_select %p60, %s61, %s62
      %p66 = pneg %p60
      %p67 = scmp.eq.s32.totalorder %s25, 1
      %p68 = por %p66, %p67
      %p69 = scmp.ne.s32.totalorder %s61, %s64
      %p70 = scmp.eq.s32.totalorder %s25, 0
      %p71 = por %p69, %p70
      %p72 = scmp.ne.s32.totalorder %s61, %s64
      %p73 = scmp.eq.s32.totalorder %s30, 1
      %p74 = por %p72, %p73
      %p75 = scmp.ne.s32.totalorder %s64, %s65
      %p76 = scmp.eq.s32.totalorder %s30, 0
      %p77 = por %p75, %p76
      %p78 = scmp.ne.s32.totalorder %s64, %s65
      %p79 = scmp.eq.s32.totalorder %s31, 1
      %p80 = por %p78, %p79
      %p82 = scmp.ne.s32.totalorder %s65, %s81
      %p83 = scmp.eq.s32.totalorder %s31, 0
      %p84 = por %p82, %p83
      %s85 = ssub.s32 %s25, %s32
      %p86 = scmp.eq.s32.totalorder %s85, 0
      %s88 = sadd.s32 %s87, 1
      %s89 = scalar_select %p86, %s87, %s88
      %p92 = pneg %p86
      %p93 = scmp.eq.s32.totalorder %s25, 1
      %p94 = por %p92, %p93
      %p95 = scmp.ne.s32.totalorder %s87, %s90
      %p96 = scmp.eq.s32.totalorder %s25, 0
      %p97 = por %p95, %p96
      %p98 = scmp.ne.s32.totalorder %s87, %s90
      %p99 = scmp.eq.s32.totalorder %s30, 1
      %p100 = por %p98, %p99
      %p101 = scmp.ne.s32.totalorder %s90, %s91
      %p102 = scmp.eq.s32.totalorder %s30, 0
      %p103 = por %p101, %p102
      %p104 = scmp.ne.s32.totalorder %s90, %s91
      %p105 = scmp.eq.s32.totalorder %s31, 1
      %p106 = por %p104, %p105
      %p108 = scmp.ne.s32.totalorder %s91, %s107
      %p109 = scmp.eq.s32.totalorder %s31, 0
      %p110 = por %p108, %p109
      %s112 = sadd.s32 %s111, 1
      %p115 = scmp.eq.s32.totalorder %s25, 1
      %p116 = scmp.ne.s32.totalorder %s111, %s113
      %p117 = scmp.eq.s32.totalorder %s25, 0
      %p118 = por %p116, %p117
      %p119 = scmp.ne.s32.totalorder %s111, %s113
      %p120 = scmp.eq.s32.totalorder %s30, 1
      %p121 = por %p119, %p120
      %p122 = scmp.ne.s32.totalorder %s113, %s114
      %p123 = scmp.eq.s32.totalorder %s30, 0
      %p124 = por %p122, %p123
      %p125 = scmp.ne.s32.totalorder %s113, %s114
      %p126 = scmp.eq.s32.totalorder %s31, 1
      %p127 = por %p125, %p126
      %p129 = scmp.ne.s32.totalorder %s114, %s128
      %p130 = scmp.eq.s32.totalorder %s31, 0
      %p131 = por %p129, %p130
      %s133 = sadd.s32 %s132, 1
      %p136 = scmp.eq.s32.totalorder %s25, 1
      %p137 = scmp.ne.s32.totalorder %s132, %s134
      %p138 = scmp.eq.s32.totalorder %s25, 0
      %p139 = por %p137, %p138
      %p140 = scmp.ne.s32.totalorder %s132, %s134
      %p141 = scmp.eq.s32.totalorder %s30, 1
      %p142 = por %p140, %p141
      %p143 = scmp.ne.s32.totalorder %s134, %s135
      %p144 = scmp.eq.s32.totalorder %s30, 0
      %p145 = por %p143, %p144
      %p146 = scmp.ne.s32.totalorder %s134, %s135
      %p147 = scmp.eq.s32.totalorder %s31, 1
      %p148 = por %p146, %p147
      %p150 = scmp.ne.s32.totalorder %s135, %s149
      %p151 = scmp.eq.s32.totalorder %s31, 0
      %p152 = por %p150, %p151
      %s154 = sadd.s32 %s153, 1
      %p157 = scmp.eq.s32.totalorder %s25, 1
      %p158 = scmp.ne.s32.totalorder %s153, %s155
      %p159 = scmp.eq.s32.totalorder %s25, 0
      %p160 = por %p158, %p159
      %p161 = scmp.ne.s32.totalorder %s153, %s155
      %p162 = scmp.eq.s32.totalorder %s30, 1
      %p163 = por %p161, %p162
      %p164 = scmp.ne.s32.totalorder %s155, %s156
      %p165 = scmp.eq.s32.totalorder %s30, 0
      %p166 = por %p164, %p165
      %p167 = scmp.ne.s32.totalorder %s155, %s156
      %p168 = scmp.eq.s32.totalorder %s31, 1
      %p169 = por %p167, %p168
      %p171 = scmp.ne.s32.totalorder %s156, %s170
      %p172 = scmp.eq.s32.totalorder %s31, 0
      %p173 = por %p171, %p172
      %s175 = sadd.s32 %s174, 1
      %p178 = scmp.eq.s32.totalorder %s25, 1
      %p179 = scmp.ne.s32.totalorder %s174, %s176
      %p180 = scmp.eq.s32.totalorder %s25, 0
      %p181 = por %p179, %p180
      %p182 = scmp.ne.s32.totalorder %s174, %s176
      %p183 = scmp.eq.s32.totalorder %s30, 1
      %p184 = por %p182, %p183
      %p185 = scmp.ne.s32.totalorder %s176, %s177
      %p186 = scmp.eq.s32.totalorder %s30, 0
      %p187 = por %p185, %p186
      %p188 = scmp.ne.s32.totalorder %s176, %s177
      %p189 = scmp.eq.s32.totalorder %s31, 1
      %p190 = por %p188, %p189
      %p192 = scmp.ne.s32.totalorder %s177, %s191
      %p193 = scmp.eq.s32.totalorder %s31, 0
      %p194 = por %p192, %p193
      %s196 = sadd.s32 %s195, 1
      %p199 = scmp.eq.s32.totalorder %s25, 1
      %p200 = scmp.ne.s32.totalorder %s195, %s197
      %p201 = scmp.eq.s32.totalorder %s25, 0
      %p202 = por %p200, %p201
      %p203 = scmp.ne.s32.totalorder %s195, %s197
      %p204 = scmp.eq.s32.totalorder %s30, 1
      %p205 = por %p203, %p204
      %p206 = scmp.ne.s32.totalorder %s197, %s198
      %p207 = scmp.eq.s32.totalorder %s30, 0
      %p208 = por %p206, %p207
      %p209 = scmp.ne.s32.totalorder %s197, %s198
      %p210 = scmp.eq.s32.totalorder %s31, 1
      %p211 = por %p209, %p210
      %p213 = scmp.ne.s32.totalorder %s198, %s212
      %p214 = scmp.eq.s32.totalorder %s31, 0
      %p215 = por %p213, %p214
      %s217 = sadd.s32 %s216, 1
      %p220 = scmp.eq.s32.totalorder %s25, 1
      %p221 = scmp.ne.s32.totalorder %s216, %s218
      %p222 = scmp.eq.s32.totalorder %s25, 0
      %p223 = por %p221, %p222
      %p224 = scmp.ne.s32.totalorder %s216, %s218
      %p225 = scmp.eq.s32.totalorder %s30, 1
      %p226 = por %p224, %p225
      %p227 = scmp.ne.s32.totalorder %s218, %s219
      %p228 = scmp.eq.s32.totalorder %s30, 0
      %p229 = por %p227, %p228
      %p230 = scmp.ne.s32.totalorder %s218, %s219
      %p231 = scmp.eq.s32.totalorder %s31, 1
      %p232 = por %p230, %p231
      %p234 = scmp.ne.s32.totalorder %s219, %s233
      %p235 = scmp.eq.s32.totalorder %s31, 0
      %p236 = por %p234, %p235
      %s238 = sadd.s32 %s237, 1
      %p241 = scmp.eq.s32.totalorder %s25, 1
      %p242 = scmp.ne.s32.totalorder %s237, %s239
      %p243 = scmp.eq.s32.totalorder %s25, 0
      %p244 = por %p242, %p243
      %p245 = scmp.ne.s32.totalorder %s237, %s239
      %p246 = scmp.eq.s32.totalorder %s30, 1
      %p247 = por %p245, %p246
      %p248 = scmp.ne.s32.totalorder %s239, %s240
      %p249 = scmp.eq.s32.totalorder %s30, 0
      %p250 = por %p248, %p249
      %p251 = scmp.ne.s32.totalorder %s239, %s240
      %p252 = scmp.eq.s32.totalorder %s31, 1
      %p253 = por %p251, %p252
      %p255 = scmp.ne.s32.totalorder %s240, %s254
      %p256 = scmp.eq.s32.totalorder %s31, 0
      %p257 = por %p255, %p256
      %s259 = sadd.s32 %s258, 1
      %p262 = scmp.eq.s32.totalorder %s25, 1
      %p263 = scmp.ne.s32.totalorder %s258, %s260
      %p264 = scmp.eq.s32.totalorder %s25, 0
      %p265 = por %p263, %p264
      %p266 = scmp.ne.s32.totalorder %s258, %s260
      %p267 = scmp.eq.s32.totalorder %s30, 1
      %p268 = por %p266, %p267
      %p269 = scmp.ne.s32.totalorder %s260, %s261
      %p270 = scmp.eq.s32.totalorder %s30, 0
      %p271 = por %p269, %p270
      %p272 = scmp.ne.s32.totalorder %s260, %s261
      %p273 = scmp.eq.s32.totalorder %s31, 1
      %p274 = por %p272, %p273
      %p276 = scmp.ne.s32.totalorder %s261, %s275
      %p277 = scmp.eq.s32.totalorder %s31, 0
      %p278 = por %p276, %p277
      %s280 = sadd.s32 %s279, 1
      %p283 = scmp.eq.s32.totalorder %s25, 1
      %p284 = scmp.ne.s32.totalorder %s279, %s281
      %p285 = scmp.eq.s32.totalorder %s25, 0
      %p286 = por %p284, %p285
      %p287 = scmp.ne.s32.totalorder %s279, %s281
      %p288 = scmp.eq.s32.totalorder %s30, 1
      %p289 = por %p287, %p288
      %p290 = scmp.ne.s32.totalorder %s281, %s282
      %p291 = scmp.eq.s32.totalorder %s30, 0
      %p292 = por %p290, %p291
      %p293 = scmp.ne.s32.totalorder %s281, %s282
      %p294 = scmp.eq.s32.totalorder %s31, 1
      %p295 = por %p293, %p294
      %p297 = scmp.ne.s32.totalorder %s282, %s296
      %p298 = scmp.eq.s32.totalorder %s31, 0
      %p299 = por %p297, %p298
      %s301 = sadd.s32 %s300, 1
      %p304 = scmp.eq.s32.totalorder %s25, 1
      %p305 = scmp.ne.s32.totalorder %s300, %s302
      %p306 = scmp.eq.s32.totalorder %s25, 0
      %p307 = por %p305, %p306
      %p308 = scmp.ne.s32.totalorder %s300, %s302
      %p309 = scmp.eq.s32.totalorder %s30, 1
      %p310 = por %p308, %p309
      %p311 = scmp.ne.s32.totalorder %s302, %s303
      %p312 = scmp.eq.s32.totalorder %s30, 0
      %p313 = por %p311, %p312
      %p314 = scmp.ne.s32.totalorder %s302, %s303
      %p315 = scmp.eq.s32.totalorder %s31, 1
      %p316 = por %p314, %p315
      %p318 = scmp.ne.s32.totalorder %s303, %s317
      %p319 = scmp.eq.s32.totalorder %s31, 0
      %p320 = por %p318, %p319
      %s322 = sadd.s32 %s321, 1
      %p325 = scmp.eq.s32.totalorder %s25, 1
      %p326 = scmp.ne.s32.totalorder %s321, %s323
      %p327 = scmp.eq.s32.totalorder %s25, 0
      %p328 = por %p326, %p327
      %p329 = scmp.ne.s32.totalorder %s321, %s323
      %p330 = scmp.eq.s32.totalorder %s30, 1
      %p331 = por %p329, %p330
      %p332 = scmp.ne.s32.totalorder %s323, %s324
      %p333 = scmp.eq.s32.totalorder %s30, 0
      %p334 = por %p332, %p333
      %p335 = scmp.ne.s32.totalorder %s323, %s324
      %p336 = scmp.eq.s32.totalorder %s31, 1
      %p337 = por %p335, %p336
      %p339 = scmp.ne.s32.totalorder %s324, %s338
      %p340 = scmp.eq.s32.totalorder %s31, 0
      %p341 = por %p339, %p340
      %s343 = sadd.s32 %s342, 1
      %p346 = scmp.eq.s32.totalorder %s25, 1
      %p347 = scmp.ne.s32.totalorder %s342, %s344
      %p348 = scmp.eq.s32.totalorder %s25, 0
      %p349 = por %p347, %p348
      %p350 = scmp.ne.s32.totalorder %s342, %s344
      %p351 = scmp.eq.s32.totalorder %s30, 1
      %p352 = por %p350, %p351
      %p353 = scmp.ne.s32.totalorder %s344, %s345
      %p354 = scmp.eq.s32.totalorder %s30, 0
      %p355 = por %p353, %p354
      %p356 = scmp.ne.s32.totalorder %s344, %s345
      %p357 = scmp.eq.s32.totalorder %s31, 1
      %p358 = por %p356, %p357
      %p360 = scmp.ne.s32.totalorder %s345, %s359
      %p361 = scmp.eq.s32.totalorder %s31, 0
      %p362 = por %p360, %p361
      %s364 = sadd.s32 %s363, 1
      %p367 = scmp.eq.s32.totalorder %s25, 1
      %p368 = scmp.ne.s32.totalorder %s363, %s365
      %p369 = scmp.eq.s32.totalorder %s25, 0
      %p370 = por %p368, %p369
      %p371 = scmp.ne.s32.totalorder %s363, %s365
      %p372 = scmp.eq.s32.totalorder %s30, 1
      %p373 = por %p371, %p372
      %p374 = scmp.ne.s32.totalorder %s365, %s366
      %p375 = scmp.eq.s32.totalorder %s30, 0
      %p376 = por %p374, %p375
      %p377 = scmp.ne.s32.totalorder %s365, %s366
      %p378 = scmp.eq.s32.totalorder %s31, 1
      %p379 = por %p377, %p378
      %p381 = scmp.ne.s32.totalorder %s366, %s380
      %p382 = scmp.eq.s32.totalorder %s31, 0
      %p383 = por %p381, %p382
      %s385 = sadd.s32 %s384, 1
      %p388 = scmp.eq.s32.totalorder %s25, 1
      %p389 = scmp.ne.s32.totalorder %s384, %s386
      %p390 = scmp.eq.s32.totalorder %s25, 0
      %p391 = por %p389, %p390
      %p392 = scmp.ne.s32.totalorder %s384, %s386
      %p393 = scmp.eq.s32.totalorder %s30, 1
      %p394 = por %p392, %p393
      %p395 = scmp.ne.s32.totalorder %s386, %s387
      %p396 = scmp.eq.s32.totalorder %s30, 0
      %p397 = por %p395, %p396
      %p398 = scmp.ne.s32.totalorder %s386, %s387
      %p399 = scmp.eq.s32.totalorder %s31, 1
      %p400 = por %p398, %p399
      %p402 = scmp.ne.s32.totalorder %s387, %s401
      %p403 = scmp.eq.s32.totalorder %s31, 0
      %p404 = por %p402, %p403
      %s406 = sadd.s32 %s405, 1
      %p409 = scmp.eq.s32.totalorder %s25, 1
      %p410 = scmp.ne.s32.totalorder %s405, %s407
      %p411 = scmp.eq.s32.totalorder %s25, 0
      %p412 = por %p410, %p411
      %p413 = scmp.ne.s32.totalorder %s405, %s407
      %p414 = scmp.eq.s32.totalorder %s30, 1
      %p415 = por %p413, %p414
      %p416 = scmp.ne.s32.totalorder %s407, %s408
      %p417 = scmp.eq.s32.totalorder %s30, 0
      %p418 = por %p416, %p417
      %p419 = scmp.ne.s32.totalorder %s407, %s408
      %p420 = scmp.eq.s32.totalorder %s31, 1
      %p421 = por %p419, %p420
      %p423 = scmp.ne.s32.totalorder %s408, %s422
      %p424 = scmp.eq.s32.totalorder %s31, 0
      %p425 = por %p423, %p424
      %s427 = sadd.s32 %s426, 1
      %p430 = scmp.eq.s32.totalorder %s25, 1
      %p431 = scmp.ne.s32.totalorder %s426, %s428
      %p432 = scmp.eq.s32.totalorder %s25, 0
      %p433 = por %p431, %p432
      %p434 = scmp.ne.s32.totalorder %s426, %s428
      %p435 = scmp.eq.s32.totalorder %s30, 1
      %p436 = por %p434, %p435
      %p437 = scmp.ne.s32.totalorder %s428, %s429
      %p438 = scmp.eq.s32.totalorder %s30, 0
      %p439 = por %p437, %p438
      %p440 = scmp.ne.s32.totalorder %s428, %s429
      %p441 = scmp.eq.s32.totalorder %s31, 1
      %p442 = por %p440, %p441
      %p444 = scmp.ne.s32.totalorder %s429, %s443
      %p445 = scmp.eq.s32.totalorder %s31, 0
      %p446 = por %p444, %p445
      %s447 = ssub.s32 %s25, %s32
      %p448 = scmp.eq.s32.totalorder %s447, 0
      %s450 = sadd.s32 %s449, 1
      %s451 = scalar_select %p448, %s449, %s450
      %p454 = pneg %p448
      %p455 = scmp.eq.s32.totalorder %s25, 1
      %p456 = por %p454, %p455
      %p457 = scmp.ne.s32.totalorder %s449, %s452
      %p458 = scmp.eq.s32.totalorder %s25, 0
      %p459 = por %p457, %p458
      %p460 = scmp.ne.s32.totalorder %s449, %s452
      %p461 = scmp.eq.s32.totalorder %s30, 1
      %p462 = por %p460, %p461
      %p463 = scmp.ne.s32.totalorder %s452, %s453
      %p464 = scmp.eq.s32.totalorder %s30, 0
      %p465 = por %p463, %p464
      %p466 = scmp.ne.s32.totalorder %s452, %s453
      %p467 = scmp.eq.s32.totalorder %s31, 1
      %p468 = por %p466, %p467
      %p470 = scmp.ne.s32.totalorder %s453, %s469
      %p471 = scmp.eq.s32.totalorder %s31, 0
      %p472 = por %p470, %p471
      %p473 = scmp.le.s32.totalorder 1, %s25
      %p474 = scmp.lt.s32.totalorder %s25, 3
      %p475 = pnand %p473, %p474
      %p476 = pneg %p475
      // Predicated region
      $region9: #{robot_classify_pallas.1} parent=5 // pred_check
        _
      $region10: #{robot_classify_pallas.1} parent=5 // pred_check_branch
        %478 = sbr.rel (%p475) target = $region12
      $region11: #{robot_classify_pallas.1} parent=5 // pred_region
        %s479 = ssub.s32 %s25, 1
        // Predicated region
        $region13: #{robot_classify_pallas.1} parent=11 // pred_check
          %p480 = pneg %p124
        $region14: #{robot_classify_pallas.1} parent=11 // pred_check_branch
          %482 = sbr.rel (%p480) target = $region16
        $region15: #{robot_classify_pallas.1} parent=11 // pred_region
          _
        $region16: #{robot_classify_pallas.1} parent=11 // pred_fallthru
          _
        // Predicated region
        $region17: #{robot_classify_pallas.1} parent=11 // pred_check
          %p483 = pneg %p145
        $region18: #{robot_classify_pallas.1} parent=11 // pred_check_branch
          %485 = sbr.rel (%p483) target = $region20
        $region19: #{robot_classify_pallas.1} parent=11 // pred_region
          _
        $region20: #{robot_classify_pallas.1} parent=11 // pred_fallthru
          _
        // Predicated region
        $region21: #{robot_classify_pallas.1} parent=11 // pred_check
          %p486 = pneg %p166
        $region22: #{robot_classify_pallas.1} parent=11 // pred_check_branch
          %488 = sbr.rel (%p486) target = $region24
        $region23: #{robot_classify_pallas.1} parent=11 // pred_region
          _
        $region24: #{robot_classify_pallas.1} parent=11 // pred_fallthru
          _
        // Predicated region
        $region25: #{robot_classify_pallas.1} parent=11 // pred_check
          %p489 = pneg %p187
        $region26: #{robot_classify_pallas.1} parent=11 // pred_check_branch
          %491 = sbr.rel (%p489) target = $region28
        $region27: #{robot_classify_pallas.1} parent=11 // pred_region
          _
        $region28: #{robot_classify_pallas.1} parent=11 // pred_fallthru
          _
        // Predicated region
        $region29: #{robot_classify_pallas.1} parent=11 // pred_check
          %p492 = pneg %p208
        $region30: #{robot_classify_pallas.1} parent=11 // pred_check_branch
          %494 = sbr.rel (%p492) target = $region32
        $region31: #{robot_classify_pallas.1} parent=11 // pred_region
          _
        $region32: #{robot_classify_pallas.1} parent=11 // pred_fallthru
          _
        // Predicated region
        $region33: #{robot_classify_pallas.1} parent=11 // pred_check
          %p495 = pneg %p229
        $region34: #{robot_classify_pallas.1} parent=11 // pred_check_branch
          %497 = sbr.rel (%p495) target = $region36
        $region35: #{robot_classify_pallas.1} parent=11 // pred_region
          _
        $region36: #{robot_classify_pallas.1} parent=11 // pred_fallthru
          _
        // Predicated region
        $region37: #{robot_classify_pallas.1} parent=11 // pred_check
          %p498 = pneg %p250
        $region38: #{robot_classify_pallas.1} parent=11 // pred_check_branch
          %500 = sbr.rel (%p498) target = $region40
        $region39: #{robot_classify_pallas.1} parent=11 // pred_region
          _
        $region40: #{robot_classify_pallas.1} parent=11 // pred_fallthru
          _
        // Predicated region
        $region41: #{robot_classify_pallas.1} parent=11 // pred_check
          %p501 = pneg %p271
        $region42: #{robot_classify_pallas.1} parent=11 // pred_check_branch
          %503 = sbr.rel (%p501) target = $region44
        $region43: #{robot_classify_pallas.1} parent=11 // pred_region
          _
        $region44: #{robot_classify_pallas.1} parent=11 // pred_fallthru
          _
        // Predicated region
        $region45: #{robot_classify_pallas.1} parent=11 // pred_check
          %p504 = pneg %p292
        $region46: #{robot_classify_pallas.1} parent=11 // pred_check_branch
          %506 = sbr.rel (%p504) target = $region48
        $region47: #{robot_classify_pallas.1} parent=11 // pred_region
          _
        $region48: #{robot_classify_pallas.1} parent=11 // pred_fallthru
          _
        // Predicated region
        $region49: #{robot_classify_pallas.1} parent=11 // pred_check
          %p507 = pneg %p313
        $region50: #{robot_classify_pallas.1} parent=11 // pred_check_branch
          %509 = sbr.rel (%p507) target = $region52
        $region51: #{robot_classify_pallas.1} parent=11 // pred_region
          _
        $region52: #{robot_classify_pallas.1} parent=11 // pred_fallthru
          _
        // Predicated region
        $region53: #{robot_classify_pallas.1} parent=11 // pred_check
          %p510 = pneg %p334
        $region54: #{robot_classify_pallas.1} parent=11 // pred_check_branch
          %512 = sbr.rel (%p510) target = $region56
        $region55: #{robot_classify_pallas.1} parent=11 // pred_region
          _
        $region56: #{robot_classify_pallas.1} parent=11 // pred_fallthru
          _
        // Predicated region
        $region57: #{robot_classify_pallas.1} parent=11 // pred_check
          %p513 = pneg %p355
        $region58: #{robot_classify_pallas.1} parent=11 // pred_check_branch
          %515 = sbr.rel (%p513) target = $region60
        $region59: #{robot_classify_pallas.1} parent=11 // pred_region
          _
        $region60: #{robot_classify_pallas.1} parent=11 // pred_fallthru
          _
        // Predicated region
        $region61: #{robot_classify_pallas.1} parent=11 // pred_check
          %p516 = pneg %p376
        $region62: #{robot_classify_pallas.1} parent=11 // pred_check_branch
          %518 = sbr.rel (%p516) target = $region64
        $region63: #{robot_classify_pallas.1} parent=11 // pred_region
          _
        $region64: #{robot_classify_pallas.1} parent=11 // pred_fallthru
          _
        // Predicated region
        $region65: #{robot_classify_pallas.1} parent=11 // pred_check
          %p519 = pneg %p397
        $region66: #{robot_classify_pallas.1} parent=11 // pred_check_branch
          %521 = sbr.rel (%p519) target = $region68
        $region67: #{robot_classify_pallas.1} parent=11 // pred_region
          _
        $region68: #{robot_classify_pallas.1} parent=11 // pred_fallthru
          _
        // Predicated region
        $region69: #{robot_classify_pallas.1} parent=11 // pred_check
          %p522 = pneg %p418
        $region70: #{robot_classify_pallas.1} parent=11 // pred_check_branch
          %524 = sbr.rel (%p522) target = $region72
        $region71: #{robot_classify_pallas.1} parent=11 // pred_region
          _
        $region72: #{robot_classify_pallas.1} parent=11 // pred_fallthru
          _
        // Predicated region
        $region73: #{robot_classify_pallas.1} parent=11 // pred_check
          %p525 = pneg %p439
        $region74: #{robot_classify_pallas.1} parent=11 // pred_check_branch
          %527 = sbr.rel (%p525) target = $region76
        $region75: #{robot_classify_pallas.1} parent=11 // pred_region
          _
        $region76: #{robot_classify_pallas.1} parent=11 // pred_fallthru
          _
      $region12: #{robot_classify_pallas.1} parent=5 // pred_fallthru
        _
      %p528 = scmp.lt.s32.totalorder %s25, 2
      // Predicated region
      $region77: #{robot_classify_pallas.1} parent=5 // pred_check
        %p529 = pneg %p528
      $region78: #{robot_classify_pallas.1} parent=5 // pred_check_branch
        %531 = sbr.rel (%p529) target = $region80
      $region79: #{robot_classify_pallas.1} parent=5 // pred_region
        // Predicated region
        $region81: #{robot_classify_pallas.1} parent=79 // pred_check
          %p532 = pneg %p45
        $region82: #{robot_classify_pallas.1} parent=79 // pred_check_branch
          %534 = sbr.rel (%p532) target = $region84
        $region83: #{robot_classify_pallas.1} parent=79 // pred_region
          %s535 = sand.u32 %s35, 1
          %s536 = sand.u32 %s35, 1
          %s537 = smul.addr %s536, 384
          %s538 = scalar_lea.vmem [#allocation6], %s537
          %s539 = smul.addr %s25, 6
          %s540 = smul.addr %s539, 8
          %s541 = scalar_lea.vmem %s0, %s540
          // Predicated region
          $region85: #{robot_classify_pallas.1} parent=83 // pred_check
            _
          $region86: #{robot_classify_pallas.1} parent=83 // pred_check_branch
            %543 = sbr.rel (0) target = $region88
          $region87: #{robot_classify_pallas.1} parent=83 // pred_region
            // Predicated region
            $region89: #{robot_classify_pallas.1} parent=87 // pred_check
              _
            $region90: #{robot_classify_pallas.1} parent=87 // pred_check_branch
              %545 = sbr.rel (0) target = $region92
            $region91: #{robot_classify_pallas.1} parent=87 // pred_region
              loop: start=0, step=1, limit=1
              $region93: #{robot_classify_pallas.1} parent=91 // loop_pre_header
                _
              $region94: #{robot_classify_pallas.1} parent=91 // loop_header
                %s547 = sphi 0, %s551
                %p548 = scmp.ge.s32.totalorder %s547, 1
                %s552 = sphi %s541, %s541
                %s553 = sphi %s538, %s538
              $region95: #{robot_classify_pallas.1} parent=91 // loop_header_branch
                %550 = sbr.rel (%p548) target = $region99
              $region96: #{robot_classify_pallas.1} parent=91 // loop_body
                %v554 = vld [vmem:[%s552] sm:$0xff]
                %555 = vst [vmem:[%s553] sm:$0xff] %v554
                %v556 = vld [vmem:[%s552 + $0x8] sm:$0xff]
                %557 = vst [vmem:[%s553 + $0x8] sm:$0xff] %v556
                %v558 = vld [vmem:[%s552 + $0x10] sm:$0xff]
                %559 = vst [vmem:[%s553 + $0x10] sm:$0xff] %v558
                %v560 = vld [vmem:[%s552 + $0x18] sm:$0xff]
                %561 = vst [vmem:[%s553 + $0x18] sm:$0xff] %v560
                %v562 = vld [vmem:[%s552 + $0x20] sm:$0xff]
                %563 = vst [vmem:[%s553 + $0x20] sm:$0xff] %v562
                %v564 = vld [vmem:[%s552 + $0x28] sm:$0xff]
                %565 = vst [vmem:[%s553 + $0x28] sm:$0xff] %v564
                %v566 = vld [vmem:[%s552 + $0x60] sm:$0xff]
                %567 = vst [vmem:[%s553 + $0x30] sm:$0xff] %v566
                %v568 = vld [vmem:[%s552 + $0x68] sm:$0xff]
                %569 = vst [vmem:[%s553 + $0x38] sm:$0xff] %v568
                %v570 = vld [vmem:[%s552 + $0x70] sm:$0xff]
                %571 = vst [vmem:[%s553 + $0x40] sm:$0xff] %v570
                %v572 = vld [vmem:[%s552 + $0x78] sm:$0xff]
                %573 = vst [vmem:[%s553 + $0x48] sm:$0xff] %v572
                %v574 = vld [vmem:[%s552 + $0x80] sm:$0xff]
                %575 = vst [vmem:[%s553 + $0x50] sm:$0xff] %v574
                %v576 = vld [vmem:[%s552 + $0x88] sm:$0xff]
                %577 = vst [vmem:[%s553 + $0x58] sm:$0xff] %v576
                %v578 = vld [vmem:[%s552 + $0xc0] sm:$0xff]
                %579 = vst [vmem:[%s553 + $0x60] sm:$0xff] %v578
                %v580 = vld [vmem:[%s552 + $0xc8] sm:$0xff]
                %581 = vst [vmem:[%s553 + $0x68] sm:$0xff] %v580
                %v582 = vld [vmem:[%s552 + $0xd0] sm:$0xff]
                %583 = vst [vmem:[%s553 + $0x70] sm:$0xff] %v582
                %v584 = vld [vmem:[%s552 + $0xd8] sm:$0xff]
                %585 = vst [vmem:[%s553 + $0x78] sm:$0xff] %v584
                %v586 = vld [vmem:[%s552 + $0xe0] sm:$0xff]
                %587 = vst [vmem:[%s553 + $0x80] sm:$0xff] %v586
                %v588 = vld [vmem:[%s552 + $0xe8] sm:$0xff]
                %589 = vst [vmem:[%s553 + $0x88] sm:$0xff] %v588
                %v590 = vld [vmem:[%s552 + $0x120] sm:$0xff]
                %591 = vst [vmem:[%s553 + $0x90] sm:$0xff] %v590
                %v592 = vld [vmem:[%s552 + $0x128] sm:$0xff]
                %593 = vst [vmem:[%s553 + $0x98] sm:$0xff] %v592
                %v594 = vld [vmem:[%s552 + $0x130] sm:$0xff]
                %595 = vst [vmem:[%s553 + $0xa0] sm:$0xff] %v594
                %v596 = vld [vmem:[%s552 + $0x138] sm:$0xff]
                %597 = vst [vmem:[%s553 + $0xa8] sm:$0xff] %v596
                %v598 = vld [vmem:[%s552 + $0x140] sm:$0xff]
                %599 = vst [vmem:[%s553 + $0xb0] sm:$0xff] %v598
                %v600 = vld [vmem:[%s552 + $0x148] sm:$0xff]
                %601 = vst [vmem:[%s553 + $0xb8] sm:$0xff] %v600
                %v602 = vld [vmem:[%s552 + $0x180] sm:$0xff]
                %603 = vst [vmem:[%s553 + $0xc0] sm:$0xff] %v602
                %v604 = vld [vmem:[%s552 + $0x188] sm:$0xff]
                %605 = vst [vmem:[%s553 + $0xc8] sm:$0xff] %v604
                %v606 = vld [vmem:[%s552 + $0x190] sm:$0xff]
                %607 = vst [vmem:[%s553 + $0xd0] sm:$0xff] %v606
                %v608 = vld [vmem:[%s552 + $0x198] sm:$0xff]
                %609 = vst [vmem:[%s553 + $0xd8] sm:$0xff] %v608
                %v610 = vld [vmem:[%s552 + $0x1a0] sm:$0xff]
                %611 = vst [vmem:[%s553 + $0xe0] sm:$0xff] %v610
                %v612 = vld [vmem:[%s552 + $0x1a8] sm:$0xff]
                %613 = vst [vmem:[%s553 + $0xe8] sm:$0xff] %v612
                %v614 = vld [vmem:[%s552 + $0x1e0] sm:$0xff]
                %615 = vst [vmem:[%s553 + $0xf0] sm:$0xff] %v614
                %v616 = vld [vmem:[%s552 + $0x1e8] sm:$0xff]
                %617 = vst [vmem:[%s553 + $0xf8] sm:$0xff] %v616
                %v618 = vld [vmem:[%s552 + $0x1f0] sm:$0xff]
                %619 = vst [vmem:[%s553 + $0x100] sm:$0xff] %v618
                %v620 = vld [vmem:[%s552 + $0x1f8] sm:$0xff]
                %621 = vst [vmem:[%s553 + $0x108] sm:$0xff] %v620
                %v622 = vld [vmem:[%s552 + $0x200] sm:$0xff]
                %623 = vst [vmem:[%s553 + $0x110] sm:$0xff] %v622
                %v624 = vld [vmem:[%s552 + $0x208] sm:$0xff]
                %625 = vst [vmem:[%s553 + $0x118] sm:$0xff] %v624
                %v626 = vld [vmem:[%s552 + $0x240] sm:$0xff]
                %627 = vst [vmem:[%s553 + $0x120] sm:$0xff] %v626
                %v628 = vld [vmem:[%s552 + $0x248] sm:$0xff]
                %629 = vst [vmem:[%s553 + $0x128] sm:$0xff] %v628
                %v630 = vld [vmem:[%s552 + $0x250] sm:$0xff]
                %631 = vst [vmem:[%s553 + $0x130] sm:$0xff] %v630
                %v632 = vld [vmem:[%s552 + $0x258] sm:$0xff]
                %633 = vst [vmem:[%s553 + $0x138] sm:$0xff] %v632
                %v634 = vld [vmem:[%s552 + $0x260] sm:$0xff]
                %635 = vst [vmem:[%s553 + $0x140] sm:$0xff] %v634
                %v636 = vld [vmem:[%s552 + $0x268] sm:$0xff]
                %637 = vst [vmem:[%s553 + $0x148] sm:$0xff] %v636
                %v638 = vld [vmem:[%s552 + $0x2a0] sm:$0xff]
                %639 = vst [vmem:[%s553 + $0x150] sm:$0xff] %v638
                %v640 = vld [vmem:[%s552 + $0x2a8] sm:$0xff]
                %641 = vst [vmem:[%s553 + $0x158] sm:$0xff] %v640
                %v642 = vld [vmem:[%s552 + $0x2b0] sm:$0xff]
                %643 = vst [vmem:[%s553 + $0x160] sm:$0xff] %v642
                %v644 = vld [vmem:[%s552 + $0x2b8] sm:$0xff]
                %645 = vst [vmem:[%s553 + $0x168] sm:$0xff] %v644
                %v646 = vld [vmem:[%s552 + $0x2c0] sm:$0xff]
                %647 = vst [vmem:[%s553 + $0x170] sm:$0xff] %v646
                %v648 = vld [vmem:[%s552 + $0x2c8] sm:$0xff]
                %649 = vst [vmem:[%s553 + $0x178] sm:$0xff] %v648
              $region97: #{robot_classify_pallas.1} parent=91 // loop_footer
                %s551 = sadd.s32 1, %s547
              $region98: #{robot_classify_pallas.1} parent=91 // loop_footer_branch
                %546 = sbr.rel target = $region94
              $region99: #{robot_classify_pallas.1} parent=91 // loop_exit
                _
            $region92: #{robot_classify_pallas.1} parent=87 // pred_fallthru
              _
            // Predicated region
            $region100: #{robot_classify_pallas.1} parent=87 // pred_check
              _
            $region101: #{robot_classify_pallas.1} parent=87 // pred_check_branch
              %651 = sbr.rel target = $region103
            $region102: #{robot_classify_pallas.1} parent=87 // pred_region
              _
            $region103: #{robot_classify_pallas.1} parent=87 // pred_fallthru
              _
          $region88: #{robot_classify_pallas.1} parent=83 // pred_fallthru
            _
          %652 = vnop
        $region84: #{robot_classify_pallas.1} parent=79 // pred_fallthru
          _
        // Predicated region
        $region104: #{robot_classify_pallas.1} parent=79 // pred_check
          %p653 = pneg %p71
        $region105: #{robot_classify_pallas.1} parent=79 // pred_check_branch
          %655 = sbr.rel (%p653) target = $region107
        $region106: #{robot_classify_pallas.1} parent=79 // pred_region
          %p656 = scmp.lt.s32.totalorder %s25, 1
          %s657 = scalar_select %p656, %s25, 1
          %s658 = smul.addr %s657, 6
          %s659 = smul.addr %s658, 8
          %s660 = scalar_lea.vmem %s1, %s659
        $region107: #{robot_classify_pallas.1} parent=79 // pred_fallthru
          _
        // Predicated region
        $region108: #{robot_classify_pallas.1} parent=79 // pred_check
          %p661 = pneg %p97
        $region109: #{robot_classify_pallas.1} parent=79 // pred_check_branch
          %663 = sbr.rel (%p661) target = $region111
        $region110: #{robot_classify_pallas.1} parent=79 // pred_region
          %p664 = scmp.lt.s32.totalorder %s25, 1
          %s665 = scalar_select %p664, %s25, 1
          %s666 = smul.addr %s665, 8
          %s667 = scalar_lea.vmem %s2, %s666
        $region111: #{robot_classify_pallas.1} parent=79 // pred_fallthru
          _
      $region80: #{robot_classify_pallas.1} parent=5 // pred_fallthru
        _
      %p668 = scmp.le.s32.totalorder 1, %s25
      %p669 = scmp.lt.s32.totalorder %s25, 3
      %p670 = pnand %p668, %p669
      %p671 = pneg %p670
      // Predicated region
      $region112: #{robot_classify_pallas.1} parent=5 // pred_check
        _
      $region113: #{robot_classify_pallas.1} parent=5 // pred_check_branch
        %673 = sbr.rel (%p670) target = $region115
      $region114: #{robot_classify_pallas.1} parent=5 // pred_region
        %s674 = ssub.s32 %s25, 1
        %s675 = sand.u32 %s38, 1
        %s676 = sand.u32 %s38, 1
        %s677 = smul.addr %s676, 384
        %s678 = scalar_lea.vmem [#allocation6], %s677
        // Predicated region
        $region116: #{robot_classify_pallas.1} parent=114 // pred_check
          %p679 = pneg %p51
        $region117: #{robot_classify_pallas.1} parent=114 // pred_check_branch
          %681 = sbr.rel (%p679) target = $region119
        $region118: #{robot_classify_pallas.1} parent=114 // pred_region
          _
        $region119: #{robot_classify_pallas.1} parent=114 // pred_fallthru
          _
        %s682 = sand.u32 %s38, 1
        %s683 = sand.u32 %s38, 1
        %s684 = smul.addr %s683, 384
        %s685 = scalar_lea.vmem [#allocation6], %s684
        %p686 = pneg %p51
        %p687 = pneg %p48
        %p688 = scmp.lt.s32.totalorder %s30, 1
        %s689 = scalar_select %p688, %s30, 1
        %s690 = smul.addr %s689, 6
        %s691 = smul.addr %s690, 8
        %s692 = scalar_lea.vmem %s1, %s691
        %p693 = pneg %p77
        %p694 = pneg %p74
        %p695 = scmp.lt.s32.totalorder %s30, 1
        %s696 = scalar_select %p695, %s30, 1
        %s697 = smul.addr %s696, 8
        %s698 = scalar_lea.vmem %s2, %s697
        %p699 = pneg %p103
        %p700 = pneg %p100
        %p701 = pneg %p124
        %p702 = pneg %p121
        %p703 = pneg %p145
        %p704 = pneg %p142
        %p705 = pneg %p166
        %p706 = pneg %p163
        %p707 = pneg %p187
        %p708 = pneg %p184
        %p709 = pneg %p208
        %p710 = pneg %p205
        %p711 = pneg %p229
        %p712 = pneg %p226
        %p713 = pneg %p250
        %p714 = pneg %p247
        %p715 = pneg %p271
        %p716 = pneg %p268
        %p717 = pneg %p292
        %p718 = pneg %p289
        %p719 = pneg %p313
        %p720 = pneg %p310
        %p721 = pneg %p334
        %p722 = pneg %p331
        %p723 = pneg %p355
        %p724 = pneg %p352
        %p725 = pneg %p376
        %p726 = pneg %p373
        %p727 = pneg %p397
        %p728 = pneg %p394
        %p729 = pneg %p418
        %p730 = pneg %p415
        %p731 = pneg %p439
        %p732 = pneg %p436
        %p733 = pneg %p465
        %p734 = pneg %p462
        %p735 = scmp.lt.s32.totalorder %s30, 1
        %s736 = scalar_select %p735, %s30, 1
        %s737 = smul.addr %s736, 8
        %s738 = scalar_lea.vmem %s19, %s737
        %p739 = scmp.lt.s32.totalorder %s30, 1
        %s740 = scalar_select %p739, %s30, 1
        %s741 = smul.addr %s740, 6
        %s742 = smul.addr %s741, 8
        %s743 = scalar_lea.vmem %s1, %s742
        %p744 = scmp.lt.s32.totalorder %s30, 1
        %s745 = scalar_select %p744, %s30, 1
        %s746 = smul.addr %s745, 8
        %s747 = scalar_lea.vmem %s2, %s746
        %p748 = scmp.lt.s32.totalorder %s30, 1
        %s749 = scalar_select %p748, %s30, 1
        %s750 = smul.addr %s749, 8
        %s751 = scalar_lea.vmem %s19, %s750
        %v752 = vlaneseq
        %v753 = vand.u32 %v752, 127
        %v754 = vadd.s32 %v753, 128
        %v755 = vadd.s32 %v753, 256
        %v756 = vadd.s32 %v753, 384
        %vm757 = vcmp.lt.s32.totalorder %v753, 0
        %v758 = vsub.s32 0, %v753
        %v759 = vsel %vm757, %v758, %v753
        %v760 = vshrl.u32 %v759, 7
        %v761 = vand.u32 %v759, 127
        %v762 = vsub.s32 0, %v761
        %v763 = vsel %vm757, %v762, %v761
        %vm764 = vcmp.lt.s32.totalorder %v754, 0
        %v765 = vsub.s32 0, %v754
        %v766 = vsel %vm764, %v765, %v754
        %v767 = vshrl.u32 %v766, 7
        %v768 = vand.u32 %v766, 127
        %v769 = vsub.s32 0, %v768
        %v770 = vsel %vm764, %v769, %v768
        %vm771 = vcmp.lt.s32.totalorder %v755, 0
        %v772 = vsub.s32 0, %v755
        %v773 = vsel %vm771, %v772, %v755
        %v774 = vshrl.u32 %v773, 7
        %v775 = vand.u32 %v773, 127
        %v776 = vsub.s32 0, %v775
        %v777 = vsel %vm771, %v776, %v775
        %vm778 = vcmp.lt.s32.totalorder %v756, 0
        %v779 = vsub.s32 0, %v756
        %v780 = vsel %vm778, %v779, %v756
        %v781 = vshrl.u32 %v780, 7
        %v782 = vand.u32 %v780, 127
        %v783 = vsub.s32 0, %v782
        %v784 = vsel %vm778, %v783, %v782
        %vm785 = vcmp.ne.s32.totalorder %v763, 0
        %vm786 = vcmp.ne.s32.totalorder %v770, 0
        %vm787 = vcmp.ne.s32.totalorder %v777, 0
        %vm788 = vcmp.ne.s32.totalorder %v784, 0
        %vm789 = vcmp.lt.s32.totalorder %v763, 0
        %vm790 = vcmp.lt.s32.totalorder %v770, 0
        %vm791 = vcmp.lt.s32.totalorder %v777, 0
        %vm792 = vcmp.lt.s32.totalorder %v784, 0
        %vm793 = vmand %vm789, %vm785
        %vm794 = vmand %vm790, %vm786
        %vm795 = vmand %vm791, %vm787
        %vm796 = vmand %vm792, %vm788
        %v797 = vadd.s32 %v763, 128
        %v798 = vadd.s32 %v770, 128
        %v799 = vadd.s32 %v777, 128
        %v800 = vadd.s32 %v784, 128
        %v801 = vsel %vm793, %v797, %v763
        %v802 = vsel %vm794, %v798, %v770
        %v803 = vsel %vm795, %v799, %v777
        %v804 = vsel %vm796, %v800, %v784
        %vm805 = vcmp.lt.s32.totalorder %v801, 64
        %vm806 = vcmp.lt.s32.totalorder %v802, 64
        %vm807 = vcmp.lt.s32.totalorder %v803, 64
        %vm808 = vcmp.lt.s32.totalorder %v804, 64
        %vm809 = vcmp.lt.s32.totalorder %v753, 64
        %v810 = vld [vmem:[%s678] sm:$0xff]
        %v811 = vld [vmem:[%s678 + $0x8] sm:$0xff]
        %v812 = vld [vmem:[%s678 + $0x10] sm:$0xff]
        %v813 = vld [vmem:[%s678 + $0x18] sm:$0xff]
        %v814 = vld [vmem:[%s678 + $0x20] sm:$0xff]
        %v815 = vld [vmem:[%s678 + $0x28] sm:$0xff]
        %v816 = vld [vmem:[%s678 + $0x30] sm:$0xff]
        %v817 = vld [vmem:[%s678 + $0x38] sm:$0xff]
        %v818 = vld [vmem:[%s678 + $0x40] sm:$0xff]
        %v819 = vld [vmem:[%s678 + $0x48] sm:$0xff]
        %v820 = vld [vmem:[%s678 + $0x50] sm:$0xff]
        %v821 = vld [vmem:[%s678 + $0x58] sm:$0xff]
        %v822 = vld [vmem:[%s678 + $0x60] sm:$0xff]
        %v823 = vld [vmem:[%s678 + $0x68] sm:$0xff]
        %v824 = vld [vmem:[%s678 + $0x70] sm:$0xff]
        %v825 = vld [vmem:[%s678 + $0x78] sm:$0xff]
        %v826 = vld [vmem:[%s678 + $0x80] sm:$0xff]
        %v827 = vld [vmem:[%s678 + $0x88] sm:$0xff]
        %v828 = vld [vmem:[%s678 + $0x90] sm:$0xff]
        %v829 = vld [vmem:[%s678 + $0x98] sm:$0xff]
        %v830 = vld [vmem:[%s678 + $0xa0] sm:$0xff]
        %v831 = vld [vmem:[%s678 + $0xa8] sm:$0xff]
        %v832 = vld [vmem:[%s678 + $0xb0] sm:$0xff]
        %v833 = vld [vmem:[%s678 + $0xb8] sm:$0xff]
        %v834 = vld [vmem:[%s678 + $0xc0] sm:$0xff]
        %v835 = vld [vmem:[%s678 + $0xc8] sm:$0xff]
        %v836 = vld [vmem:[%s678 + $0xd0] sm:$0xff]
        %v837 = vld [vmem:[%s678 + $0xd8] sm:$0xff]
        %v838 = vld [vmem:[%s678 + $0xe0] sm:$0xff]
        %v839 = vld [vmem:[%s678 + $0xe8] sm:$0xff]
        %v840 = vld [vmem:[%s678 + $0xf0] sm:$0xff]
        %v841 = vld [vmem:[%s678 + $0xf8] sm:$0xff]
        %v842 = vld [vmem:[%s678 + $0x100] sm:$0xff]
        %v843 = vld [vmem:[%s678 + $0x108] sm:$0xff]
        %v844 = vld [vmem:[%s678 + $0x110] sm:$0xff]
        %v845 = vld [vmem:[%s678 + $0x118] sm:$0xff]
        %v846 = vld [vmem:[%s678 + $0x120] sm:$0xff]
        %v847 = vld [vmem:[%s678 + $0x128] sm:$0xff]
        %v848 = vld [vmem:[%s678 + $0x130] sm:$0xff]
        %v849 = vld [vmem:[%s678 + $0x138] sm:$0xff]
        %v850 = vld [vmem:[%s678 + $0x140] sm:$0xff]
        %v851 = vld [vmem:[%s678 + $0x148] sm:$0xff]
        %v852 = vld [vmem:[%s678 + $0x150] sm:$0xff]
        %v853 = vld [vmem:[%s678 + $0x158] sm:$0xff]
        %v854 = vld [vmem:[%s678 + $0x160] sm:$0xff]
        %v855 = vld [vmem:[%s678 + $0x168] sm:$0xff]
        %v856 = vld [vmem:[%s678 + $0x170] sm:$0xff]
        %v857 = vld [vmem:[%s678 + $0x178] sm:$0xff]
        %v858 = vld [vmem:[%s3] sm:$0xff]
        %v859 = vld [vmem:[%s3 + $0x8] sm:$0xff]
        %v860 = vld [vmem:[%s3 + $0x10] sm:$0xff]
        %v861 = vld [vmem:[%s3 + $0x18] sm:$0xff]
        %v862 = vld [vmem:[%s3 + $0x20] sm:$0xff]
        %v863 = vld [vmem:[%s3 + $0x28] sm:$0xff]
        %v864 = vld [vmem:[%s3 + $0x30] sm:$0xff]
        %v865 = vld [vmem:[%s3 + $0x38] sm:$0xff]
        %v866 = vld [vmem:[%s3 + $0x40] sm:$0xff]
        %v867 = vld [vmem:[%s3 + $0x48] sm:$0xff]
        %v868 = vld [vmem:[%s3 + $0x50] sm:$0xff]
        %v869 = vld [vmem:[%s3 + $0x58] sm:$0xff]
        %v870 = vld [vmem:[%s3 + $0x60] sm:$0xff]
        %v871 = vld [vmem:[%s3 + $0x68] sm:$0xff]
        %v872 = vld [vmem:[%s3 + $0x70] sm:$0xff]
        %v873 = vld [vmem:[%s3 + $0x78] sm:$0xff]
        %v874 = vld [vmem:[%s3 + $0x80] sm:$0xff]
        %v875 = vld [vmem:[%s3 + $0x88] sm:$0xff]
        %v876 = vld [vmem:[%s3 + $0x90] sm:$0xff]
        %v877 = vld [vmem:[%s3 + $0x98] sm:$0xff]
        %v878 = vld [vmem:[%s3 + $0xa0] sm:$0xff]
        %v879 = vld [vmem:[%s3 + $0xa8] sm:$0xff]
        %v880 = vld [vmem:[%s3 + $0xb0] sm:$0xff]
        %v881 = vld [vmem:[%s3 + $0xb8] sm:$0xff]
        %v882 = vld [vmem:[%s3 + $0xc0] sm:$0xff]
        %v883 = vld [vmem:[%s3 + $0xc8] sm:$0xff]
        %v884 = vld [vmem:[%s3 + $0xd0] sm:$0xff]
        %v885 = vld [vmem:[%s3 + $0xd8] sm:$0xff]
        %v886 = vld [vmem:[%s3 + $0xe0] sm:$0xff]
        %v887 = vld [vmem:[%s3 + $0xe8] sm:$0xff]
        %v888 = vld [vmem:[%s3 + $0xf0] sm:$0xff]
        %v889 = vld [vmem:[%s3 + $0xf8] sm:$0xff]
        %v890 = vld [vmem:[%s3 + $0x100] sm:$0xff]
        %v891 = vld [vmem:[%s3 + $0x108] sm:$0xff]
        %v892 = vld [vmem:[%s3 + $0x110] sm:$0xff]
        %v893 = vld [vmem:[%s3 + $0x118] sm:$0xff]
        %v894 = vld [vmem:[%s3 + $0x120] sm:$0xff]
        %v895 = vld [vmem:[%s3 + $0x128] sm:$0xff]
        %v896 = vld [vmem:[%s3 + $0x130] sm:$0xff]
        %v897 = vld [vmem:[%s3 + $0x138] sm:$0xff]
        %v898 = vld [vmem:[%s3 + $0x140] sm:$0xff]
        %v899 = vld [vmem:[%s3 + $0x148] sm:$0xff]
        %v900 = vld [vmem:[%s3 + $0x150] sm:$0xff]
        %v901 = vld [vmem:[%s3 + $0x158] sm:$0xff]
        %v902 = vld [vmem:[%s3 + $0x160] sm:$0xff]
        %v903 = vld [vmem:[%s3 + $0x168] sm:$0xff]
        %v904 = vld [vmem:[%s3 + $0x170] sm:$0xff]
        %v905 = vld [vmem:[%s3 + $0x178] sm:$0xff]
        %v906 = vld [vmem:[%s3 + $0x180] sm:$0xff]
        %v907 = vld [vmem:[%s3 + $0x188] sm:$0xff]
        %v908 = vld [vmem:[%s3 + $0x190] sm:$0xff]
        %v909 = vld [vmem:[%s3 + $0x198] sm:$0xff]
        %v910 = vld [vmem:[%s3 + $0x1a0] sm:$0xff]
        %v911 = vld [vmem:[%s3 + $0x1a8] sm:$0xff]
        %v912 = vld [vmem:[%s3 + $0x1b0] sm:$0xff]
        %v913 = vld [vmem:[%s3 + $0x1b8] sm:$0xff]
        %v914 = vld [vmem:[%s3 + $0x1c0] sm:$0xff]
        %v915 = vld [vmem:[%s3 + $0x1c8] sm:$0xff]
        %v916 = vld [vmem:[%s3 + $0x1d0] sm:$0xff]
        %v917 = vld [vmem:[%s3 + $0x1d8] sm:$0xff]
        %v918 = vld [vmem:[%s3 + $0x1e0] sm:$0xff]
        %v919 = vld [vmem:[%s3 + $0x1e8] sm:$0xff]
        %v920 = vld [vmem:[%s3 + $0x1f0] sm:$0xff]
        %v921 = vld [vmem:[%s3 + $0x1f8] sm:$0xff]
        %v922 = vld [vmem:[%s3 + $0x200] sm:$0xff]
        %v923 = vld [vmem:[%s3 + $0x208] sm:$0xff]
        %v924 = vld [vmem:[%s3 + $0x210] sm:$0xff]
        %v925 = vld [vmem:[%s3 + $0x218] sm:$0xff]
        %v926 = vld [vmem:[%s3 + $0x220] sm:$0xff]
        %v927 = vld [vmem:[%s3 + $0x228] sm:$0xff]
        %v928 = vld [vmem:[%s3 + $0x230] sm:$0xff]
        %v929 = vld [vmem:[%s3 + $0x238] sm:$0xff]
        %v930 = vld [vmem:[%s3 + $0x240] sm:$0xff]
        %v931 = vld [vmem:[%s3 + $0x248] sm:$0xff]
        %v932 = vld [vmem:[%s3 + $0x250] sm:$0xff]
        %v933 = vld [vmem:[%s3 + $0x258] sm:$0xff]
        %v934 = vld [vmem:[%s3 + $0x260] sm:$0xff]
        %v935 = vld [vmem:[%s3 + $0x268] sm:$0xff]
        %v936 = vld [vmem:[%s3 + $0x270] sm:$0xff]
        %v937 = vld [vmem:[%s3 + $0x278] sm:$0xff]
        %v938 = vld [vmem:[%s3 + $0x280] sm:$0xff]
        %v939 = vld [vmem:[%s3 + $0x288] sm:$0xff]
        %v940 = vld [vmem:[%s3 + $0x290] sm:$0xff]
        %v941 = vld [vmem:[%s3 + $0x298] sm:$0xff]
        %v942 = vld [vmem:[%s3 + $0x2a0] sm:$0xff]
        %v943 = vld [vmem:[%s3 + $0x2a8] sm:$0xff]
        %v944 = vld [vmem:[%s3 + $0x2b0] sm:$0xff]
        %v945 = vld [vmem:[%s3 + $0x2b8] sm:$0xff]
        %v946 = vld [vmem:[%s3 + $0x2c0] sm:$0xff]
        %v947 = vld [vmem:[%s3 + $0x2c8] sm:$0xff]
        %v948 = vld [vmem:[%s3 + $0x2d0] sm:$0xff]
        %v949 = vld [vmem:[%s3 + $0x2d8] sm:$0xff]
        %v950 = vld [vmem:[%s3 + $0x2e0] sm:$0xff]
        %v951 = vld [vmem:[%s3 + $0x2e8] sm:$0xff]
        %v952 = vld [vmem:[%s3 + $0x2f0] sm:$0xff]
        %v953 = vld [vmem:[%s3 + $0x2f8] sm:$0xff]
        %v954 = vld [vmem:[%s3 + $0x300] sm:$0xff]
        %v955 = vld [vmem:[%s3 + $0x308] sm:$0xff]
        %v956 = vld [vmem:[%s3 + $0x310] sm:$0xff]
        %v957 = vld [vmem:[%s3 + $0x318] sm:$0xff]
        %v958 = vld [vmem:[%s3 + $0x320] sm:$0xff]
        %v959 = vld [vmem:[%s3 + $0x328] sm:$0xff]
        %v960 = vld [vmem:[%s3 + $0x330] sm:$0xff]
        %v961 = vld [vmem:[%s3 + $0x338] sm:$0xff]
        %v962 = vld [vmem:[%s3 + $0x340] sm:$0xff]
        %v963 = vld [vmem:[%s3 + $0x348] sm:$0xff]
        %v964 = vld [vmem:[%s3 + $0x350] sm:$0xff]
        %v965 = vld [vmem:[%s3 + $0x358] sm:$0xff]
        %v966 = vld [vmem:[%s3 + $0x360] sm:$0xff]
        %v967 = vld [vmem:[%s3 + $0x368] sm:$0xff]
        %v968 = vld [vmem:[%s3 + $0x370] sm:$0xff]
        %v969 = vld [vmem:[%s3 + $0x378] sm:$0xff]
        %v970 = vld [vmem:[%s3 + $0x380] sm:$0xff]
        %v971 = vld [vmem:[%s3 + $0x388] sm:$0xff]
        %v972 = vld [vmem:[%s3 + $0x390] sm:$0xff]
        %v973 = vld [vmem:[%s3 + $0x398] sm:$0xff]
        %v974 = vld [vmem:[%s3 + $0x3a0] sm:$0xff]
        %v975 = vld [vmem:[%s3 + $0x3a8] sm:$0xff]
        %v976 = vld [vmem:[%s3 + $0x3b0] sm:$0xff]
        %v977 = vld [vmem:[%s3 + $0x3b8] sm:$0xff]
        %v978 = vld [vmem:[%s3 + $0x3c0] sm:$0xff]
        %v979 = vld [vmem:[%s3 + $0x3c8] sm:$0xff]
        %v980 = vld [vmem:[%s3 + $0x3d0] sm:$0xff]
        %v981 = vld [vmem:[%s3 + $0x3d8] sm:$0xff]
        %v982 = vld [vmem:[%s3 + $0x3e0] sm:$0xff]
        %v983 = vld [vmem:[%s3 + $0x3e8] sm:$0xff]
        %v984 = vld [vmem:[%s3 + $0x3f0] sm:$0xff]
        %v985 = vld [vmem:[%s3 + $0x3f8] sm:$0xff]
        %v986 = vld [vmem:[%s3 + $0x400] sm:$0xff]
        %v987 = vld [vmem:[%s3 + $0x408] sm:$0xff]
        %v988 = vld [vmem:[%s3 + $0x410] sm:$0xff]
        %v989 = vld [vmem:[%s3 + $0x418] sm:$0xff]
        %v990 = vld [vmem:[%s3 + $0x420] sm:$0xff]
        %v991 = vld [vmem:[%s3 + $0x428] sm:$0xff]
        %v992 = vld [vmem:[%s3 + $0x430] sm:$0xff]
        %v993 = vld [vmem:[%s3 + $0x438] sm:$0xff]
        %v994 = vld [vmem:[%s3 + $0x440] sm:$0xff]
        %v995 = vld [vmem:[%s3 + $0x448] sm:$0xff]
        %v996 = vld [vmem:[%s3 + $0x450] sm:$0xff]
        %v997 = vld [vmem:[%s3 + $0x458] sm:$0xff]
        %v998 = vld [vmem:[%s3 + $0x460] sm:$0xff]
        %v999 = vld [vmem:[%s3 + $0x468] sm:$0xff]
        %v1000 = vld [vmem:[%s3 + $0x470] sm:$0xff]
        %v1001 = vld [vmem:[%s3 + $0x478] sm:$0xff]
        %v1002 = vld [vmem:[%s3 + $0x480] sm:$0xff]
        %v1003 = vld [vmem:[%s3 + $0x488] sm:$0xff]
        %v1004 = vld [vmem:[%s3 + $0x490] sm:$0xff]
        %v1005 = vld [vmem:[%s3 + $0x498] sm:$0xff]
        %v1006 = vld [vmem:[%s3 + $0x4a0] sm:$0xff]
        %v1007 = vld [vmem:[%s3 + $0x4a8] sm:$0xff]
        %v1008 = vld [vmem:[%s3 + $0x4b0] sm:$0xff]
        %v1009 = vld [vmem:[%s3 + $0x4b8] sm:$0xff]
        %v1010 = vld [vmem:[%s3 + $0x4c0] sm:$0xff]
        %v1011 = vld [vmem:[%s3 + $0x4c8] sm:$0xff]
        %v1012 = vld [vmem:[%s3 + $0x4d0] sm:$0xff]
        %v1013 = vld [vmem:[%s3 + $0x4d8] sm:$0xff]
        %v1014 = vld [vmem:[%s3 + $0x4e0] sm:$0xff]
        %v1015 = vld [vmem:[%s3 + $0x4e8] sm:$0xff]
        %v1016 = vld [vmem:[%s3 + $0x4f0] sm:$0xff]
        %v1017 = vld [vmem:[%s3 + $0x4f8] sm:$0xff]
        %v1018 = vld [vmem:[%s3 + $0x500] sm:$0xff]
        %v1019 = vld [vmem:[%s3 + $0x508] sm:$0xff]
        %v1020 = vld [vmem:[%s3 + $0x510] sm:$0xff]
        %v1021 = vld [vmem:[%s3 + $0x518] sm:$0xff]
        %v1022 = vld [vmem:[%s3 + $0x520] sm:$0xff]
        %v1023 = vld [vmem:[%s3 + $0x528] sm:$0xff]
        %v1024 = vld [vmem:[%s3 + $0x530] sm:$0xff]
        %v1025 = vld [vmem:[%s3 + $0x538] sm:$0xff]
        %v1026 = vld [vmem:[%s3 + $0x540] sm:$0xff]
        %v1027 = vld [vmem:[%s3 + $0x548] sm:$0xff]
        %v1028 = vld [vmem:[%s3 + $0x550] sm:$0xff]
        %v1029 = vld [vmem:[%s3 + $0x558] sm:$0xff]
        %v1030 = vld [vmem:[%s3 + $0x560] sm:$0xff]
        %v1031 = vld [vmem:[%s3 + $0x568] sm:$0xff]
        %v1032 = vld [vmem:[%s3 + $0x570] sm:$0xff]
        %v1033 = vld [vmem:[%s3 + $0x578] sm:$0xff]
        %v1034 = vld [vmem:[%s3 + $0x580] sm:$0xff]
        %v1035 = vld [vmem:[%s3 + $0x588] sm:$0xff]
        %v1036 = vld [vmem:[%s3 + $0x590] sm:$0xff]
        %v1037 = vld [vmem:[%s3 + $0x598] sm:$0xff]
        %v1038 = vld [vmem:[%s3 + $0x5a0] sm:$0xff]
        %v1039 = vld [vmem:[%s3 + $0x5a8] sm:$0xff]
        %v1040 = vld [vmem:[%s3 + $0x5b0] sm:$0xff]
        %v1041 = vld [vmem:[%s3 + $0x5b8] sm:$0xff]
        %v1042 = vld [vmem:[%s3 + $0x5c0] sm:$0xff]
        %v1043 = vld [vmem:[%s3 + $0x5c8] sm:$0xff]
        %v1044 = vld [vmem:[%s3 + $0x5d0] sm:$0xff]
        %v1045 = vld [vmem:[%s3 + $0x5d8] sm:$0xff]
        %v1046 = vld [vmem:[%s3 + $0x5e0] sm:$0xff]
        %v1047 = vld [vmem:[%s3 + $0x5e8] sm:$0xff]
        %v1048 = vld [vmem:[%s3 + $0x5f0] sm:$0xff]
        %v1049 = vld [vmem:[%s3 + $0x5f8] sm:$0xff]
        %v1050 = vld [vmem:[%s3 + $0x600] sm:$0xff]
        %v1051 = vld [vmem:[%s3 + $0x608] sm:$0xff]
        %v1052 = vld [vmem:[%s3 + $0x610] sm:$0xff]
        %v1053 = vld [vmem:[%s3 + $0x618] sm:$0xff]
        %v1054 = vld [vmem:[%s3 + $0x620] sm:$0xff]
        %v1055 = vld [vmem:[%s3 + $0x628] sm:$0xff]
        %v1056 = vld [vmem:[%s3 + $0x630] sm:$0xff]
        %v1057 = vld [vmem:[%s3 + $0x638] sm:$0xff]
        %v1058 = vld [vmem:[%s3 + $0x640] sm:$0xff]
        %v1059 = vld [vmem:[%s3 + $0x648] sm:$0xff]
        %v1060 = vld [vmem:[%s3 + $0x650] sm:$0xff]
        %v1061 = vld [vmem:[%s3 + $0x658] sm:$0xff]
        %v1062 = vld [vmem:[%s3 + $0x660] sm:$0xff]
        %v1063 = vld [vmem:[%s3 + $0x668] sm:$0xff]
        %v1064 = vld [vmem:[%s3 + $0x670] sm:$0xff]
        %v1065 = vld [vmem:[%s3 + $0x678] sm:$0xff]
        %v1066 = vld [vmem:[%s3 + $0x680] sm:$0xff]
        %v1067 = vld [vmem:[%s3 + $0x688] sm:$0xff]
        %v1068 = vld [vmem:[%s3 + $0x690] sm:$0xff]
        %v1069 = vld [vmem:[%s3 + $0x698] sm:$0xff]
        %v1070 = vld [vmem:[%s3 + $0x6a0] sm:$0xff]
        %v1071 = vld [vmem:[%s3 + $0x6a8] sm:$0xff]
        %v1072 = vld [vmem:[%s3 + $0x6b0] sm:$0xff]
        %v1073 = vld [vmem:[%s3 + $0x6b8] sm:$0xff]
        %v1074 = vld [vmem:[%s3 + $0x6c0] sm:$0xff]
        %v1075 = vld [vmem:[%s3 + $0x6c8] sm:$0xff]
        %v1076 = vld [vmem:[%s3 + $0x6d0] sm:$0xff]
        %v1077 = vld [vmem:[%s3 + $0x6d8] sm:$0xff]
        %v1078 = vld [vmem:[%s3 + $0x6e0] sm:$0xff]
        %v1079 = vld [vmem:[%s3 + $0x6e8] sm:$0xff]
        %v1080 = vld [vmem:[%s3 + $0x6f0] sm:$0xff]
        %v1081 = vld [vmem:[%s3 + $0x6f8] sm:$0xff]
        %v1082 = vld [vmem:[%s3 + $0x700] sm:$0xff]
        %v1083 = vld [vmem:[%s3 + $0x708] sm:$0xff]
        %v1084 = vld [vmem:[%s3 + $0x710] sm:$0xff]
        %v1085 = vld [vmem:[%s3 + $0x718] sm:$0xff]
        %v1086 = vld [vmem:[%s3 + $0x720] sm:$0xff]
        %v1087 = vld [vmem:[%s3 + $0x728] sm:$0xff]
        %v1088 = vld [vmem:[%s3 + $0x730] sm:$0xff]
        %v1089 = vld [vmem:[%s3 + $0x738] sm:$0xff]
        %v1090 = vld [vmem:[%s3 + $0x740] sm:$0xff]
        %v1091 = vld [vmem:[%s3 + $0x748] sm:$0xff]
        %v1092 = vld [vmem:[%s3 + $0x750] sm:$0xff]
        %v1093 = vld [vmem:[%s3 + $0x758] sm:$0xff]
        %v1094 = vld [vmem:[%s3 + $0x760] sm:$0xff]
        %v1095 = vld [vmem:[%s3 + $0x768] sm:$0xff]
        %v1096 = vld [vmem:[%s3 + $0x770] sm:$0xff]
        %v1097 = vld [vmem:[%s3 + $0x778] sm:$0xff]
        %v1098 = vld [vmem:[%s3 + $0x780] sm:$0xff]
        %v1099 = vld [vmem:[%s3 + $0x788] sm:$0xff]
        %v1100 = vld [vmem:[%s3 + $0x790] sm:$0xff]
        %v1101 = vld [vmem:[%s3 + $0x798] sm:$0xff]
        %v1102 = vld [vmem:[%s3 + $0x7a0] sm:$0xff]
        %v1103 = vld [vmem:[%s3 + $0x7a8] sm:$0xff]
        %v1104 = vld [vmem:[%s3 + $0x7b0] sm:$0xff]
        %v1105 = vld [vmem:[%s3 + $0x7b8] sm:$0xff]
        %v1106 = vld [vmem:[%s3 + $0x7c0] sm:$0xff]
        %v1107 = vld [vmem:[%s3 + $0x7c8] sm:$0xff]
        %v1108 = vld [vmem:[%s3 + $0x7d0] sm:$0xff]
        %v1109 = vld [vmem:[%s3 + $0x7d8] sm:$0xff]
        %v1110 = vld [vmem:[%s3 + $0x7e0] sm:$0xff]
        %v1111 = vld [vmem:[%s3 + $0x7e8] sm:$0xff]
        %v1112 = vld [vmem:[%s3 + $0x7f0] sm:$0xff]
        %v1113 = vld [vmem:[%s3 + $0x7f8] sm:$0xff]
        %v1114 = vld [vmem:[%s3 + $0x800] sm:$0xff]
        %v1115 = vld [vmem:[%s3 + $0x808] sm:$0xff]
        %v1116 = vld [vmem:[%s3 + $0x810] sm:$0xff]
        %v1117 = vld [vmem:[%s3 + $0x818] sm:$0xff]
        %v1118 = vld [vmem:[%s3 + $0x820] sm:$0xff]
        %v1119 = vld [vmem:[%s3 + $0x828] sm:$0xff]
        %v1120 = vld [vmem:[%s3 + $0x830] sm:$0xff]
        %v1121 = vld [vmem:[%s3 + $0x838] sm:$0xff]
        %v1122 = vld [vmem:[%s3 + $0x840] sm:$0xff]
        %v1123 = vld [vmem:[%s3 + $0x848] sm:$0xff]
        %v1124 = vld [vmem:[%s3 + $0x850] sm:$0xff]
        %v1125 = vld [vmem:[%s3 + $0x858] sm:$0xff]
        %v1126 = vld [vmem:[%s3 + $0x860] sm:$0xff]
        %v1127 = vld [vmem:[%s3 + $0x868] sm:$0xff]
        %v1128 = vld [vmem:[%s3 + $0x870] sm:$0xff]
        %v1129 = vld [vmem:[%s3 + $0x878] sm:$0xff]
        %v1130 = vld [vmem:[%s3 + $0x880] sm:$0xff]
        %v1131 = vld [vmem:[%s3 + $0x888] sm:$0xff]
        %v1132 = vld [vmem:[%s3 + $0x890] sm:$0xff]
        %v1133 = vld [vmem:[%s3 + $0x898] sm:$0xff]
        %v1134 = vld [vmem:[%s3 + $0x8a0] sm:$0xff]
        %v1135 = vld [vmem:[%s3 + $0x8a8] sm:$0xff]
        %v1136 = vld [vmem:[%s3 + $0x8b0] sm:$0xff]
        %v1137 = vld [vmem:[%s3 + $0x8b8] sm:$0xff]
        %v1138 = vld [vmem:[%s3 + $0x8c0] sm:$0xff]
        %v1139 = vld [vmem:[%s3 + $0x8c8] sm:$0xff]
        %v1140 = vld [vmem:[%s3 + $0x8d0] sm:$0xff]
        %v1141 = vld [vmem:[%s3 + $0x8d8] sm:$0xff]
        %v1142 = vld [vmem:[%s3 + $0x8e0] sm:$0xff]
        %v1143 = vld [vmem:[%s3 + $0x8e8] sm:$0xff]
        %v1144 = vld [vmem:[%s3 + $0x8f0] sm:$0xff]
        %v1145 = vld [vmem:[%s3 + $0x8f8] sm:$0xff]
        %v1146 = vld [vmem:[%s3 + $0x900] sm:$0xff]
        %v1147 = vld [vmem:[%s3 + $0x908] sm:$0xff]
        %v1148 = vld [vmem:[%s3 + $0x910] sm:$0xff]
        %v1149 = vld [vmem:[%s3 + $0x918] sm:$0xff]
        %v1150 = vld [vmem:[%s3 + $0x920] sm:$0xff]
        %v1151 = vld [vmem:[%s3 + $0x928] sm:$0xff]
        %v1152 = vld [vmem:[%s3 + $0x930] sm:$0xff]
        %v1153 = vld [vmem:[%s3 + $0x938] sm:$0xff]
        %v1154 = vld [vmem:[%s3 + $0x940] sm:$0xff]
        %v1155 = vld [vmem:[%s3 + $0x948] sm:$0xff]
        %v1156 = vld [vmem:[%s3 + $0x950] sm:$0xff]
        %v1157 = vld [vmem:[%s3 + $0x958] sm:$0xff]
        %v1158 = vld [vmem:[%s3 + $0x960] sm:$0xff]
        %v1159 = vld [vmem:[%s3 + $0x968] sm:$0xff]
        %v1160 = vld [vmem:[%s3 + $0x970] sm:$0xff]
        %v1161 = vld [vmem:[%s3 + $0x978] sm:$0xff]
        %v1162 = vld [vmem:[%s3 + $0x980] sm:$0xff]
        %v1163 = vld [vmem:[%s3 + $0x988] sm:$0xff]
        %v1164 = vld [vmem:[%s3 + $0x990] sm:$0xff]
        %v1165 = vld [vmem:[%s3 + $0x998] sm:$0xff]
        %v1166 = vld [vmem:[%s3 + $0x9a0] sm:$0xff]
        %v1167 = vld [vmem:[%s3 + $0x9a8] sm:$0xff]
        %v1168 = vld [vmem:[%s3 + $0x9b0] sm:$0xff]
        %v1169 = vld [vmem:[%s3 + $0x9b8] sm:$0xff]
        %v1170 = vld [vmem:[%s3 + $0x9c0] sm:$0xff]
        %v1171 = vld [vmem:[%s3 + $0x9c8] sm:$0xff]
        %v1172 = vld [vmem:[%s3 + $0x9d0] sm:$0xff]
        %v1173 = vld [vmem:[%s3 + $0x9d8] sm:$0xff]
        %v1174 = vld [vmem:[%s3 + $0x9e0] sm:$0xff]
        %v1175 = vld [vmem:[%s3 + $0x9e8] sm:$0xff]
        %v1176 = vld [vmem:[%s3 + $0x9f0] sm:$0xff]
        %v1177 = vld [vmem:[%s3 + $0x9f8] sm:$0xff]
        %v1178 = vld [vmem:[%s3 + $0xa00] sm:$0xff]
        %v1179 = vld [vmem:[%s3 + $0xa08] sm:$0xff]
        %v1180 = vld [vmem:[%s3 + $0xa10] sm:$0xff]
        %v1181 = vld [vmem:[%s3 + $0xa18] sm:$0xff]
        %v1182 = vld [vmem:[%s3 + $0xa20] sm:$0xff]
        %v1183 = vld [vmem:[%s3 + $0xa28] sm:$0xff]
        %v1184 = vld [vmem:[%s3 + $0xa30] sm:$0xff]
        %v1185 = vld [vmem:[%s3 + $0xa38] sm:$0xff]
        %v1186 = vld [vmem:[%s3 + $0xa40] sm:$0xff]
        %v1187 = vld [vmem:[%s3 + $0xa48] sm:$0xff]
        %v1188 = vld [vmem:[%s3 + $0xa50] sm:$0xff]
        %v1189 = vld [vmem:[%s3 + $0xa58] sm:$0xff]
        %v1190 = vld [vmem:[%s3 + $0xa60] sm:$0xff]
        %v1191 = vld [vmem:[%s3 + $0xa68] sm:$0xff]
        %v1192 = vld [vmem:[%s3 + $0xa70] sm:$0xff]
        %v1193 = vld [vmem:[%s3 + $0xa78] sm:$0xff]
        %v1194 = vld [vmem:[%s3 + $0xa80] sm:$0xff]
        %v1195 = vld [vmem:[%s3 + $0xa88] sm:$0xff]
        %v1196 = vld [vmem:[%s3 + $0xa90] sm:$0xff]
        %v1197 = vld [vmem:[%s3 + $0xa98] sm:$0xff]
        %v1198 = vld [vmem:[%s3 + $0xaa0] sm:$0xff]
        %v1199 = vld [vmem:[%s3 + $0xaa8] sm:$0xff]
        %v1200 = vld [vmem:[%s3 + $0xab0] sm:$0xff]
        %v1201 = vld [vmem:[%s3 + $0xab8] sm:$0xff]
        %v1202 = vld [vmem:[%s3 + $0xac0] sm:$0xff]
        %v1203 = vld [vmem:[%s3 + $0xac8] sm:$0xff]
        %v1204 = vld [vmem:[%s3 + $0xad0] sm:$0xff]
        %v1205 = vld [vmem:[%s3 + $0xad8] sm:$0xff]
        %v1206 = vld [vmem:[%s3 + $0xae0] sm:$0xff]
        %v1207 = vld [vmem:[%s3 + $0xae8] sm:$0xff]
        %v1208 = vld [vmem:[%s3 + $0xaf0] sm:$0xff]
        %v1209 = vld [vmem:[%s3 + $0xaf8] sm:$0xff]
        %v1210 = vld [vmem:[%s3 + $0xb00] sm:$0xff]
        %v1211 = vld [vmem:[%s3 + $0xb08] sm:$0xff]
        %v1212 = vld [vmem:[%s3 + $0xb10] sm:$0xff]
        %v1213 = vld [vmem:[%s3 + $0xb18] sm:$0xff]
        %v1214 = vld [vmem:[%s3 + $0xb20] sm:$0xff]
        %v1215 = vld [vmem:[%s3 + $0xb28] sm:$0xff]
        %v1216 = vld [vmem:[%s3 + $0xb30] sm:$0xff]
        %v1217 = vld [vmem:[%s3 + $0xb38] sm:$0xff]
        %v1218 = vld [vmem:[%s3 + $0xb40] sm:$0xff]
        %v1219 = vld [vmem:[%s3 + $0xb48] sm:$0xff]
        %v1220 = vld [vmem:[%s3 + $0xb50] sm:$0xff]
        %v1221 = vld [vmem:[%s3 + $0xb58] sm:$0xff]
        %v1222 = vld [vmem:[%s3 + $0xb60] sm:$0xff]
        %v1223 = vld [vmem:[%s3 + $0xb68] sm:$0xff]
        %v1224 = vld [vmem:[%s3 + $0xb70] sm:$0xff]
        %v1225 = vld [vmem:[%s3 + $0xb78] sm:$0xff]
        %v1226 = vld [vmem:[%s3 + $0xb80] sm:$0xff]
        %v1227 = vld [vmem:[%s3 + $0xb88] sm:$0xff]
        %v1228 = vld [vmem:[%s3 + $0xb90] sm:$0xff]
        %v1229 = vld [vmem:[%s3 + $0xb98] sm:$0xff]
        %v1230 = vld [vmem:[%s3 + $0xba0] sm:$0xff]
        %v1231 = vld [vmem:[%s3 + $0xba8] sm:$0xff]
        %v1232 = vld [vmem:[%s3 + $0xbb0] sm:$0xff]
        %v1233 = vld [vmem:[%s3 + $0xbb8] sm:$0xff]
        %v1234 = vld [vmem:[%s3 + $0xbc0] sm:$0xff]
        %v1235 = vld [vmem:[%s3 + $0xbc8] sm:$0xff]
        %v1236 = vld [vmem:[%s3 + $0xbd0] sm:$0xff]
        %v1237 = vld [vmem:[%s3 + $0xbd8] sm:$0xff]
        %v1238 = vld [vmem:[%s3 + $0xbe0] sm:$0xff]
        %v1239 = vld [vmem:[%s3 + $0xbe8] sm:$0xff]
        %v1240 = vld [vmem:[%s3 + $0xbf0] sm:$0xff]
        %v1241 = vld [vmem:[%s3 + $0xbf8] sm:$0xff]
        %v1242 = vld [vmem:[%s5] sm:$0xf]
        %v1244 = vlaneseq
        %v1245 = vshrl.u32 %v1244, 7
        %v1246 = vsub.s32 0, %v1245
        %v1247 = vrot.slane %v1242, %v1246
        %v1248 = vlaneseq
        %v1249 = vshrl.u32 %v1248, 7
        %v1250 = vsub.s32 1, %v1249
        %v1251 = vrot.slane %v1242, %v1250
        %v1252 = vlaneseq
        %v1253 = vshrl.u32 %v1252, 7
        %v1254 = vsub.s32 2, %v1253
        %v1255 = vrot.slane %v1242, %v1254
        %v1256 = vlaneseq
        %v1257 = vshrl.u32 %v1256, 7
        %v1258 = vsub.s32 3, %v1257
        %v1259 = vrot.slane %v1242, %v1258
        %1264 = vmatprep.subr.mxu0 %v859
        %1265 = vmatpush1.msra.mxu0 %v858
        %1266 = vmatprep.subr.mxu0 %v863
        %1267 = vmatpush1.msra.mxu0 %v862
        %1268 = vmatprep.subr.mxu0 %v867
        %1269 = vmatpush1.msra.mxu0 %v866
        %1270 = vmatprep.subr.mxu0 %v871
        %1271 = vmatpush1.msra.mxu0 %v870
        %1272 = vmatprep.subr.mxu0 %v875
        %1273 = vmatpush1.msra.mxu0 %v874
        %1274 = vmatprep.subr.mxu0 %v879
        %1275 = vmatpush1.msra.mxu0 %v878
        %1276 = vmatprep.subr.mxu0 %v883
        %1277 = vmatpush1.msra.mxu0 %v882
        %1278 = vmatprep.subr.mxu0 %v887
        %1279 = vmatpush1.msra.mxu0 %v886
        %1280 = vmatprep.subr.mxu0 %v891
        %1281 = vmatpush1.msra.mxu0 %v890
        %1282 = vmatprep.subr.mxu0 %v895
        %1283 = vmatpush1.msra.mxu0 %v894
        %1284 = vmatprep.subr.mxu0 %v899
        %1285 = vmatpush1.msra.mxu0 %v898
        %1286 = vmatprep.subr.mxu0 %v903
        %1287 = vmatpush1.msra.mxu0 %v902
        %1288 = vmatprep.subr.mxu0 %v907
        %1289 = vmatpush1.msra.mxu0 %v906
        %1290 = vmatprep.subr.mxu0 %v911
        %1291 = vmatpush1.msra.mxu0 %v910
        %1292 = vmatprep.subr.mxu0 %v915
        %1293 = vmatpush1.msra.mxu0 %v914
        %1294 = vmatprep.subr.mxu0 %v919
        %1295 = vmatpush1.msra.mxu0 %v918
        %1296 = vmatprep.subr.mxu0 %v923
        %1297 = vmatpush1.msra.mxu0 %v922
        %1298 = vmatprep.subr.mxu0 %v927
        %1299 = vmatpush1.msra.mxu0 %v926
        %1300 = vmatprep.subr.mxu0 %v931
        %1301 = vmatpush1.msra.mxu0 %v930
        %1302 = vmatprep.subr.mxu0 %v935
        %1303 = vmatpush1.msra.mxu0 %v934
        %1304 = vmatprep.subr.mxu0 %v939
        %1305 = vmatpush1.msra.mxu0 %v938
        %1306 = vmatprep.subr.mxu0 %v943
        %1307 = vmatpush1.msra.mxu0 %v942
        %1308 = vmatprep.subr.mxu0 %v947
        %1309 = vmatpush1.msra.mxu0 %v946
        %1310 = vmatprep.subr.mxu0 %v951
        %1311 = vmatpush1.msra.mxu0 %v950
        %1312 = vmatprep.subr.mxu0 %v955
        %1313 = vmatpush1.msra.mxu0 %v954
        %1314 = vmatprep.subr.mxu0 %v959
        %1315 = vmatpush1.msra.mxu0 %v958
        %1316 = vmatprep.subr.mxu0 %v963
        %1317 = vmatpush1.msra.mxu0 %v962
        %1318 = vmatprep.subr.mxu0 %v967
        %1319 = vmatpush1.msra.mxu0 %v966
        %1320 = vmatprep.subr.mxu0 %v971
        %1321 = vmatpush1.msra.mxu0 %v970
        %1322 = vmatprep.subr.mxu0 %v975
        %1323 = vmatpush1.msra.mxu0 %v974
        %1324 = vmatprep.subr.mxu0 %v979
        %1325 = vmatpush1.msra.mxu0 %v978
        %1326 = vmatprep.subr.mxu0 %v983
        %1327 = vmatpush1.msra.mxu0 %v982
        %1328 = vmatprep.mubr.f32.mxu0 %v811
        %1329 = vmatmul.mubr.f32.gmra.mrb[0].mxu0 %v810
        %v1330 = vpop.f32.mrb[0].mxu0
        %v1331 = vadd.f32 %v1247, %v1330
        %v1332 = vpop.f32.mrb[0].mxu0
        %v1333 = vadd.f32 %v1251, %v1332
        %1334 = vmatprep.mubr.f32.mxu0 %v817
        %1335 = vmatmul.mubr.f32.gmra.mrb[0].mxu0 %v816
        %v1336 = vpop.f32.mrb[0].mxu0
        %v1337 = vadd.f32 %v1247, %v1336
        %v1338 = vpop.f32.mrb[0].mxu0
        %v1339 = vadd.f32 %v1251, %v1338
        %1340 = vmatprep.mubr.f32.mxu0 %v823
        %1341 = vmatmul.mubr.f32.gmra.mrb[0].mxu0 %v822
        %v1342 = vpop.f32.mrb[0].mxu0
        %v1343 = vadd.f32 %v1247, %v1342
        %v1344 = vpop.f32.mrb[0].mxu0
        %v1345 = vadd.f32 %v1251, %v1344
        %1346 = vmatprep.mubr.f32.mxu0 %v829
        %1347 = vmatmul.mubr.f32.gmra.mrb[0].mxu0 %v828
        %v1348 = vpop.f32.mrb[0].mxu0
        %v1349 = vadd.f32 %v1247, %v1348
        %v1350 = vpop.f32.mrb[0].mxu0
        %v1351 = vadd.f32 %v1251, %v1350
        %1352 = vmatprep.mubr.f32.mxu0 %v835
        %1353 = vmatmul.mubr.f32.gmra.mrb[0].mxu0 %v834
        %v1354 = vpop.f32.mrb[0].mxu0
        %v1355 = vadd.f32 %v1247, %v1354
        %v1356 = vpop.f32.mrb[0].mxu0
        %v1357 = vadd.f32 %v1251, %v1356
        %1358 = vmatprep.mubr.f32.mxu0 %v841
        %1359 = vmatmul.mubr.f32.gmra.mrb[0].mxu0 %v840
        %v1360 = vpop.f32.mrb[0].mxu0
        %v1361 = vadd.f32 %v1247, %v1360
        %v1362 = vpop.f32.mrb[0].mxu0
        %v1363 = vadd.f32 %v1251, %v1362
        %1364 = vmatprep.mubr.f32.mxu0 %v847
        %1365 = vmatmul.mubr.f32.gmra.mrb[0].mxu0 %v846
        %v1366 = vpop.f32.mrb[0].mxu0
        %v1367 = vadd.f32 %v1247, %v1366
        %v1368 = vpop.f32.mrb[0].mxu0
        %v1369 = vadd.f32 %v1251, %v1368
        %1370 = vmatprep.mubr.f32.mxu0 %v853
        %1371 = vmatmul.mubr.f32.gmra.mrb[0].mxu0 %v852
        %v1372 = vpop.f32.mrb[0].mxu0
        %v1373 = vadd.f32 %v1247, %v1372
        %v1374 = vpop.f32.mrb[0].mxu0
        %v1375 = vadd.f32 %v1251, %v1374
        %1376 = vdwg.mxu0
        %1377 = vmatprep.subr.mxu0 %v987
        %1378 = vmatpush1.msra.mxu0 %v986
        %1379 = vmatprep.subr.mxu0 %v991
        %1380 = vmatpush1.msra.mxu0 %v990
        %1381 = vmatprep.subr.mxu0 %v995
        %1382 = vmatpush1.msra.mxu0 %v994
        %1383 = vmatprep.subr.mxu0 %v999
        %1384 = vmatpush1.msra.mxu0 %v998
        %1385 = vmatprep.subr.mxu0 %v1003
        %1386 = vmatpush1.msra.mxu0 %v1002
        %1387 = vmatprep.subr.mxu0 %v1007
        %1388 = vmatpush1.msra.mxu0 %v1006
        %1389 = vmatprep.subr.mxu0 %v1011
        %1390 = vmatpush1.msra.mxu0 %v1010
        %1391 = vmatprep.subr.mxu0 %v1015
        %1392 = vmatpush1.msra.mxu0 %v1014
        %1393 = vmatprep.subr.mxu0 %v1019
        %1394 = vmatpush1.msra.mxu0 %v1018
        %1395 = vmatprep.subr.mxu0 %v1023
        %1396 = vmatpush1.msra.mxu0 %v1022
        %1397 = vmatprep.subr.mxu0 %v1027
        %1398 = vmatpush1.msra.mxu0 %v1026
        %1399 = vmatprep.subr.mxu0 %v1031
        %1400 = vmatpush1.msra.mxu0 %v1030
        %1401 = vmatprep.subr.mxu0 %v1035
        %1402 = vmatpush1.msra.mxu0 %v1034
        %1403 = vmatprep.subr.mxu0 %v1039
        %1404 = vmatpush1.msra.mxu0 %v1038
        %1405 = vmatprep.subr.mxu0 %v1043
        %1406 = vmatpush1.msra.mxu0 %v1042
        %1407 = vmatprep.subr.mxu0 %v1047
        %1408 = vmatpush1.msra.mxu0 %v1046
        %1409 = vmatprep.subr.mxu0 %v1051
        %1410 = vmatpush1.msra.mxu0 %v1050
        %1411 = vmatprep.subr.mxu0 %v1055
        %1412 = vmatpush1.msra.mxu0 %v1054
        %1413 = vmatprep.subr.mxu0 %v1059
        %1414 = vmatpush1.msra.mxu0 %v1058
        %1415 = vmatprep.subr.mxu0 %v1063
        %1416 = vmatpush1.msra.mxu0 %v1062
        %1417 = vmatprep.subr.mxu0 %v1067
        %1418 = vmatpush1.msra.mxu0 %v1066
        %1419 = vmatprep.subr.mxu0 %v1071
        %1420 = vmatpush1.msra.mxu0 %v1070
        %1421 = vmatprep.subr.mxu0 %v1075
        %1422 = vmatpush1.msra.mxu0 %v1074
        %1423 = vmatprep.subr.mxu0 %v1079
        %1424 = vmatpush1.msra.mxu0 %v1078
        %1425 = vmatprep.subr.mxu0 %v1083
        %1426 = vmatpush1.msra.mxu0 %v1082
        %1427 = vmatprep.subr.mxu0 %v1087
        %1428 = vmatpush1.msra.mxu0 %v1086
        %1429 = vmatprep.subr.mxu0 %v1091
        %1430 = vmatpush1.msra.mxu0 %v1090
        %1431 = vmatprep.subr.mxu0 %v1095
        %1432 = vmatpush1.msra.mxu0 %v1094
        %1433 = vmatprep.subr.mxu0 %v1099
        %1434 = vmatpush1.msra.mxu0 %v1098
        %1435 = vmatprep.subr.mxu0 %v1103
        %1436 = vmatpush1.msra.mxu0 %v1102
        %1437 = vmatprep.subr.mxu0 %v1107
        %1438 = vmatpush1.msra.mxu0 %v1106
        %1439 = vmatprep.subr.mxu0 %v1111
        %1440 = vmatpush1.msra.mxu0 %v1110
        %1441 = vmatprep.mubr.f32.mxu0 %v813
        %1442 = vmatmul.mubr.f32.gmra.mrb[0].mxu0 %v812
        %v1443 = vpop.f32.mrb[0].mxu0
        %v1444 = vadd.f32 %v1331, %v1443
        %v1445 = vpop.f32.mrb[0].mxu0
        %v1446 = vadd.f32 %v1333, %v1445
        %1447 = vmatprep.mubr.f32.mxu0 %v819
        %1448 = vmatmul.mubr.f32.gmra.mrb[0].mxu0 %v818
        %v1449 = vpop.f32.mrb[0].mxu0
        %v1450 = vadd.f32 %v1337, %v1449
        %v1451 = vpop.f32.mrb[0].mxu0
        %v1452 = vadd.f32 %v1339, %v1451
        %1453 = vmatprep.mubr.f32.mxu0 %v825
        %1454 = vmatmul.mubr.f32.gmra.mrb[0].mxu0 %v824
        %v1455 = vpop.f32.mrb[0].mxu0
        %v1456 = vadd.f32 %v1343, %v1455
        %v1457 = vpop.f32.mrb[0].mxu0
        %v1458 = vadd.f32 %v1345, %v1457
        %1459 = vmatprep.mubr.f32.mxu0 %v831
        %1460 = vmatmul.mubr.f32.gmra.mrb[0].mxu0 %v830
        %v1461 = vpop.f32.mrb[0].mxu0
        %v1462 = vadd.f32 %v1349, %v1461
        %v1463 = vpop.f32.mrb[0].mxu0
        %v1464 = vadd.f32 %v1351, %v1463
        %1465 = vmatprep.mubr.f32.mxu0 %v837
        %1466 = vmatmul.mubr.f32.gmra.mrb[0].mxu0 %v836
        %v1467 = vpop.f32.mrb[0].mxu0
        %v1468 = vadd.f32 %v1355, %v1467
        %v1469 = vpop.f32.mrb[0].mxu0
        %v1470 = vadd.f32 %v1357, %v1469
        %1471 = vmatprep.mubr.f32.mxu0 %v843
        %1472 = vmatmul.mubr.f32.gmra.mrb[0].mxu0 %v842
        %v1473 = vpop.f32.mrb[0].mxu0
        %v1474 = vadd.f32 %v1361, %v1473
        %v1475 = vpop.f32.mrb[0].mxu0
        %v1476 = vadd.f32 %v1363, %v1475
        %1477 = vmatprep.mubr.f32.mxu0 %v849
        %1478 = vmatmul.mubr.f32.gmra.mrb[0].mxu0 %v848
        %v1479 = vpop.f32.mrb[0].mxu0
        %v1480 = vadd.f32 %v1367, %v1479
        %v1481 = vpop.f32.mrb[0].mxu0
        %v1482 = vadd.f32 %v1369, %v1481
        %1483 = vmatprep.mubr.f32.mxu0 %v855
        %1484 = vmatmul.mubr.f32.gmra.mrb[0].mxu0 %v854
        %v1485 = vpop.f32.mrb[0].mxu0
        %v1486 = vadd.f32 %v1373, %v1485
        %v1487 = vpop.f32.mrb[0].mxu0
        %v1488 = vadd.f32 %v1375, %v1487
        %1489 = vdwg.mxu0
        %1490 = vmatprep.subr.mxu0 %v1115
        %1491 = vmatpush1.msra.mxu0 %v1114
        %1492 = vmatprep.subr.mxu0 %v1119
        %1493 = vmatpush1.msra.mxu0 %v1118
        %1494 = vmatprep.subr.mxu0 %v1123
        %1495 = vmatpush1.msra.mxu0 %v1122
        %1496 = vmatprep.subr.mxu0 %v1127
        %1497 = vmatpush1.msra.mxu0 %v1126
        %1498 = vmatprep.subr.mxu0 %v1131
        %1499 = vmatpush1.msra.mxu0 %v1130
        %1500 = vmatprep.subr.mxu0 %v1135
        %1501 = vmatpush1.msra.mxu0 %v1134
        %1502 = vmatprep.subr.mxu0 %v1139
        %1503 = vmatpush1.msra.mxu0 %v1138
        %1504 = vmatprep.subr.mxu0 %v1143
        %1505 = vmatpush1.msra.mxu0 %v1142
        %1506 = vmatprep.subr.mxu0 %v1147
        %1507 = vmatpush1.msra.mxu0 %v1146
        %1508 = vmatprep.subr.mxu0 %v1151
        %1509 = vmatpush1.msra.mxu0 %v1150
        %1510 = vmatprep.subr.mxu0 %v1155
        %1511 = vmatpush1.msra.mxu0 %v1154
        %1512 = vmatprep.subr.mxu0 %v1159
        %1513 = vmatpush1.msra.mxu0 %v1158
        %1514 = vmatprep.subr.mxu0 %v1163
        %1515 = vmatpush1.msra.mxu0 %v1162
        %1516 = vmatprep.subr.mxu0 %v1167
        %1517 = vmatpush1.msra.mxu0 %v1166
        %1518 = vmatprep.subr.mxu0 %v1171
        %1519 = vmatpush1.msra.mxu0 %v1170
        %1520 = vmatprep.subr.mxu0 %v1175
        %1521 = vmatpush1.msra.mxu0 %v1174
        %1522 = vmatprep.subr.mxu0 %v1179
        %1523 = vmatpush1.msra.mxu0 %v1178
        %1524 = vmatprep.subr.mxu0 %v1183
        %1525 = vmatpush1.msra.mxu0 %v1182
        %1526 = vmatprep.subr.mxu0 %v1187
        %1527 = vmatpush1.msra.mxu0 %v1186
        %1528 = vmatprep.subr.mxu0 %v1191
        %1529 = vmatpush1.msra.mxu0 %v1190
        %1530 = vmatprep.subr.mxu0 %v1195
        %1531 = vmatpush1.msra.mxu0 %v1194
        %1532 = vmatprep.subr.mxu0 %v1199
        %1533 = vmatpush1.msra.mxu0 %v1198
        %1534 = vmatprep.subr.mxu0 %v1203
        %1535 = vmatpush1.msra.mxu0 %v1202
        %1536 = vmatprep.subr.mxu0 %v1207
        %1537 = vmatpush1.msra.mxu0 %v1206
        %1538 = vmatprep.subr.mxu0 %v1211
        %1539 = vmatpush1.msra.mxu0 %v1210
        %1540 = vmatprep.subr.mxu0 %v1215
        %1541 = vmatpush1.msra.mxu0 %v1214
        %1542 = vmatprep.subr.mxu0 %v1219
        %1543 = vmatpush1.msra.mxu0 %v1218
        %1544 = vmatprep.subr.mxu0 %v1223
        %1545 = vmatpush1.msra.mxu0 %v1222
        %1546 = vmatprep.subr.mxu0 %v1227
        %1547 = vmatpush1.msra.mxu0 %v1226
        %1548 = vmatprep.subr.mxu0 %v1231
        %1549 = vmatpush1.msra.mxu0 %v1230
        %1550 = vmatprep.subr.mxu0 %v1235
        %1551 = vmatpush1.msra.mxu0 %v1234
        %1552 = vmatprep.subr.mxu0 %v1239
        %1553 = vmatpush1.msra.mxu0 %v1238
        %1554 = vmatprep.mubr.f32.mxu0 %v815
        %1555 = vmatmul.mubr.f32.gmra.mrb[0].mxu0 %v814
        %v1556 = vpop.f32.mrb[0].mxu0
        %v1557 = vadd.f32 %v1444, %v1556
        %v1558 = vpop.f32.mrb[0].mxu0
        %v1559 = vadd.f32 %v1446, %v1558
        %1560 = vmatprep.mubr.f32.mxu0 %v821
        %1561 = vmatmul.mubr.f32.gmra.mrb[0].mxu0 %v820
        %v1562 = vpop.f32.mrb[0].mxu0
        %v1563 = vadd.f32 %v1450, %v1562
        %v1564 = vpop.f32.mrb[0].mxu0
        %v1565 = vadd.f32 %v1452, %v1564
        %1566 = vmatprep.mubr.f32.mxu0 %v827
        %1567 = vmatmul.mubr.f32.gmra.mrb[0].mxu0 %v826
        %v1568 = vpop.f32.mrb[0].mxu0
        %v1569 = vadd.f32 %v1456, %v1568
        %v1570 = vpop.f32.mrb[0].mxu0
        %v1571 = vadd.f32 %v1458, %v1570
        %1572 = vmatprep.mubr.f32.mxu0 %v833
        %1573 = vmatmul.mubr.f32.gmra.mrb[0].mxu0 %v832
        %v1574 = vpop.f32.mrb[0].mxu0
        %v1575 = vadd.f32 %v1462, %v1574
        %v1576 = vpop.f32.mrb[0].mxu0
        %v1577 = vadd.f32 %v1464, %v1576
        %1578 = vmatprep.mubr.f32.mxu0 %v839
        %1579 = vmatmul.mubr.f32.gmra.mrb[0].mxu0 %v838
        %v1580 = vpop.f32.mrb[0].mxu0
        %v1581 = vadd.f32 %v1468, %v1580
        %v1582 = vpop.f32.mrb[0].mxu0
        %v1583 = vadd.f32 %v1470, %v1582
        %1584 = vmatprep.mubr.f32.mxu0 %v845
        %1585 = vmatmul.mubr.f32.gmra.mrb[0].mxu0 %v844
        %v1586 = vpop.f32.mrb[0].mxu0
        %v1587 = vadd.f32 %v1474, %v1586
        %v1588 = vpop.f32.mrb[0].mxu0
        %v1589 = vadd.f32 %v1476, %v1588
        %1590 = vmatprep.mubr.f32.mxu0 %v851
        %1591 = vmatmul.mubr.f32.gmra.mrb[0].mxu0 %v850
        %v1592 = vpop.f32.mrb[0].mxu0
        %v1593 = vadd.f32 %v1480, %v1592
        %v1594 = vpop.f32.mrb[0].mxu0
        %v1595 = vadd.f32 %v1482, %v1594
        %1596 = vmatprep.mubr.f32.mxu0 %v857
        %1597 = vmatmul.mubr.f32.gmra.mrb[0].mxu0 %v856
        %v1598 = vpop.f32.mrb[0].mxu0
        %v1599 = vadd.f32 %v1486, %v1598
        %v1600 = vpop.f32.mrb[0].mxu0
        %v1601 = vadd.f32 %v1488, %v1600
        %1602 = vdwg.mxu0
        %1603 = vmatprep.subr.mxu0 %v861
        %1604 = vmatpush1.msra.mxu0 %v860
        %1605 = vmatprep.subr.mxu0 %v865
        %1606 = vmatpush1.msra.mxu0 %v864
        %1607 = vmatprep.subr.mxu0 %v869
        %1608 = vmatpush1.msra.mxu0 %v868
        %1609 = vmatprep.subr.mxu0 %v873
        %1610 = vmatpush1.msra.mxu0 %v872
        %1611 = vmatprep.subr.mxu0 %v877
        %1612 = vmatpush1.msra.mxu0 %v876
        %1613 = vmatprep.subr.mxu0 %v881
        %1614 = vmatpush1.msra.mxu0 %v880
        %1615 = vmatprep.subr.mxu0 %v885
        %1616 = vmatpush1.msra.mxu0 %v884
        %1617 = vmatprep.subr.mxu0 %v889
        %1618 = vmatpush1.msra.mxu0 %v888
        %1619 = vmatprep.subr.mxu0 %v893
        %1620 = vmatpush1.msra.mxu0 %v892
        %1621 = vmatprep.subr.mxu0 %v897
        %1622 = vmatpush1.msra.mxu0 %v896
        %1623 = vmatprep.subr.mxu0 %v901
        %1624 = vmatpush1.msra.mxu0 %v900
        %1625 = vmatprep.subr.mxu0 %v905
        %1626 = vmatpush1.msra.mxu0 %v904
        %1627 = vmatprep.subr.mxu0 %v909
        %1628 = vmatpush1.msra.mxu0 %v908
        %1629 = vmatprep.subr.mxu0 %v913
        %1630 = vmatpush1.msra.mxu0 %v912
        %1631 = vmatprep.subr.mxu0 %v917
        %1632 = vmatpush1.msra.mxu0 %v916
        %1633 = vmatprep.subr.mxu0 %v921
        %1634 = vmatpush1.msra.mxu0 %v920
        %1635 = vmatprep.subr.mxu0 %v925
        %1636 = vmatpush1.msra.mxu0 %v924
        %1637 = vmatprep.subr.mxu0 %v929
        %1638 = vmatpush1.msra.mxu0 %v928
        %1639 = vmatprep.subr.mxu0 %v933
        %1640 = vmatpush1.msra.mxu0 %v932
        %1641 = vmatprep.subr.mxu0 %v937
        %1642 = vmatpush1.msra.mxu0 %v936
        %1643 = vmatprep.subr.mxu0 %v941
        %1644 = vmatpush1.msra.mxu0 %v940
        %1645 = vmatprep.subr.mxu0 %v945
        %1646 = vmatpush1.msra.mxu0 %v944
        %1647 = vmatprep.subr.mxu0 %v949
        %1648 = vmatpush1.msra.mxu0 %v948
        %1649 = vmatprep.subr.mxu0 %v953
        %1650 = vmatpush1.msra.mxu0 %v952
        %1651 = vmatprep.subr.mxu0 %v957
        %1652 = vmatpush1.msra.mxu0 %v956
        %1653 = vmatprep.subr.mxu0 %v961
        %1654 = vmatpush1.msra.mxu0 %v960
        %1655 = vmatprep.subr.mxu0 %v965
        %1656 = vmatpush1.msra.mxu0 %v964
        %1657 = vmatprep.subr.mxu0 %v969
        %1658 = vmatpush1.msra.mxu0 %v968
        %1659 = vmatprep.subr.mxu0 %v973
        %1660 = vmatpush1.msra.mxu0 %v972
        %1661 = vmatprep.subr.mxu0 %v977
        %1662 = vmatpush1.msra.mxu0 %v976
        %1663 = vmatprep.subr.mxu0 %v981
        %1664 = vmatpush1.msra.mxu0 %v980
        %1665 = vmatprep.subr.mxu0 %v985
        %1666 = vmatpush1.msra.mxu0 %v984
        %1667 = vmatprep.mubr.f32.mxu0 %v811
        %1668 = vmatmul.mubr.f32.gmra.mrb[0].mxu0 %v810
        %v1669 = vpop.f32.mrb[0].mxu0
        %v1670 = vadd.f32 %v1255, %v1669
        %v1671 = vpop.f32.mrb[0].mxu0
        %v1672 = vadd.f32 %v1259, %v1671
        %1673 = vmatprep.mubr.f32.mxu0 %v817
        %1674 = vmatmul.mubr.f32.gmra.mrb[0].mxu0 %v816
        %v1675 = vpop.f32.mrb[0].mxu0
        %v1676 = vadd.f32 %v1255, %v1675
        %v1677 = vpop.f32.mrb[0].mxu0
        %v1678 = vadd.f32 %v1259, %v1677
        %1679 = vmatprep.mubr.f32.mxu0 %v823
        %1680 = vmatmul.mubr.f32.gmra.mrb[0].mxu0 %v822
        %v1681 = vpop.f32.mrb[0].mxu0
        %v1682 = vadd.f32 %v1255, %v1681
        %v1683 = vpop.f32.mrb[0].mxu0
        %v1684 = vadd.f32 %v1259, %v1683
        %1685 = vmatprep.mubr.f32.mxu0 %v829
        %1686 = vmatmul.mubr.f32.gmra.mrb[0].mxu0 %v828
        %v1687 = vpop.f32.mrb[0].mxu0
        %v1688 = vadd.f32 %v1255, %v1687
        %v1689 = vpop.f32.mrb[0].mxu0
        %v1690 = vadd.f32 %v1259, %v1689
        %1691 = vmatprep.mubr.f32.mxu0 %v835
        %1692 = vmatmul.mubr.f32.gmra.mrb[0].mxu0 %v834
        %v1693 = vpop.f32.mrb[0].mxu0
        %v1694 = vadd.f32 %v1255, %v1693
        %v1695 = vpop.f32.mrb[0].mxu0
        %v1696 = vadd.f32 %v1259, %v1695
        %1697 = vmatprep.mubr.f32.mxu0 %v841
        %1698 = vmatmul.mubr.f32.gmra.mrb[0].mxu0 %v840
        %v1699 = vpop.f32.mrb[0].mxu0
        %v1700 = vadd.f32 %v1255, %v1699
        %v1701 = vpop.f32.mrb[0].mxu0
        %v1702 = vadd.f32 %v1259, %v1701
        %1703 = vmatprep.mubr.f32.mxu0 %v847
        %1704 = vmatmul.mubr.f32.gmra.mrb[0].mxu0 %v846
        %v1705 = vpop.f32.mrb[0].mxu0
        %v1706 = vadd.f32 %v1255, %v1705
        %v1707 = vpop.f32.mrb[0].mxu0
        %v1708 = vadd.f32 %v1259, %v1707
        %1709 = vmatprep.mubr.f32.mxu0 %v853
        %1710 = vmatmul.mubr.f32.gmra.mrb[0].mxu0 %v852
        %v1711 = vpop.f32.mrb[0].mxu0
        %v1712 = vadd.f32 %v1255, %v1711
        %v1713 = vpop.f32.mrb[0].mxu0
        %v1714 = vadd.f32 %v1259, %v1713
        %1715 = vdwg.mxu0
        %1716 = vmatprep.subr.mxu0 %v989
        %1717 = vmatpush1.msra.mxu0 %v988
        %1718 = vmatprep.subr.mxu0 %v993
        %1719 = vmatpush1.msra.mxu0 %v992
        %1720 = vmatprep.subr.mxu0 %v997
        %1721 = vmatpush1.msra.mxu0 %v996
        %1722 = vmatprep.subr.mxu0 %v1001
        %1723 = vmatpush1.msra.mxu0 %v1000
        %1724 = vmatprep.subr.mxu0 %v1005
        %1725 = vmatpush1.msra.mxu0 %v1004
        %1726 = vmatprep.subr.mxu0 %v1009
        %1727 = vmatpush1.msra.mxu0 %v1008
        %1728 = vmatprep.subr.mxu0 %v1013
        %1729 = vmatpush1.msra.mxu0 %v1012
        %1730 = vmatprep.subr.mxu0 %v1017
        %1731 = vmatpush1.msra.mxu0 %v1016
        %1732 = vmatprep.subr.mxu0 %v1021
        %1733 = vmatpush1.msra.mxu0 %v1020
        %1734 = vmatprep.subr.mxu0 %v1025
        %1735 = vmatpush1.msra.mxu0 %v1024
        %1736 = vmatprep.subr.mxu0 %v1029
        %1737 = vmatpush1.msra.mxu0 %v1028
        %1738 = vmatprep.subr.mxu0 %v1033
        %1739 = vmatpush1.msra.mxu0 %v1032
        %1740 = vmatprep.subr.mxu0 %v1037
        %1741 = vmatpush1.msra.mxu0 %v1036
        %1742 = vmatprep.subr.mxu0 %v1041
        %1743 = vmatpush1.msra.mxu0 %v1040
        %1744 = vmatprep.subr.mxu0 %v1045
        %1745 = vmatpush1.msra.mxu0 %v1044
        %1746 = vmatprep.subr.mxu0 %v1049
        %1747 = vmatpush1.msra.mxu0 %v1048
        %1748 = vmatprep.subr.mxu0 %v1053
        %1749 = vmatpush1.msra.mxu0 %v1052
        %1750 = vmatprep.subr.mxu0 %v1057
        %1751 = vmatpush1.msra.mxu0 %v1056
        %1752 = vmatprep.subr.mxu0 %v1061
        %1753 = vmatpush1.msra.mxu0 %v1060
        %1754 = vmatprep.subr.mxu0 %v1065
        %1755 = vmatpush1.msra.mxu0 %v1064
        %1756 = vmatprep.subr.mxu0 %v1069
        %1757 = vmatpush1.msra.mxu0 %v1068
        %1758 = vmatprep.subr.mxu0 %v1073
        %1759 = vmatpush1.msra.mxu0 %v1072
        %1760 = vmatprep.subr.mxu0 %v1077
        %1761 = vmatpush1.msra.mxu0 %v1076
        %1762 = vmatprep.subr.mxu0 %v1081
        %1763 = vmatpush1.msra.mxu0 %v1080
        %1764 = vmatprep.subr.mxu0 %v1085
        %1765 = vmatpush1.msra.mxu0 %v1084
        %1766 = vmatprep.subr.mxu0 %v1089
        %1767 = vmatpush1.msra.mxu0 %v1088
        %1768 = vmatprep.subr.mxu0 %v1093
        %1769 = vmatpush1.msra.mxu0 %v1092
        %1770 = vmatprep.subr.mxu0 %v1097
        %1771 = vmatpush1.msra.mxu0 %v1096
        %1772 = vmatprep.subr.mxu0 %v1101
        %1773 = vmatpush1.msra.mxu0 %v1100
        %1774 = vmatprep.subr.mxu0 %v1105
        %1775 = vmatpush1.msra.mxu0 %v1104
        %1776 = vmatprep.subr.mxu0 %v1109
        %1777 = vmatpush1.msra.mxu0 %v1108
        %1778 = vmatprep.subr.mxu0 %v1113
        %1779 = vmatpush1.msra.mxu0 %v1112
        %1780 = vmatprep.mubr.f32.mxu0 %v813
        %1781 = vmatmul.mubr.f32.gmra.mrb[0].mxu0 %v812
        %v1782 = vpop.f32.mrb[0].mxu0
        %v1783 = vadd.f32 %v1670, %v1782
        %v1784 = vpop.f32.mrb[0].mxu0
        %v1785 = vadd.f32 %v1672, %v1784
        %1786 = vmatprep.mubr.f32.mxu0 %v819
        %1787 = vmatmul.mubr.f32.gmra.mrb[0].mxu0 %v818
        %v1788 = vpop.f32.mrb[0].mxu0
        %v1789 = vadd.f32 %v1676, %v1788
        %v1790 = vpop.f32.mrb[0].mxu0
        %v1791 = vadd.f32 %v1678, %v1790
        %1792 = vmatprep.mubr.f32.mxu0 %v825
        %1793 = vmatmul.mubr.f32.gmra.mrb[0].mxu0 %v824
        %v1794 = vpop.f32.mrb[0].mxu0
        %v1795 = vadd.f32 %v1682, %v1794
        %v1796 = vpop.f32.mrb[0].mxu0
        %v1797 = vadd.f32 %v1684, %v1796
        %1798 = vmatprep.mubr.f32.mxu0 %v831
        %1799 = vmatmul.mubr.f32.gmra.mrb[0].mxu0 %v830
        %v1800 = vpop.f32.mrb[0].mxu0
        %v1801 = vadd.f32 %v1688, %v1800
        %v1802 = vpop.f32.mrb[0].mxu0
        %v1803 = vadd.f32 %v1690, %v1802
        %1804 = vmatprep.mubr.f32.mxu0 %v837
        %1805 = vmatmul.mubr.f32.gmra.mrb[0].mxu0 %v836
        %v1806 = vpop.f32.mrb[0].mxu0
        %v1807 = vadd.f32 %v1694, %v1806
        %v1808 = vpop.f32.mrb[0].mxu0
        %v1809 = vadd.f32 %v1696, %v1808
        %1810 = vmatprep.mubr.f32.mxu0 %v843
        %1811 = vmatmul.mubr.f32.gmra.mrb[0].mxu0 %v842
        %v1812 = vpop.f32.mrb[0].mxu0
        %v1813 = vadd.f32 %v1700, %v1812
        %v1814 = vpop.f32.mrb[0].mxu0
        %v1815 = vadd.f32 %v1702, %v1814
        %1816 = vmatprep.mubr.f32.mxu0 %v849
        %1817 = vmatmul.mubr.f32.gmra.mrb[0].mxu0 %v848
        %v1818 = vpop.f32.mrb[0].mxu0
        %v1819 = vadd.f32 %v1706, %v1818
        %v1820 = vpop.f32.mrb[0].mxu0
        %v1821 = vadd.f32 %v1708, %v1820
        %1822 = vmatprep.mubr.f32.mxu0 %v855
        %1823 = vmatmul.mubr.f32.gmra.mrb[0].mxu0 %v854
        %v1824 = vpop.f32.mrb[0].mxu0
        %v1825 = vadd.f32 %v1712, %v1824
        %v1826 = vpop.f32.mrb[0].mxu0
        %v1827 = vadd.f32 %v1714, %v1826
        %1828 = vdwg.mxu0
        %1829 = vmatprep.subr.mxu0 %v1117
        %1830 = vmatpush1.msra.mxu0 %v1116
        %1831 = vmatprep.subr.mxu0 %v1121
        %1832 = vmatpush1.msra.mxu0 %v1120
        %1833 = vmatprep.subr.mxu0 %v1125
        %1834 = vmatpush1.msra.mxu0 %v1124
        %1835 = vmatprep.subr.mxu0 %v1129
        %1836 = vmatpush1.msra.mxu0 %v1128
        %1837 = vmatprep.subr.mxu0 %v1133
        %1838 = vmatpush1.msra.mxu0 %v1132
        %1839 = vmatprep.subr.mxu0 %v1137
        %1840 = vmatpush1.msra.mxu0 %v1136
        %1841 = vmatprep.subr.mxu0 %v1141
        %1842 = vmatpush1.msra.mxu0 %v1140
        %1843 = vmatprep.subr.mxu0 %v1145
        %1844 = vmatpush1.msra.mxu0 %v1144
        %1845 = vmatprep.subr.mxu0 %v1149
        %1846 = vmatpush1.msra.mxu0 %v1148
        %1847 = vmatprep.subr.mxu0 %v1153
        %1848 = vmatpush1.msra.mxu0 %v1152
        %1849 = vmatprep.subr.mxu0 %v1157
        %1850 = vmatpush1.msra.mxu0 %v1156
        %1851 = vmatprep.subr.mxu0 %v1161
        %1852 = vmatpush1.msra.mxu0 %v1160
        %1853 = vmatprep.subr.mxu0 %v1165
        %1854 = vmatpush1.msra.mxu0 %v1164
        %1855 = vmatprep.subr.mxu0 %v1169
        %1856 = vmatpush1.msra.mxu0 %v1168
        %1857 = vmatprep.subr.mxu0 %v1173
        %1858 = vmatpush1.msra.mxu0 %v1172
        %1859 = vmatprep.subr.mxu0 %v1177
        %1860 = vmatpush1.msra.mxu0 %v1176
        %1861 = vmatprep.subr.mxu0 %v1181
        %1862 = vmatpush1.msra.mxu0 %v1180
        %1863 = vmatprep.subr.mxu0 %v1185
        %1864 = vmatpush1.msra.mxu0 %v1184
        %1865 = vmatprep.subr.mxu0 %v1189
        %1866 = vmatpush1.msra.mxu0 %v1188
        %1867 = vmatprep.subr.mxu0 %v1193
        %1868 = vmatpush1.msra.mxu0 %v1192
        %1869 = vmatprep.subr.mxu0 %v1197
        %1870 = vmatpush1.msra.mxu0 %v1196
        %1871 = vmatprep.subr.mxu0 %v1201
        %1872 = vmatpush1.msra.mxu0 %v1200
        %1873 = vmatprep.subr.mxu0 %v1205
        %1874 = vmatpush1.msra.mxu0 %v1204
        %1875 = vmatprep.subr.mxu0 %v1209
        %1876 = vmatpush1.msra.mxu0 %v1208
        %1877 = vmatprep.subr.mxu0 %v1213
        %1878 = vmatpush1.msra.mxu0 %v1212
        %1879 = vmatprep.subr.mxu0 %v1217
        %1880 = vmatpush1.msra.mxu0 %v1216
        %1881 = vmatprep.subr.mxu0 %v1221
        %1882 = vmatpush1.msra.mxu0 %v1220
        %1883 = vmatprep.subr.mxu0 %v1225
        %1884 = vmatpush1.msra.mxu0 %v1224
        %1885 = vmatprep.subr.mxu0 %v1229
        %1886 = vmatpush1.msra.mxu0 %v1228
        %1887 = vmatprep.subr.mxu0 %v1233
        %1888 = vmatpush1.msra.mxu0 %v1232
        %1889 = vmatprep.subr.mxu0 %v1237
        %1890 = vmatpush1.msra.mxu0 %v1236
        %1891 = vmatprep.subr.mxu0 %v1241
        %1892 = vmatpush1.msra.mxu0 %v1240
        %1893 = vmatprep.mubr.f32.mxu0 %v815
        %1894 = vmatmul.mubr.f32.gmra.mrb[0].mxu0 %v814
        %v1895 = vpop.f32.mrb[0].mxu0
        %v1896 = vadd.f32 %v1783, %v1895
        %v1897 = vpop.f32.mrb[0].mxu0
        %v1898 = vadd.f32 %v1785, %v1897
        %1899 = vmatprep.mubr.f32.mxu0 %v821
        %1900 = vmatmul.mubr.f32.gmra.mrb[0].mxu0 %v820
        %v1901 = vpop.f32.mrb[0].mxu0
        %v1902 = vadd.f32 %v1789, %v1901
        %v1903 = vpop.f32.mrb[0].mxu0
        %v1904 = vadd.f32 %v1791, %v1903
        %1905 = vmatprep.mubr.f32.mxu0 %v827
        %1906 = vmatmul.mubr.f32.gmra.mrb[0].mxu0 %v826
        %v1907 = vpop.f32.mrb[0].mxu0
        %v1908 = vadd.f32 %v1795, %v1907
        %v1909 = vpop.f32.mrb[0].mxu0
        %v1910 = vadd.f32 %v1797, %v1909
        %1911 = vmatprep.mubr.f32.mxu0 %v833
        %1912 = vmatmul.mubr.f32.gmra.mrb[0].mxu0 %v832
        %v1913 = vpop.f32.mrb[0].mxu0
        %v1914 = vadd.f32 %v1801, %v1913
        %v1915 = vpop.f32.mrb[0].mxu0
        %v1916 = vadd.f32 %v1803, %v1915
        %1917 = vmatprep.mubr.f32.mxu0 %v839
        %1918 = vmatmul.mubr.f32.gmra.mrb[0].mxu0 %v838
        %v1919 = vpop.f32.mrb[0].mxu0
        %v1920 = vadd.f32 %v1807, %v1919
        %v1921 = vpop.f32.mrb[0].mxu0
        %v1922 = vadd.f32 %v1809, %v1921
        %1923 = vmatprep.mubr.f32.mxu0 %v845
        %1924 = vmatmul.mubr.f32.gmra.mrb[0].mxu0 %v844
        %v1925 = vpop.f32.mrb[0].mxu0
        %v1926 = vadd.f32 %v1813, %v1925
        %v1927 = vpop.f32.mrb[0].mxu0
        %v1928 = vadd.f32 %v1815, %v1927
        %1929 = vmatprep.mubr.f32.mxu0 %v851
        %1930 = vmatmul.mubr.f32.gmra.mrb[0].mxu0 %v850
        %v1931 = vpop.f32.mrb[0].mxu0
        %v1932 = vadd.f32 %v1819, %v1931
        %v1933 = vpop.f32.mrb[0].mxu0
        %v1934 = vadd.f32 %v1821, %v1933
        %1935 = vmatprep.mubr.f32.mxu0 %v857
        %1936 = vmatmul.mubr.f32.gmra.mrb[0].mxu0 %v856
        %v1937 = vpop.f32.mrb[0].mxu0
        %v1938 = vadd.f32 %v1825, %v1937
        %v1939 = vpop.f32.mrb[0].mxu0
        %v1940 = vadd.f32 %v1827, %v1939
        %1941 = vdwg.mxu0
        %1942 = vst [vmem:[#allocation2] sm:$0xff] %v1557
        %1943 = vst [vmem:[#allocation2 + $0x8] sm:$0xff] %v1559
        %1944 = vst [vmem:[#allocation2 + $0x10] sm:$0xff] %v1896
        %1945 = vst [vmem:[#allocation2 + $0x18] sm:$0xff] %v1898
        %1946 = vst [vmem:[#allocation2 + $0x20] sm:$0xff] %v1563
        %1947 = vst [vmem:[#allocation2 + $0x28] sm:$0xff] %v1565
        %1948 = vst [vmem:[#allocation2 + $0x30] sm:$0xff] %v1902
        %1949 = vst [vmem:[#allocation2 + $0x38] sm:$0xff] %v1904
        %1950 = vst [vmem:[#allocation2 + $0x40] sm:$0xff] %v1569
        %1951 = vst [vmem:[#allocation2 + $0x48] sm:$0xff] %v1571
        %1952 = vst [vmem:[#allocation2 + $0x50] sm:$0xff] %v1908
        %1953 = vst [vmem:[#allocation2 + $0x58] sm:$0xff] %v1910
        %1954 = vst [vmem:[#allocation2 + $0x60] sm:$0xff] %v1575
        %1955 = vst [vmem:[#allocation2 + $0x68] sm:$0xff] %v1577
        %1956 = vst [vmem:[#allocation2 + $0x70] sm:$0xff] %v1914
        %1957 = vst [vmem:[#allocation2 + $0x78] sm:$0xff] %v1916
        %1958 = vst [vmem:[#allocation2 + $0x80] sm:$0xff] %v1581
        %1959 = vst [vmem:[#allocation2 + $0x88] sm:$0xff] %v1583
        %1960 = vst [vmem:[#allocation2 + $0x90] sm:$0xff] %v1920
        %1961 = vst [vmem:[#allocation2 + $0x98] sm:$0xff] %v1922
        %1962 = vst [vmem:[#allocation2 + $0xa0] sm:$0xff] %v1587
        %1963 = vst [vmem:[#allocation2 + $0xa8] sm:$0xff] %v1589
        %1964 = vst [vmem:[#allocation2 + $0xb0] sm:$0xff] %v1926
        %1965 = vst [vmem:[#allocation2 + $0xb8] sm:$0xff] %v1928
        %1966 = vst [vmem:[#allocation2 + $0xc0] sm:$0xff] %v1593
        %1967 = vst [vmem:[#allocation2 + $0xc8] sm:$0xff] %v1595
        %1968 = vst [vmem:[#allocation2 + $0xd0] sm:$0xff] %v1932
        %1969 = vst [vmem:[#allocation2 + $0xd8] sm:$0xff] %v1934
        %1970 = vst [vmem:[#allocation2 + $0xe0] sm:$0xff] %v1599
        %1971 = vst [vmem:[#allocation2 + $0xe8] sm:$0xff] %v1601
        %1972 = vst [vmem:[#allocation2 + $0xf0] sm:$0xff] %v1938
        %1973 = vst [vmem:[#allocation2 + $0xf8] sm:$0xff] %v1940
        %v1974 = vld [vmem:[#allocation2] sm:$0xff]
        %v1975 = vld [vmem:[#allocation2 + $0x8] sm:$0xff]
        %v1976 = vld [vmem:[#allocation2 + $0x10] sm:$0xff]
        %v1977 = vld [vmem:[#allocation2 + $0x18] sm:$0xff]
        %s1978 = scalar_lea.vmem [#allocation2], 224
        %v1979 = vld [vmem:[%s1978] sm:$0xff]
        %v1980 = vld [vmem:[%s1978 + $0x8] sm:$0xff]
        %v1981 = vld [vmem:[%s1978 + $0x10] sm:$0xff]
        %v1982 = vld [vmem:[%s1978 + $0x18] sm:$0xff]
        %v1983 = vsel %vm805, 1, 0
        %v1984 = vsel %vm806, 1, 0
        %v1985 = vsel %vm807, 1, 0
        %v1986 = vsel %vm808, 1, 0
        %vm1987 = vcmp.eq.s32.totalorder %v1983, 1
        %vm1988 = vcmp.eq.s32.totalorder %v1984, 1
        %vm1989 = vcmp.eq.s32.totalorder %v1985, 1
        %vm1990 = vcmp.eq.s32.totalorder %v1986, 1
        %v1991 = vsel %vm1987, %v1974, %v1979
        %v1992 = vsel %vm1988, %v1975, %v1980
        %v1993 = vsel %vm1989, %v1976, %v1981
        %v1994 = vsel %vm1990, %v1977, %v1982
        %1995 = vst [vmem:[#allocation3] sm:$0xff] %v1991
        %1996 = vst [vmem:[#allocation3 + $0x8] sm:$0xff] %v1992
        %1997 = vst [vmem:[#allocation3 + $0x10] sm:$0xff] %v1993
        %1998 = vst [vmem:[#allocation3 + $0x18] sm:$0xff] %v1994
        %s1999 = scalar_lea.vmem [#allocation2], 32
        %v2000 = vld [vmem:[%s1999] sm:$0xff]
        %v2001 = vld [vmem:[%s1999 + $0x8] sm:$0xff]
        %v2002 = vld [vmem:[%s1999 + $0x10] sm:$0xff]
        %v2003 = vld [vmem:[%s1999 + $0x18] sm:$0xff]
        %s2004 = scalar_lea.vmem [#allocation2], 192
        %v2005 = vld [vmem:[%s2004] sm:$0xff]
        %v2006 = vld [vmem:[%s2004 + $0x8] sm:$0xff]
        %v2007 = vld [vmem:[%s2004 + $0x10] sm:$0xff]
        %v2008 = vld [vmem:[%s2004 + $0x18] sm:$0xff]
        %v2009 = vsel %vm1987, %v2000, %v2005
        %v2010 = vsel %vm1988, %v2001, %v2006
        %v2011 = vsel %vm1989, %v2002, %v2007
        %v2012 = vsel %vm1990, %v2003, %v2008
        %s2013 = scalar_lea.vmem [#allocation3], 32
        %2014 = vst [vmem:[%s2013] sm:$0xff] %v2009
        %2015 = vst [vmem:[%s2013 + $0x8] sm:$0xff] %v2010
        %2016 = vst [vmem:[%s2013 + $0x10] sm:$0xff] %v2011
        %2017 = vst [vmem:[%s2013 + $0x18] sm:$0xff] %v2012
        %s2018 = scalar_lea.vmem [#allocation2], 64
        %v2019 = vld [vmem:[%s2018] sm:$0xff]
        %v2020 = vld [vmem:[%s2018 + $0x8] sm:$0xff]
        %v2021 = vld [vmem:[%s2018 + $0x10] sm:$0xff]
        %v2022 = vld [vmem:[%s2018 + $0x18] sm:$0xff]
        %s2023 = scalar_lea.vmem [#allocation2], 160
        %v2024 = vld [vmem:[%s2023] sm:$0xff]
        %v2025 = vld [vmem:[%s2023 + $0x8] sm:$0xff]
        %v2026 = vld [vmem:[%s2023 + $0x10] sm:$0xff]
        %v2027 = vld [vmem:[%s2023 + $0x18] sm:$0xff]
        %v2028 = vsel %vm1987, %v2019, %v2024
        %v2029 = vsel %vm1988, %v2020, %v2025
        %v2030 = vsel %vm1989, %v2021, %v2026
        %v2031 = vsel %vm1990, %v2022, %v2027
        %s2032 = scalar_lea.vmem [#allocation3], 64
        %2033 = vst [vmem:[%s2032] sm:$0xff] %v2028
        %2034 = vst [vmem:[%s2032 + $0x8] sm:$0xff] %v2029
        %2035 = vst [vmem:[%s2032 + $0x10] sm:$0xff] %v2030
        %2036 = vst [vmem:[%s2032 + $0x18] sm:$0xff] %v2031
        %s2037 = scalar_lea.vmem [#allocation2], 96
        %v2038 = vld [vmem:[%s2037] sm:$0xff]
        %v2039 = vld [vmem:[%s2037 + $0x8] sm:$0xff]
        %v2040 = vld [vmem:[%s2037 + $0x10] sm:$0xff]
        %v2041 = vld [vmem:[%s2037 + $0x18] sm:$0xff]
        %s2042 = scalar_lea.vmem [#allocation2], 128
        %v2043 = vld [vmem:[%s2042] sm:$0xff]
        %v2044 = vld [vmem:[%s2042 + $0x8] sm:$0xff]
        %v2045 = vld [vmem:[%s2042 + $0x10] sm:$0xff]
        %v2046 = vld [vmem:[%s2042 + $0x18] sm:$0xff]
        %v2047 = vsel %vm1987, %v2038, %v2043
        %v2048 = vsel %vm1988, %v2039, %v2044
        %v2049 = vsel %vm1989, %v2040, %v2045
        %v2050 = vsel %vm1990, %v2041, %v2046
        %s2051 = scalar_lea.vmem [#allocation3], 96
        %2052 = vst [vmem:[%s2051] sm:$0xff] %v2047
        %2053 = vst [vmem:[%s2051 + $0x8] sm:$0xff] %v2048
        %2054 = vst [vmem:[%s2051 + $0x10] sm:$0xff] %v2049
        %2055 = vst [vmem:[%s2051 + $0x18] sm:$0xff] %v2050
        %v2056 = vld [vmem:[%s2042] sm:$0xff]
        %v2057 = vld [vmem:[%s2042 + $0x8] sm:$0xff]
        %v2058 = vld [vmem:[%s2042 + $0x10] sm:$0xff]
        %v2059 = vld [vmem:[%s2042 + $0x18] sm:$0xff]
        %v2060 = vld [vmem:[%s2037] sm:$0xff]
        %v2061 = vld [vmem:[%s2037 + $0x8] sm:$0xff]
        %v2062 = vld [vmem:[%s2037 + $0x10] sm:$0xff]
        %v2063 = vld [vmem:[%s2037 + $0x18] sm:$0xff]
        %v2064 = vsel %vm1987, %v2056, %v2060
        %v2065 = vsel %vm1988, %v2057, %v2061
        %v2066 = vsel %vm1989, %v2058, %v2062
        %v2067 = vsel %vm1990, %v2059, %v2063
        %s2068 = scalar_lea.vmem [#allocation3], 128
        %2069 = vst [vmem:[%s2068] sm:$0xff] %v2064
        %2070 = vst [vmem:[%s2068 + $0x8] sm:$0xff] %v2065
        %2071 = vst [vmem:[%s2068 + $0x10] sm:$0xff] %v2066
        %2072 = vst [vmem:[%s2068 + $0x18] sm:$0xff] %v2067
        %v2073 = vld [vmem:[%s2023] sm:$0xff]
        %v2074 = vld [vmem:[%s2023 + $0x8] sm:$0xff]
        %v2075 = vld [vmem:[%s2023 + $0x10] sm:$0xff]
        %v2076 = vld [vmem:[%s2023 + $0x18] sm:$0xff]
        %v2077 = vld [vmem:[%s2018] sm:$0xff]
        %v2078 = vld [vmem:[%s2018 + $0x8] sm:$0xff]
        %v2079 = vld [vmem:[%s2018 + $0x10] sm:$0xff]
        %v2080 = vld [vmem:[%s2018 + $0x18] sm:$0xff]
        %v2081 = vsel %vm1987, %v2073, %v2077
        %v2082 = vsel %vm1988, %v2074, %v2078
        %v2083 = vsel %vm1989, %v2075, %v2079
        %v2084 = vsel %vm1990, %v2076, %v2080
        %s2085 = scalar_lea.vmem [#allocation3], 160
        %2086 = vst [vmem:[%s2085] sm:$0xff] %v2081
        %2087 = vst [vmem:[%s2085 + $0x8] sm:$0xff] %v2082
        %2088 = vst [vmem:[%s2085 + $0x10] sm:$0xff] %v2083
        %2089 = vst [vmem:[%s2085 + $0x18] sm:$0xff] %v2084
        %v2090 = vld [vmem:[%s2004] sm:$0xff]
        %v2091 = vld [vmem:[%s2004 + $0x8] sm:$0xff]
        %v2092 = vld [vmem:[%s2004 + $0x10] sm:$0xff]
        %v2093 = vld [vmem:[%s2004 + $0x18] sm:$0xff]
        %v2094 = vld [vmem:[%s1999] sm:$0xff]
        %v2095 = vld [vmem:[%s1999 + $0x8] sm:$0xff]
        %v2096 = vld [vmem:[%s1999 + $0x10] sm:$0xff]
        %v2097 = vld [vmem:[%s1999 + $0x18] sm:$0xff]
        %v2098 = vsel %vm1987, %v2090, %v2094
        %v2099 = vsel %vm1988, %v2091, %v2095
        %v2100 = vsel %vm1989, %v2092, %v2096
        %v2101 = vsel %vm1990, %v2093, %v2097
        %s2102 = scalar_lea.vmem [#allocation3], 192
        %2103 = vst [vmem:[%s2102] sm:$0xff] %v2098
        %2104 = vst [vmem:[%s2102 + $0x8] sm:$0xff] %v2099
        %2105 = vst [vmem:[%s2102 + $0x10] sm:$0xff] %v2100
        %2106 = vst [vmem:[%s2102 + $0x18] sm:$0xff] %v2101
        %v2107 = vld [vmem:[%s1978] sm:$0xff]
        %v2108 = vld [vmem:[%s1978 + $0x8] sm:$0xff]
        %v2109 = vld [vmem:[%s1978 + $0x10] sm:$0xff]
        %v2110 = vld [vmem:[%s1978 + $0x18] sm:$0xff]
        %v2111 = vld [vmem:[#allocation2] sm:$0xff]
        %v2112 = vld [vmem:[#allocation2 + $0x8] sm:$0xff]
        %v2113 = vld [vmem:[#allocation2 + $0x10] sm:$0xff]
        %v2114 = vld [vmem:[#allocation2 + $0x18] sm:$0xff]
        %v2115 = vsel %vm1987, %v2107, %v2111
        %v2116 = vsel %vm1988, %v2108, %v2112
        %v2117 = vsel %vm1989, %v2109, %v2113
        %v2118 = vsel %vm1990, %v2110, %v2114
        %s2119 = scalar_lea.vmem [#allocation3], 224
        %2120 = vst [vmem:[%s2119] sm:$0xff] %v2115
        %2121 = vst [vmem:[%s2119 + $0x8] sm:$0xff] %v2116
        %2122 = vst [vmem:[%s2119 + $0x10] sm:$0xff] %v2117
        %2123 = vst [vmem:[%s2119 + $0x18] sm:$0xff] %v2118
        %v2124 = vld [vmem:[#allocation3] sm:$0xff]
        %v2125 = vld [vmem:[#allocation3 + $0x8] sm:$0xff]
        %v2126 = vld [vmem:[#allocation3 + $0x10] sm:$0xff]
        %v2127 = vld [vmem:[#allocation3 + $0x18] sm:$0xff]
        %v2128 = vld [vmem:[%s4] sm:$0xff]
        %v2129 = vld [vmem:[%s4 + $0x8] sm:$0xff]
        %v2130 = vld [vmem:[%s4 + $0x10] sm:$0xff]
        %v2131 = vld [vmem:[%s4 + $0x18] sm:$0xff]
        %v2132 = vld [vmem:[%s4 + $0x20] sm:$0xff]
        %v2133 = vld [vmem:[%s4 + $0x28] sm:$0xff]
        %v2134 = vld [vmem:[%s4 + $0x30] sm:$0xff]
        %v2135 = vld [vmem:[%s4 + $0x38] sm:$0xff]
        %v2136 = vld [vmem:[%s4 + $0x40] sm:$0xff]
        %v2137 = vld [vmem:[%s4 + $0x48] sm:$0xff]
        %v2138 = vld [vmem:[%s4 + $0x50] sm:$0xff]
        %v2139 = vld [vmem:[%s4 + $0x58] sm:$0xff]
        %v2140 = vld [vmem:[%s4 + $0x60] sm:$0xff]
        %v2141 = vld [vmem:[%s4 + $0x68] sm:$0xff]
        %v2142 = vld [vmem:[%s4 + $0x70] sm:$0xff]
        %v2143 = vld [vmem:[%s4 + $0x78] sm:$0xff]
        %v2144 = vld [vmem:[%s4 + $0x80] sm:$0xff]
        %v2145 = vld [vmem:[%s4 + $0x88] sm:$0xff]
        %v2146 = vld [vmem:[%s4 + $0x90] sm:$0xff]
        %v2147 = vld [vmem:[%s4 + $0x98] sm:$0xff]
        %v2148 = vld [vmem:[%s4 + $0xa0] sm:$0xff]
        %v2149 = vld [vmem:[%s4 + $0xa8] sm:$0xff]
        %v2150 = vld [vmem:[%s4 + $0xb0] sm:$0xff]
        %v2151 = vld [vmem:[%s4 + $0xb8] sm:$0xff]
        %v2152 = vld [vmem:[%s4 + $0xc0] sm:$0xff]
        %v2153 = vld [vmem:[%s4 + $0xc8] sm:$0xff]
        %v2154 = vld [vmem:[%s4 + $0xd0] sm:$0xff]
        %v2155 = vld [vmem:[%s4 + $0xd8] sm:$0xff]
        %v2156 = vld [vmem:[%s4 + $0xe0] sm:$0xff]
        %v2157 = vld [vmem:[%s4 + $0xe8] sm:$0xff]
        %v2158 = vld [vmem:[%s4 + $0xf0] sm:$0xff]
        %v2159 = vld [vmem:[%s4 + $0xf8] sm:$0xff]
        %v2160 = vld [vmem:[%s4 + $0x100] sm:$0xff]
        %v2161 = vld [vmem:[%s4 + $0x108] sm:$0xff]
        %v2162 = vld [vmem:[%s4 + $0x110] sm:$0xff]
        %v2163 = vld [vmem:[%s4 + $0x118] sm:$0xff]
        %v2164 = vld [vmem:[%s4 + $0x120] sm:$0xff]
        %v2165 = vld [vmem:[%s4 + $0x128] sm:$0xff]
        %v2166 = vld [vmem:[%s4 + $0x130] sm:$0xff]
        %v2167 = vld [vmem:[%s4 + $0x138] sm:$0xff]
        %v2168 = vld [vmem:[%s4 + $0x140] sm:$0xff]
        %v2169 = vld [vmem:[%s4 + $0x148] sm:$0xff]
        %v2170 = vld [vmem:[%s4 + $0x150] sm:$0xff]
        %v2171 = vld [vmem:[%s4 + $0x158] sm:$0xff]
        %v2172 = vld [vmem:[%s4 + $0x160] sm:$0xff]
        %v2173 = vld [vmem:[%s4 + $0x168] sm:$0xff]
        %v2174 = vld [vmem:[%s4 + $0x170] sm:$0xff]
        %v2175 = vld [vmem:[%s4 + $0x178] sm:$0xff]
        %v2176 = vld [vmem:[%s4 + $0x180] sm:$0xff]
        %v2177 = vld [vmem:[%s4 + $0x188] sm:$0xff]
        %v2178 = vld [vmem:[%s4 + $0x190] sm:$0xff]
        %v2179 = vld [vmem:[%s4 + $0x198] sm:$0xff]
        %v2180 = vld [vmem:[%s4 + $0x1a0] sm:$0xff]
        %v2181 = vld [vmem:[%s4 + $0x1a8] sm:$0xff]
        %v2182 = vld [vmem:[%s4 + $0x1b0] sm:$0xff]
        %v2183 = vld [vmem:[%s4 + $0x1b8] sm:$0xff]
        %v2184 = vld [vmem:[%s4 + $0x1c0] sm:$0xff]
        %v2185 = vld [vmem:[%s4 + $0x1c8] sm:$0xff]
        %v2186 = vld [vmem:[%s4 + $0x1d0] sm:$0xff]
        %v2187 = vld [vmem:[%s4 + $0x1d8] sm:$0xff]
        %v2188 = vld [vmem:[%s4 + $0x1e0] sm:$0xff]
        %v2189 = vld [vmem:[%s4 + $0x1e8] sm:$0xff]
        %v2190 = vld [vmem:[%s4 + $0x1f0] sm:$0xff]
        %v2191 = vld [vmem:[%s4 + $0x1f8] sm:$0xff]
        %2192 = vmatprep.subr.mxu0 %v2129
        %2193 = vmatpush1.msra.mxu0 %v2128
        %2194 = vmatprep.subr.mxu0 %v2133
        %2195 = vmatpush1.msra.mxu0 %v2132
        %2196 = vmatprep.subr.mxu0 %v2137
        %2197 = vmatpush1.msra.mxu0 %v2136
        %2198 = vmatprep.subr.mxu0 %v2141
        %2199 = vmatpush1.msra.mxu0 %v2140
        %2200 = vmatprep.subr.mxu0 %v2145
        %2201 = vmatpush1.msra.mxu0 %v2144
        %2202 = vmatprep.subr.mxu0 %v2149
        %2203 = vmatpush1.msra.mxu0 %v2148
        %2204 = vmatprep.subr.mxu0 %v2153
        %2205 = vmatpush1.msra.mxu0 %v2152
        %2206 = vmatprep.subr.mxu0 %v2157
        %2207 = vmatpush1.msra.mxu0 %v2156
        %2208 = vmatprep.subr.mxu0 %v2161
        %2209 = vmatpush1.msra.mxu0 %v2160
        %2210 = vmatprep.subr.mxu0 %v2165
        %2211 = vmatpush1.msra.mxu0 %v2164
        %2212 = vmatprep.subr.mxu0 %v2169
        %2213 = vmatpush1.msra.mxu0 %v2168
        %2214 = vmatprep.subr.mxu0 %v2173
        %2215 = vmatpush1.msra.mxu0 %v2172
        %2216 = vmatprep.subr.mxu0 %v2177
        %2217 = vmatpush1.msra.mxu0 %v2176
        %2218 = vmatprep.subr.mxu0 %v2181
        %2219 = vmatpush1.msra.mxu0 %v2180
        %2220 = vmatprep.subr.mxu0 %v2185
        %2221 = vmatpush1.msra.mxu0 %v2184
        %2222 = vmatprep.subr.mxu0 %v2189
        %2223 = vmatpush1.msra.mxu0 %v2188
        %2224 = vmatprep.subr.mxu0 0.0
        %2225 = vmatpush1.msra.mxu0 0.0
        %2226 = vmatprep.subr.mxu0 0.0
        %2227 = vmatpush1.msra.mxu0 0.0
        %2228 = vmatprep.subr.mxu0 0.0
        %2229 = vmatpush1.msra.mxu0 0.0
        %2230 = vmatprep.subr.mxu0 0.0
        %2231 = vmatpush1.msra.mxu0 0.0
        %2232 = vmatprep.subr.mxu0 0.0
        %2233 = vmatpush1.msra.mxu0 0.0
        %2234 = vmatprep.subr.mxu0 0.0
        %2235 = vmatpush1.msra.mxu0 0.0
        %2236 = vmatprep.subr.mxu0 0.0
        %2237 = vmatpush1.msra.mxu0 0.0
        %2238 = vmatprep.subr.mxu0 0.0
        %2239 = vmatpush1.msra.mxu0 0.0
        %2240 = vmatprep.subr.mxu0 0.0
        %2241 = vmatpush1.msra.mxu0 0.0
        %2242 = vmatprep.subr.mxu0 0.0
        %2243 = vmatpush1.msra.mxu0 0.0
        %2244 = vmatprep.subr.mxu0 0.0
        %2245 = vmatpush1.msra.mxu0 0.0
        %2246 = vmatprep.subr.mxu0 0.0
        %2247 = vmatpush1.msra.mxu0 0.0
        %2248 = vmatprep.subr.mxu0 0.0
        %2249 = vmatpush1.msra.mxu0 0.0
        %2250 = vmatprep.subr.mxu0 0.0
        %2251 = vmatpush1.msra.mxu0 0.0
        %2252 = vmatprep.subr.mxu0 0.0
        %2253 = vmatpush1.msra.mxu0 0.0
        %2254 = vmatprep.subr.mxu0 0.0
        %2255 = vmatpush1.msra.mxu0 0.0
        %2256 = vmatprep.mubr.f32.mxu0 0.0
        %2257 = vmatmul.mubr.f32.gmra.mrb[0].mxu0 0.0
        %v2258 = vpop.f32.mrb[0].mxu0
        %v2259 = vadd.f32 0.0, %v2258
        %v2260 = vpop.f32.mrb[0].mxu0
        %v2261 = vadd.f32 0.0, %v2260
        %2262 = vdwg.mxu0
        %2263 = vmatprep.subr.mxu0 %v2131
        %2264 = vmatpush1.msra.mxu0 %v2130
        %2265 = vmatprep.subr.mxu0 %v2135
        %2266 = vmatpush1.msra.mxu0 %v2134
        %2267 = vmatprep.subr.mxu0 %v2139
        %2268 = vmatpush1.msra.mxu0 %v2138
        %2269 = vmatprep.subr.mxu0 %v2143
        %2270 = vmatpush1.msra.mxu0 %v2142
        %2271 = vmatprep.subr.mxu0 %v2147
        %2272 = vmatpush1.msra.mxu0 %v2146
        %2273 = vmatprep.subr.mxu0 %v2151
        %2274 = vmatpush1.msra.mxu0 %v2150
        %2275 = vmatprep.subr.mxu0 %v2155
        %2276 = vmatpush1.msra.mxu0 %v2154
        %2277 = vmatprep.subr.mxu0 %v2159
        %2278 = vmatpush1.msra.mxu0 %v2158
        %2279 = vmatprep.subr.mxu0 %v2163
        %2280 = vmatpush1.msra.mxu0 %v2162
        %2281 = vmatprep.subr.mxu0 %v2167
        %2282 = vmatpush1.msra.mxu0 %v2166
        %2283 = vmatprep.subr.mxu0 %v2171
        %2284 = vmatpush1.msra.mxu0 %v2170
        %2285 = vmatprep.subr.mxu0 %v2175
        %2286 = vmatpush1.msra.mxu0 %v2174
        %2287 = vmatprep.subr.mxu0 %v2179
        %2288 = vmatpush1.msra.mxu0 %v2178
        %2289 = vmatprep.subr.mxu0 %v2183
        %2290 = vmatpush1.msra.mxu0 %v2182
        %2291 = vmatprep.subr.mxu0 %v2187
        %2292 = vmatpush1.msra.mxu0 %v2186
        %2293 = vmatprep.subr.mxu0 %v2191
        %2294 = vmatpush1.msra.mxu0 %v2190
        %2295 = vmatprep.subr.mxu0 0.0
        %2296 = vmatpush1.msra.mxu0 0.0
        %2297 = vmatprep.subr.mxu0 0.0
        %2298 = vmatpush1.msra.mxu0 0.0
        %2299 = vmatprep.subr.mxu0 0.0
        %2300 = vmatpush1.msra.mxu0 0.0
        %2301 = vmatprep.subr.mxu0 0.0
        %2302 = vmatpush1.msra.mxu0 0.0
        %2303 = vmatprep.subr.mxu0 0.0
        %2304 = vmatpush1.msra.mxu0 0.0
        %2305 = vmatprep.subr.mxu0 0.0
        %2306 = vmatpush1.msra.mxu0 0.0
        %2307 = vmatprep.subr.mxu0 0.0
        %2308 = vmatpush1.msra.mxu0 0.0
        %2309 = vmatprep.subr.mxu0 0.0
        %2310 = vmatpush1.msra.mxu0 0.0
        %2311 = vmatprep.subr.mxu0 0.0
        %2312 = vmatpush1.msra.mxu0 0.0
        %2313 = vmatprep.subr.mxu0 0.0
        %2314 = vmatpush1.msra.mxu0 0.0
        %2315 = vmatprep.subr.mxu0 0.0
        %2316 = vmatpush1.msra.mxu0 0.0
        %2317 = vmatprep.subr.mxu0 0.0
        %2318 = vmatpush1.msra.mxu0 0.0
        %2319 = vmatprep.subr.mxu0 0.0
        %2320 = vmatpush1.msra.mxu0 0.0
        %2321 = vmatprep.subr.mxu0 0.0
        %2322 = vmatpush1.msra.mxu0 0.0
        %2323 = vmatprep.subr.mxu0 0.0
        %2324 = vmatpush1.msra.mxu0 0.0
        %2325 = vmatprep.subr.mxu0 0.0
        %2326 = vmatpush1.msra.mxu0 0.0
        %2327 = vmatprep.mubr.f32.mxu0 0.0
        %2328 = vmatmul.mubr.f32.gmra.mrb[0].mxu0 0.0
        %v2329 = vpop.f32.mrb[0].mxu0
        %v2330 = vadd.f32 0.0, %v2329
        %v2331 = vpop.f32.mrb[0].mxu0
        %v2332 = vadd.f32 0.0, %v2331
        %2333 = vdwg.mxu0
        %v2334 = vadd.f32 %v2124, %v2259
        %v2335 = vadd.f32 %v2125, %v2261
        %v2336 = vadd.f32 %v2126, %v2330
        %v2337 = vadd.f32 %v2127, %v2332
        %v2338 = vmul.f32 %v2334, 0.5
        %v2339 = vtanh.pop %v2338
        %v2340 = vmul.f32 %v2339, 0.5
        %v2341 = vadd.f32 %v2340, 0.5
        %v2342 = vmul.f32 %v2335, 0.5
        %v2343 = vtanh.pop %v2342
        %v2344 = vmul.f32 %v2343, 0.5
        %v2345 = vadd.f32 %v2344, 0.5
        %v2346 = vtanh.pop %v2336
        %v2347 = vmul.f32 %v2337, 0.5
        %v2348 = vtanh.pop %v2347
        %v2349 = vmul.f32 %v2348, 0.5
        %v2350 = vadd.f32 %v2349, 0.5
        %v2351 = vmul.f32 %v2345, 0.0
        %v2352 = vmul.f32 %v2341, %v2346
        %v2353 = vadd.f32 %v2351, %v2352
        %v2354 = vtanh.pop %v2353
        %v2355 = vmul.f32 %v2350, %v2354
        %2356 = vst [vmem:[#allocation4] sm:$0xff] %v2355
        %v2357 = vld [vmem:[%s2013] sm:$0xff]
        %v2358 = vld [vmem:[%s2013 + $0x8] sm:$0xff]
        %v2359 = vld [vmem:[%s2013 + $0x10] sm:$0xff]
        %v2360 = vld [vmem:[%s2013 + $0x18] sm:$0xff]
        %v2361 = vld [vmem:[%s4] sm:$0xff]
        %v2362 = vld [vmem:[%s4 + $0x8] sm:$0xff]
        %v2363 = vld [vmem:[%s4 + $0x10] sm:$0xff]
        %v2364 = vld [vmem:[%s4 + $0x18] sm:$0xff]
        %v2365 = vld [vmem:[%s4 + $0x20] sm:$0xff]
        %v2366 = vld [vmem:[%s4 + $0x28] sm:$0xff]
        %v2367 = vld [vmem:[%s4 + $0x30] sm:$0xff]
        %v2368 = vld [vmem:[%s4 + $0x38] sm:$0xff]
        %v2369 = vld [vmem:[%s4 + $0x40] sm:$0xff]
        %v2370 = vld [vmem:[%s4 + $0x48] sm:$0xff]
        %v2371 = vld [vmem:[%s4 + $0x50] sm:$0xff]
        %v2372 = vld [vmem:[%s4 + $0x58] sm:$0xff]
        %v2373 = vld [vmem:[%s4 + $0x60] sm:$0xff]
        %v2374 = vld [vmem:[%s4 + $0x68] sm:$0xff]
        %v2375 = vld [vmem:[%s4 + $0x70] sm:$0xff]
        %v2376 = vld [vmem:[%s4 + $0x78] sm:$0xff]
        %v2377 = vld [vmem:[%s4 + $0x80] sm:$0xff]
        %v2378 = vld [vmem:[%s4 + $0x88] sm:$0xff]
        %v2379 = vld [vmem:[%s4 + $0x90] sm:$0xff]
        %v2380 = vld [vmem:[%s4 + $0x98] sm:$0xff]
        %v2381 = vld [vmem:[%s4 + $0xa0] sm:$0xff]
        %v2382 = vld [vmem:[%s4 + $0xa8] sm:$0xff]
        %v2383 = vld [vmem:[%s4 + $0xb0] sm:$0xff]
        %v2384 = vld [vmem:[%s4 + $0xb8] sm:$0xff]
        %v2385 = vld [vmem:[%s4 + $0xc0] sm:$0xff]
        %v2386 = vld [vmem:[%s4 + $0xc8] sm:$0xff]
        %v2387 = vld [vmem:[%s4 + $0xd0] sm:$0xff]
        %v2388 = vld [vmem:[%s4 + $0xd8] sm:$0xff]
        %v2389 = vld [vmem:[%s4 + $0xe0] sm:$0xff]
        %v2390 = vld [vmem:[%s4 + $0xe8] sm:$0xff]
        %v2391 = vld [vmem:[%s4 + $0xf0] sm:$0xff]
        %v2392 = vld [vmem:[%s4 + $0xf8] sm:$0xff]
        %v2393 = vld [vmem:[%s4 + $0x100] sm:$0xff]
        %v2394 = vld [vmem:[%s4 + $0x108] sm:$0xff]
        %v2395 = vld [vmem:[%s4 + $0x110] sm:$0xff]
        %v2396 = vld [vmem:[%s4 + $0x118] sm:$0xff]
        %v2397 = vld [vmem:[%s4 + $0x120] sm:$0xff]
        %v2398 = vld [vmem:[%s4 + $0x128] sm:$0xff]
        %v2399 = vld [vmem:[%s4 + $0x130] sm:$0xff]
        %v2400 = vld [vmem:[%s4 + $0x138] sm:$0xff]
        %v2401 = vld [vmem:[%s4 + $0x140] sm:$0xff]
        %v2402 = vld [vmem:[%s4 + $0x148] sm:$0xff]
        %v2403 = vld [vmem:[%s4 + $0x150] sm:$0xff]
        %v2404 = vld [vmem:[%s4 + $0x158] sm:$0xff]
        %v2405 = vld [vmem:[%s4 + $0x160] sm:$0xff]
        %v2406 = vld [vmem:[%s4 + $0x168] sm:$0xff]
        %v2407 = vld [vmem:[%s4 + $0x170] sm:$0xff]
        %v2408 = vld [vmem:[%s4 + $0x178] sm:$0xff]
        %v2409 = vld [vmem:[%s4 + $0x180] sm:$0xff]
        %v2410 = vld [vmem:[%s4 + $0x188] sm:$0xff]
        %v2411 = vld [vmem:[%s4 + $0x190] sm:$0xff]
        %v2412 = vld [vmem:[%s4 + $0x198] sm:$0xff]
        %v2413 = vld [vmem:[%s4 + $0x1a0] sm:$0xff]
        %v2414 = vld [vmem:[%s4 + $0x1a8] sm:$0xff]
        %v2415 = vld [vmem:[%s4 + $0x1b0] sm:$0xff]
        %v2416 = vld [vmem:[%s4 + $0x1b8] sm:$0xff]
        %v2417 = vld [vmem:[%s4 + $0x1c0] sm:$0xff]
        %v2418 = vld [vmem:[%s4 + $0x1c8] sm:$0xff]
        %v2419 = vld [vmem:[%s4 + $0x1d0] sm:$0xff]
        %v2420 = vld [vmem:[%s4 + $0x1d8] sm:$0xff]
        %v2421 = vld [vmem:[%s4 + $0x1e0] sm:$0xff]
        %v2422 = vld [vmem:[%s4 + $0x1e8] sm:$0xff]
        %v2423 = vld [vmem:[%s4 + $0x1f0] sm:$0xff]
        %v2424 = vld [vmem:[%s4 + $0x1f8] sm:$0xff]
        %2425 = vmatprep.subr.mxu0 %v2362
        %2426 = vmatpush1.msra.mxu0 %v2361
        %2427 = vmatprep.subr.mxu0 %v2366
        %2428 = vmatpush1.msra.mxu0 %v2365
        %2429 = vmatprep.subr.mxu0 %v2370
        %2430 = vmatpush1.msra.mxu0 %v2369
        %2431 = vmatprep.subr.mxu0 %v2374
        %2432 = vmatpush1.msra.mxu0 %v2373
        %2433 = vmatprep.subr.mxu0 %v2378
        %2434 = vmatpush1.msra.mxu0 %v2377
        %2435 = vmatprep.subr.mxu0 %v2382
        %2436 = vmatpush1.msra.mxu0 %v2381
        %2437 = vmatprep.subr.mxu0 %v2386
        %2438 = vmatpush1.msra.mxu0 %v2385
        %2439 = vmatprep.subr.mxu0 %v2390
        %2440 = vmatpush1.msra.mxu0 %v2389
        %2441 = vmatprep.subr.mxu0 %v2394
        %2442 = vmatpush1.msra.mxu0 %v2393
        %2443 = vmatprep.subr.mxu0 %v2398
        %2444 = vmatpush1.msra.mxu0 %v2397
        %2445 = vmatprep.subr.mxu0 %v2402
        %2446 = vmatpush1.msra.mxu0 %v2401
        %2447 = vmatprep.subr.mxu0 %v2406
        %2448 = vmatpush1.msra.mxu0 %v2405
        %2449 = vmatprep.subr.mxu0 %v2410
        %2450 = vmatpush1.msra.mxu0 %v2409
        %2451 = vmatprep.subr.mxu0 %v2414
        %2452 = vmatpush1.msra.mxu0 %v2413
        %2453 = vmatprep.subr.mxu0 %v2418
        %2454 = vmatpush1.msra.mxu0 %v2417
        %2455 = vmatprep.subr.mxu0 %v2422
        %2456 = vmatpush1.msra.mxu0 %v2421
        %2457 = vmatprep.subr.mxu0 0.0
        %2458 = vmatpush1.msra.mxu0 0.0
        %2459 = vmatprep.subr.mxu0 0.0
        %2460 = vmatpush1.msra.mxu0 0.0
        %2461 = vmatprep.subr.mxu0 0.0
        %2462 = vmatpush1.msra.mxu0 0.0
        %2463 = vmatprep.subr.mxu0 0.0
        %2464 = vmatpush1.msra.mxu0 0.0
        %2465 = vmatprep.subr.mxu0 0.0
        %2466 = vmatpush1.msra.mxu0 0.0
        %2467 = vmatprep.subr.mxu0 0.0
        %2468 = vmatpush1.msra.mxu0 0.0
        %2469 = vmatprep.subr.mxu0 0.0
        %2470 = vmatpush1.msra.mxu0 0.0
        %2471 = vmatprep.subr.mxu0 0.0
        %2472 = vmatpush1.msra.mxu0 0.0
        %2473 = vmatprep.subr.mxu0 0.0
        %2474 = vmatpush1.msra.mxu0 0.0
        %2475 = vmatprep.subr.mxu0 0.0
        %2476 = vmatpush1.msra.mxu0 0.0
        %2477 = vmatprep.subr.mxu0 0.0
        %2478 = vmatpush1.msra.mxu0 0.0
        %2479 = vmatprep.subr.mxu0 0.0
        %2480 = vmatpush1.msra.mxu0 0.0
        %2481 = vmatprep.subr.mxu0 0.0
        %2482 = vmatpush1.msra.mxu0 0.0
        %2483 = vmatprep.subr.mxu0 0.0
        %2484 = vmatpush1.msra.mxu0 0.0
        %2485 = vmatprep.subr.mxu0 0.0
        %2486 = vmatpush1.msra.mxu0 0.0
        %2487 = vmatprep.subr.mxu0 0.0
        %2488 = vmatpush1.msra.mxu0 0.0
        %2489 = vmatprep.mubr.f32.mxu0 0.0
        %2490 = vmatmul.mubr.f32.gmra.mrb[0].mxu0 %v2355
        %v2491 = vpop.f32.mrb[0].mxu0
        %v2492 = vadd.f32 0.0, %v2491
        %v2493 = vpop.f32.mrb[0].mxu0
        %v2494 = vadd.f32 0.0, %v2493
        %2495 = vdwg.mxu0
        %2496 = vmatprep.subr.mxu0 %v2364
        %2497 = vmatpush1.msra.mxu0 %v2363
        %2498 = vmatprep.subr.mxu0 %v2368
        %2499 = vmatpush1.msra.mxu0 %v2367
        %2500 = vmatprep.subr.mxu0 %v2372
        %2501 = vmatpush1.msra.mxu0 %v2371
        %2502 = vmatprep.subr.mxu0 %v2376
        %2503 = vmatpush1.msra.mxu0 %v2375
        %2504 = vmatprep.subr.mxu0 %v2380
        %2505 = vmatpush1.msra.mxu0 %v2379
        %2506 = vmatprep.subr.mxu0 %v2384
        %2507 = vmatpush1.msra.mxu0 %v2383
        %2508 = vmatprep.subr.mxu0 %v2388
        %2509 = vmatpush1.msra.mxu0 %v2387
        %2510 = vmatprep.subr.mxu0 %v2392
        %2511 = vmatpush1.msra.mxu0 %v2391
        %2512 = vmatprep.subr.mxu0 %v2396
        %2513 = vmatpush1.msra.mxu0 %v2395
        %2514 = vmatprep.subr.mxu0 %v2400
        %2515 = vmatpush1.msra.mxu0 %v2399
        %2516 = vmatprep.subr.mxu0 %v2404
        %2517 = vmatpush1.msra.mxu0 %v2403
        %2518 = vmatprep.subr.mxu0 %v2408
        %2519 = vmatpush1.msra.mxu0 %v2407
        %2520 = vmatprep.subr.mxu0 %v2412
        %2521 = vmatpush1.msra.mxu0 %v2411
        %2522 = vmatprep.subr.mxu0 %v2416
        %2523 = vmatpush1.msra.mxu0 %v2415
        %2524 = vmatprep.subr.mxu0 %v2420
        %2525 = vmatpush1.msra.mxu0 %v2419
        %2526 = vmatprep.subr.mxu0 %v2424
        %2527 = vmatpush1.msra.mxu0 %v2423
        %2528 = vmatprep.subr.mxu0 0.0
        %2529 = vmatpush1.msra.mxu0 0.0
        %2530 = vmatprep.subr.mxu0 0.0
        %2531 = vmatpush1.msra.mxu0 0.0
        %2532 = vmatprep.subr.mxu0 0.0
        %2533 = vmatpush1.msra.mxu0 0.0
        %2534 = vmatprep.subr.mxu0 0.0
        %2535 = vmatpush1.msra.mxu0 0.0
        %2536 = vmatprep.subr.mxu0 0.0
        %2537 = vmatpush1.msra.mxu0 0.0
        %2538 = vmatprep.subr.mxu0 0.0
        %2539 = vmatpush1.msra.mxu0 0.0
        %2540 = vmatprep.subr.mxu0 0.0
        %2541 = vmatpush1.msra.mxu0 0.0
        %2542 = vmatprep.subr.mxu0 0.0
        %2543 = vmatpush1.msra.mxu0 0.0
        %2544 = vmatprep.subr.mxu0 0.0
        %2545 = vmatpush1.msra.mxu0 0.0
        %2546 = vmatprep.subr.mxu0 0.0
        %2547 = vmatpush1.msra.mxu0 0.0
        %2548 = vmatprep.subr.mxu0 0.0
        %2549 = vmatpush1.msra.mxu0 0.0
        %2550 = vmatprep.subr.mxu0 0.0
        %2551 = vmatpush1.msra.mxu0 0.0
        %2552 = vmatprep.subr.mxu0 0.0
        %2553 = vmatpush1.msra.mxu0 0.0
        %2554 = vmatprep.subr.mxu0 0.0
        %2555 = vmatpush1.msra.mxu0 0.0
        %2556 = vmatprep.subr.mxu0 0.0
        %2557 = vmatpush1.msra.mxu0 0.0
        %2558 = vmatprep.subr.mxu0 0.0
        %2559 = vmatpush1.msra.mxu0 0.0
        %2560 = vmatprep.mubr.f32.mxu0 0.0
        %2561 = vmatmul.mubr.f32.gmra.mrb[0].mxu0 %v2355
        %v2562 = vpop.f32.mrb[0].mxu0
        %v2563 = vadd.f32 0.0, %v2562
        %v2564 = vpop.f32.mrb[0].mxu0
        %v2565 = vadd.f32 0.0, %v2564
        %2566 = vdwg.mxu0
        %v2567 = vadd.f32 %v2357, %v2492
        %v2568 = vadd.f32 %v2358, %v2494
        %v2569 = vadd.f32 %v2359, %v2563
        %v2570 = vadd.f32 %v2360, %v2565
        %v2571 = vmul.f32 %v2567, 0.5
        %v2572 = vtanh.pop %v2571
        %v2573 = vmul.f32 %v2572, 0.5
        %v2574 = vadd.f32 %v2573, 0.5
        %v2575 = vmul.f32 %v2568, 0.5
        %v2576 = vtanh.pop %v2575
        %v2577 = vmul.f32 %v2576, 0.5
        %v2578 = vadd.f32 %v2577, 0.5
        %v2579 = vtanh.pop %v2569
        %v2580 = vmul.f32 %v2570, 0.5
        %v2581 = vtanh.pop %v2580
        %v2582 = vmul.f32 %v2581, 0.5
        %v2583 = vadd.f32 %v2582, 0.5
        %v2584 = vmul.f32 %v2578, %v2353
        %v2585 = vmul.f32 %v2574, %v2579
        %v2586 = vadd.f32 %v2584, %v2585
        %v2587 = vtanh.pop %v2586
        %v2588 = vmul.f32 %v2583, %v2587
        %s2589 = scalar_lea.vmem [#allocation4], 8
        %2590 = vst [vmem:[%s2589] sm:$0xff] %v2588
        %v2591 = vld [vmem:[%s2032] sm:$0xff]
        %v2592 = vld [vmem:[%s2032 + $0x8] sm:$0xff]
        %v2593 = vld [vmem:[%s2032 + $0x10] sm:$0xff]
        %v2594 = vld [vmem:[%s2032 + $0x18] sm:$0xff]
        %v2595 = vld [vmem:[%s4] sm:$0xff]
        %v2596 = vld [vmem:[%s4 + $0x8] sm:$0xff]
        %v2597 = vld [vmem:[%s4 + $0x10] sm:$0xff]
        %v2598 = vld [vmem:[%s4 + $0x18] sm:$0xff]
        %v2599 = vld [vmem:[%s4 + $0x20] sm:$0xff]
        %v2600 = vld [vmem:[%s4 + $0x28] sm:$0xff]
        %v2601 = vld [vmem:[%s4 + $0x30] sm:$0xff]
        %v2602 = vld [vmem:[%s4 + $0x38] sm:$0xff]
        %v2603 = vld [vmem:[%s4 + $0x40] sm:$0xff]
        %v2604 = vld [vmem:[%s4 + $0x48] sm:$0xff]
        %v2605 = vld [vmem:[%s4 + $0x50] sm:$0xff]
        %v2606 = vld [vmem:[%s4 + $0x58] sm:$0xff]
        %v2607 = vld [vmem:[%s4 + $0x60] sm:$0xff]
        %v2608 = vld [vmem:[%s4 + $0x68] sm:$0xff]
        %v2609 = vld [vmem:[%s4 + $0x70] sm:$0xff]
        %v2610 = vld [vmem:[%s4 + $0x78] sm:$0xff]
        %v2611 = vld [vmem:[%s4 + $0x80] sm:$0xff]
        %v2612 = vld [vmem:[%s4 + $0x88] sm:$0xff]
        %v2613 = vld [vmem:[%s4 + $0x90] sm:$0xff]
        %v2614 = vld [vmem:[%s4 + $0x98] sm:$0xff]
        %v2615 = vld [vmem:[%s4 + $0xa0] sm:$0xff]
        %v2616 = vld [vmem:[%s4 + $0xa8] sm:$0xff]
        %v2617 = vld [vmem:[%s4 + $0xb0] sm:$0xff]
        %v2618 = vld [vmem:[%s4 + $0xb8] sm:$0xff]
        %v2619 = vld [vmem:[%s4 + $0xc0] sm:$0xff]
        %v2620 = vld [vmem:[%s4 + $0xc8] sm:$0xff]
        %v2621 = vld [vmem:[%s4 + $0xd0] sm:$0xff]
        %v2622 = vld [vmem:[%s4 + $0xd8] sm:$0xff]
        %v2623 = vld [vmem:[%s4 + $0xe0] sm:$0xff]
        %v2624 = vld [vmem:[%s4 + $0xe8] sm:$0xff]
        %v2625 = vld [vmem:[%s4 + $0xf0] sm:$0xff]
        %v2626 = vld [vmem:[%s4 + $0xf8] sm:$0xff]
        %v2627 = vld [vmem:[%s4 + $0x100] sm:$0xff]
        %v2628 = vld [vmem:[%s4 + $0x108] sm:$0xff]
        %v2629 = vld [vmem:[%s4 + $0x110] sm:$0xff]
        %v2630 = vld [vmem:[%s4 + $0x118] sm:$0xff]
        %v2631 = vld [vmem:[%s4 + $0x120] sm:$0xff]
        %v2632 = vld [vmem:[%s4 + $0x128] sm:$0xff]
        %v2633 = vld [vmem:[%s4 + $0x130] sm:$0xff]
        %v2634 = vld [vmem:[%s4 + $0x138] sm:$0xff]
        %v2635 = vld [vmem:[%s4 + $0x140] sm:$0xff]
        %v2636 = vld [vmem:[%s4 + $0x148] sm:$0xff]
        %v2637 = vld [vmem:[%s4 + $0x150] sm:$0xff]
        %v2638 = vld [vmem:[%s4 + $0x158] sm:$0xff]
        %v2639 = vld [vmem:[%s4 + $0x160] sm:$0xff]
        %v2640 = vld [vmem:[%s4 + $0x168] sm:$0xff]
        %v2641 = vld [vmem:[%s4 + $0x170] sm:$0xff]
        %v2642 = vld [vmem:[%s4 + $0x178] sm:$0xff]
        %v2643 = vld [vmem:[%s4 + $0x180] sm:$0xff]
        %v2644 = vld [vmem:[%s4 + $0x188] sm:$0xff]
        %v2645 = vld [vmem:[%s4 + $0x190] sm:$0xff]
        %v2646 = vld [vmem:[%s4 + $0x198] sm:$0xff]
        %v2647 = vld [vmem:[%s4 + $0x1a0] sm:$0xff]
        %v2648 = vld [vmem:[%s4 + $0x1a8] sm:$0xff]
        %v2649 = vld [vmem:[%s4 + $0x1b0] sm:$0xff]
        %v2650 = vld [vmem:[%s4 + $0x1b8] sm:$0xff]
        %v2651 = vld [vmem:[%s4 + $0x1c0] sm:$0xff]
        %v2652 = vld [vmem:[%s4 + $0x1c8] sm:$0xff]
        %v2653 = vld [vmem:[%s4 + $0x1d0] sm:$0xff]
        %v2654 = vld [vmem:[%s4 + $0x1d8] sm:$0xff]
        %v2655 = vld [vmem:[%s4 + $0x1e0] sm:$0xff]
        %v2656 = vld [vmem:[%s4 + $0x1e8] sm:$0xff]
        %v2657 = vld [vmem:[%s4 + $0x1f0] sm:$0xff]
        %v2658 = vld [vmem:[%s4 + $0x1f8] sm:$0xff]
        %2659 = vmatprep.subr.mxu0 %v2596
        %2660 = vmatpush1.msra.mxu0 %v2595
        %2661 = vmatprep.subr.mxu0 %v2600
        %2662 = vmatpush1.msra.mxu0 %v2599
        %2663 = vmatprep.subr.mxu0 %v2604
        %2664 = vmatpush1.msra.mxu0 %v2603
        %2665 = vmatprep.subr.mxu0 %v2608
        %2666 = vmatpush1.msra.mxu0 %v2607
        %2667 = vmatprep.subr.mxu0 %v2612
        %2668 = vmatpush1.msra.mxu0 %v2611
        %2669 = vmatprep.subr.mxu0 %v2616
        %2670 = vmatpush1.msra.mxu0 %v2615
        %2671 = vmatprep.subr.mxu0 %v2620
        %2672 = vmatpush1.msra.mxu0 %v2619
        %2673 = vmatprep.subr.mxu0 %v2624
        %2674 = vmatpush1.msra.mxu0 %v2623
        %2675 = vmatprep.subr.mxu0 %v2628
        %2676 = vmatpush1.msra.mxu0 %v2627
        %2677 = vmatprep.subr.mxu0 %v2632
        %2678 = vmatpush1.msra.mxu0 %v2631
        %2679 = vmatprep.subr.mxu0 %v2636
        %2680 = vmatpush1.msra.mxu0 %v2635
        %2681 = vmatprep.subr.mxu0 %v2640
        %2682 = vmatpush1.msra.mxu0 %v2639
        %2683 = vmatprep.subr.mxu0 %v2644
        %2684 = vmatpush1.msra.mxu0 %v2643
        %2685 = vmatprep.subr.mxu0 %v2648
        %2686 = vmatpush1.msra.mxu0 %v2647
        %2687 = vmatprep.subr.mxu0 %v2652
        %2688 = vmatpush1.msra.mxu0 %v2651
        %2689 = vmatprep.subr.mxu0 %v2656
        %2690 = vmatpush1.msra.mxu0 %v2655
        %2691 = vmatprep.subr.mxu0 0.0
        %2692 = vmatpush1.msra.mxu0 0.0
        %2693 = vmatprep.subr.mxu0 0.0
        %2694 = vmatpush1.msra.mxu0 0.0
        %2695 = vmatprep.subr.mxu0 0.0
        %2696 = vmatpush1.msra.mxu0 0.0
        %2697 = vmatprep.subr.mxu0 0.0
        %2698 = vmatpush1.msra.mxu0 0.0
        %2699 = vmatprep.subr.mxu0 0.0
        %2700 = vmatpush1.msra.mxu0 0.0
        %2701 = vmatprep.subr.mxu0 0.0
        %2702 = vmatpush1.msra.mxu0 0.0
        %2703 = vmatprep.subr.mxu0 0.0
        %2704 = vmatpush1.msra.mxu0 0.0
        %2705 = vmatprep.subr.mxu0 0.0
        %2706 = vmatpush1.msra.mxu0 0.0
        %2707 = vmatprep.subr.mxu0 0.0
        %2708 = vmatpush1.msra.mxu0 0.0
        %2709 = vmatprep.subr.mxu0 0.0
        %2710 = vmatpush1.msra.mxu0 0.0
        %2711 = vmatprep.subr.mxu0 0.0
        %2712 = vmatpush1.msra.mxu0 0.0
        %2713 = vmatprep.subr.mxu0 0.0
        %2714 = vmatpush1.msra.mxu0 0.0
        %2715 = vmatprep.subr.mxu0 0.0
        %2716 = vmatpush1.msra.mxu0 0.0
        %2717 = vmatprep.subr.mxu0 0.0
        %2718 = vmatpush1.msra.mxu0 0.0
        %2719 = vmatprep.subr.mxu0 0.0
        %2720 = vmatpush1.msra.mxu0 0.0
        %2721 = vmatprep.subr.mxu0 0.0
        %2722 = vmatpush1.msra.mxu0 0.0
        %2723 = vmatprep.mubr.f32.mxu0 0.0
        %2724 = vmatmul.mubr.f32.gmra.mrb[0].mxu0 %v2588
        %v2725 = vpop.f32.mrb[0].mxu0
        %v2726 = vadd.f32 0.0, %v2725
        %v2727 = vpop.f32.mrb[0].mxu0
        %v2728 = vadd.f32 0.0, %v2727
        %2729 = vdwg.mxu0
        %2730 = vmatprep.subr.mxu0 %v2598
        %2731 = vmatpush1.msra.mxu0 %v2597
        %2732 = vmatprep.subr.mxu0 %v2602
        %2733 = vmatpush1.msra.mxu0 %v2601
        %2734 = vmatprep.subr.mxu0 %v2606
        %2735 = vmatpush1.msra.mxu0 %v2605
        %2736 = vmatprep.subr.mxu0 %v2610
        %2737 = vmatpush1.msra.mxu0 %v2609
        %2738 = vmatprep.subr.mxu0 %v2614
        %2739 = vmatpush1.msra.mxu0 %v2613
        %2740 = vmatprep.subr.mxu0 %v2618
        %2741 = vmatpush1.msra.mxu0 %v2617
        %2742 = vmatprep.subr.mxu0 %v2622
        %2743 = vmatpush1.msra.mxu0 %v2621
        %2744 = vmatprep.subr.mxu0 %v2626
        %2745 = vmatpush1.msra.mxu0 %v2625
        %2746 = vmatprep.subr.mxu0 %v2630
        %2747 = vmatpush1.msra.mxu0 %v2629
        %2748 = vmatprep.subr.mxu0 %v2634
        %2749 = vmatpush1.msra.mxu0 %v2633
        %2750 = vmatprep.subr.mxu0 %v2638
        %2751 = vmatpush1.msra.mxu0 %v2637
        %2752 = vmatprep.subr.mxu0 %v2642
        %2753 = vmatpush1.msra.mxu0 %v2641
        %2754 = vmatprep.subr.mxu0 %v2646
        %2755 = vmatpush1.msra.mxu0 %v2645
        %2756 = vmatprep.subr.mxu0 %v2650
        %2757 = vmatpush1.msra.mxu0 %v2649
        %2758 = vmatprep.subr.mxu0 %v2654
        %2759 = vmatpush1.msra.mxu0 %v2653
        %2760 = vmatprep.subr.mxu0 %v2658
        %2761 = vmatpush1.msra.mxu0 %v2657
        %2762 = vmatprep.subr.mxu0 0.0
        %2763 = vmatpush1.msra.mxu0 0.0
        %2764 = vmatprep.subr.mxu0 0.0
        %2765 = vmatpush1.msra.mxu0 0.0
        %2766 = vmatprep.subr.mxu0 0.0
        %2767 = vmatpush1.msra.mxu0 0.0
        %2768 = vmatprep.subr.mxu0 0.0
        %2769 = vmatpush1.msra.mxu0 0.0
        %2770 = vmatprep.subr.mxu0 0.0
        %2771 = vmatpush1.msra.mxu0 0.0
        %2772 = vmatprep.subr.mxu0 0.0
        %2773 = vmatpush1.msra.mxu0 0.0
        %2774 = vmatprep.subr.mxu0 0.0
        %2775 = vmatpush1.msra.mxu0 0.0
        %2776 = vmatprep.subr.mxu0 0.0
        %2777 = vmatpush1.msra.mxu0 0.0
        %2778 = vmatprep.subr.mxu0 0.0
        %2779 = vmatpush1.msra.mxu0 0.0
        %2780 = vmatprep.subr.mxu0 0.0
        %2781 = vmatpush1.msra.mxu0 0.0
        %2782 = vmatprep.subr.mxu0 0.0
        %2783 = vmatpush1.msra.mxu0 0.0
        %2784 = vmatprep.subr.mxu0 0.0
        %2785 = vmatpush1.msra.mxu0 0.0
        %2786 = vmatprep.subr.mxu0 0.0
        %2787 = vmatpush1.msra.mxu0 0.0
        %2788 = vmatprep.subr.mxu0 0.0
        %2789 = vmatpush1.msra.mxu0 0.0
        %2790 = vmatprep.subr.mxu0 0.0
        %2791 = vmatpush1.msra.mxu0 0.0
        %2792 = vmatprep.subr.mxu0 0.0
        %2793 = vmatpush1.msra.mxu0 0.0
        %2794 = vmatprep.mubr.f32.mxu0 0.0
        %2795 = vmatmul.mubr.f32.gmra.mrb[0].mxu0 %v2588
        %v2796 = vpop.f32.mrb[0].mxu0
        %v2797 = vadd.f32 0.0, %v2796
        %v2798 = vpop.f32.mrb[0].mxu0
        %v2799 = vadd.f32 0.0, %v2798
        %2800 = vdwg.mxu0
        %v2801 = vadd.f32 %v2591, %v2726
        %v2802 = vadd.f32 %v2592, %v2728
        %v2803 = vadd.f32 %v2593, %v2797
        %v2804 = vadd.f32 %v2594, %v2799
        %v2805 = vmul.f32 %v2801, 0.5
        %v2806 = vtanh.pop %v2805
        %v2807 = vmul.f32 %v2806, 0.5
        %v2808 = vadd.f32 %v2807, 0.5
        %v2809 = vmul.f32 %v2802, 0.5
        %v2810 = vtanh.pop %v2809
        %v2811 = vmul.f32 %v2810, 0.5
        %v2812 = vadd.f32 %v2811, 0.5
        %v2813 = vtanh.pop %v2803
        %v2814 = vmul.f32 %v2804, 0.5
        %v2815 = vtanh.pop %v2814
        %v2816 = vmul.f32 %v2815, 0.5
        %v2817 = vadd.f32 %v2816, 0.5
        %v2818 = vmul.f32 %v2812, %v2586
        %v2819 = vmul.f32 %v2808, %v2813
        %v2820 = vadd.f32 %v2818, %v2819
        %v2821 = vtanh.pop %v2820
        %v2822 = vmul.f32 %v2817, %v2821
        %s2823 = scalar_lea.vmem [#allocation4], 16
        %2824 = vst [vmem:[%s2823] sm:$0xff] %v2822
        %v2825 = vld [vmem:[%s2051] sm:$0xff]
        %v2826 = vld [vmem:[%s2051 + $0x8] sm:$0xff]
        %v2827 = vld [vmem:[%s2051 + $0x10] sm:$0xff]
        %v2828 = vld [vmem:[%s2051 + $0x18] sm:$0xff]
        %v2829 = vld [vmem:[%s4] sm:$0xff]
        %v2830 = vld [vmem:[%s4 + $0x8] sm:$0xff]
        %v2831 = vld [vmem:[%s4 + $0x10] sm:$0xff]
        %v2832 = vld [vmem:[%s4 + $0x18] sm:$0xff]
        %v2833 = vld [vmem:[%s4 + $0x20] sm:$0xff]
        %v2834 = vld [vmem:[%s4 + $0x28] sm:$0xff]
        %v2835 = vld [vmem:[%s4 + $0x30] sm:$0xff]
        %v2836 = vld [vmem:[%s4 + $0x38] sm:$0xff]
        %v2837 = vld [vmem:[%s4 + $0x40] sm:$0xff]
        %v2838 = vld [vmem:[%s4 + $0x48] sm:$0xff]
        %v2839 = vld [vmem:[%s4 + $0x50] sm:$0xff]
        %v2840 = vld [vmem:[%s4 + $0x58] sm:$0xff]
        %v2841 = vld [vmem:[%s4 + $0x60] sm:$0xff]
        %v2842 = vld [vmem:[%s4 + $0x68] sm:$0xff]
        %v2843 = vld [vmem:[%s4 + $0x70] sm:$0xff]
        %v2844 = vld [vmem:[%s4 + $0x78] sm:$0xff]
        %v2845 = vld [vmem:[%s4 + $0x80] sm:$0xff]
        %v2846 = vld [vmem:[%s4 + $0x88] sm:$0xff]
        %v2847 = vld [vmem:[%s4 + $0x90] sm:$0xff]
        %v2848 = vld [vmem:[%s4 + $0x98] sm:$0xff]
        %v2849 = vld [vmem:[%s4 + $0xa0] sm:$0xff]
        %v2850 = vld [vmem:[%s4 + $0xa8] sm:$0xff]
        %v2851 = vld [vmem:[%s4 + $0xb0] sm:$0xff]
        %v2852 = vld [vmem:[%s4 + $0xb8] sm:$0xff]
        %v2853 = vld [vmem:[%s4 + $0xc0] sm:$0xff]
        %v2854 = vld [vmem:[%s4 + $0xc8] sm:$0xff]
        %v2855 = vld [vmem:[%s4 + $0xd0] sm:$0xff]
        %v2856 = vld [vmem:[%s4 + $0xd8] sm:$0xff]
        %v2857 = vld [vmem:[%s4 + $0xe0] sm:$0xff]
        %v2858 = vld [vmem:[%s4 + $0xe8] sm:$0xff]
        %v2859 = vld [vmem:[%s4 + $0xf0] sm:$0xff]
        %v2860 = vld [vmem:[%s4 + $0xf8] sm:$0xff]
        %v2861 = vld [vmem:[%s4 + $0x100] sm:$0xff]
        %v2862 = vld [vmem:[%s4 + $0x108] sm:$0xff]
        %v2863 = vld [vmem:[%s4 + $0x110] sm:$0xff]
        %v2864 = vld [vmem:[%s4 + $0x118] sm:$0xff]
        %v2865 = vld [vmem:[%s4 + $0x120] sm:$0xff]
        %v2866 = vld [vmem:[%s4 + $0x128] sm:$0xff]
        %v2867 = vld [vmem:[%s4 + $0x130] sm:$0xff]
        %v2868 = vld [vmem:[%s4 + $0x138] sm:$0xff]
        %v2869 = vld [vmem:[%s4 + $0x140] sm:$0xff]
        %v2870 = vld [vmem:[%s4 + $0x148] sm:$0xff]
        %v2871 = vld [vmem:[%s4 + $0x150] sm:$0xff]
        %v2872 = vld [vmem:[%s4 + $0x158] sm:$0xff]
        %v2873 = vld [vmem:[%s4 + $0x160] sm:$0xff]
        %v2874 = vld [vmem:[%s4 + $0x168] sm:$0xff]
        %v2875 = vld [vmem:[%s4 + $0x170] sm:$0xff]
        %v2876 = vld [vmem:[%s4 + $0x178] sm:$0xff]
        %v2877 = vld [vmem:[%s4 + $0x180] sm:$0xff]
        %v2878 = vld [vmem:[%s4 + $0x188] sm:$0xff]
        %v2879 = vld [vmem:[%s4 + $0x190] sm:$0xff]
        %v2880 = vld [vmem:[%s4 + $0x198] sm:$0xff]
        %v2881 = vld [vmem:[%s4 + $0x1a0] sm:$0xff]
        %v2882 = vld [vmem:[%s4 + $0x1a8] sm:$0xff]
        %v2883 = vld [vmem:[%s4 + $0x1b0] sm:$0xff]
        %v2884 = vld [vmem:[%s4 + $0x1b8] sm:$0xff]
        %v2885 = vld [vmem:[%s4 + $0x1c0] sm:$0xff]
        %v2886 = vld [vmem:[%s4 + $0x1c8] sm:$0xff]
        %v2887 = vld [vmem:[%s4 + $0x1d0] sm:$0xff]
        %v2888 = vld [vmem:[%s4 + $0x1d8] sm:$0xff]
        %v2889 = vld [vmem:[%s4 + $0x1e0] sm:$0xff]
        %v2890 = vld [vmem:[%s4 + $0x1e8] sm:$0xff]
        %v2891 = vld [vmem:[%s4 + $0x1f0] sm:$0xff]
        %v2892 = vld [vmem:[%s4 + $0x1f8] sm:$0xff]
        %2893 = vmatprep.subr.mxu0 %v2830
        %2894 = vmatpush1.msra.mxu0 %v2829
        %2895 = vmatprep.subr.mxu0 %v2834
        %2896 = vmatpush1.msra.mxu0 %v2833
        %2897 = vmatprep.subr.mxu0 %v2838
        %2898 = vmatpush1.msra.mxu0 %v2837
        %2899 = vmatprep.subr.mxu0 %v2842
        %2900 = vmatpush1.msra.mxu0 %v2841
        %2901 = vmatprep.subr.mxu0 %v2846
        %2902 = vmatpush1.msra.mxu0 %v2845
        %2903 = vmatprep.subr.mxu0 %v2850
        %2904 = vmatpush1.msra.mxu0 %v2849
        %2905 = vmatprep.subr.mxu0 %v2854
        %2906 = vmatpush1.msra.mxu0 %v2853
        %2907 = vmatprep.subr.mxu0 %v2858
        %2908 = vmatpush1.msra.mxu0 %v2857
        %2909 = vmatprep.subr.mxu0 %v2862
        %2910 = vmatpush1.msra.mxu0 %v2861
        %2911 = vmatprep.subr.mxu0 %v2866
        %2912 = vmatpush1.msra.mxu0 %v2865
        %2913 = vmatprep.subr.mxu0 %v2870
        %2914 = vmatpush1.msra.mxu0 %v2869
        %2915 = vmatprep.subr.mxu0 %v2874
        %2916 = vmatpush1.msra.mxu0 %v2873
        %2917 = vmatprep.subr.mxu0 %v2878
        %2918 = vmatpush1.msra.mxu0 %v2877
        %2919 = vmatprep.subr.mxu0 %v2882
        %2920 = vmatpush1.msra.mxu0 %v2881
        %2921 = vmatprep.subr.mxu0 %v2886
        %2922 = vmatpush1.msra.mxu0 %v2885
        %2923 = vmatprep.subr.mxu0 %v2890
        %2924 = vmatpush1.msra.mxu0 %v2889
        %2925 = vmatprep.subr.mxu0 0.0
        %2926 = vmatpush1.msra.mxu0 0.0
        %2927 = vmatprep.subr.mxu0 0.0
        %2928 = vmatpush1.msra.mxu0 0.0
        %2929 = vmatprep.subr.mxu0 0.0
        %2930 = vmatpush1.msra.mxu0 0.0
        %2931 = vmatprep.subr.mxu0 0.0
        %2932 = vmatpush1.msra.mxu0 0.0
        %2933 = vmatprep.subr.mxu0 0.0
        %2934 = vmatpush1.msra.mxu0 0.0
        %2935 = vmatprep.subr.mxu0 0.0
        %2936 = vmatpush1.msra.mxu0 0.0
        %2937 = vmatprep.subr.mxu0 0.0
        %2938 = vmatpush1.msra.mxu0 0.0
        %2939 = vmatprep.subr.mxu0 0.0
        %2940 = vmatpush1.msra.mxu0 0.0
        %2941 = vmatprep.subr.mxu0 0.0
        %2942 = vmatpush1.msra.mxu0 0.0
        %2943 = vmatprep.subr.mxu0 0.0
        %2944 = vmatpush1.msra.mxu0 0.0
        %2945 = vmatprep.subr.mxu0 0.0
        %2946 = vmatpush1.msra.mxu0 0.0
        %2947 = vmatprep.subr.mxu0 0.0
        %2948 = vmatpush1.msra.mxu0 0.0
        %2949 = vmatprep.subr.mxu0 0.0
        %2950 = vmatpush1.msra.mxu0 0.0
        %2951 = vmatprep.subr.mxu0 0.0
        %2952 = vmatpush1.msra.mxu0 0.0
        %2953 = vmatprep.subr.mxu0 0.0
        %2954 = vmatpush1.msra.mxu0 0.0
        %2955 = vmatprep.subr.mxu0 0.0
        %2956 = vmatpush1.msra.mxu0 0.0
        %2957 = vmatprep.mubr.f32.mxu0 0.0
        %2958 = vmatmul.mubr.f32.gmra.mrb[0].mxu0 %v2822
        %v2959 = vpop.f32.mrb[0].mxu0
        %v2960 = vadd.f32 0.0, %v2959
        %v2961 = vpop.f32.mrb[0].mxu0
        %v2962 = vadd.f32 0.0, %v2961
        %2963 = vdwg.mxu0
        %2964 = vmatprep.subr.mxu0 %v2832
        %2965 = vmatpush1.msra.mxu0 %v2831
        %2966 = vmatprep.subr.mxu0 %v2836
        %2967 = vmatpush1.msra.mxu0 %v2835
        %2968 = vmatprep.subr.mxu0 %v2840
        %2969 = vmatpush1.msra.mxu0 %v2839
        %2970 = vmatprep.subr.mxu0 %v2844
        %2971 = vmatpush1.msra.mxu0 %v2843
        %2972 = vmatprep.subr.mxu0 %v2848
        %2973 = vmatpush1.msra.mxu0 %v2847
        %2974 = vmatprep.subr.mxu0 %v2852
        %2975 = vmatpush1.msra.mxu0 %v2851
        %2976 = vmatprep.subr.mxu0 %v2856
        %2977 = vmatpush1.msra.mxu0 %v2855
        %2978 = vmatprep.subr.mxu0 %v2860
        %2979 = vmatpush1.msra.mxu0 %v2859
        %2980 = vmatprep.subr.mxu0 %v2864
        %2981 = vmatpush1.msra.mxu0 %v2863
        %2982 = vmatprep.subr.mxu0 %v2868
        %2983 = vmatpush1.msra.mxu0 %v2867
        %2984 = vmatprep.subr.mxu0 %v2872
        %2985 = vmatpush1.msra.mxu0 %v2871
        %2986 = vmatprep.subr.mxu0 %v2876
        %2987 = vmatpush1.msra.mxu0 %v2875
        %2988 = vmatprep.subr.mxu0 %v2880
        %2989 = vmatpush1.msra.mxu0 %v2879
        %2990 = vmatprep.subr.mxu0 %v2884
        %2991 = vmatpush1.msra.mxu0 %v2883
        %2992 = vmatprep.subr.mxu0 %v2888
        %2993 = vmatpush1.msra.mxu0 %v2887
        %2994 = vmatprep.subr.mxu0 %v2892
        %2995 = vmatpush1.msra.mxu0 %v2891
        %2996 = vmatprep.subr.mxu0 0.0
        %2997 = vmatpush1.msra.mxu0 0.0
        %2998 = vmatprep.subr.mxu0 0.0
        %2999 = vmatpush1.msra.mxu0 0.0
        %3000 = vmatprep.subr.mxu0 0.0
        %3001 = vmatpush1.msra.mxu0 0.0
        %3002 = vmatprep.subr.mxu0 0.0
        %3003 = vmatpush1.msra.mxu0 0.0
        %3004 = vmatprep.subr.mxu0 0.0
        %3005 = vmatpush1.msra.mxu0 0.0
        %3006 = vmatprep.subr.mxu0 0.0
        %3007 = vmatpush1.msra.mxu0 0.0
        %3008 = vmatprep.subr.mxu0 0.0
        %3009 = vmatpush1.msra.mxu0 0.0
        %3010 = vmatprep.subr.mxu0 0.0
        %3011 = vmatpush1.msra.mxu0 0.0
        %3012 = vmatprep.subr.mxu0 0.0
        %3013 = vmatpush1.msra.mxu0 0.0
        %3014 = vmatprep.subr.mxu0 0.0
        %3015 = vmatpush1.msra.mxu0 0.0
        %3016 = vmatprep.subr.mxu0 0.0
        %3017 = vmatpush1.msra.mxu0 0.0
        %3018 = vmatprep.subr.mxu0 0.0
        %3019 = vmatpush1.msra.mxu0 0.0
        %3020 = vmatprep.subr.mxu0 0.0
        %3021 = vmatpush1.msra.mxu0 0.0
        %3022 = vmatprep.subr.mxu0 0.0
        %3023 = vmatpush1.msra.mxu0 0.0
        %3024 = vmatprep.subr.mxu0 0.0
        %3025 = vmatpush1.msra.mxu0 0.0
        %3026 = vmatprep.subr.mxu0 0.0
        %3027 = vmatpush1.msra.mxu0 0.0
        %3028 = vmatprep.mubr.f32.mxu0 0.0
        %3029 = vmatmul.mubr.f32.gmra.mrb[0].mxu0 %v2822
        %v3030 = vpop.f32.mrb[0].mxu0
        %v3031 = vadd.f32 0.0, %v3030
        %v3032 = vpop.f32.mrb[0].mxu0
        %v3033 = vadd.f32 0.0, %v3032
        %3034 = vdwg.mxu0
        %v3035 = vadd.f32 %v2825, %v2960
        %v3036 = vadd.f32 %v2826, %v2962
        %v3037 = vadd.f32 %v2827, %v3031
        %v3038 = vadd.f32 %v2828, %v3033
        %v3039 = vmul.f32 %v3035, 0.5
        %v3040 = vtanh.pop %v3039
        %v3041 = vmul.f32 %v3040, 0.5
        %v3042 = vadd.f32 %v3041, 0.5
        %v3043 = vmul.f32 %v3036, 0.5
        %v3044 = vtanh.pop %v3043
        %v3045 = vmul.f32 %v3044, 0.5
        %v3046 = vadd.f32 %v3045, 0.5
        %v3047 = vtanh.pop %v3037
        %v3048 = vmul.f32 %v3038, 0.5
        %v3049 = vtanh.pop %v3048
        %v3050 = vmul.f32 %v3049, 0.5
        %v3051 = vadd.f32 %v3050, 0.5
        %v3052 = vmul.f32 %v3046, %v2820
        %v3053 = vmul.f32 %v3042, %v3047
        %v3054 = vadd.f32 %v3052, %v3053
        %v3055 = vtanh.pop %v3054
        %v3056 = vmul.f32 %v3051, %v3055
        %s3057 = scalar_lea.vmem [#allocation4], 24
        %3058 = vst [vmem:[%s3057] sm:$0xff] %v3056
        %v3059 = vld [vmem:[%s2068] sm:$0xff]
        %v3060 = vld [vmem:[%s2068 + $0x8] sm:$0xff]
        %v3061 = vld [vmem:[%s2068 + $0x10] sm:$0xff]
        %v3062 = vld [vmem:[%s2068 + $0x18] sm:$0xff]
        %v3063 = vld [vmem:[%s4] sm:$0xff]
        %v3064 = vld [vmem:[%s4 + $0x8] sm:$0xff]
        %v3065 = vld [vmem:[%s4 + $0x10] sm:$0xff]
        %v3066 = vld [vmem:[%s4 + $0x18] sm:$0xff]
        %v3067 = vld [vmem:[%s4 + $0x20] sm:$0xff]
        %v3068 = vld [vmem:[%s4 + $0x28] sm:$0xff]
        %v3069 = vld [vmem:[%s4 + $0x30] sm:$0xff]
        %v3070 = vld [vmem:[%s4 + $0x38] sm:$0xff]
        %v3071 = vld [vmem:[%s4 + $0x40] sm:$0xff]
        %v3072 = vld [vmem:[%s4 + $0x48] sm:$0xff]
        %v3073 = vld [vmem:[%s4 + $0x50] sm:$0xff]
        %v3074 = vld [vmem:[%s4 + $0x58] sm:$0xff]
        %v3075 = vld [vmem:[%s4 + $0x60] sm:$0xff]
        %v3076 = vld [vmem:[%s4 + $0x68] sm:$0xff]
        %v3077 = vld [vmem:[%s4 + $0x70] sm:$0xff]
        %v3078 = vld [vmem:[%s4 + $0x78] sm:$0xff]
        %v3079 = vld [vmem:[%s4 + $0x80] sm:$0xff]
        %v3080 = vld [vmem:[%s4 + $0x88] sm:$0xff]
        %v3081 = vld [vmem:[%s4 + $0x90] sm:$0xff]
        %v3082 = vld [vmem:[%s4 + $0x98] sm:$0xff]
        %v3083 = vld [vmem:[%s4 + $0xa0] sm:$0xff]
        %v3084 = vld [vmem:[%s4 + $0xa8] sm:$0xff]
        %v3085 = vld [vmem:[%s4 + $0xb0] sm:$0xff]
        %v3086 = vld [vmem:[%s4 + $0xb8] sm:$0xff]
        %v3087 = vld [vmem:[%s4 + $0xc0] sm:$0xff]
        %v3088 = vld [vmem:[%s4 + $0xc8] sm:$0xff]
        %v3089 = vld [vmem:[%s4 + $0xd0] sm:$0xff]
        %v3090 = vld [vmem:[%s4 + $0xd8] sm:$0xff]
        %v3091 = vld [vmem:[%s4 + $0xe0] sm:$0xff]
        %v3092 = vld [vmem:[%s4 + $0xe8] sm:$0xff]
        %v3093 = vld [vmem:[%s4 + $0xf0] sm:$0xff]
        %v3094 = vld [vmem:[%s4 + $0xf8] sm:$0xff]
        %v3095 = vld [vmem:[%s4 + $0x100] sm:$0xff]
        %v3096 = vld [vmem:[%s4 + $0x108] sm:$0xff]
        %v3097 = vld [vmem:[%s4 + $0x110] sm:$0xff]
        %v3098 = vld [vmem:[%s4 + $0x118] sm:$0xff]
        %v3099 = vld [vmem:[%s4 + $0x120] sm:$0xff]
        %v3100 = vld [vmem:[%s4 + $0x128] sm:$0xff]
        %v3101 = vld [vmem:[%s4 + $0x130] sm:$0xff]
        %v3102 = vld [vmem:[%s4 + $0x138] sm:$0xff]
        %v3103 = vld [vmem:[%s4 + $0x140] sm:$0xff]
        %v3104 = vld [vmem:[%s4 + $0x148] sm:$0xff]
        %v3105 = vld [vmem:[%s4 + $0x150] sm:$0xff]
        %v3106 = vld [vmem:[%s4 + $0x158] sm:$0xff]
        %v3107 = vld [vmem:[%s4 + $0x160] sm:$0xff]
        %v3108 = vld [vmem:[%s4 + $0x168] sm:$0xff]
        %v3109 = vld [vmem:[%s4 + $0x170] sm:$0xff]
        %v3110 = vld [vmem:[%s4 + $0x178] sm:$0xff]
        %v3111 = vld [vmem:[%s4 + $0x180] sm:$0xff]
        %v3112 = vld [vmem:[%s4 + $0x188] sm:$0xff]
        %v3113 = vld [vmem:[%s4 + $0x190] sm:$0xff]
        %v3114 = vld [vmem:[%s4 + $0x198] sm:$0xff]
        %v3115 = vld [vmem:[%s4 + $0x1a0] sm:$0xff]
        %v3116 = vld [vmem:[%s4 + $0x1a8] sm:$0xff]
        %v3117 = vld [vmem:[%s4 + $0x1b0] sm:$0xff]
        %v3118 = vld [vmem:[%s4 + $0x1b8] sm:$0xff]
        %v3119 = vld [vmem:[%s4 + $0x1c0] sm:$0xff]
        %v3120 = vld [vmem:[%s4 + $0x1c8] sm:$0xff]
        %v3121 = vld [vmem:[%s4 + $0x1d0] sm:$0xff]
        %v3122 = vld [vmem:[%s4 + $0x1d8] sm:$0xff]
        %v3123 = vld [vmem:[%s4 + $0x1e0] sm:$0xff]
        %v3124 = vld [vmem:[%s4 + $0x1e8] sm:$0xff]
        %v3125 = vld [vmem:[%s4 + $0x1f0] sm:$0xff]
        %v3126 = vld [vmem:[%s4 + $0x1f8] sm:$0xff]
        %3127 = vmatprep.subr.mxu0 %v3064
        %3128 = vmatpush1.msra.mxu0 %v3063
        %3129 = vmatprep.subr.mxu0 %v3068
        %3130 = vmatpush1.msra.mxu0 %v3067
        %3131 = vmatprep.subr.mxu0 %v3072
        %3132 = vmatpush1.msra.mxu0 %v3071
        %3133 = vmatprep.subr.mxu0 %v3076
        %3134 = vmatpush1.msra.mxu0 %v3075
        %3135 = vmatprep.subr.mxu0 %v3080
        %3136 = vmatpush1.msra.mxu0 %v3079
        %3137 = vmatprep.subr.mxu0 %v3084
        %3138 = vmatpush1.msra.mxu0 %v3083
        %3139 = vmatprep.subr.mxu0 %v3088
        %3140 = vmatpush1.msra.mxu0 %v3087
        %3141 = vmatprep.subr.mxu0 %v3092
        %3142 = vmatpush1.msra.mxu0 %v3091
        %3143 = vmatprep.subr.mxu0 %v3096
        %3144 = vmatpush1.msra.mxu0 %v3095
        %3145 = vmatprep.subr.mxu0 %v3100
        %3146 = vmatpush1.msra.mxu0 %v3099
        %3147 = vmatprep.subr.mxu0 %v3104
        %3148 = vmatpush1.msra.mxu0 %v3103
        %3149 = vmatprep.subr.mxu0 %v3108
        %3150 = vmatpush1.msra.mxu0 %v3107
        %3151 = vmatprep.subr.mxu0 %v3112
        %3152 = vmatpush1.msra.mxu0 %v3111
        %3153 = vmatprep.subr.mxu0 %v3116
        %3154 = vmatpush1.msra.mxu0 %v3115
        %3155 = vmatprep.subr.mxu0 %v3120
        %3156 = vmatpush1.msra.mxu0 %v3119
        %3157 = vmatprep.subr.mxu0 %v3124
        %3158 = vmatpush1.msra.mxu0 %v3123
        %3159 = vmatprep.subr.mxu0 0.0
        %3160 = vmatpush1.msra.mxu0 0.0
        %3161 = vmatprep.subr.mxu0 0.0
        %3162 = vmatpush1.msra.mxu0 0.0
        %3163 = vmatprep.subr.mxu0 0.0
        %3164 = vmatpush1.msra.mxu0 0.0
        %3165 = vmatprep.subr.mxu0 0.0
        %3166 = vmatpush1.msra.mxu0 0.0
        %3167 = vmatprep.subr.mxu0 0.0
        %3168 = vmatpush1.msra.mxu0 0.0
        %3169 = vmatprep.subr.mxu0 0.0
        %3170 = vmatpush1.msra.mxu0 0.0
        %3171 = vmatprep.subr.mxu0 0.0
        %3172 = vmatpush1.msra.mxu0 0.0
        %3173 = vmatprep.subr.mxu0 0.0
        %3174 = vmatpush1.msra.mxu0 0.0
        %3175 = vmatprep.subr.mxu0 0.0
        %3176 = vmatpush1.msra.mxu0 0.0
        %3177 = vmatprep.subr.mxu0 0.0
        %3178 = vmatpush1.msra.mxu0 0.0
        %3179 = vmatprep.subr.mxu0 0.0
        %3180 = vmatpush1.msra.mxu0 0.0
        %3181 = vmatprep.subr.mxu0 0.0
        %3182 = vmatpush1.msra.mxu0 0.0
        %3183 = vmatprep.subr.mxu0 0.0
        %3184 = vmatpush1.msra.mxu0 0.0
        %3185 = vmatprep.subr.mxu0 0.0
        %3186 = vmatpush1.msra.mxu0 0.0
        %3187 = vmatprep.subr.mxu0 0.0
        %3188 = vmatpush1.msra.mxu0 0.0
        %3189 = vmatprep.subr.mxu0 0.0
        %3190 = vmatpush1.msra.mxu0 0.0
        %3191 = vmatprep.mubr.f32.mxu0 0.0
        %3192 = vmatmul.mubr.f32.gmra.mrb[0].mxu0 %v3056
        %v3193 = vpop.f32.mrb[0].mxu0
        %v3194 = vadd.f32 0.0, %v3193
        %v3195 = vpop.f32.mrb[0].mxu0
        %v3196 = vadd.f32 0.0, %v3195
        %3197 = vdwg.mxu0
        %3198 = vmatprep.subr.mxu0 %v3066
        %3199 = vmatpush1.msra.mxu0 %v3065
        %3200 = vmatprep.subr.mxu0 %v3070
        %3201 = vmatpush1.msra.mxu0 %v3069
        %3202 = vmatprep.subr.mxu0 %v3074
        %3203 = vmatpush1.msra.mxu0 %v3073
        %3204 = vmatprep.subr.mxu0 %v3078
        %3205 = vmatpush1.msra.mxu0 %v3077
        %3206 = vmatprep.subr.mxu0 %v3082
        %3207 = vmatpush1.msra.mxu0 %v3081
        %3208 = vmatprep.subr.mxu0 %v3086
        %3209 = vmatpush1.msra.mxu0 %v3085
        %3210 = vmatprep.subr.mxu0 %v3090
        %3211 = vmatpush1.msra.mxu0 %v3089
        %3212 = vmatprep.subr.mxu0 %v3094
        %3213 = vmatpush1.msra.mxu0 %v3093
        %3214 = vmatprep.subr.mxu0 %v3098
        %3215 = vmatpush1.msra.mxu0 %v3097
        %3216 = vmatprep.subr.mxu0 %v3102
        %3217 = vmatpush1.msra.mxu0 %v3101
        %3218 = vmatprep.subr.mxu0 %v3106
        %3219 = vmatpush1.msra.mxu0 %v3105
        %3220 = vmatprep.subr.mxu0 %v3110
        %3221 = vmatpush1.msra.mxu0 %v3109
        %3222 = vmatprep.subr.mxu0 %v3114
        %3223 = vmatpush1.msra.mxu0 %v3113
        %3224 = vmatprep.subr.mxu0 %v3118
        %3225 = vmatpush1.msra.mxu0 %v3117
        %3226 = vmatprep.subr.mxu0 %v3122
        %3227 = vmatpush1.msra.mxu0 %v3121
        %3228 = vmatprep.subr.mxu0 %v3126
        %3229 = vmatpush1.msra.mxu0 %v3125
        %3230 = vmatprep.subr.mxu0 0.0
        %3231 = vmatpush1.msra.mxu0 0.0
        %3232 = vmatprep.subr.mxu0 0.0
        %3233 = vmatpush1.msra.mxu0 0.0
        %3234 = vmatprep.subr.mxu0 0.0
        %3235 = vmatpush1.msra.mxu0 0.0
        %3236 = vmatprep.subr.mxu0 0.0
        %3237 = vmatpush1.msra.mxu0 0.0
        %3238 = vmatprep.subr.mxu0 0.0
        %3239 = vmatpush1.msra.mxu0 0.0
        %3240 = vmatprep.subr.mxu0 0.0
        %3241 = vmatpush1.msra.mxu0 0.0
        %3242 = vmatprep.subr.mxu0 0.0
        %3243 = vmatpush1.msra.mxu0 0.0
        %3244 = vmatprep.subr.mxu0 0.0
        %3245 = vmatpush1.msra.mxu0 0.0
        %3246 = vmatprep.subr.mxu0 0.0
        %3247 = vmatpush1.msra.mxu0 0.0
        %3248 = vmatprep.subr.mxu0 0.0
        %3249 = vmatpush1.msra.mxu0 0.0
        %3250 = vmatprep.subr.mxu0 0.0
        %3251 = vmatpush1.msra.mxu0 0.0
        %3252 = vmatprep.subr.mxu0 0.0
        %3253 = vmatpush1.msra.mxu0 0.0
        %3254 = vmatprep.subr.mxu0 0.0
        %3255 = vmatpush1.msra.mxu0 0.0
        %3256 = vmatprep.subr.mxu0 0.0
        %3257 = vmatpush1.msra.mxu0 0.0
        %3258 = vmatprep.subr.mxu0 0.0
        %3259 = vmatpush1.msra.mxu0 0.0
        %3260 = vmatprep.subr.mxu0 0.0
        %3261 = vmatpush1.msra.mxu0 0.0
        %3262 = vmatprep.mubr.f32.mxu0 0.0
        %3263 = vmatmul.mubr.f32.gmra.mrb[0].mxu0 %v3056
        %v3264 = vpop.f32.mrb[0].mxu0
        %v3265 = vadd.f32 0.0, %v3264
        %v3266 = vpop.f32.mrb[0].mxu0
        %v3267 = vadd.f32 0.0, %v3266
        %3268 = vdwg.mxu0
        %v3269 = vadd.f32 %v3059, %v3194
        %v3270 = vadd.f32 %v3060, %v3196
        %v3271 = vadd.f32 %v3061, %v3265
        %v3272 = vadd.f32 %v3062, %v3267
        %v3273 = vmul.f32 %v3269, 0.5
        %v3274 = vtanh.pop %v3273
        %v3275 = vmul.f32 %v3274, 0.5
        %v3276 = vadd.f32 %v3275, 0.5
        %v3277 = vmul.f32 %v3270, 0.5
        %v3278 = vtanh.pop %v3277
        %v3279 = vmul.f32 %v3278, 0.5
        %v3280 = vadd.f32 %v3279, 0.5
        %v3281 = vtanh.pop %v3271
        %v3282 = vmul.f32 %v3272, 0.5
        %v3283 = vtanh.pop %v3282
        %v3284 = vmul.f32 %v3283, 0.5
        %v3285 = vadd.f32 %v3284, 0.5
        %v3286 = vmul.f32 %v3280, %v3054
        %v3287 = vmul.f32 %v3276, %v3281
        %v3288 = vadd.f32 %v3286, %v3287
        %v3289 = vtanh.pop %v3288
        %v3290 = vmul.f32 %v3285, %v3289
        %s3291 = scalar_lea.vmem [#allocation4], 32
        %3292 = vst [vmem:[%s3291] sm:$0xff] %v3290
        %v3293 = vld [vmem:[%s2085] sm:$0xff]
        %v3294 = vld [vmem:[%s2085 + $0x8] sm:$0xff]
        %v3295 = vld [vmem:[%s2085 + $0x10] sm:$0xff]
        %v3296 = vld [vmem:[%s2085 + $0x18] sm:$0xff]
        %v3297 = vld [vmem:[%s4] sm:$0xff]
        %v3298 = vld [vmem:[%s4 + $0x8] sm:$0xff]
        %v3299 = vld [vmem:[%s4 + $0x10] sm:$0xff]
        %v3300 = vld [vmem:[%s4 + $0x18] sm:$0xff]
        %v3301 = vld [vmem:[%s4 + $0x20] sm:$0xff]
        %v3302 = vld [vmem:[%s4 + $0x28] sm:$0xff]
        %v3303 = vld [vmem:[%s4 + $0x30] sm:$0xff]
        %v3304 = vld [vmem:[%s4 + $0x38] sm:$0xff]
        %v3305 = vld [vmem:[%s4 + $0x40] sm:$0xff]
        %v3306 = vld [vmem:[%s4 + $0x48] sm:$0xff]
        %v3307 = vld [vmem:[%s4 + $0x50] sm:$0xff]
        %v3308 = vld [vmem:[%s4 + $0x58] sm:$0xff]
        %v3309 = vld [vmem:[%s4 + $0x60] sm:$0xff]
        %v3310 = vld [vmem:[%s4 + $0x68] sm:$0xff]
        %v3311 = vld [vmem:[%s4 + $0x70] sm:$0xff]
        %v3312 = vld [vmem:[%s4 + $0x78] sm:$0xff]
        %v3313 = vld [vmem:[%s4 + $0x80] sm:$0xff]
        %v3314 = vld [vmem:[%s4 + $0x88] sm:$0xff]
        %v3315 = vld [vmem:[%s4 + $0x90] sm:$0xff]
        %v3316 = vld [vmem:[%s4 + $0x98] sm:$0xff]
        %v3317 = vld [vmem:[%s4 + $0xa0] sm:$0xff]
        %v3318 = vld [vmem:[%s4 + $0xa8] sm:$0xff]
        %v3319 = vld [vmem:[%s4 + $0xb0] sm:$0xff]
        %v3320 = vld [vmem:[%s4 + $0xb8] sm:$0xff]
        %v3321 = vld [vmem:[%s4 + $0xc0] sm:$0xff]
        %v3322 = vld [vmem:[%s4 + $0xc8] sm:$0xff]
        %v3323 = vld [vmem:[%s4 + $0xd0] sm:$0xff]
        %v3324 = vld [vmem:[%s4 + $0xd8] sm:$0xff]
        %v3325 = vld [vmem:[%s4 + $0xe0] sm:$0xff]
        %v3326 = vld [vmem:[%s4 + $0xe8] sm:$0xff]
        %v3327 = vld [vmem:[%s4 + $0xf0] sm:$0xff]
        %v3328 = vld [vmem:[%s4 + $0xf8] sm:$0xff]
        %v3329 = vld [vmem:[%s4 + $0x100] sm:$0xff]
        %v3330 = vld [vmem:[%s4 + $0x108] sm:$0xff]
        %v3331 = vld [vmem:[%s4 + $0x110] sm:$0xff]
        %v3332 = vld [vmem:[%s4 + $0x118] sm:$0xff]
        %v3333 = vld [vmem:[%s4 + $0x120] sm:$0xff]
        %v3334 = vld [vmem:[%s4 + $0x128] sm:$0xff]
        %v3335 = vld [vmem:[%s4 + $0x130] sm:$0xff]
        %v3336 = vld [vmem:[%s4 + $0x138] sm:$0xff]
        %v3337 = vld [vmem:[%s4 + $0x140] sm:$0xff]
        %v3338 = vld [vmem:[%s4 + $0x148] sm:$0xff]
        %v3339 = vld [vmem:[%s4 + $0x150] sm:$0xff]
        %v3340 = vld [vmem:[%s4 + $0x158] sm:$0xff]
        %v3341 = vld [vmem:[%s4 + $0x160] sm:$0xff]
        %v3342 = vld [vmem:[%s4 + $0x168] sm:$0xff]
        %v3343 = vld [vmem:[%s4 + $0x170] sm:$0xff]
        %v3344 = vld [vmem:[%s4 + $0x178] sm:$0xff]
        %v3345 = vld [vmem:[%s4 + $0x180] sm:$0xff]
        %v3346 = vld [vmem:[%s4 + $0x188] sm:$0xff]
        %v3347 = vld [vmem:[%s4 + $0x190] sm:$0xff]
        %v3348 = vld [vmem:[%s4 + $0x198] sm:$0xff]
        %v3349 = vld [vmem:[%s4 + $0x1a0] sm:$0xff]
        %v3350 = vld [vmem:[%s4 + $0x1a8] sm:$0xff]
        %v3351 = vld [vmem:[%s4 + $0x1b0] sm:$0xff]
        %v3352 = vld [vmem:[%s4 + $0x1b8] sm:$0xff]
        %v3353 = vld [vmem:[%s4 + $0x1c0] sm:$0xff]
        %v3354 = vld [vmem:[%s4 + $0x1c8] sm:$0xff]
        %v3355 = vld [vmem:[%s4 + $0x1d0] sm:$0xff]
        %v3356 = vld [vmem:[%s4 + $0x1d8] sm:$0xff]
        %v3357 = vld [vmem:[%s4 + $0x1e0] sm:$0xff]
        %v3358 = vld [vmem:[%s4 + $0x1e8] sm:$0xff]
        %v3359 = vld [vmem:[%s4 + $0x1f0] sm:$0xff]
        %v3360 = vld [vmem:[%s4 + $0x1f8] sm:$0xff]
        %3361 = vmatprep.subr.mxu0 %v3298
        %3362 = vmatpush1.msra.mxu0 %v3297
        %3363 = vmatprep.subr.mxu0 %v3302
        %3364 = vmatpush1.msra.mxu0 %v3301
        %3365 = vmatprep.subr.mxu0 %v3306
        %3366 = vmatpush1.msra.mxu0 %v3305
        %3367 = vmatprep.subr.mxu0 %v3310
        %3368 = vmatpush1.msra.mxu0 %v3309
        %3369 = vmatprep.subr.mxu0 %v3314
        %3370 = vmatpush1.msra.mxu0 %v3313
        %3371 = vmatprep.subr.mxu0 %v3318
        %3372 = vmatpush1.msra.mxu0 %v3317
        %3373 = vmatprep.subr.mxu0 %v3322
        %3374 = vmatpush1.msra.mxu0 %v3321
        %3375 = vmatprep.subr.mxu0 %v3326
        %3376 = vmatpush1.msra.mxu0 %v3325
        %3377 = vmatprep.subr.mxu0 %v3330
        %3378 = vmatpush1.msra.mxu0 %v3329
        %3379 = vmatprep.subr.mxu0 %v3334
        %3380 = vmatpush1.msra.mxu0 %v3333
        %3381 = vmatprep.subr.mxu0 %v3338
        %3382 = vmatpush1.msra.mxu0 %v3337
        %3383 = vmatprep.subr.mxu0 %v3342
        %3384 = vmatpush1.msra.mxu0 %v3341
        %3385 = vmatprep.subr.mxu0 %v3346
        %3386 = vmatpush1.msra.mxu0 %v3345
        %3387 = vmatprep.subr.mxu0 %v3350
        %3388 = vmatpush1.msra.mxu0 %v3349
        %3389 = vmatprep.subr.mxu0 %v3354
        %3390 = vmatpush1.msra.mxu0 %v3353
        %3391 = vmatprep.subr.mxu0 %v3358
        %3392 = vmatpush1.msra.mxu0 %v3357
        %3393 = vmatprep.subr.mxu0 0.0
        %3394 = vmatpush1.msra.mxu0 0.0
        %3395 = vmatprep.subr.mxu0 0.0
        %3396 = vmatpush1.msra.mxu0 0.0
        %3397 = vmatprep.subr.mxu0 0.0
        %3398 = vmatpush1.msra.mxu0 0.0
        %3399 = vmatprep.subr.mxu0 0.0
        %3400 = vmatpush1.msra.mxu0 0.0
        %3401 = vmatprep.subr.mxu0 0.0
        %3402 = vmatpush1.msra.mxu0 0.0
        %3403 = vmatprep.subr.mxu0 0.0
        %3404 = vmatpush1.msra.mxu0 0.0
        %3405 = vmatprep.subr.mxu0 0.0
        %3406 = vmatpush1.msra.mxu0 0.0
        %3407 = vmatprep.subr.mxu0 0.0
        %3408 = vmatpush1.msra.mxu0 0.0
        %3409 = vmatprep.subr.mxu0 0.0
        %3410 = vmatpush1.msra.mxu0 0.0
        %3411 = vmatprep.subr.mxu0 0.0
        %3412 = vmatpush1.msra.mxu0 0.0
        %3413 = vmatprep.subr.mxu0 0.0
        %3414 = vmatpush1.msra.mxu0 0.0
        %3415 = vmatprep.subr.mxu0 0.0
        %3416 = vmatpush1.msra.mxu0 0.0
        %3417 = vmatprep.subr.mxu0 0.0
        %3418 = vmatpush1.msra.mxu0 0.0
        %3419 = vmatprep.subr.mxu0 0.0
        %3420 = vmatpush1.msra.mxu0 0.0
        %3421 = vmatprep.subr.mxu0 0.0
        %3422 = vmatpush1.msra.mxu0 0.0
        %3423 = vmatprep.subr.mxu0 0.0
        %3424 = vmatpush1.msra.mxu0 0.0
        %3425 = vmatprep.mubr.f32.mxu0 0.0
        %3426 = vmatmul.mubr.f32.gmra.mrb[0].mxu0 %v3290
        %v3427 = vpop.f32.mrb[0].mxu0
        %v3428 = vadd.f32 0.0, %v3427
        %v3429 = vpop.f32.mrb[0].mxu0
        %v3430 = vadd.f32 0.0, %v3429
        %3431 = vdwg.mxu0
        %3432 = vmatprep.subr.mxu0 %v3300
        %3433 = vmatpush1.msra.mxu0 %v3299
        %3434 = vmatprep.subr.mxu0 %v3304
        %3435 = vmatpush1.msra.mxu0 %v3303
        %3436 = vmatprep.subr.mxu0 %v3308
        %3437 = vmatpush1.msra.mxu0 %v3307
        %3438 = vmatprep.subr.mxu0 %v3312
        %3439 = vmatpush1.msra.mxu0 %v3311
        %3440 = vmatprep.subr.mxu0 %v3316
        %3441 = vmatpush1.msra.mxu0 %v3315
        %3442 = vmatprep.subr.mxu0 %v3320
        %3443 = vmatpush1.msra.mxu0 %v3319
        %3444 = vmatprep.subr.mxu0 %v3324
        %3445 = vmatpush1.msra.mxu0 %v3323
        %3446 = vmatprep.subr.mxu0 %v3328
        %3447 = vmatpush1.msra.mxu0 %v3327
        %3448 = vmatprep.subr.mxu0 %v3332
        %3449 = vmatpush1.msra.mxu0 %v3331
        %3450 = vmatprep.subr.mxu0 %v3336
        %3451 = vmatpush1.msra.mxu0 %v3335
        %3452 = vmatprep.subr.mxu0 %v3340
        %3453 = vmatpush1.msra.mxu0 %v3339
        %3454 = vmatprep.subr.mxu0 %v3344
        %3455 = vmatpush1.msra.mxu0 %v3343
        %3456 = vmatprep.subr.mxu0 %v3348
        %3457 = vmatpush1.msra.mxu0 %v3347
        %3458 = vmatprep.subr.mxu0 %v3352
        %3459 = vmatpush1.msra.mxu0 %v3351
        %3460 = vmatprep.subr.mxu0 %v3356
        %3461 = vmatpush1.msra.mxu0 %v3355
        %3462 = vmatprep.subr.mxu0 %v3360
        %3463 = vmatpush1.msra.mxu0 %v3359
        %3464 = vmatprep.subr.mxu0 0.0
        %3465 = vmatpush1.msra.mxu0 0.0
        %3466 = vmatprep.subr.mxu0 0.0
        %3467 = vmatpush1.msra.mxu0 0.0
        %3468 = vmatprep.subr.mxu0 0.0
        %3469 = vmatpush1.msra.mxu0 0.0
        %3470 = vmatprep.subr.mxu0 0.0
        %3471 = vmatpush1.msra.mxu0 0.0
        %3472 = vmatprep.subr.mxu0 0.0
        %3473 = vmatpush1.msra.mxu0 0.0
        %3474 = vmatprep.subr.mxu0 0.0
        %3475 = vmatpush1.msra.mxu0 0.0
        %3476 = vmatprep.subr.mxu0 0.0
        %3477 = vmatpush1.msra.mxu0 0.0
        %3478 = vmatprep.subr.mxu0 0.0
        %3479 = vmatpush1.msra.mxu0 0.0
        %3480 = vmatprep.subr.mxu0 0.0
        %3481 = vmatpush1.msra.mxu0 0.0
        %3482 = vmatprep.subr.mxu0 0.0
        %3483 = vmatpush1.msra.mxu0 0.0
        %3484 = vmatprep.subr.mxu0 0.0
        %3485 = vmatpush1.msra.mxu0 0.0
        %3486 = vmatprep.subr.mxu0 0.0
        %3487 = vmatpush1.msra.mxu0 0.0
        %3488 = vmatprep.subr.mxu0 0.0
        %3489 = vmatpush1.msra.mxu0 0.0
        %3490 = vmatprep.subr.mxu0 0.0
        %3491 = vmatpush1.msra.mxu0 0.0
        %3492 = vmatprep.subr.mxu0 0.0
        %3493 = vmatpush1.msra.mxu0 0.0
        %3494 = vmatprep.subr.mxu0 0.0
        %3495 = vmatpush1.msra.mxu0 0.0
        %3496 = vmatprep.mubr.f32.mxu0 0.0
        %3497 = vmatmul.mubr.f32.gmra.mrb[0].mxu0 %v3290
        %v3498 = vpop.f32.mrb[0].mxu0
        %v3499 = vadd.f32 0.0, %v3498
        %v3500 = vpop.f32.mrb[0].mxu0
        %v3501 = vadd.f32 0.0, %v3500
        %3502 = vdwg.mxu0
        %v3503 = vadd.f32 %v3293, %v3428
        %v3504 = vadd.f32 %v3294, %v3430
        %v3505 = vadd.f32 %v3295, %v3499
        %v3506 = vadd.f32 %v3296, %v3501
        %v3507 = vmul.f32 %v3503, 0.5
        %v3508 = vtanh.pop %v3507
        %v3509 = vmul.f32 %v3508, 0.5
        %v3510 = vadd.f32 %v3509, 0.5
        %v3511 = vmul.f32 %v3504, 0.5
        %v3512 = vtanh.pop %v3511
        %v3513 = vmul.f32 %v3512, 0.5
        %v3514 = vadd.f32 %v3513, 0.5
        %v3515 = vtanh.pop %v3505
        %v3516 = vmul.f32 %v3506, 0.5
        %v3517 = vtanh.pop %v3516
        %v3518 = vmul.f32 %v3517, 0.5
        %v3519 = vadd.f32 %v3518, 0.5
        %v3520 = vmul.f32 %v3514, %v3288
        %v3521 = vmul.f32 %v3510, %v3515
        %v3522 = vadd.f32 %v3520, %v3521
        %v3523 = vtanh.pop %v3522
        %v3524 = vmul.f32 %v3519, %v3523
        %s3525 = scalar_lea.vmem [#allocation4], 40
        %3526 = vst [vmem:[%s3525] sm:$0xff] %v3524
        %v3527 = vld [vmem:[%s2102] sm:$0xff]
        %v3528 = vld [vmem:[%s2102 + $0x8] sm:$0xff]
        %v3529 = vld [vmem:[%s2102 + $0x10] sm:$0xff]
        %v3530 = vld [vmem:[%s2102 + $0x18] sm:$0xff]
        %v3531 = vld [vmem:[%s4] sm:$0xff]
        %v3532 = vld [vmem:[%s4 + $0x8] sm:$0xff]
        %v3533 = vld [vmem:[%s4 + $0x10] sm:$0xff]
        %v3534 = vld [vmem:[%s4 + $0x18] sm:$0xff]
        %v3535 = vld [vmem:[%s4 + $0x20] sm:$0xff]
        %v3536 = vld [vmem:[%s4 + $0x28] sm:$0xff]
        %v3537 = vld [vmem:[%s4 + $0x30] sm:$0xff]
        %v3538 = vld [vmem:[%s4 + $0x38] sm:$0xff]
        %v3539 = vld [vmem:[%s4 + $0x40] sm:$0xff]
        %v3540 = vld [vmem:[%s4 + $0x48] sm:$0xff]
        %v3541 = vld [vmem:[%s4 + $0x50] sm:$0xff]
        %v3542 = vld [vmem:[%s4 + $0x58] sm:$0xff]
        %v3543 = vld [vmem:[%s4 + $0x60] sm:$0xff]
        %v3544 = vld [vmem:[%s4 + $0x68] sm:$0xff]
        %v3545 = vld [vmem:[%s4 + $0x70] sm:$0xff]
        %v3546 = vld [vmem:[%s4 + $0x78] sm:$0xff]
        %v3547 = vld [vmem:[%s4 + $0x80] sm:$0xff]
        %v3548 = vld [vmem:[%s4 + $0x88] sm:$0xff]
        %v3549 = vld [vmem:[%s4 + $0x90] sm:$0xff]
        %v3550 = vld [vmem:[%s4 + $0x98] sm:$0xff]
        %v3551 = vld [vmem:[%s4 + $0xa0] sm:$0xff]
        %v3552 = vld [vmem:[%s4 + $0xa8] sm:$0xff]
        %v3553 = vld [vmem:[%s4 + $0xb0] sm:$0xff]
        %v3554 = vld [vmem:[%s4 + $0xb8] sm:$0xff]
        %v3555 = vld [vmem:[%s4 + $0xc0] sm:$0xff]
        %v3556 = vld [vmem:[%s4 + $0xc8] sm:$0xff]
        %v3557 = vld [vmem:[%s4 + $0xd0] sm:$0xff]
        %v3558 = vld [vmem:[%s4 + $0xd8] sm:$0xff]
        %v3559 = vld [vmem:[%s4 + $0xe0] sm:$0xff]
        %v3560 = vld [vmem:[%s4 + $0xe8] sm:$0xff]
        %v3561 = vld [vmem:[%s4 + $0xf0] sm:$0xff]
        %v3562 = vld [vmem:[%s4 + $0xf8] sm:$0xff]
        %v3563 = vld [vmem:[%s4 + $0x100] sm:$0xff]
        %v3564 = vld [vmem:[%s4 + $0x108] sm:$0xff]
        %v3565 = vld [vmem:[%s4 + $0x110] sm:$0xff]
        %v3566 = vld [vmem:[%s4 + $0x118] sm:$0xff]
        %v3567 = vld [vmem:[%s4 + $0x120] sm:$0xff]
        %v3568 = vld [vmem:[%s4 + $0x128] sm:$0xff]
        %v3569 = vld [vmem:[%s4 + $0x130] sm:$0xff]
        %v3570 = vld [vmem:[%s4 + $0x138] sm:$0xff]
        %v3571 = vld [vmem:[%s4 + $0x140] sm:$0xff]
        %v3572 = vld [vmem:[%s4 + $0x148] sm:$0xff]
        %v3573 = vld [vmem:[%s4 + $0x150] sm:$0xff]
        %v3574 = vld [vmem:[%s4 + $0x158] sm:$0xff]
        %v3575 = vld [vmem:[%s4 + $0x160] sm:$0xff]
        %v3576 = vld [vmem:[%s4 + $0x168] sm:$0xff]
        %v3577 = vld [vmem:[%s4 + $0x170] sm:$0xff]
        %v3578 = vld [vmem:[%s4 + $0x178] sm:$0xff]
        %v3579 = vld [vmem:[%s4 + $0x180] sm:$0xff]
        %v3580 = vld [vmem:[%s4 + $0x188] sm:$0xff]
        %v3581 = vld [vmem:[%s4 + $0x190] sm:$0xff]
        %v3582 = vld [vmem:[%s4 + $0x198] sm:$0xff]
        %v3583 = vld [vmem:[%s4 + $0x1a0] sm:$0xff]
        %v3584 = vld [vmem:[%s4 + $0x1a8] sm:$0xff]
        %v3585 = vld [vmem:[%s4 + $0x1b0] sm:$0xff]
        %v3586 = vld [vmem:[%s4 + $0x1b8] sm:$0xff]
        %v3587 = vld [vmem:[%s4 + $0x1c0] sm:$0xff]
        %v3588 = vld [vmem:[%s4 + $0x1c8] sm:$0xff]
        %v3589 = vld [vmem:[%s4 + $0x1d0] sm:$0xff]
        %v3590 = vld [vmem:[%s4 + $0x1d8] sm:$0xff]
        %v3591 = vld [vmem:[%s4 + $0x1e0] sm:$0xff]
        %v3592 = vld [vmem:[%s4 + $0x1e8] sm:$0xff]
        %v3593 = vld [vmem:[%s4 + $0x1f0] sm:$0xff]
        %v3594 = vld [vmem:[%s4 + $0x1f8] sm:$0xff]
        %3595 = vmatprep.subr.mxu0 %v3532
        %3596 = vmatpush1.msra.mxu0 %v3531
        %3597 = vmatprep.subr.mxu0 %v3536
        %3598 = vmatpush1.msra.mxu0 %v3535
        %3599 = vmatprep.subr.mxu0 %v3540
        %3600 = vmatpush1.msra.mxu0 %v3539
        %3601 = vmatprep.subr.mxu0 %v3544
        %3602 = vmatpush1.msra.mxu0 %v3543
        %3603 = vmatprep.subr.mxu0 %v3548
        %3604 = vmatpush1.msra.mxu0 %v3547
        %3605 = vmatprep.subr.mxu0 %v3552
        %3606 = vmatpush1.msra.mxu0 %v3551
        %3607 = vmatprep.subr.mxu0 %v3556
        %3608 = vmatpush1.msra.mxu0 %v3555
        %3609 = vmatprep.subr.mxu0 %v3560
        %3610 = vmatpush1.msra.mxu0 %v3559
        %3611 = vmatprep.subr.mxu0 %v3564
        %3612 = vmatpush1.msra.mxu0 %v3563
        %3613 = vmatprep.subr.mxu0 %v3568
        %3614 = vmatpush1.msra.mxu0 %v3567
        %3615 = vmatprep.subr.mxu0 %v3572
        %3616 = vmatpush1.msra.mxu0 %v3571
        %3617 = vmatprep.subr.mxu0 %v3576
        %3618 = vmatpush1.msra.mxu0 %v3575
        %3619 = vmatprep.subr.mxu0 %v3580
        %3620 = vmatpush1.msra.mxu0 %v3579
        %3621 = vmatprep.subr.mxu0 %v3584
        %3622 = vmatpush1.msra.mxu0 %v3583
        %3623 = vmatprep.subr.mxu0 %v3588
        %3624 = vmatpush1.msra.mxu0 %v3587
        %3625 = vmatprep.subr.mxu0 %v3592
        %3626 = vmatpush1.msra.mxu0 %v3591
        %3627 = vmatprep.subr.mxu0 0.0
        %3628 = vmatpush1.msra.mxu0 0.0
        %3629 = vmatprep.subr.mxu0 0.0
        %3630 = vmatpush1.msra.mxu0 0.0
        %3631 = vmatprep.subr.mxu0 0.0
        %3632 = vmatpush1.msra.mxu0 0.0
        %3633 = vmatprep.subr.mxu0 0.0
        %3634 = vmatpush1.msra.mxu0 0.0
        %3635 = vmatprep.subr.mxu0 0.0
        %3636 = vmatpush1.msra.mxu0 0.0
        %3637 = vmatprep.subr.mxu0 0.0
        %3638 = vmatpush1.msra.mxu0 0.0
        %3639 = vmatprep.subr.mxu0 0.0
        %3640 = vmatpush1.msra.mxu0 0.0
        %3641 = vmatprep.subr.mxu0 0.0
        %3642 = vmatpush1.msra.mxu0 0.0
        %3643 = vmatprep.subr.mxu0 0.0
        %3644 = vmatpush1.msra.mxu0 0.0
        %3645 = vmatprep.subr.mxu0 0.0
        %3646 = vmatpush1.msra.mxu0 0.0
        %3647 = vmatprep.subr.mxu0 0.0
        %3648 = vmatpush1.msra.mxu0 0.0
        %3649 = vmatprep.subr.mxu0 0.0
        %3650 = vmatpush1.msra.mxu0 0.0
        %3651 = vmatprep.subr.mxu0 0.0
        %3652 = vmatpush1.msra.mxu0 0.0
        %3653 = vmatprep.subr.mxu0 0.0
        %3654 = vmatpush1.msra.mxu0 0.0
        %3655 = vmatprep.subr.mxu0 0.0
        %3656 = vmatpush1.msra.mxu0 0.0
        %3657 = vmatprep.subr.mxu0 0.0
        %3658 = vmatpush1.msra.mxu0 0.0
        %3659 = vmatprep.mubr.f32.mxu0 0.0
        %3660 = vmatmul.mubr.f32.gmra.mrb[0].mxu0 %v3524
        %v3661 = vpop.f32.mrb[0].mxu0
        %v3662 = vadd.f32 0.0, %v3661
        %v3663 = vpop.f32.mrb[0].mxu0
        %v3664 = vadd.f32 0.0, %v3663
        %3665 = vdwg.mxu0
        %3666 = vmatprep.subr.mxu0 %v3534
        %3667 = vmatpush1.msra.mxu0 %v3533
        %3668 = vmatprep.subr.mxu0 %v3538
        %3669 = vmatpush1.msra.mxu0 %v3537
        %3670 = vmatprep.subr.mxu0 %v3542
        %3671 = vmatpush1.msra.mxu0 %v3541
        %3672 = vmatprep.subr.mxu0 %v3546
        %3673 = vmatpush1.msra.mxu0 %v3545
        %3674 = vmatprep.subr.mxu0 %v3550
        %3675 = vmatpush1.msra.mxu0 %v3549
        %3676 = vmatprep.subr.mxu0 %v3554
        %3677 = vmatpush1.msra.mxu0 %v3553
        %3678 = vmatprep.subr.mxu0 %v3558
        %3679 = vmatpush1.msra.mxu0 %v3557
        %3680 = vmatprep.subr.mxu0 %v3562
        %3681 = vmatpush1.msra.mxu0 %v3561
        %3682 = vmatprep.subr.mxu0 %v3566
        %3683 = vmatpush1.msra.mxu0 %v3565
        %3684 = vmatprep.subr.mxu0 %v3570
        %3685 = vmatpush1.msra.mxu0 %v3569
        %3686 = vmatprep.subr.mxu0 %v3574
        %3687 = vmatpush1.msra.mxu0 %v3573
        %3688 = vmatprep.subr.mxu0 %v3578
        %3689 = vmatpush1.msra.mxu0 %v3577
        %3690 = vmatprep.subr.mxu0 %v3582
        %3691 = vmatpush1.msra.mxu0 %v3581
        %3692 = vmatprep.subr.mxu0 %v3586
        %3693 = vmatpush1.msra.mxu0 %v3585
        %3694 = vmatprep.subr.mxu0 %v3590
        %3695 = vmatpush1.msra.mxu0 %v3589
        %3696 = vmatprep.subr.mxu0 %v3594
        %3697 = vmatpush1.msra.mxu0 %v3593
        %3698 = vmatprep.subr.mxu0 0.0
        %3699 = vmatpush1.msra.mxu0 0.0
        %3700 = vmatprep.subr.mxu0 0.0
        %3701 = vmatpush1.msra.mxu0 0.0
        %3702 = vmatprep.subr.mxu0 0.0
        %3703 = vmatpush1.msra.mxu0 0.0
        %3704 = vmatprep.subr.mxu0 0.0
        %3705 = vmatpush1.msra.mxu0 0.0
        %3706 = vmatprep.subr.mxu0 0.0
        %3707 = vmatpush1.msra.mxu0 0.0
        %3708 = vmatprep.subr.mxu0 0.0
        %3709 = vmatpush1.msra.mxu0 0.0
        %3710 = vmatprep.subr.mxu0 0.0
        %3711 = vmatpush1.msra.mxu0 0.0
        %3712 = vmatprep.subr.mxu0 0.0
        %3713 = vmatpush1.msra.mxu0 0.0
        %3714 = vmatprep.subr.mxu0 0.0
        %3715 = vmatpush1.msra.mxu0 0.0
        %3716 = vmatprep.subr.mxu0 0.0
        %3717 = vmatpush1.msra.mxu0 0.0
        %3718 = vmatprep.subr.mxu0 0.0
        %3719 = vmatpush1.msra.mxu0 0.0
        %3720 = vmatprep.subr.mxu0 0.0
        %3721 = vmatpush1.msra.mxu0 0.0
        %3722 = vmatprep.subr.mxu0 0.0
        %3723 = vmatpush1.msra.mxu0 0.0
        %3724 = vmatprep.subr.mxu0 0.0
        %3725 = vmatpush1.msra.mxu0 0.0
        %3726 = vmatprep.subr.mxu0 0.0
        %3727 = vmatpush1.msra.mxu0 0.0
        %3728 = vmatprep.subr.mxu0 0.0
        %3729 = vmatpush1.msra.mxu0 0.0
        %3730 = vmatprep.mubr.f32.mxu0 0.0
        %3731 = vmatmul.mubr.f32.gmra.mrb[0].mxu0 %v3524
        %v3732 = vpop.f32.mrb[0].mxu0
        %v3733 = vadd.f32 0.0, %v3732
        %v3734 = vpop.f32.mrb[0].mxu0
        %v3735 = vadd.f32 0.0, %v3734
        %3736 = vdwg.mxu0
        %v3737 = vadd.f32 %v3527, %v3662
        %v3738 = vadd.f32 %v3528, %v3664
        %v3739 = vadd.f32 %v3529, %v3733
        %v3740 = vadd.f32 %v3530, %v3735
        %v3741 = vmul.f32 %v3737, 0.5
        %v3742 = vtanh.pop %v3741
        %v3743 = vmul.f32 %v3742, 0.5
        %v3744 = vadd.f32 %v3743, 0.5
        %v3745 = vmul.f32 %v3738, 0.5
        %v3746 = vtanh.pop %v3745
        %v3747 = vmul.f32 %v3746, 0.5
        %v3748 = vadd.f32 %v3747, 0.5
        %v3749 = vtanh.pop %v3739
        %v3750 = vmul.f32 %v3740, 0.5
        %v3751 = vtanh.pop %v3750
        %v3752 = vmul.f32 %v3751, 0.5
        %v3753 = vadd.f32 %v3752, 0.5
        %v3754 = vmul.f32 %v3748, %v3522
        %v3755 = vmul.f32 %v3744, %v3749
        %v3756 = vadd.f32 %v3754, %v3755
        %v3757 = vtanh.pop %v3756
        %v3758 = vmul.f32 %v3753, %v3757
        %s3759 = scalar_lea.vmem [#allocation4], 48
        %3760 = vst [vmem:[%s3759] sm:$0xff] %v3758
        %v3761 = vld [vmem:[%s2119] sm:$0xff]
        %v3762 = vld [vmem:[%s2119 + $0x8] sm:$0xff]
        %v3763 = vld [vmem:[%s2119 + $0x10] sm:$0xff]
        %v3764 = vld [vmem:[%s2119 + $0x18] sm:$0xff]
        %v3765 = vld [vmem:[%s4] sm:$0xff]
        %v3766 = vld [vmem:[%s4 + $0x8] sm:$0xff]
        %v3767 = vld [vmem:[%s4 + $0x10] sm:$0xff]
        %v3768 = vld [vmem:[%s4 + $0x18] sm:$0xff]
        %v3769 = vld [vmem:[%s4 + $0x20] sm:$0xff]
        %v3770 = vld [vmem:[%s4 + $0x28] sm:$0xff]
        %v3771 = vld [vmem:[%s4 + $0x30] sm:$0xff]
        %v3772 = vld [vmem:[%s4 + $0x38] sm:$0xff]
        %v3773 = vld [vmem:[%s4 + $0x40] sm:$0xff]
        %v3774 = vld [vmem:[%s4 + $0x48] sm:$0xff]
        %v3775 = vld [vmem:[%s4 + $0x50] sm:$0xff]
        %v3776 = vld [vmem:[%s4 + $0x58] sm:$0xff]
        %v3777 = vld [vmem:[%s4 + $0x60] sm:$0xff]
        %v3778 = vld [vmem:[%s4 + $0x68] sm:$0xff]
        %v3779 = vld [vmem:[%s4 + $0x70] sm:$0xff]
        %v3780 = vld [vmem:[%s4 + $0x78] sm:$0xff]
        %v3781 = vld [vmem:[%s4 + $0x80] sm:$0xff]
        %v3782 = vld [vmem:[%s4 + $0x88] sm:$0xff]
        %v3783 = vld [vmem:[%s4 + $0x90] sm:$0xff]
        %v3784 = vld [vmem:[%s4 + $0x98] sm:$0xff]
        %v3785 = vld [vmem:[%s4 + $0xa0] sm:$0xff]
        %v3786 = vld [vmem:[%s4 + $0xa8] sm:$0xff]
        %v3787 = vld [vmem:[%s4 + $0xb0] sm:$0xff]
        %v3788 = vld [vmem:[%s4 + $0xb8] sm:$0xff]
        %v3789 = vld [vmem:[%s4 + $0xc0] sm:$0xff]
        %v3790 = vld [vmem:[%s4 + $0xc8] sm:$0xff]
        %v3791 = vld [vmem:[%s4 + $0xd0] sm:$0xff]
        %v3792 = vld [vmem:[%s4 + $0xd8] sm:$0xff]
        %v3793 = vld [vmem:[%s4 + $0xe0] sm:$0xff]
        %v3794 = vld [vmem:[%s4 + $0xe8] sm:$0xff]
        %v3795 = vld [vmem:[%s4 + $0xf0] sm:$0xff]
        %v3796 = vld [vmem:[%s4 + $0xf8] sm:$0xff]
        %v3797 = vld [vmem:[%s4 + $0x100] sm:$0xff]
        %v3798 = vld [vmem:[%s4 + $0x108] sm:$0xff]
        %v3799 = vld [vmem:[%s4 + $0x110] sm:$0xff]
        %v3800 = vld [vmem:[%s4 + $0x118] sm:$0xff]
        %v3801 = vld [vmem:[%s4 + $0x120] sm:$0xff]
        %v3802 = vld [vmem:[%s4 + $0x128] sm:$0xff]
        %v3803 = vld [vmem:[%s4 + $0x130] sm:$0xff]
        %v3804 = vld [vmem:[%s4 + $0x138] sm:$0xff]
        %v3805 = vld [vmem:[%s4 + $0x140] sm:$0xff]
        %v3806 = vld [vmem:[%s4 + $0x148] sm:$0xff]
        %v3807 = vld [vmem:[%s4 + $0x150] sm:$0xff]
        %v3808 = vld [vmem:[%s4 + $0x158] sm:$0xff]
        %v3809 = vld [vmem:[%s4 + $0x160] sm:$0xff]
        %v3810 = vld [vmem:[%s4 + $0x168] sm:$0xff]
        %v3811 = vld [vmem:[%s4 + $0x170] sm:$0xff]
        %v3812 = vld [vmem:[%s4 + $0x178] sm:$0xff]
        %v3813 = vld [vmem:[%s4 + $0x180] sm:$0xff]
        %v3814 = vld [vmem:[%s4 + $0x188] sm:$0xff]
        %v3815 = vld [vmem:[%s4 + $0x190] sm:$0xff]
        %v3816 = vld [vmem:[%s4 + $0x198] sm:$0xff]
        %v3817 = vld [vmem:[%s4 + $0x1a0] sm:$0xff]
        %v3818 = vld [vmem:[%s4 + $0x1a8] sm:$0xff]
        %v3819 = vld [vmem:[%s4 + $0x1b0] sm:$0xff]
        %v3820 = vld [vmem:[%s4 + $0x1b8] sm:$0xff]
        %v3821 = vld [vmem:[%s4 + $0x1c0] sm:$0xff]
        %v3822 = vld [vmem:[%s4 + $0x1c8] sm:$0xff]
        %v3823 = vld [vmem:[%s4 + $0x1d0] sm:$0xff]
        %v3824 = vld [vmem:[%s4 + $0x1d8] sm:$0xff]
        %v3825 = vld [vmem:[%s4 + $0x1e0] sm:$0xff]
        %v3826 = vld [vmem:[%s4 + $0x1e8] sm:$0xff]
        %v3827 = vld [vmem:[%s4 + $0x1f0] sm:$0xff]
        %v3828 = vld [vmem:[%s4 + $0x1f8] sm:$0xff]
        %3829 = vmatprep.subr.mxu0 %v3766
        %3830 = vmatpush1.msra.mxu0 %v3765
        %3831 = vmatprep.subr.mxu0 %v3770
        %3832 = vmatpush1.msra.mxu0 %v3769
        %3833 = vmatprep.subr.mxu0 %v3774
        %3834 = vmatpush1.msra.mxu0 %v3773
        %3835 = vmatprep.subr.mxu0 %v3778
        %3836 = vmatpush1.msra.mxu0 %v3777
        %3837 = vmatprep.subr.mxu0 %v3782
        %3838 = vmatpush1.msra.mxu0 %v3781
        %3839 = vmatprep.subr.mxu0 %v3786
        %3840 = vmatpush1.msra.mxu0 %v3785
        %3841 = vmatprep.subr.mxu0 %v3790
        %3842 = vmatpush1.msra.mxu0 %v3789
        %3843 = vmatprep.subr.mxu0 %v3794
        %3844 = vmatpush1.msra.mxu0 %v3793
        %3845 = vmatprep.subr.mxu0 %v3798
        %3846 = vmatpush1.msra.mxu0 %v3797
        %3847 = vmatprep.subr.mxu0 %v3802
        %3848 = vmatpush1.msra.mxu0 %v3801
        %3849 = vmatprep.subr.mxu0 %v3806
        %3850 = vmatpush1.msra.mxu0 %v3805
        %3851 = vmatprep.subr.mxu0 %v3810
        %3852 = vmatpush1.msra.mxu0 %v3809
        %3853 = vmatprep.subr.mxu0 %v3814
        %3854 = vmatpush1.msra.mxu0 %v3813
        %3855 = vmatprep.subr.mxu0 %v3818
        %3856 = vmatpush1.msra.mxu0 %v3817
        %3857 = vmatprep.subr.mxu0 %v3822
        %3858 = vmatpush1.msra.mxu0 %v3821
        %3859 = vmatprep.subr.mxu0 %v3826
        %3860 = vmatpush1.msra.mxu0 %v3825
        %3861 = vmatprep.subr.mxu0 0.0
        %3862 = vmatpush1.msra.mxu0 0.0
        %3863 = vmatprep.subr.mxu0 0.0
        %3864 = vmatpush1.msra.mxu0 0.0
        %3865 = vmatprep.subr.mxu0 0.0
        %3866 = vmatpush1.msra.mxu0 0.0
        %3867 = vmatprep.subr.mxu0 0.0
        %3868 = vmatpush1.msra.mxu0 0.0
        %3869 = vmatprep.subr.mxu0 0.0
        %3870 = vmatpush1.msra.mxu0 0.0
        %3871 = vmatprep.subr.mxu0 0.0
        %3872 = vmatpush1.msra.mxu0 0.0
        %3873 = vmatprep.subr.mxu0 0.0
        %3874 = vmatpush1.msra.mxu0 0.0
        %3875 = vmatprep.subr.mxu0 0.0
        %3876 = vmatpush1.msra.mxu0 0.0
        %3877 = vmatprep.subr.mxu0 0.0
        %3878 = vmatpush1.msra.mxu0 0.0
        %3879 = vmatprep.subr.mxu0 0.0
        %3880 = vmatpush1.msra.mxu0 0.0
        %3881 = vmatprep.subr.mxu0 0.0
        %3882 = vmatpush1.msra.mxu0 0.0
        %3883 = vmatprep.subr.mxu0 0.0
        %3884 = vmatpush1.msra.mxu0 0.0
        %3885 = vmatprep.subr.mxu0 0.0
        %3886 = vmatpush1.msra.mxu0 0.0
        %3887 = vmatprep.subr.mxu0 0.0
        %3888 = vmatpush1.msra.mxu0 0.0
        %3889 = vmatprep.subr.mxu0 0.0
        %3890 = vmatpush1.msra.mxu0 0.0
        %3891 = vmatprep.subr.mxu0 0.0
        %3892 = vmatpush1.msra.mxu0 0.0
        %3893 = vmatprep.mubr.f32.mxu0 0.0
        %3894 = vmatmul.mubr.f32.gmra.mrb[0].mxu0 %v3758
        %v3895 = vpop.f32.mrb[0].mxu0
        %v3896 = vadd.f32 0.0, %v3895
        %v3897 = vpop.f32.mrb[0].mxu0
        %v3898 = vadd.f32 0.0, %v3897
        %3899 = vdwg.mxu0
        %3900 = vmatprep.subr.mxu0 %v3768
        %3901 = vmatpush1.msra.mxu0 %v3767
        %3902 = vmatprep.subr.mxu0 %v3772
        %3903 = vmatpush1.msra.mxu0 %v3771
        %3904 = vmatprep.subr.mxu0 %v3776
        %3905 = vmatpush1.msra.mxu0 %v3775
        %3906 = vmatprep.subr.mxu0 %v3780
        %3907 = vmatpush1.msra.mxu0 %v3779
        %3908 = vmatprep.subr.mxu0 %v3784
        %3909 = vmatpush1.msra.mxu0 %v3783
        %3910 = vmatprep.subr.mxu0 %v3788
        %3911 = vmatpush1.msra.mxu0 %v3787
        %3912 = vmatprep.subr.mxu0 %v3792
        %3913 = vmatpush1.msra.mxu0 %v3791
        %3914 = vmatprep.subr.mxu0 %v3796
        %3915 = vmatpush1.msra.mxu0 %v3795
        %3916 = vmatprep.subr.mxu0 %v3800
        %3917 = vmatpush1.msra.mxu0 %v3799
        %3918 = vmatprep.subr.mxu0 %v3804
        %3919 = vmatpush1.msra.mxu0 %v3803
        %3920 = vmatprep.subr.mxu0 %v3808
        %3921 = vmatpush1.msra.mxu0 %v3807
        %3922 = vmatprep.subr.mxu0 %v3812
        %3923 = vmatpush1.msra.mxu0 %v3811
        %3924 = vmatprep.subr.mxu0 %v3816
        %3925 = vmatpush1.msra.mxu0 %v3815
        %3926 = vmatprep.subr.mxu0 %v3820
        %3927 = vmatpush1.msra.mxu0 %v3819
        %3928 = vmatprep.subr.mxu0 %v3824
        %3929 = vmatpush1.msra.mxu0 %v3823
        %3930 = vmatprep.subr.mxu0 %v3828
        %3931 = vmatpush1.msra.mxu0 %v3827
        %3932 = vmatprep.subr.mxu0 0.0
        %3933 = vmatpush1.msra.mxu0 0.0
        %3934 = vmatprep.subr.mxu0 0.0
        %3935 = vmatpush1.msra.mxu0 0.0
        %3936 = vmatprep.subr.mxu0 0.0
        %3937 = vmatpush1.msra.mxu0 0.0
        %3938 = vmatprep.subr.mxu0 0.0
        %3939 = vmatpush1.msra.mxu0 0.0
        %3940 = vmatprep.subr.mxu0 0.0
        %3941 = vmatpush1.msra.mxu0 0.0
        %3942 = vmatprep.subr.mxu0 0.0
        %3943 = vmatpush1.msra.mxu0 0.0
        %3944 = vmatprep.subr.mxu0 0.0
        %3945 = vmatpush1.msra.mxu0 0.0
        %3946 = vmatprep.subr.mxu0 0.0
        %3947 = vmatpush1.msra.mxu0 0.0
        %3948 = vmatprep.subr.mxu0 0.0
        %3949 = vmatpush1.msra.mxu0 0.0
        %3950 = vmatprep.subr.mxu0 0.0
        %3951 = vmatpush1.msra.mxu0 0.0
        %3952 = vmatprep.subr.mxu0 0.0
        %3953 = vmatpush1.msra.mxu0 0.0
        %3954 = vmatprep.subr.mxu0 0.0
        %3955 = vmatpush1.msra.mxu0 0.0
        %3956 = vmatprep.subr.mxu0 0.0
        %3957 = vmatpush1.msra.mxu0 0.0
        %3958 = vmatprep.subr.mxu0 0.0
        %3959 = vmatpush1.msra.mxu0 0.0
        %3960 = vmatprep.subr.mxu0 0.0
        %3961 = vmatpush1.msra.mxu0 0.0
        %3962 = vmatprep.subr.mxu0 0.0
        %3963 = vmatpush1.msra.mxu0 0.0
        %3964 = vmatprep.mubr.f32.mxu0 0.0
        %3965 = vmatmul.mubr.f32.gmra.mrb[0].mxu0 %v3758
        %v3966 = vpop.f32.mrb[0].mxu0
        %v3967 = vadd.f32 0.0, %v3966
        %v3968 = vpop.f32.mrb[0].mxu0
        %v3969 = vadd.f32 0.0, %v3968
        %3970 = vdwg.mxu0
        %v3971 = vadd.f32 %v3761, %v3896
        %v3972 = vadd.f32 %v3762, %v3898
        %v3973 = vadd.f32 %v3763, %v3967
        %v3974 = vadd.f32 %v3764, %v3969
        %v3975 = vmul.f32 %v3971, 0.5
        %v3976 = vtanh.pop %v3975
        %v3977 = vmul.f32 %v3976, 0.5
        %v3978 = vadd.f32 %v3977, 0.5
        %v3979 = vmul.f32 %v3972, 0.5
        %v3980 = vtanh.pop %v3979
        %v3981 = vmul.f32 %v3980, 0.5
        %v3982 = vadd.f32 %v3981, 0.5
        %v3983 = vtanh.pop %v3973
        %v3984 = vmul.f32 %v3974, 0.5
        %v3985 = vtanh.pop %v3984
        %v3986 = vmul.f32 %v3985, 0.5
        %v3987 = vadd.f32 %v3986, 0.5
        %v3988 = vmul.f32 %v3982, %v3756
        %v3989 = vmul.f32 %v3978, %v3983
        %v3990 = vadd.f32 %v3988, %v3989
        %v3991 = vtanh.pop %v3990
        %v3992 = vmul.f32 %v3987, %v3991
        %s3993 = scalar_lea.vmem [#allocation4], 56
        %3994 = vst [vmem:[%s3993] sm:$0xff] %v3992
        %v3995 = vld [vmem:[#allocation4] sm:$0xff]
        %v3996 = vld [vmem:[%s3993] sm:$0xff]
        %v3997 = vsel %vm809, 1, 0
        %vm3998 = vcmp.eq.s32.totalorder %v3997, 1
        %v3999 = vsel %vm3998, %v3995, %v3996
        %4000 = vst [vmem:[#allocation5] sm:$0xff] %v3999
        %v4001 = vld [vmem:[%s2589] sm:$0xff]
        %v4002 = vld [vmem:[%s3759] sm:$0xff]
        %v4003 = vsel %vm3998, %v4001, %v4002
        %s4004 = scalar_lea.vmem [#allocation5], 8
        %4005 = vst [vmem:[%s4004] sm:$0xff] %v4003
        %v4006 = vld [vmem:[%s2823] sm:$0xff]
        %v4007 = vld [vmem:[%s3525] sm:$0xff]
        %v4008 = vsel %vm3998, %v4006, %v4007
        %s4009 = scalar_lea.vmem [#allocation5], 16
        %4010 = vst [vmem:[%s4009] sm:$0xff] %v4008
        %v4011 = vld [vmem:[%s3057] sm:$0xff]
        %v4012 = vld [vmem:[%s3291] sm:$0xff]
        %v4013 = vsel %vm3998, %v4011, %v4012
        %s4014 = scalar_lea.vmem [#allocation5], 24
        %4015 = vst [vmem:[%s4014] sm:$0xff] %v4013
        %v4016 = vld [vmem:[%s3291] sm:$0xff]
        %v4017 = vld [vmem:[%s3057] sm:$0xff]
        %v4018 = vsel %vm3998, %v4016, %v4017
        %s4019 = scalar_lea.vmem [#allocation5], 32
        %4020 = vst [vmem:[%s4019] sm:$0xff] %v4018
        %v4021 = vld [vmem:[%s3525] sm:$0xff]
        %v4022 = vld [vmem:[%s2823] sm:$0xff]
        %v4023 = vsel %vm3998, %v4021, %v4022
        %s4024 = scalar_lea.vmem [#allocation5], 40
        %4025 = vst [vmem:[%s4024] sm:$0xff] %v4023
        %v4026 = vld [vmem:[%s3759] sm:$0xff]
        %v4027 = vld [vmem:[%s2589] sm:$0xff]
        %v4028 = vsel %vm3998, %v4026, %v4027
        %s4029 = scalar_lea.vmem [#allocation5], 48
        %4030 = vst [vmem:[%s4029] sm:$0xff] %v4028
        %v4031 = vld [vmem:[%s3993] sm:$0xff]
        %v4032 = vld [vmem:[#allocation4] sm:$0xff]
        %v4033 = vsel %vm3998, %v4031, %v4032
        %s4034 = scalar_lea.vmem [#allocation5], 56
        %4035 = vst [vmem:[%s4034] sm:$0xff] %v4033
        %v4036 = vld [vmem:[#allocation5] sm:$0xff]
        %v4037 = vld [vmem:[#allocation5 + $0x8] sm:$0xff]
        %v4038 = vld [vmem:[#allocation5 + $0x10] sm:$0xff]
        %v4039 = vld [vmem:[#allocation5 + $0x18] sm:$0xff]
        %v4040 = vld [vmem:[#allocation5 + $0x20] sm:$0xff]
        %v4041 = vld [vmem:[#allocation5 + $0x28] sm:$0xff]
        %v4042 = vld [vmem:[#allocation5 + $0x30] sm:$0xff]
        %v4043 = vld [vmem:[#allocation5 + $0x38] sm:$0xff]
        %v4044 = vld [vmem:[%s6] sm:$0xff]
        %v4045 = vld [vmem:[%s6 + $0x8] sm:$0xff]
        %v4046 = vld [vmem:[%s6 + $0x10] sm:$0xff]
        %v4047 = vld [vmem:[%s6 + $0x18] sm:$0xff]
        %v4048 = vld [vmem:[%s6 + $0x20] sm:$0xff]
        %v4049 = vld [vmem:[%s6 + $0x28] sm:$0xff]
        %v4050 = vld [vmem:[%s6 + $0x30] sm:$0xff]
        %v4051 = vld [vmem:[%s6 + $0x38] sm:$0xff]
        %v4052 = vld [vmem:[%s6 + $0x40] sm:$0xff]
        %v4053 = vld [vmem:[%s6 + $0x48] sm:$0xff]
        %v4054 = vld [vmem:[%s6 + $0x50] sm:$0xff]
        %v4055 = vld [vmem:[%s6 + $0x58] sm:$0xff]
        %v4056 = vld [vmem:[%s6 + $0x60] sm:$0xff]
        %v4057 = vld [vmem:[%s6 + $0x68] sm:$0xff]
        %v4058 = vld [vmem:[%s6 + $0x70] sm:$0xff]
        %v4059 = vld [vmem:[%s6 + $0x78] sm:$0xff]
        %v4060 = vld [vmem:[%s6 + $0x80] sm:$0xff]
        %v4061 = vld [vmem:[%s6 + $0x88] sm:$0xff]
        %v4062 = vld [vmem:[%s6 + $0x90] sm:$0xff]
        %v4063 = vld [vmem:[%s6 + $0x98] sm:$0xff]
        %v4064 = vld [vmem:[%s6 + $0xa0] sm:$0xff]
        %v4065 = vld [vmem:[%s6 + $0xa8] sm:$0xff]
        %v4066 = vld [vmem:[%s6 + $0xb0] sm:$0xff]
        %v4067 = vld [vmem:[%s6 + $0xb8] sm:$0xff]
        %v4068 = vld [vmem:[%s6 + $0xc0] sm:$0xff]
        %v4069 = vld [vmem:[%s6 + $0xc8] sm:$0xff]
        %v4070 = vld [vmem:[%s6 + $0xd0] sm:$0xff]
        %v4071 = vld [vmem:[%s6 + $0xd8] sm:$0xff]
        %v4072 = vld [vmem:[%s6 + $0xe0] sm:$0xff]
        %v4073 = vld [vmem:[%s6 + $0xe8] sm:$0xff]
        %v4074 = vld [vmem:[%s6 + $0xf0] sm:$0xff]
        %v4075 = vld [vmem:[%s6 + $0xf8] sm:$0xff]
        %v4076 = vld [vmem:[%s6 + $0x100] sm:$0xff]
        %v4077 = vld [vmem:[%s6 + $0x108] sm:$0xff]
        %v4078 = vld [vmem:[%s6 + $0x110] sm:$0xff]
        %v4079 = vld [vmem:[%s6 + $0x118] sm:$0xff]
        %v4080 = vld [vmem:[%s6 + $0x120] sm:$0xff]
        %v4081 = vld [vmem:[%s6 + $0x128] sm:$0xff]
        %v4082 = vld [vmem:[%s6 + $0x130] sm:$0xff]
        %v4083 = vld [vmem:[%s6 + $0x138] sm:$0xff]
        %v4084 = vld [vmem:[%s6 + $0x140] sm:$0xff]
        %v4085 = vld [vmem:[%s6 + $0x148] sm:$0xff]
        %v4086 = vld [vmem:[%s6 + $0x150] sm:$0xff]
        %v4087 = vld [vmem:[%s6 + $0x158] sm:$0xff]
        %v4088 = vld [vmem:[%s6 + $0x160] sm:$0xff]
        %v4089 = vld [vmem:[%s6 + $0x168] sm:$0xff]
        %v4090 = vld [vmem:[%s6 + $0x170] sm:$0xff]
        %v4091 = vld [vmem:[%s6 + $0x178] sm:$0xff]
        %v4092 = vld [vmem:[%s6 + $0x180] sm:$0xff]
        %v4093 = vld [vmem:[%s6 + $0x188] sm:$0xff]
        %v4094 = vld [vmem:[%s6 + $0x190] sm:$0xff]
        %v4095 = vld [vmem:[%s6 + $0x198] sm:$0xff]
        %v4096 = vld [vmem:[%s6 + $0x1a0] sm:$0xff]
        %v4097 = vld [vmem:[%s6 + $0x1a8] sm:$0xff]
        %v4098 = vld [vmem:[%s6 + $0x1b0] sm:$0xff]
        %v4099 = vld [vmem:[%s6 + $0x1b8] sm:$0xff]
        %v4100 = vld [vmem:[%s6 + $0x1c0] sm:$0xff]
        %v4101 = vld [vmem:[%s6 + $0x1c8] sm:$0xff]
        %v4102 = vld [vmem:[%s6 + $0x1d0] sm:$0xff]
        %v4103 = vld [vmem:[%s6 + $0x1d8] sm:$0xff]
        %v4104 = vld [vmem:[%s6 + $0x1e0] sm:$0xff]
        %v4105 = vld [vmem:[%s6 + $0x1e8] sm:$0xff]
        %v4106 = vld [vmem:[%s6 + $0x1f0] sm:$0xff]
        %v4107 = vld [vmem:[%s6 + $0x1f8] sm:$0xff]
        %v4108 = vld [vmem:[%s8] sm:$0xf]
        %v4110 = vlaneseq
        %v4111 = vshrl.u32 %v4110, 7
        %v4112 = vsub.s32 0, %v4111
        %v4113 = vrot.slane %v4108, %v4112
        %v4114 = vlaneseq
        %v4115 = vshrl.u32 %v4114, 7
        %v4116 = vsub.s32 1, %v4115
        %v4117 = vrot.slane %v4108, %v4116
        %v4118 = vlaneseq
        %v4119 = vshrl.u32 %v4118, 7
        %v4120 = vsub.s32 2, %v4119
        %v4121 = vrot.slane %v4108, %v4120
        %v4122 = vlaneseq
        %v4123 = vshrl.u32 %v4122, 7
        %v4124 = vsub.s32 3, %v4123
        %v4125 = vrot.slane %v4108, %v4124
        %4130 = vmatprep.subr.mxu0 %v4045
        %4131 = vmatpush1.msra.mxu0 %v4044
        %4132 = vmatprep.subr.mxu0 %v4049
        %4133 = vmatpush1.msra.mxu0 %v4048
        %4134 = vmatprep.subr.mxu0 %v4053
        %4135 = vmatpush1.msra.mxu0 %v4052
        %4136 = vmatprep.subr.mxu0 %v4057
        %4137 = vmatpush1.msra.mxu0 %v4056
        %4138 = vmatprep.subr.mxu0 %v4061
        %4139 = vmatpush1.msra.mxu0 %v4060
        %4140 = vmatprep.subr.mxu0 %v4065
        %4141 = vmatpush1.msra.mxu0 %v4064
        %4142 = vmatprep.subr.mxu0 %v4069
        %4143 = vmatpush1.msra.mxu0 %v4068
        %4144 = vmatprep.subr.mxu0 %v4073
        %4145 = vmatpush1.msra.mxu0 %v4072
        %4146 = vmatprep.subr.mxu0 %v4077
        %4147 = vmatpush1.msra.mxu0 %v4076
        %4148 = vmatprep.subr.mxu0 %v4081
        %4149 = vmatpush1.msra.mxu0 %v4080
        %4150 = vmatprep.subr.mxu0 %v4085
        %4151 = vmatpush1.msra.mxu0 %v4084
        %4152 = vmatprep.subr.mxu0 %v4089
        %4153 = vmatpush1.msra.mxu0 %v4088
        %4154 = vmatprep.subr.mxu0 %v4093
        %4155 = vmatpush1.msra.mxu0 %v4092
        %4156 = vmatprep.subr.mxu0 %v4097
        %4157 = vmatpush1.msra.mxu0 %v4096
        %4158 = vmatprep.subr.mxu0 %v4101
        %4159 = vmatpush1.msra.mxu0 %v4100
        %4160 = vmatprep.subr.mxu0 %v4105
        %4161 = vmatpush1.msra.mxu0 %v4104
        %4162 = vmatprep.subr.mxu0 0.0
        %4163 = vmatpush1.msra.mxu0 0.0
        %4164 = vmatprep.subr.mxu0 0.0
        %4165 = vmatpush1.msra.mxu0 0.0
        %4166 = vmatprep.subr.mxu0 0.0
        %4167 = vmatpush1.msra.mxu0 0.0
        %4168 = vmatprep.subr.mxu0 0.0
        %4169 = vmatpush1.msra.mxu0 0.0
        %4170 = vmatprep.subr.mxu0 0.0
        %4171 = vmatpush1.msra.mxu0 0.0
        %4172 = vmatprep.subr.mxu0 0.0
        %4173 = vmatpush1.msra.mxu0 0.0
        %4174 = vmatprep.subr.mxu0 0.0
        %4175 = vmatpush1.msra.mxu0 0.0
        %4176 = vmatprep.subr.mxu0 0.0
        %4177 = vmatpush1.msra.mxu0 0.0
        %4178 = vmatprep.subr.mxu0 0.0
        %4179 = vmatpush1.msra.mxu0 0.0
        %4180 = vmatprep.subr.mxu0 0.0
        %4181 = vmatpush1.msra.mxu0 0.0
        %4182 = vmatprep.subr.mxu0 0.0
        %4183 = vmatpush1.msra.mxu0 0.0
        %4184 = vmatprep.subr.mxu0 0.0
        %4185 = vmatpush1.msra.mxu0 0.0
        %4186 = vmatprep.subr.mxu0 0.0
        %4187 = vmatpush1.msra.mxu0 0.0
        %4188 = vmatprep.subr.mxu0 0.0
        %4189 = vmatpush1.msra.mxu0 0.0
        %4190 = vmatprep.subr.mxu0 0.0
        %4191 = vmatpush1.msra.mxu0 0.0
        %4192 = vmatprep.subr.mxu0 0.0
        %4193 = vmatpush1.msra.mxu0 0.0
        %4194 = vmatprep.mubr.f32.mxu0 0.0
        %4195 = vmatmul.mubr.f32.gmra.mrb[0].mxu0 %v4036
        %v4196 = vpop.f32.mrb[0].mxu0
        %v4197 = vadd.f32 %v4113, %v4196
        %v4198 = vpop.f32.mrb[0].mxu0
        %v4199 = vadd.f32 %v4117, %v4198
        %4200 = vmatprep.mubr.f32.mxu0 0.0
        %4201 = vmatmul.mubr.f32.gmra.mrb[0].mxu0 %v4037
        %v4202 = vpop.f32.mrb[0].mxu0
        %v4203 = vadd.f32 %v4113, %v4202
        %v4204 = vpop.f32.mrb[0].mxu0
        %v4205 = vadd.f32 %v4117, %v4204
        %4206 = vmatprep.mubr.f32.mxu0 0.0
        %4207 = vmatmul.mubr.f32.gmra.mrb[0].mxu0 %v4038
        %v4208 = vpop.f32.mrb[0].mxu0
        %v4209 = vadd.f32 %v4113, %v4208
        %v4210 = vpop.f32.mrb[0].mxu0
        %v4211 = vadd.f32 %v4117, %v4210
        %4212 = vmatprep.mubr.f32.mxu0 0.0
        %4213 = vmatmul.mubr.f32.gmra.mrb[0].mxu0 %v4039
        %v4214 = vpop.f32.mrb[0].mxu0
        %v4215 = vadd.f32 %v4113, %v4214
        %v4216 = vpop.f32.mrb[0].mxu0
        %v4217 = vadd.f32 %v4117, %v4216
        %4218 = vmatprep.mubr.f32.mxu0 0.0
        %4219 = vmatmul.mubr.f32.gmra.mrb[0].mxu0 %v4040
        %v4220 = vpop.f32.mrb[0].mxu0
        %v4221 = vadd.f32 %v4113, %v4220
        %v4222 = vpop.f32.mrb[0].mxu0
        %v4223 = vadd.f32 %v4117, %v4222
        %4224 = vmatprep.mubr.f32.mxu0 0.0
        %4225 = vmatmul.mubr.f32.gmra.mrb[0].mxu0 %v4041
        %v4226 = vpop.f32.mrb[0].mxu0
        %v4227 = vadd.f32 %v4113, %v4226
        %v4228 = vpop.f32.mrb[0].mxu0
        %v4229 = vadd.f32 %v4117, %v4228
        %4230 = vmatprep.mubr.f32.mxu0 0.0
        %4231 = vmatmul.mubr.f32.gmra.mrb[0].mxu0 %v4042
        %v4232 = vpop.f32.mrb[0].mxu0
        %v4233 = vadd.f32 %v4113, %v4232
        %v4234 = vpop.f32.mrb[0].mxu0
        %v4235 = vadd.f32 %v4117, %v4234
        %4236 = vmatprep.mubr.f32.mxu0 0.0
        %4237 = vmatmul.mubr.f32.gmra.mrb[0].mxu0 %v4043
        %v4238 = vpop.f32.mrb[0].mxu0
        %v4239 = vadd.f32 %v4113, %v4238
        %v4240 = vpop.f32.mrb[0].mxu0
        %v4241 = vadd.f32 %v4117, %v4240
        %4242 = vdwg.mxu0
        %4243 = vmatprep.subr.mxu0 %v4047
        %4244 = vmatpush1.msra.mxu0 %v4046
        %4245 = vmatprep.subr.mxu0 %v4051
        %4246 = vmatpush1.msra.mxu0 %v4050
        %4247 = vmatprep.subr.mxu0 %v4055
        %4248 = vmatpush1.msra.mxu0 %v4054
        %4249 = vmatprep.subr.mxu0 %v4059
        %4250 = vmatpush1.msra.mxu0 %v4058
        %4251 = vmatprep.subr.mxu0 %v4063
        %4252 = vmatpush1.msra.mxu0 %v4062
        %4253 = vmatprep.subr.mxu0 %v4067
        %4254 = vmatpush1.msra.mxu0 %v4066
        %4255 = vmatprep.subr.mxu0 %v4071
        %4256 = vmatpush1.msra.mxu0 %v4070
        %4257 = vmatprep.subr.mxu0 %v4075
        %4258 = vmatpush1.msra.mxu0 %v4074
        %4259 = vmatprep.subr.mxu0 %v4079
        %4260 = vmatpush1.msra.mxu0 %v4078
        %4261 = vmatprep.subr.mxu0 %v4083
        %4262 = vmatpush1.msra.mxu0 %v4082
        %4263 = vmatprep.subr.mxu0 %v4087
        %4264 = vmatpush1.msra.mxu0 %v4086
        %4265 = vmatprep.subr.mxu0 %v4091
        %4266 = vmatpush1.msra.mxu0 %v4090
        %4267 = vmatprep.subr.mxu0 %v4095
        %4268 = vmatpush1.msra.mxu0 %v4094
        %4269 = vmatprep.subr.mxu0 %v4099
        %4270 = vmatpush1.msra.mxu0 %v4098
        %4271 = vmatprep.subr.mxu0 %v4103
        %4272 = vmatpush1.msra.mxu0 %v4102
        %4273 = vmatprep.subr.mxu0 %v4107
        %4274 = vmatpush1.msra.mxu0 %v4106
        %4275 = vmatprep.subr.mxu0 0.0
        %4276 = vmatpush1.msra.mxu0 0.0
        %4277 = vmatprep.subr.mxu0 0.0
        %4278 = vmatpush1.msra.mxu0 0.0
        %4279 = vmatprep.subr.mxu0 0.0
        %4280 = vmatpush1.msra.mxu0 0.0
        %4281 = vmatprep.subr.mxu0 0.0
        %4282 = vmatpush1.msra.mxu0 0.0
        %4283 = vmatprep.subr.mxu0 0.0
        %4284 = vmatpush1.msra.mxu0 0.0
        %4285 = vmatprep.subr.mxu0 0.0
        %4286 = vmatpush1.msra.mxu0 0.0
        %4287 = vmatprep.subr.mxu0 0.0
        %4288 = vmatpush1.msra.mxu0 0.0
        %4289 = vmatprep.subr.mxu0 0.0
        %4290 = vmatpush1.msra.mxu0 0.0
        %4291 = vmatprep.subr.mxu0 0.0
        %4292 = vmatpush1.msra.mxu0 0.0
        %4293 = vmatprep.subr.mxu0 0.0
        %4294 = vmatpush1.msra.mxu0 0.0
        %4295 = vmatprep.subr.mxu0 0.0
        %4296 = vmatpush1.msra.mxu0 0.0
        %4297 = vmatprep.subr.mxu0 0.0
        %4298 = vmatpush1.msra.mxu0 0.0
        %4299 = vmatprep.subr.mxu0 0.0
        %4300 = vmatpush1.msra.mxu0 0.0
        %4301 = vmatprep.subr.mxu0 0.0
        %4302 = vmatpush1.msra.mxu0 0.0
        %4303 = vmatprep.subr.mxu0 0.0
        %4304 = vmatpush1.msra.mxu0 0.0
        %4305 = vmatprep.subr.mxu0 0.0
        %4306 = vmatpush1.msra.mxu0 0.0
        %4307 = vmatprep.mubr.f32.mxu0 0.0
        %4308 = vmatmul.mubr.f32.gmra.mrb[0].mxu0 %v4036
        %v4309 = vpop.f32.mrb[0].mxu0
        %v4310 = vadd.f32 %v4121, %v4309
        %v4311 = vpop.f32.mrb[0].mxu0
        %v4312 = vadd.f32 %v4125, %v4311
        %4313 = vmatprep.mubr.f32.mxu0 0.0
        %4314 = vmatmul.mubr.f32.gmra.mrb[0].mxu0 %v4037
        %v4315 = vpop.f32.mrb[0].mxu0
        %v4316 = vadd.f32 %v4121, %v4315
        %v4317 = vpop.f32.mrb[0].mxu0
        %v4318 = vadd.f32 %v4125, %v4317
        %4319 = vmatprep.mubr.f32.mxu0 0.0
        %4320 = vmatmul.mubr.f32.gmra.mrb[0].mxu0 %v4038
        %v4321 = vpop.f32.mrb[0].mxu0
        %v4322 = vadd.f32 %v4121, %v4321
        %v4323 = vpop.f32.mrb[0].mxu0
        %v4324 = vadd.f32 %v4125, %v4323
        %4325 = vmatprep.mubr.f32.mxu0 0.0
        %4326 = vmatmul.mubr.f32.gmra.mrb[0].mxu0 %v4039
        %v4327 = vpop.f32.mrb[0].mxu0
        %v4328 = vadd.f32 %v4121, %v4327
        %v4329 = vpop.f32.mrb[0].mxu0
        %v4330 = vadd.f32 %v4125, %v4329
        %4331 = vmatprep.mubr.f32.mxu0 0.0
        %4332 = vmatmul.mubr.f32.gmra.mrb[0].mxu0 %v4040
        %v4333 = vpop.f32.mrb[0].mxu0
        %v4334 = vadd.f32 %v4121, %v4333
        %v4335 = vpop.f32.mrb[0].mxu0
        %v4336 = vadd.f32 %v4125, %v4335
        %4337 = vmatprep.mubr.f32.mxu0 0.0
        %4338 = vmatmul.mubr.f32.gmra.mrb[0].mxu0 %v4041
        %v4339 = vpop.f32.mrb[0].mxu0
        %v4340 = vadd.f32 %v4121, %v4339
        %v4341 = vpop.f32.mrb[0].mxu0
        %v4342 = vadd.f32 %v4125, %v4341
        %4343 = vmatprep.mubr.f32.mxu0 0.0
        %4344 = vmatmul.mubr.f32.gmra.mrb[0].mxu0 %v4042
        %v4345 = vpop.f32.mrb[0].mxu0
        %v4346 = vadd.f32 %v4121, %v4345
        %v4347 = vpop.f32.mrb[0].mxu0
        %v4348 = vadd.f32 %v4125, %v4347
        %4349 = vmatprep.mubr.f32.mxu0 0.0
        %4350 = vmatmul.mubr.f32.gmra.mrb[0].mxu0 %v4043
        %v4351 = vpop.f32.mrb[0].mxu0
        %v4352 = vadd.f32 %v4121, %v4351
        %v4353 = vpop.f32.mrb[0].mxu0
        %v4354 = vadd.f32 %v4125, %v4353
        %4355 = vdwg.mxu0
        %4356 = vst [vmem:[#allocation2] sm:$0xff] %v4197
        %4357 = vst [vmem:[#allocation2 + $0x8] sm:$0xff] %v4199
        %4358 = vst [vmem:[#allocation2 + $0x10] sm:$0xff] %v4310
        %4359 = vst [vmem:[#allocation2 + $0x18] sm:$0xff] %v4312
        %4360 = vst [vmem:[#allocation2 + $0x20] sm:$0xff] %v4203
        %4361 = vst [vmem:[#allocation2 + $0x28] sm:$0xff] %v4205
        %4362 = vst [vmem:[#allocation2 + $0x30] sm:$0xff] %v4316
        %4363 = vst [vmem:[#allocation2 + $0x38] sm:$0xff] %v4318
        %4364 = vst [vmem:[#allocation2 + $0x40] sm:$0xff] %v4209
        %4365 = vst [vmem:[#allocation2 + $0x48] sm:$0xff] %v4211
        %4366 = vst [vmem:[#allocation2 + $0x50] sm:$0xff] %v4322
        %4367 = vst [vmem:[#allocation2 + $0x58] sm:$0xff] %v4324
        %4368 = vst [vmem:[#allocation2 + $0x60] sm:$0xff] %v4215
        %4369 = vst [vmem:[#allocation2 + $0x68] sm:$0xff] %v4217
        %4370 = vst [vmem:[#allocation2 + $0x70] sm:$0xff] %v4328
        %4371 = vst [vmem:[#allocation2 + $0x78] sm:$0xff] %v4330
        %4372 = vst [vmem:[#allocation2 + $0x80] sm:$0xff] %v4221
        %4373 = vst [vmem:[#allocation2 + $0x88] sm:$0xff] %v4223
        %4374 = vst [vmem:[#allocation2 + $0x90] sm:$0xff] %v4334
        %4375 = vst [vmem:[#allocation2 + $0x98] sm:$0xff] %v4336
        %4376 = vst [vmem:[#allocation2 + $0xa0] sm:$0xff] %v4227
        %4377 = vst [vmem:[#allocation2 + $0xa8] sm:$0xff] %v4229
        %4378 = vst [vmem:[#allocation2 + $0xb0] sm:$0xff] %v4340
        %4379 = vst [vmem:[#allocation2 + $0xb8] sm:$0xff] %v4342
        %4380 = vst [vmem:[#allocation2 + $0xc0] sm:$0xff] %v4233
        %4381 = vst [vmem:[#allocation2 + $0xc8] sm:$0xff] %v4235
        %4382 = vst [vmem:[#allocation2 + $0xd0] sm:$0xff] %v4346
        %4383 = vst [vmem:[#allocation2 + $0xd8] sm:$0xff] %v4348
        %4384 = vst [vmem:[#allocation2 + $0xe0] sm:$0xff] %v4239
        %4385 = vst [vmem:[#allocation2 + $0xe8] sm:$0xff] %v4241
        %4386 = vst [vmem:[#allocation2 + $0xf0] sm:$0xff] %v4352
        %4387 = vst [vmem:[#allocation2 + $0xf8] sm:$0xff] %v4354
        %v4388 = vld [vmem:[#allocation2] sm:$0xff]
        %v4389 = vld [vmem:[#allocation2 + $0x8] sm:$0xff]
        %v4390 = vld [vmem:[#allocation2 + $0x10] sm:$0xff]
        %v4391 = vld [vmem:[#allocation2 + $0x18] sm:$0xff]
        %v4392 = vld [vmem:[%s1978] sm:$0xff]
        %v4393 = vld [vmem:[%s1978 + $0x8] sm:$0xff]
        %v4394 = vld [vmem:[%s1978 + $0x10] sm:$0xff]
        %v4395 = vld [vmem:[%s1978 + $0x18] sm:$0xff]
        %v4396 = vsel %vm1987, %v4388, %v4392
        %v4397 = vsel %vm1988, %v4389, %v4393
        %v4398 = vsel %vm1989, %v4390, %v4394
        %v4399 = vsel %vm1990, %v4391, %v4395
        %4400 = vst [vmem:[#allocation3] sm:$0xff] %v4396
        %4401 = vst [vmem:[#allocation3 + $0x8] sm:$0xff] %v4397
        %4402 = vst [vmem:[#allocation3 + $0x10] sm:$0xff] %v4398
        %4403 = vst [vmem:[#allocation3 + $0x18] sm:$0xff] %v4399
        %v4404 = vld [vmem:[%s1999] sm:$0xff]
        %v4405 = vld [vmem:[%s1999 + $0x8] sm:$0xff]
        %v4406 = vld [vmem:[%s1999 + $0x10] sm:$0xff]
        %v4407 = vld [vmem:[%s1999 + $0x18] sm:$0xff]
        %v4408 = vld [vmem:[%s2004] sm:$0xff]
        %v4409 = vld [vmem:[%s2004 + $0x8] sm:$0xff]
        %v4410 = vld [vmem:[%s2004 + $0x10] sm:$0xff]
        %v4411 = vld [vmem:[%s2004 + $0x18] sm:$0xff]
        %v4412 = vsel %vm1987, %v4404, %v4408
        %v4413 = vsel %vm1988, %v4405, %v4409
        %v4414 = vsel %vm1989, %v4406, %v4410
        %v4415 = vsel %vm1990, %v4407, %v4411
        %4416 = vst [vmem:[%s2013] sm:$0xff] %v4412
        %4417 = vst [vmem:[%s2013 + $0x8] sm:$0xff] %v4413
        %4418 = vst [vmem:[%s2013 + $0x10] sm:$0xff] %v4414
        %4419 = vst [vmem:[%s2013 + $0x18] sm:$0xff] %v4415
        %v4420 = vld [vmem:[%s2018] sm:$0xff]
        %v4421 = vld [vmem:[%s2018 + $0x8] sm:$0xff]
        %v4422 = vld [vmem:[%s2018 + $0x10] sm:$0xff]
        %v4423 = vld [vmem:[%s2018 + $0x18] sm:$0xff]
        %v4424 = vld [vmem:[%s2023] sm:$0xff]
        %v4425 = vld [vmem:[%s2023 + $0x8] sm:$0xff]
        %v4426 = vld [vmem:[%s2023 + $0x10] sm:$0xff]
        %v4427 = vld [vmem:[%s2023 + $0x18] sm:$0xff]
        %v4428 = vsel %vm1987, %v4420, %v4424
        %v4429 = vsel %vm1988, %v4421, %v4425
        %v4430 = vsel %vm1989, %v4422, %v4426
        %v4431 = vsel %vm1990, %v4423, %v4427
        %4432 = vst [vmem:[%s2032] sm:$0xff] %v4428
        %4433 = vst [vmem:[%s2032 + $0x8] sm:$0xff] %v4429
        %4434 = vst [vmem:[%s2032 + $0x10] sm:$0xff] %v4430
        %4435 = vst [vmem:[%s2032 + $0x18] sm:$0xff] %v4431
        %v4436 = vld [vmem:[%s2037] sm:$0xff]
        %v4437 = vld [vmem:[%s2037 + $0x8] sm:$0xff]
        %v4438 = vld [vmem:[%s2037 + $0x10] sm:$0xff]
        %v4439 = vld [vmem:[%s2037 + $0x18] sm:$0xff]
        %v4440 = vld [vmem:[%s2042] sm:$0xff]
        %v4441 = vld [vmem:[%s2042 + $0x8] sm:$0xff]
        %v4442 = vld [vmem:[%s2042 + $0x10] sm:$0xff]
        %v4443 = vld [vmem:[%s2042 + $0x18] sm:$0xff]
        %v4444 = vsel %vm1987, %v4436, %v4440
        %v4445 = vsel %vm1988, %v4437, %v4441
        %v4446 = vsel %vm1989, %v4438, %v4442
        %v4447 = vsel %vm1990, %v4439, %v4443
        %4448 = vst [vmem:[%s2051] sm:$0xff] %v4444
        %4449 = vst [vmem:[%s2051 + $0x8] sm:$0xff] %v4445
        %4450 = vst [vmem:[%s2051 + $0x10] sm:$0xff] %v4446
        %4451 = vst [vmem:[%s2051 + $0x18] sm:$0xff] %v4447
        %v4452 = vld [vmem:[%s2042] sm:$0xff]
        %v4453 = vld [vmem:[%s2042 + $0x8] sm:$0xff]
        %v4454 = vld [vmem:[%s2042 + $0x10] sm:$0xff]
        %v4455 = vld [vmem:[%s2042 + $0x18] sm:$0xff]
        %v4456 = vld [vmem:[%s2037] sm:$0xff]
        %v4457 = vld [vmem:[%s2037 + $0x8] sm:$0xff]
        %v4458 = vld [vmem:[%s2037 + $0x10] sm:$0xff]
        %v4459 = vld [vmem:[%s2037 + $0x18] sm:$0xff]
        %v4460 = vsel %vm1987, %v4452, %v4456
        %v4461 = vsel %vm1988, %v4453, %v4457
        %v4462 = vsel %vm1989, %v4454, %v4458
        %v4463 = vsel %vm1990, %v4455, %v4459
        %4464 = vst [vmem:[%s2068] sm:$0xff] %v4460
        %4465 = vst [vmem:[%s2068 + $0x8] sm:$0xff] %v4461
        %4466 = vst [vmem:[%s2068 + $0x10] sm:$0xff] %v4462
        %4467 = vst [vmem:[%s2068 + $0x18] sm:$0xff] %v4463
        %v4468 = vld [vmem:[%s2023] sm:$0xff]
        %v4469 = vld [vmem:[%s2023 + $0x8] sm:$0xff]
        %v4470 = vld [vmem:[%s2023 + $0x10] sm:$0xff]
        %v4471 = vld [vmem:[%s2023 + $0x18] sm:$0xff]
        %v4472 = vld [vmem:[%s2018] sm:$0xff]
        %v4473 = vld [vmem:[%s2018 + $0x8] sm:$0xff]
        %v4474 = vld [vmem:[%s2018 + $0x10] sm:$0xff]
        %v4475 = vld [vmem:[%s2018 + $0x18] sm:$0xff]
        %v4476 = vsel %vm1987, %v4468, %v4472
        %v4477 = vsel %vm1988, %v4469, %v4473
        %v4478 = vsel %vm1989, %v4470, %v4474
        %v4479 = vsel %vm1990, %v4471, %v4475
        %4480 = vst [vmem:[%s2085] sm:$0xff] %v4476
        %4481 = vst [vmem:[%s2085 + $0x8] sm:$0xff] %v4477
        %4482 = vst [vmem:[%s2085 + $0x10] sm:$0xff] %v4478
        %4483 = vst [vmem:[%s2085 + $0x18] sm:$0xff] %v4479
        %v4484 = vld [vmem:[%s2004] sm:$0xff]
        %v4485 = vld [vmem:[%s2004 + $0x8] sm:$0xff]
        %v4486 = vld [vmem:[%s2004 + $0x10] sm:$0xff]
        %v4487 = vld [vmem:[%s2004 + $0x18] sm:$0xff]
        %v4488 = vld [vmem:[%s1999] sm:$0xff]
        %v4489 = vld [vmem:[%s1999 + $0x8] sm:$0xff]
        %v4490 = vld [vmem:[%s1999 + $0x10] sm:$0xff]
        %v4491 = vld [vmem:[%s1999 + $0x18] sm:$0xff]
        %v4492 = vsel %vm1987, %v4484, %v4488
        %v4493 = vsel %vm1988, %v4485, %v4489
        %v4494 = vsel %vm1989, %v4486, %v4490
        %v4495 = vsel %vm1990, %v4487, %v4491
        %4496 = vst [vmem:[%s2102] sm:$0xff] %v4492
        %4497 = vst [vmem:[%s2102 + $0x8] sm:$0xff] %v4493
        %4498 = vst [vmem:[%s2102 + $0x10] sm:$0xff] %v4494
        %4499 = vst [vmem:[%s2102 + $0x18] sm:$0xff] %v4495
        %v4500 = vld [vmem:[%s1978] sm:$0xff]
        %v4501 = vld [vmem:[%s1978 + $0x8] sm:$0xff]
        %v4502 = vld [vmem:[%s1978 + $0x10] sm:$0xff]
        %v4503 = vld [vmem:[%s1978 + $0x18] sm:$0xff]
        %v4504 = vld [vmem:[#allocation2] sm:$0xff]
        %v4505 = vld [vmem:[#allocation2 + $0x8] sm:$0xff]
        %v4506 = vld [vmem:[#allocation2 + $0x10] sm:$0xff]
        %v4507 = vld [vmem:[#allocation2 + $0x18] sm:$0xff]
        %v4508 = vsel %vm1987, %v4500, %v4504
        %v4509 = vsel %vm1988, %v4501, %v4505
        %v4510 = vsel %vm1989, %v4502, %v4506
        %v4511 = vsel %vm1990, %v4503, %v4507
        %4512 = vst [vmem:[%s2119] sm:$0xff] %v4508
        %4513 = vst [vmem:[%s2119 + $0x8] sm:$0xff] %v4509
        %4514 = vst [vmem:[%s2119 + $0x10] sm:$0xff] %v4510
        %4515 = vst [vmem:[%s2119 + $0x18] sm:$0xff] %v4511
        %v4516 = vld [vmem:[#allocation3] sm:$0xff]
        %v4517 = vld [vmem:[#allocation3 + $0x8] sm:$0xff]
        %v4518 = vld [vmem:[#allocation3 + $0x10] sm:$0xff]
        %v4519 = vld [vmem:[#allocation3 + $0x18] sm:$0xff]
        %v4520 = vld [vmem:[%s7] sm:$0xff]
        %v4521 = vld [vmem:[%s7 + $0x8] sm:$0xff]
        %v4522 = vld [vmem:[%s7 + $0x10] sm:$0xff]
        %v4523 = vld [vmem:[%s7 + $0x18] sm:$0xff]
        %v4524 = vld [vmem:[%s7 + $0x20] sm:$0xff]
        %v4525 = vld [vmem:[%s7 + $0x28] sm:$0xff]
        %v4526 = vld [vmem:[%s7 + $0x30] sm:$0xff]
        %v4527 = vld [vmem:[%s7 + $0x38] sm:$0xff]
        %v4528 = vld [vmem:[%s7 + $0x40] sm:$0xff]
        %v4529 = vld [vmem:[%s7 + $0x48] sm:$0xff]
        %v4530 = vld [vmem:[%s7 + $0x50] sm:$0xff]
        %v4531 = vld [vmem:[%s7 + $0x58] sm:$0xff]
        %v4532 = vld [vmem:[%s7 + $0x60] sm:$0xff]
        %v4533 = vld [vmem:[%s7 + $0x68] sm:$0xff]
        %v4534 = vld [vmem:[%s7 + $0x70] sm:$0xff]
        %v4535 = vld [vmem:[%s7 + $0x78] sm:$0xff]
        %v4536 = vld [vmem:[%s7 + $0x80] sm:$0xff]
        %v4537 = vld [vmem:[%s7 + $0x88] sm:$0xff]
        %v4538 = vld [vmem:[%s7 + $0x90] sm:$0xff]
        %v4539 = vld [vmem:[%s7 + $0x98] sm:$0xff]
        %v4540 = vld [vmem:[%s7 + $0xa0] sm:$0xff]
        %v4541 = vld [vmem:[%s7 + $0xa8] sm:$0xff]
        %v4542 = vld [vmem:[%s7 + $0xb0] sm:$0xff]
        %v4543 = vld [vmem:[%s7 + $0xb8] sm:$0xff]
        %v4544 = vld [vmem:[%s7 + $0xc0] sm:$0xff]
        %v4545 = vld [vmem:[%s7 + $0xc8] sm:$0xff]
        %v4546 = vld [vmem:[%s7 + $0xd0] sm:$0xff]
        %v4547 = vld [vmem:[%s7 + $0xd8] sm:$0xff]
        %v4548 = vld [vmem:[%s7 + $0xe0] sm:$0xff]
        %v4549 = vld [vmem:[%s7 + $0xe8] sm:$0xff]
        %v4550 = vld [vmem:[%s7 + $0xf0] sm:$0xff]
        %v4551 = vld [vmem:[%s7 + $0xf8] sm:$0xff]
        %v4552 = vld [vmem:[%s7 + $0x100] sm:$0xff]
        %v4553 = vld [vmem:[%s7 + $0x108] sm:$0xff]
        %v4554 = vld [vmem:[%s7 + $0x110] sm:$0xff]
        %v4555 = vld [vmem:[%s7 + $0x118] sm:$0xff]
        %v4556 = vld [vmem:[%s7 + $0x120] sm:$0xff]
        %v4557 = vld [vmem:[%s7 + $0x128] sm:$0xff]
        %v4558 = vld [vmem:[%s7 + $0x130] sm:$0xff]
        %v4559 = vld [vmem:[%s7 + $0x138] sm:$0xff]
        %v4560 = vld [vmem:[%s7 + $0x140] sm:$0xff]
        %v4561 = vld [vmem:[%s7 + $0x148] sm:$0xff]
        %v4562 = vld [vmem:[%s7 + $0x150] sm:$0xff]
        %v4563 = vld [vmem:[%s7 + $0x158] sm:$0xff]
        %v4564 = vld [vmem:[%s7 + $0x160] sm:$0xff]
        %v4565 = vld [vmem:[%s7 + $0x168] sm:$0xff]
        %v4566 = vld [vmem:[%s7 + $0x170] sm:$0xff]
        %v4567 = vld [vmem:[%s7 + $0x178] sm:$0xff]
        %v4568 = vld [vmem:[%s7 + $0x180] sm:$0xff]
        %v4569 = vld [vmem:[%s7 + $0x188] sm:$0xff]
        %v4570 = vld [vmem:[%s7 + $0x190] sm:$0xff]
        %v4571 = vld [vmem:[%s7 + $0x198] sm:$0xff]
        %v4572 = vld [vmem:[%s7 + $0x1a0] sm:$0xff]
        %v4573 = vld [vmem:[%s7 + $0x1a8] sm:$0xff]
        %v4574 = vld [vmem:[%s7 + $0x1b0] sm:$0xff]
        %v4575 = vld [vmem:[%s7 + $0x1b8] sm:$0xff]
        %v4576 = vld [vmem:[%s7 + $0x1c0] sm:$0xff]
        %v4577 = vld [vmem:[%s7 + $0x1c8] sm:$0xff]
        %v4578 = vld [vmem:[%s7 + $0x1d0] sm:$0xff]
        %v4579 = vld [vmem:[%s7 + $0x1d8] sm:$0xff]
        %v4580 = vld [vmem:[%s7 + $0x1e0] sm:$0xff]
        %v4581 = vld [vmem:[%s7 + $0x1e8] sm:$0xff]
        %v4582 = vld [vmem:[%s7 + $0x1f0] sm:$0xff]
        %v4583 = vld [vmem:[%s7 + $0x1f8] sm:$0xff]
        %4584 = vmatprep.subr.mxu0 %v4521
        %4585 = vmatpush1.msra.mxu0 %v4520
        %4586 = vmatprep.subr.mxu0 %v4525
        %4587 = vmatpush1.msra.mxu0 %v4524
        %4588 = vmatprep.subr.mxu0 %v4529
        %4589 = vmatpush1.msra.mxu0 %v4528
        %4590 = vmatprep.subr.mxu0 %v4533
        %4591 = vmatpush1.msra.mxu0 %v4532
        %4592 = vmatprep.subr.mxu0 %v4537
        %4593 = vmatpush1.msra.mxu0 %v4536
        %4594 = vmatprep.subr.mxu0 %v4541
        %4595 = vmatpush1.msra.mxu0 %v4540
        %4596 = vmatprep.subr.mxu0 %v4545
        %4597 = vmatpush1.msra.mxu0 %v4544
        %4598 = vmatprep.subr.mxu0 %v4549
        %4599 = vmatpush1.msra.mxu0 %v4548
        %4600 = vmatprep.subr.mxu0 %v4553
        %4601 = vmatpush1.msra.mxu0 %v4552
        %4602 = vmatprep.subr.mxu0 %v4557
        %4603 = vmatpush1.msra.mxu0 %v4556
        %4604 = vmatprep.subr.mxu0 %v4561
        %4605 = vmatpush1.msra.mxu0 %v4560
        %4606 = vmatprep.subr.mxu0 %v4565
        %4607 = vmatpush1.msra.mxu0 %v4564
        %4608 = vmatprep.subr.mxu0 %v4569
        %4609 = vmatpush1.msra.mxu0 %v4568
        %4610 = vmatprep.subr.mxu0 %v4573
        %4611 = vmatpush1.msra.mxu0 %v4572
        %4612 = vmatprep.subr.mxu0 %v4577
        %4613 = vmatpush1.msra.mxu0 %v4576
        %4614 = vmatprep.subr.mxu0 %v4581
        %4615 = vmatpush1.msra.mxu0 %v4580
        %4616 = vmatprep.subr.mxu0 0.0
        %4617 = vmatpush1.msra.mxu0 0.0
        %4618 = vmatprep.subr.mxu0 0.0
        %4619 = vmatpush1.msra.mxu0 0.0
        %4620 = vmatprep.subr.mxu0 0.0
        %4621 = vmatpush1.msra.mxu0 0.0
        %4622 = vmatprep.subr.mxu0 0.0
        %4623 = vmatpush1.msra.mxu0 0.0
        %4624 = vmatprep.subr.mxu0 0.0
        %4625 = vmatpush1.msra.mxu0 0.0
        %4626 = vmatprep.subr.mxu0 0.0
        %4627 = vmatpush1.msra.mxu0 0.0
        %4628 = vmatprep.subr.mxu0 0.0
        %4629 = vmatpush1.msra.mxu0 0.0
        %4630 = vmatprep.subr.mxu0 0.0
        %4631 = vmatpush1.msra.mxu0 0.0
        %4632 = vmatprep.subr.mxu0 0.0
        %4633 = vmatpush1.msra.mxu0 0.0
        %4634 = vmatprep.subr.mxu0 0.0
        %4635 = vmatpush1.msra.mxu0 0.0
        %4636 = vmatprep.subr.mxu0 0.0
        %4637 = vmatpush1.msra.mxu0 0.0
        %4638 = vmatprep.subr.mxu0 0.0
        %4639 = vmatpush1.msra.mxu0 0.0
        %4640 = vmatprep.subr.mxu0 0.0
        %4641 = vmatpush1.msra.mxu0 0.0
        %4642 = vmatprep.subr.mxu0 0.0
        %4643 = vmatpush1.msra.mxu0 0.0
        %4644 = vmatprep.subr.mxu0 0.0
        %4645 = vmatpush1.msra.mxu0 0.0
        %4646 = vmatprep.subr.mxu0 0.0
        %4647 = vmatpush1.msra.mxu0 0.0
        %4648 = vmatprep.mubr.f32.mxu0 0.0
        %4649 = vmatmul.mubr.f32.gmra.mrb[0].mxu0 0.0
        %v4650 = vpop.f32.mrb[0].mxu0
        %v4651 = vadd.f32 0.0, %v4650
        %v4652 = vpop.f32.mrb[0].mxu0
        %v4653 = vadd.f32 0.0, %v4652
        %4654 = vdwg.mxu0
        %4655 = vmatprep.subr.mxu0 %v4523
        %4656 = vmatpush1.msra.mxu0 %v4522
        %4657 = vmatprep.subr.mxu0 %v4527
        %4658 = vmatpush1.msra.mxu0 %v4526
        %4659 = vmatprep.subr.mxu0 %v4531
        %4660 = vmatpush1.msra.mxu0 %v4530
        %4661 = vmatprep.subr.mxu0 %v4535
        %4662 = vmatpush1.msra.mxu0 %v4534
        %4663 = vmatprep.subr.mxu0 %v4539
        %4664 = vmatpush1.msra.mxu0 %v4538
        %4665 = vmatprep.subr.mxu0 %v4543
        %4666 = vmatpush1.msra.mxu0 %v4542
        %4667 = vmatprep.subr.mxu0 %v4547
        %4668 = vmatpush1.msra.mxu0 %v4546
        %4669 = vmatprep.subr.mxu0 %v4551
        %4670 = vmatpush1.msra.mxu0 %v4550
        %4671 = vmatprep.subr.mxu0 %v4555
        %4672 = vmatpush1.msra.mxu0 %v4554
        %4673 = vmatprep.subr.mxu0 %v4559
        %4674 = vmatpush1.msra.mxu0 %v4558
        %4675 = vmatprep.subr.mxu0 %v4563
        %4676 = vmatpush1.msra.mxu0 %v4562
        %4677 = vmatprep.subr.mxu0 %v4567
        %4678 = vmatpush1.msra.mxu0 %v4566
        %4679 = vmatprep.subr.mxu0 %v4571
        %4680 = vmatpush1.msra.mxu0 %v4570
        %4681 = vmatprep.subr.mxu0 %v4575
        %4682 = vmatpush1.msra.mxu0 %v4574
        %4683 = vmatprep.subr.mxu0 %v4579
        %4684 = vmatpush1.msra.mxu0 %v4578
        %4685 = vmatprep.subr.mxu0 %v4583
        %4686 = vmatpush1.msra.mxu0 %v4582
        %4687 = vmatprep.subr.mxu0 0.0
        %4688 = vmatpush1.msra.mxu0 0.0
        %4689 = vmatprep.subr.mxu0 0.0
        %4690 = vmatpush1.msra.mxu0 0.0
        %4691 = vmatprep.subr.mxu0 0.0
        %4692 = vmatpush1.msra.mxu0 0.0
        %4693 = vmatprep.subr.mxu0 0.0
        %4694 = vmatpush1.msra.mxu0 0.0
        %4695 = vmatprep.subr.mxu0 0.0
        %4696 = vmatpush1.msra.mxu0 0.0
        %4697 = vmatprep.subr.mxu0 0.0
        %4698 = vmatpush1.msra.mxu0 0.0
        %4699 = vmatprep.subr.mxu0 0.0
        %4700 = vmatpush1.msra.mxu0 0.0
        %4701 = vmatprep.subr.mxu0 0.0
        %4702 = vmatpush1.msra.mxu0 0.0
        %4703 = vmatprep.subr.mxu0 0.0
        %4704 = vmatpush1.msra.mxu0 0.0
        %4705 = vmatprep.subr.mxu0 0.0
        %4706 = vmatpush1.msra.mxu0 0.0
        %4707 = vmatprep.subr.mxu0 0.0
        %4708 = vmatpush1.msra.mxu0 0.0
        %4709 = vmatprep.subr.mxu0 0.0
        %4710 = vmatpush1.msra.mxu0 0.0
        %4711 = vmatprep.subr.mxu0 0.0
        %4712 = vmatpush1.msra.mxu0 0.0
        %4713 = vmatprep.subr.mxu0 0.0
        %4714 = vmatpush1.msra.mxu0 0.0
        %4715 = vmatprep.subr.mxu0 0.0
        %4716 = vmatpush1.msra.mxu0 0.0
        %4717 = vmatprep.subr.mxu0 0.0
        %4718 = vmatpush1.msra.mxu0 0.0
        %4719 = vmatprep.mubr.f32.mxu0 0.0
        %4720 = vmatmul.mubr.f32.gmra.mrb[0].mxu0 0.0
        %v4721 = vpop.f32.mrb[0].mxu0
        %v4722 = vadd.f32 0.0, %v4721
        %v4723 = vpop.f32.mrb[0].mxu0
        %v4724 = vadd.f32 0.0, %v4723
        %4725 = vdwg.mxu0
        %v4726 = vadd.f32 %v4516, %v4651
        %v4727 = vadd.f32 %v4517, %v4653
        %v4728 = vadd.f32 %v4518, %v4722
        %v4729 = vadd.f32 %v4519, %v4724
        %v4730 = vmul.f32 %v4726, 0.5
        %v4731 = vtanh.pop %v4730
        %v4732 = vmul.f32 %v4731, 0.5
        %v4733 = vadd.f32 %v4732, 0.5
        %v4734 = vmul.f32 %v4727, 0.5
        %v4735 = vtanh.pop %v4734
        %v4736 = vmul.f32 %v4735, 0.5
        %v4737 = vadd.f32 %v4736, 0.5
        %v4738 = vtanh.pop %v4728
        %v4739 = vmul.f32 %v4729, 0.5
        %v4740 = vtanh.pop %v4739
        %v4741 = vmul.f32 %v4740, 0.5
        %v4742 = vadd.f32 %v4741, 0.5
        %v4743 = vmul.f32 %v4737, 0.0
        %v4744 = vmul.f32 %v4733, %v4738
        %v4745 = vadd.f32 %v4743, %v4744
        %v4746 = vtanh.pop %v4745
        %v4747 = vmul.f32 %v4742, %v4746
        %v4748 = vld [vmem:[%s2013] sm:$0xff]
        %v4749 = vld [vmem:[%s2013 + $0x8] sm:$0xff]
        %v4750 = vld [vmem:[%s2013 + $0x10] sm:$0xff]
        %v4751 = vld [vmem:[%s2013 + $0x18] sm:$0xff]
        %4752 = vmatprep.subr.mxu0 %v4521
        %4753 = vmatpush1.msra.mxu0 %v4520
        %4754 = vmatprep.subr.mxu0 %v4525
        %4755 = vmatpush1.msra.mxu0 %v4524
        %4756 = vmatprep.subr.mxu0 %v4529
        %4757 = vmatpush1.msra.mxu0 %v4528
        %4758 = vmatprep.subr.mxu0 %v4533
        %4759 = vmatpush1.msra.mxu0 %v4532
        %4760 = vmatprep.subr.mxu0 %v4537
        %4761 = vmatpush1.msra.mxu0 %v4536
        %4762 = vmatprep.subr.mxu0 %v4541
        %4763 = vmatpush1.msra.mxu0 %v4540
        %4764 = vmatprep.subr.mxu0 %v4545
        %4765 = vmatpush1.msra.mxu0 %v4544
        %4766 = vmatprep.subr.mxu0 %v4549
        %4767 = vmatpush1.msra.mxu0 %v4548
        %4768 = vmatprep.subr.mxu0 %v4553
        %4769 = vmatpush1.msra.mxu0 %v4552
        %4770 = vmatprep.subr.mxu0 %v4557
        %4771 = vmatpush1.msra.mxu0 %v4556
        %4772 = vmatprep.subr.mxu0 %v4561
        %4773 = vmatpush1.msra.mxu0 %v4560
        %4774 = vmatprep.subr.mxu0 %v4565
        %4775 = vmatpush1.msra.mxu0 %v4564
        %4776 = vmatprep.subr.mxu0 %v4569
        %4777 = vmatpush1.msra.mxu0 %v4568
        %4778 = vmatprep.subr.mxu0 %v4573
        %4779 = vmatpush1.msra.mxu0 %v4572
        %4780 = vmatprep.subr.mxu0 %v4577
        %4781 = vmatpush1.msra.mxu0 %v4576
        %4782 = vmatprep.subr.mxu0 %v4581
        %4783 = vmatpush1.msra.mxu0 %v4580
        %4784 = vmatprep.subr.mxu0 0.0
        %4785 = vmatpush1.msra.mxu0 0.0
        %4786 = vmatprep.subr.mxu0 0.0
        %4787 = vmatpush1.msra.mxu0 0.0
        %4788 = vmatprep.subr.mxu0 0.0
        %4789 = vmatpush1.msra.mxu0 0.0
        %4790 = vmatprep.subr.mxu0 0.0
        %4791 = vmatpush1.msra.mxu0 0.0
        %4792 = vmatprep.subr.mxu0 0.0
        %4793 = vmatpush1.msra.mxu0 0.0
        %4794 = vmatprep.subr.mxu0 0.0
        %4795 = vmatpush1.msra.mxu0 0.0
        %4796 = vmatprep.subr.mxu0 0.0
        %4797 = vmatpush1.msra.mxu0 0.0
        %4798 = vmatprep.subr.mxu0 0.0
        %4799 = vmatpush1.msra.mxu0 0.0
        %4800 = vmatprep.subr.mxu0 0.0
        %4801 = vmatpush1.msra.mxu0 0.0
        %4802 = vmatprep.subr.mxu0 0.0
        %4803 = vmatpush1.msra.mxu0 0.0
        %4804 = vmatprep.subr.mxu0 0.0
        %4805 = vmatpush1.msra.mxu0 0.0
        %4806 = vmatprep.subr.mxu0 0.0
        %4807 = vmatpush1.msra.mxu0 0.0
        %4808 = vmatprep.subr.mxu0 0.0
        %4809 = vmatpush1.msra.mxu0 0.0
        %4810 = vmatprep.subr.mxu0 0.0
        %4811 = vmatpush1.msra.mxu0 0.0
        %4812 = vmatprep.subr.mxu0 0.0
        %4813 = vmatpush1.msra.mxu0 0.0
        %4814 = vmatprep.subr.mxu0 0.0
        %4815 = vmatpush1.msra.mxu0 0.0
        %4816 = vmatprep.mubr.f32.mxu0 0.0
        %4817 = vmatmul.mubr.f32.gmra.mrb[0].mxu0 %v4747
        %v4818 = vpop.f32.mrb[0].mxu0
        %v4819 = vadd.f32 0.0, %v4818
        %v4820 = vpop.f32.mrb[0].mxu0
        %v4821 = vadd.f32 0.0, %v4820
        %4822 = vdwg.mxu0
        %4823 = vmatprep.subr.mxu0 %v4523
        %4824 = vmatpush1.msra.mxu0 %v4522
        %4825 = vmatprep.subr.mxu0 %v4527
        %4826 = vmatpush1.msra.mxu0 %v4526
        %4827 = vmatprep.subr.mxu0 %v4531
        %4828 = vmatpush1.msra.mxu0 %v4530
        %4829 = vmatprep.subr.mxu0 %v4535
        %4830 = vmatpush1.msra.mxu0 %v4534
        %4831 = vmatprep.subr.mxu0 %v4539
        %4832 = vmatpush1.msra.mxu0 %v4538
        %4833 = vmatprep.subr.mxu0 %v4543
        %4834 = vmatpush1.msra.mxu0 %v4542
        %4835 = vmatprep.subr.mxu0 %v4547
        %4836 = vmatpush1.msra.mxu0 %v4546
        %4837 = vmatprep.subr.mxu0 %v4551
        %4838 = vmatpush1.msra.mxu0 %v4550
        %4839 = vmatprep.subr.mxu0 %v4555
        %4840 = vmatpush1.msra.mxu0 %v4554
        %4841 = vmatprep.subr.mxu0 %v4559
        %4842 = vmatpush1.msra.mxu0 %v4558
        %4843 = vmatprep.subr.mxu0 %v4563
        %4844 = vmatpush1.msra.mxu0 %v4562
        %4845 = vmatprep.subr.mxu0 %v4567
        %4846 = vmatpush1.msra.mxu0 %v4566
        %4847 = vmatprep.subr.mxu0 %v4571
        %4848 = vmatpush1.msra.mxu0 %v4570
        %4849 = vmatprep.subr.mxu0 %v4575
        %4850 = vmatpush1.msra.mxu0 %v4574
        %4851 = vmatprep.subr.mxu0 %v4579
        %4852 = vmatpush1.msra.mxu0 %v4578
        %4853 = vmatprep.subr.mxu0 %v4583
        %4854 = vmatpush1.msra.mxu0 %v4582
        %4855 = vmatprep.subr.mxu0 0.0
        %4856 = vmatpush1.msra.mxu0 0.0
        %4857 = vmatprep.subr.mxu0 0.0
        %4858 = vmatpush1.msra.mxu0 0.0
        %4859 = vmatprep.subr.mxu0 0.0
        %4860 = vmatpush1.msra.mxu0 0.0
        %4861 = vmatprep.subr.mxu0 0.0
        %4862 = vmatpush1.msra.mxu0 0.0
        %4863 = vmatprep.subr.mxu0 0.0
        %4864 = vmatpush1.msra.mxu0 0.0
        %4865 = vmatprep.subr.mxu0 0.0
        %4866 = vmatpush1.msra.mxu0 0.0
        %4867 = vmatprep.subr.mxu0 0.0
        %4868 = vmatpush1.msra.mxu0 0.0
        %4869 = vmatprep.subr.mxu0 0.0
        %4870 = vmatpush1.msra.mxu0 0.0
        %4871 = vmatprep.subr.mxu0 0.0
        %4872 = vmatpush1.msra.mxu0 0.0
        %4873 = vmatprep.subr.mxu0 0.0
        %4874 = vmatpush1.msra.mxu0 0.0
        %4875 = vmatprep.subr.mxu0 0.0
        %4876 = vmatpush1.msra.mxu0 0.0
        %4877 = vmatprep.subr.mxu0 0.0
        %4878 = vmatpush1.msra.mxu0 0.0
        %4879 = vmatprep.subr.mxu0 0.0
        %4880 = vmatpush1.msra.mxu0 0.0
        %4881 = vmatprep.subr.mxu0 0.0
        %4882 = vmatpush1.msra.mxu0 0.0
        %4883 = vmatprep.subr.mxu0 0.0
        %4884 = vmatpush1.msra.mxu0 0.0
        %4885 = vmatprep.subr.mxu0 0.0
        %4886 = vmatpush1.msra.mxu0 0.0
        %4887 = vmatprep.mubr.f32.mxu0 0.0
        %4888 = vmatmul.mubr.f32.gmra.mrb[0].mxu0 %v4747
        %v4889 = vpop.f32.mrb[0].mxu0
        %v4890 = vadd.f32 0.0, %v4889
        %v4891 = vpop.f32.mrb[0].mxu0
        %v4892 = vadd.f32 0.0, %v4891
        %4893 = vdwg.mxu0
        %v4894 = vadd.f32 %v4748, %v4819
        %v4895 = vadd.f32 %v4749, %v4821
        %v4896 = vadd.f32 %v4750, %v4890
        %v4897 = vadd.f32 %v4751, %v4892
        %v4898 = vmul.f32 %v4894, 0.5
        %v4899 = vtanh.pop %v4898
        %v4900 = vmul.f32 %v4899, 0.5
        %v4901 = vadd.f32 %v4900, 0.5
        %v4902 = vmul.f32 %v4895, 0.5
        %v4903 = vtanh.pop %v4902
        %v4904 = vmul.f32 %v4903, 0.5
        %v4905 = vadd.f32 %v4904, 0.5
        %v4906 = vtanh.pop %v4896
        %v4907 = vmul.f32 %v4897, 0.5
        %v4908 = vtanh.pop %v4907
        %v4909 = vmul.f32 %v4908, 0.5
        %v4910 = vadd.f32 %v4909, 0.5
        %v4911 = vmul.f32 %v4905, %v4745
        %v4912 = vmul.f32 %v4901, %v4906
        %v4913 = vadd.f32 %v4911, %v4912
        %v4914 = vtanh.pop %v4913
        %v4915 = vmul.f32 %v4910, %v4914
        %v4916 = vld [vmem:[%s2032] sm:$0xff]
        %v4917 = vld [vmem:[%s2032 + $0x8] sm:$0xff]
        %v4918 = vld [vmem:[%s2032 + $0x10] sm:$0xff]
        %v4919 = vld [vmem:[%s2032 + $0x18] sm:$0xff]
        %4920 = vmatprep.subr.mxu0 %v4521
        %4921 = vmatpush1.msra.mxu0 %v4520
        %4922 = vmatprep.subr.mxu0 %v4525
        %4923 = vmatpush1.msra.mxu0 %v4524
        %4924 = vmatprep.subr.mxu0 %v4529
        %4925 = vmatpush1.msra.mxu0 %v4528
        %4926 = vmatprep.subr.mxu0 %v4533
        %4927 = vmatpush1.msra.mxu0 %v4532
        %4928 = vmatprep.subr.mxu0 %v4537
        %4929 = vmatpush1.msra.mxu0 %v4536
        %4930 = vmatprep.subr.mxu0 %v4541
        %4931 = vmatpush1.msra.mxu0 %v4540
        %4932 = vmatprep.subr.mxu0 %v4545
        %4933 = vmatpush1.msra.mxu0 %v4544
        %4934 = vmatprep.subr.mxu0 %v4549
        %4935 = vmatpush1.msra.mxu0 %v4548
        %4936 = vmatprep.subr.mxu0 %v4553
        %4937 = vmatpush1.msra.mxu0 %v4552
        %4938 = vmatprep.subr.mxu0 %v4557
        %4939 = vmatpush1.msra.mxu0 %v4556
        %4940 = vmatprep.subr.mxu0 %v4561
        %4941 = vmatpush1.msra.mxu0 %v4560
        %4942 = vmatprep.subr.mxu0 %v4565
        %4943 = vmatpush1.msra.mxu0 %v4564
        %4944 = vmatprep.subr.mxu0 %v4569
        %4945 = vmatpush1.msra.mxu0 %v4568
        %4946 = vmatprep.subr.mxu0 %v4573
        %4947 = vmatpush1.msra.mxu0 %v4572
        %4948 = vmatprep.subr.mxu0 %v4577
        %4949 = vmatpush1.msra.mxu0 %v4576
        %4950 = vmatprep.subr.mxu0 %v4581
        %4951 = vmatpush1.msra.mxu0 %v4580
        %4952 = vmatprep.subr.mxu0 0.0
        %4953 = vmatpush1.msra.mxu0 0.0
        %4954 = vmatprep.subr.mxu0 0.0
        %4955 = vmatpush1.msra.mxu0 0.0
        %4956 = vmatprep.subr.mxu0 0.0
        %4957 = vmatpush1.msra.mxu0 0.0
        %4958 = vmatprep.subr.mxu0 0.0
        %4959 = vmatpush1.msra.mxu0 0.0
        %4960 = vmatprep.subr.mxu0 0.0
        %4961 = vmatpush1.msra.mxu0 0.0
        %4962 = vmatprep.subr.mxu0 0.0
        %4963 = vmatpush1.msra.mxu0 0.0
        %4964 = vmatprep.subr.mxu0 0.0
        %4965 = vmatpush1.msra.mxu0 0.0
        %4966 = vmatprep.subr.mxu0 0.0
        %4967 = vmatpush1.msra.mxu0 0.0
        %4968 = vmatprep.subr.mxu0 0.0
        %4969 = vmatpush1.msra.mxu0 0.0
        %4970 = vmatprep.subr.mxu0 0.0
        %4971 = vmatpush1.msra.mxu0 0.0
        %4972 = vmatprep.subr.mxu0 0.0
        %4973 = vmatpush1.msra.mxu0 0.0
        %4974 = vmatprep.subr.mxu0 0.0
        %4975 = vmatpush1.msra.mxu0 0.0
        %4976 = vmatprep.subr.mxu0 0.0
        %4977 = vmatpush1.msra.mxu0 0.0
        %4978 = vmatprep.subr.mxu0 0.0
        %4979 = vmatpush1.msra.mxu0 0.0
        %4980 = vmatprep.subr.mxu0 0.0
        %4981 = vmatpush1.msra.mxu0 0.0
        %4982 = vmatprep.subr.mxu0 0.0
        %4983 = vmatpush1.msra.mxu0 0.0
        %4984 = vmatprep.mubr.f32.mxu0 0.0
        %4985 = vmatmul.mubr.f32.gmra.mrb[0].mxu0 %v4915
        %v4986 = vpop.f32.mrb[0].mxu0
        %v4987 = vadd.f32 0.0, %v4986
        %v4988 = vpop.f32.mrb[0].mxu0
        %v4989 = vadd.f32 0.0, %v4988
        %4990 = vdwg.mxu0
        %4991 = vmatprep.subr.mxu0 %v4523
        %4992 = vmatpush1.msra.mxu0 %v4522
        %4993 = vmatprep.subr.mxu0 %v4527
        %4994 = vmatpush1.msra.mxu0 %v4526
        %4995 = vmatprep.subr.mxu0 %v4531
        %4996 = vmatpush1.msra.mxu0 %v4530
        %4997 = vmatprep.subr.mxu0 %v4535
        %4998 = vmatpush1.msra.mxu0 %v4534
        %4999 = vmatprep.subr.mxu0 %v4539
        %5000 = vmatpush1.msra.mxu0 %v4538
        %5001 = vmatprep.subr.mxu0 %v4543
        %5002 = vmatpush1.msra.mxu0 %v4542
        %5003 = vmatprep.subr.mxu0 %v4547
        %5004 = vmatpush1.msra.mxu0 %v4546
        %5005 = vmatprep.subr.mxu0 %v4551
        %5006 = vmatpush1.msra.mxu0 %v4550
        %5007 = vmatprep.subr.mxu0 %v4555
        %5008 = vmatpush1.msra.mxu0 %v4554
        %5009 = vmatprep.subr.mxu0 %v4559
        %5010 = vmatpush1.msra.mxu0 %v4558
        %5011 = vmatprep.subr.mxu0 %v4563
        %5012 = vmatpush1.msra.mxu0 %v4562
        %5013 = vmatprep.subr.mxu0 %v4567
        %5014 = vmatpush1.msra.mxu0 %v4566
        %5015 = vmatprep.subr.mxu0 %v4571
        %5016 = vmatpush1.msra.mxu0 %v4570
        %5017 = vmatprep.subr.mxu0 %v4575
        %5018 = vmatpush1.msra.mxu0 %v4574
        %5019 = vmatprep.subr.mxu0 %v4579
        %5020 = vmatpush1.msra.mxu0 %v4578
        %5021 = vmatprep.subr.mxu0 %v4583
        %5022 = vmatpush1.msra.mxu0 %v4582
        %5023 = vmatprep.subr.mxu0 0.0
        %5024 = vmatpush1.msra.mxu0 0.0
        %5025 = vmatprep.subr.mxu0 0.0
        %5026 = vmatpush1.msra.mxu0 0.0
        %5027 = vmatprep.subr.mxu0 0.0
        %5028 = vmatpush1.msra.mxu0 0.0
        %5029 = vmatprep.subr.mxu0 0.0
        %5030 = vmatpush1.msra.mxu0 0.0
        %5031 = vmatprep.subr.mxu0 0.0
        %5032 = vmatpush1.msra.mxu0 0.0
        %5033 = vmatprep.subr.mxu0 0.0
        %5034 = vmatpush1.msra.mxu0 0.0
        %5035 = vmatprep.subr.mxu0 0.0
        %5036 = vmatpush1.msra.mxu0 0.0
        %5037 = vmatprep.subr.mxu0 0.0
        %5038 = vmatpush1.msra.mxu0 0.0
        %5039 = vmatprep.subr.mxu0 0.0
        %5040 = vmatpush1.msra.mxu0 0.0
        %5041 = vmatprep.subr.mxu0 0.0
        %5042 = vmatpush1.msra.mxu0 0.0
        %5043 = vmatprep.subr.mxu0 0.0
        %5044 = vmatpush1.msra.mxu0 0.0
        %5045 = vmatprep.subr.mxu0 0.0
        %5046 = vmatpush1.msra.mxu0 0.0
        %5047 = vmatprep.subr.mxu0 0.0
        %5048 = vmatpush1.msra.mxu0 0.0
        %5049 = vmatprep.subr.mxu0 0.0
        %5050 = vmatpush1.msra.mxu0 0.0
        %5051 = vmatprep.subr.mxu0 0.0
        %5052 = vmatpush1.msra.mxu0 0.0
        %5053 = vmatprep.subr.mxu0 0.0
        %5054 = vmatpush1.msra.mxu0 0.0
        %5055 = vmatprep.mubr.f32.mxu0 0.0
        %5056 = vmatmul.mubr.f32.gmra.mrb[0].mxu0 %v4915
        %v5057 = vpop.f32.mrb[0].mxu0
        %v5058 = vadd.f32 0.0, %v5057
        %v5059 = vpop.f32.mrb[0].mxu0
        %v5060 = vadd.f32 0.0, %v5059
        %5061 = vdwg.mxu0
        %v5062 = vadd.f32 %v4916, %v4987
        %v5063 = vadd.f32 %v4917, %v4989
        %v5064 = vadd.f32 %v4918, %v5058
        %v5065 = vadd.f32 %v4919, %v5060
        %v5066 = vmul.f32 %v5062, 0.5
        %v5067 = vtanh.pop %v5066
        %v5068 = vmul.f32 %v5067, 0.5
        %v5069 = vadd.f32 %v5068, 0.5
        %v5070 = vmul.f32 %v5063, 0.5
        %v5071 = vtanh.pop %v5070
        %v5072 = vmul.f32 %v5071, 0.5
        %v5073 = vadd.f32 %v5072, 0.5
        %v5074 = vtanh.pop %v5064
        %v5075 = vmul.f32 %v5065, 0.5
        %v5076 = vtanh.pop %v5075
        %v5077 = vmul.f32 %v5076, 0.5
        %v5078 = vadd.f32 %v5077, 0.5
        %v5079 = vmul.f32 %v5073, %v4913
        %v5080 = vmul.f32 %v5069, %v5074
        %v5081 = vadd.f32 %v5079, %v5080
        %v5082 = vtanh.pop %v5081
        %v5083 = vmul.f32 %v5078, %v5082
        %v5084 = vld [vmem:[%s2051] sm:$0xff]
        %v5085 = vld [vmem:[%s2051 + $0x8] sm:$0xff]
        %v5086 = vld [vmem:[%s2051 + $0x10] sm:$0xff]
        %v5087 = vld [vmem:[%s2051 + $0x18] sm:$0xff]
        %5088 = vmatprep.subr.mxu0 %v4521
        %5089 = vmatpush1.msra.mxu0 %v4520
        %5090 = vmatprep.subr.mxu0 %v4525
        %5091 = vmatpush1.msra.mxu0 %v4524
        %5092 = vmatprep.subr.mxu0 %v4529
        %5093 = vmatpush1.msra.mxu0 %v4528
        %5094 = vmatprep.subr.mxu0 %v4533
        %5095 = vmatpush1.msra.mxu0 %v4532
        %5096 = vmatprep.subr.mxu0 %v4537
        %5097 = vmatpush1.msra.mxu0 %v4536
        %5098 = vmatprep.subr.mxu0 %v4541
        %5099 = vmatpush1.msra.mxu0 %v4540
        %5100 = vmatprep.subr.mxu0 %v4545
        %5101 = vmatpush1.msra.mxu0 %v4544
        %5102 = vmatprep.subr.mxu0 %v4549
        %5103 = vmatpush1.msra.mxu0 %v4548
        %5104 = vmatprep.subr.mxu0 %v4553
        %5105 = vmatpush1.msra.mxu0 %v4552
        %5106 = vmatprep.subr.mxu0 %v4557
        %5107 = vmatpush1.msra.mxu0 %v4556
        %5108 = vmatprep.subr.mxu0 %v4561
        %5109 = vmatpush1.msra.mxu0 %v4560
        %5110 = vmatprep.subr.mxu0 %v4565
        %5111 = vmatpush1.msra.mxu0 %v4564
        %5112 = vmatprep.subr.mxu0 %v4569
        %5113 = vmatpush1.msra.mxu0 %v4568
        %5114 = vmatprep.subr.mxu0 %v4573
        %5115 = vmatpush1.msra.mxu0 %v4572
        %5116 = vmatprep.subr.mxu0 %v4577
        %5117 = vmatpush1.msra.mxu0 %v4576
        %5118 = vmatprep.subr.mxu0 %v4581
        %5119 = vmatpush1.msra.mxu0 %v4580
        %5120 = vmatprep.subr.mxu0 0.0
        %5121 = vmatpush1.msra.mxu0 0.0
        %5122 = vmatprep.subr.mxu0 0.0
        %5123 = vmatpush1.msra.mxu0 0.0
        %5124 = vmatprep.subr.mxu0 0.0
        %5125 = vmatpush1.msra.mxu0 0.0
        %5126 = vmatprep.subr.mxu0 0.0
        %5127 = vmatpush1.msra.mxu0 0.0
        %5128 = vmatprep.subr.mxu0 0.0
        %5129 = vmatpush1.msra.mxu0 0.0
        %5130 = vmatprep.subr.mxu0 0.0
        %5131 = vmatpush1.msra.mxu0 0.0
        %5132 = vmatprep.subr.mxu0 0.0
        %5133 = vmatpush1.msra.mxu0 0.0
        %5134 = vmatprep.subr.mxu0 0.0
        %5135 = vmatpush1.msra.mxu0 0.0
        %5136 = vmatprep.subr.mxu0 0.0
        %5137 = vmatpush1.msra.mxu0 0.0
        %5138 = vmatprep.subr.mxu0 0.0
        %5139 = vmatpush1.msra.mxu0 0.0
        %5140 = vmatprep.subr.mxu0 0.0
        %5141 = vmatpush1.msra.mxu0 0.0
        %5142 = vmatprep.subr.mxu0 0.0
        %5143 = vmatpush1.msra.mxu0 0.0
        %5144 = vmatprep.subr.mxu0 0.0
        %5145 = vmatpush1.msra.mxu0 0.0
        %5146 = vmatprep.subr.mxu0 0.0
        %5147 = vmatpush1.msra.mxu0 0.0
        %5148 = vmatprep.subr.mxu0 0.0
        %5149 = vmatpush1.msra.mxu0 0.0
        %5150 = vmatprep.subr.mxu0 0.0
        %5151 = vmatpush1.msra.mxu0 0.0
        %5152 = vmatprep.mubr.f32.mxu0 0.0
        %5153 = vmatmul.mubr.f32.gmra.mrb[0].mxu0 %v5083
        %v5154 = vpop.f32.mrb[0].mxu0
        %v5155 = vadd.f32 0.0, %v5154
        %v5156 = vpop.f32.mrb[0].mxu0
        %v5157 = vadd.f32 0.0, %v5156
        %5158 = vdwg.mxu0
        %5159 = vmatprep.subr.mxu0 %v4523
        %5160 = vmatpush1.msra.mxu0 %v4522
        %5161 = vmatprep.subr.mxu0 %v4527
        %5162 = vmatpush1.msra.mxu0 %v4526
        %5163 = vmatprep.subr.mxu0 %v4531
        %5164 = vmatpush1.msra.mxu0 %v4530
        %5165 = vmatprep.subr.mxu0 %v4535
        %5166 = vmatpush1.msra.mxu0 %v4534
        %5167 = vmatprep.subr.mxu0 %v4539
        %5168 = vmatpush1.msra.mxu0 %v4538
        %5169 = vmatprep.subr.mxu0 %v4543
        %5170 = vmatpush1.msra.mxu0 %v4542
        %5171 = vmatprep.subr.mxu0 %v4547
        %5172 = vmatpush1.msra.mxu0 %v4546
        %5173 = vmatprep.subr.mxu0 %v4551
        %5174 = vmatpush1.msra.mxu0 %v4550
        %5175 = vmatprep.subr.mxu0 %v4555
        %5176 = vmatpush1.msra.mxu0 %v4554
        %5177 = vmatprep.subr.mxu0 %v4559
        %5178 = vmatpush1.msra.mxu0 %v4558
        %5179 = vmatprep.subr.mxu0 %v4563
        %5180 = vmatpush1.msra.mxu0 %v4562
        %5181 = vmatprep.subr.mxu0 %v4567
        %5182 = vmatpush1.msra.mxu0 %v4566
        %5183 = vmatprep.subr.mxu0 %v4571
        %5184 = vmatpush1.msra.mxu0 %v4570
        %5185 = vmatprep.subr.mxu0 %v4575
        %5186 = vmatpush1.msra.mxu0 %v4574
        %5187 = vmatprep.subr.mxu0 %v4579
        %5188 = vmatpush1.msra.mxu0 %v4578
        %5189 = vmatprep.subr.mxu0 %v4583
        %5190 = vmatpush1.msra.mxu0 %v4582
        %5191 = vmatprep.subr.mxu0 0.0
        %5192 = vmatpush1.msra.mxu0 0.0
        %5193 = vmatprep.subr.mxu0 0.0
        %5194 = vmatpush1.msra.mxu0 0.0
        %5195 = vmatprep.subr.mxu0 0.0
        %5196 = vmatpush1.msra.mxu0 0.0
        %5197 = vmatprep.subr.mxu0 0.0
        %5198 = vmatpush1.msra.mxu0 0.0
        %5199 = vmatprep.subr.mxu0 0.0
        %5200 = vmatpush1.msra.mxu0 0.0
        %5201 = vmatprep.subr.mxu0 0.0
        %5202 = vmatpush1.msra.mxu0 0.0
        %5203 = vmatprep.subr.mxu0 0.0
        %5204 = vmatpush1.msra.mxu0 0.0
        %5205 = vmatprep.subr.mxu0 0.0
        %5206 = vmatpush1.msra.mxu0 0.0
        %5207 = vmatprep.subr.mxu0 0.0
        %5208 = vmatpush1.msra.mxu0 0.0
        %5209 = vmatprep.subr.mxu0 0.0
        %5210 = vmatpush1.msra.mxu0 0.0
        %5211 = vmatprep.subr.mxu0 0.0
        %5212 = vmatpush1.msra.mxu0 0.0
        %5213 = vmatprep.subr.mxu0 0.0
        %5214 = vmatpush1.msra.mxu0 0.0
        %5215 = vmatprep.subr.mxu0 0.0
        %5216 = vmatpush1.msra.mxu0 0.0
        %5217 = vmatprep.subr.mxu0 0.0
        %5218 = vmatpush1.msra.mxu0 0.0
        %5219 = vmatprep.subr.mxu0 0.0
        %5220 = vmatpush1.msra.mxu0 0.0
        %5221 = vmatprep.subr.mxu0 0.0
        %5222 = vmatpush1.msra.mxu0 0.0
        %5223 = vmatprep.mubr.f32.mxu0 0.0
        %5224 = vmatmul.mubr.f32.gmra.mrb[0].mxu0 %v5083
        %v5225 = vpop.f32.mrb[0].mxu0
        %v5226 = vadd.f32 0.0, %v5225
        %v5227 = vpop.f32.mrb[0].mxu0
        %v5228 = vadd.f32 0.0, %v5227
        %5229 = vdwg.mxu0
        %v5230 = vadd.f32 %v5084, %v5155
        %v5231 = vadd.f32 %v5085, %v5157
        %v5232 = vadd.f32 %v5086, %v5226
        %v5233 = vadd.f32 %v5087, %v5228
        %v5234 = vmul.f32 %v5230, 0.5
        %v5235 = vtanh.pop %v5234
        %v5236 = vmul.f32 %v5235, 0.5
        %v5237 = vadd.f32 %v5236, 0.5
        %v5238 = vmul.f32 %v5231, 0.5
        %v5239 = vtanh.pop %v5238
        %v5240 = vmul.f32 %v5239, 0.5
        %v5241 = vadd.f32 %v5240, 0.5
        %v5242 = vtanh.pop %v5232
        %v5243 = vmul.f32 %v5233, 0.5
        %v5244 = vtanh.pop %v5243
        %v5245 = vmul.f32 %v5244, 0.5
        %v5246 = vadd.f32 %v5245, 0.5
        %v5247 = vmul.f32 %v5241, %v5081
        %v5248 = vmul.f32 %v5237, %v5242
        %v5249 = vadd.f32 %v5247, %v5248
        %v5250 = vtanh.pop %v5249
        %v5251 = vmul.f32 %v5246, %v5250
        %v5252 = vld [vmem:[%s2068] sm:$0xff]
        %v5253 = vld [vmem:[%s2068 + $0x8] sm:$0xff]
        %v5254 = vld [vmem:[%s2068 + $0x10] sm:$0xff]
        %v5255 = vld [vmem:[%s2068 + $0x18] sm:$0xff]
        %5256 = vmatprep.subr.mxu0 %v4521
        %5257 = vmatpush1.msra.mxu0 %v4520
        %5258 = vmatprep.subr.mxu0 %v4525
        %5259 = vmatpush1.msra.mxu0 %v4524
        %5260 = vmatprep.subr.mxu0 %v4529
        %5261 = vmatpush1.msra.mxu0 %v4528
        %5262 = vmatprep.subr.mxu0 %v4533
        %5263 = vmatpush1.msra.mxu0 %v4532
        %5264 = vmatprep.subr.mxu0 %v4537
        %5265 = vmatpush1.msra.mxu0 %v4536
        %5266 = vmatprep.subr.mxu0 %v4541
        %5267 = vmatpush1.msra.mxu0 %v4540
        %5268 = vmatprep.subr.mxu0 %v4545
        %5269 = vmatpush1.msra.mxu0 %v4544
        %5270 = vmatprep.subr.mxu0 %v4549
        %5271 = vmatpush1.msra.mxu0 %v4548
        %5272 = vmatprep.subr.mxu0 %v4553
        %5273 = vmatpush1.msra.mxu0 %v4552
        %5274 = vmatprep.subr.mxu0 %v4557
        %5275 = vmatpush1.msra.mxu0 %v4556
        %5276 = vmatprep.subr.mxu0 %v4561
        %5277 = vmatpush1.msra.mxu0 %v4560
        %5278 = vmatprep.subr.mxu0 %v4565
        %5279 = vmatpush1.msra.mxu0 %v4564
        %5280 = vmatprep.subr.mxu0 %v4569
        %5281 = vmatpush1.msra.mxu0 %v4568
        %5282 = vmatprep.subr.mxu0 %v4573
        %5283 = vmatpush1.msra.mxu0 %v4572
        %5284 = vmatprep.subr.mxu0 %v4577
        %5285 = vmatpush1.msra.mxu0 %v4576
        %5286 = vmatprep.subr.mxu0 %v4581
        %5287 = vmatpush1.msra.mxu0 %v4580
        %5288 = vmatprep.subr.mxu0 0.0
        %5289 = vmatpush1.msra.mxu0 0.0
        %5290 = vmatprep.subr.mxu0 0.0
        %5291 = vmatpush1.msra.mxu0 0.0
        %5292 = vmatprep.subr.mxu0 0.0
        %5293 = vmatpush1.msra.mxu0 0.0
        %5294 = vmatprep.subr.mxu0 0.0
        %5295 = vmatpush1.msra.mxu0 0.0
        %5296 = vmatprep.subr.mxu0 0.0
        %5297 = vmatpush1.msra.mxu0 0.0
        %5298 = vmatprep.subr.mxu0 0.0
        %5299 = vmatpush1.msra.mxu0 0.0
        %5300 = vmatprep.subr.mxu0 0.0
        %5301 = vmatpush1.msra.mxu0 0.0
        %5302 = vmatprep.subr.mxu0 0.0
        %5303 = vmatpush1.msra.mxu0 0.0
        %5304 = vmatprep.subr.mxu0 0.0
        %5305 = vmatpush1.msra.mxu0 0.0
        %5306 = vmatprep.subr.mxu0 0.0
        %5307 = vmatpush1.msra.mxu0 0.0
        %5308 = vmatprep.subr.mxu0 0.0
        %5309 = vmatpush1.msra.mxu0 0.0
        %5310 = vmatprep.subr.mxu0 0.0
        %5311 = vmatpush1.msra.mxu0 0.0
        %5312 = vmatprep.subr.mxu0 0.0
        %5313 = vmatpush1.msra.mxu0 0.0
        %5314 = vmatprep.subr.mxu0 0.0
        %5315 = vmatpush1.msra.mxu0 0.0
        %5316 = vmatprep.subr.mxu0 0.0
        %5317 = vmatpush1.msra.mxu0 0.0
        %5318 = vmatprep.subr.mxu0 0.0
        %5319 = vmatpush1.msra.mxu0 0.0
        %5320 = vmatprep.mubr.f32.mxu0 0.0
        %5321 = vmatmul.mubr.f32.gmra.mrb[0].mxu0 %v5251
        %v5322 = vpop.f32.mrb[0].mxu0
        %v5323 = vadd.f32 0.0, %v5322
        %v5324 = vpop.f32.mrb[0].mxu0
        %v5325 = vadd.f32 0.0, %v5324
        %5326 = vdwg.mxu0
        %5327 = vmatprep.subr.mxu0 %v4523
        %5328 = vmatpush1.msra.mxu0 %v4522
        %5329 = vmatprep.subr.mxu0 %v4527
        %5330 = vmatpush1.msra.mxu0 %v4526
        %5331 = vmatprep.subr.mxu0 %v4531
        %5332 = vmatpush1.msra.mxu0 %v4530
        %5333 = vmatprep.subr.mxu0 %v4535
        %5334 = vmatpush1.msra.mxu0 %v4534
        %5335 = vmatprep.subr.mxu0 %v4539
        %5336 = vmatpush1.msra.mxu0 %v4538
        %5337 = vmatprep.subr.mxu0 %v4543
        %5338 = vmatpush1.msra.mxu0 %v4542
        %5339 = vmatprep.subr.mxu0 %v4547
        %5340 = vmatpush1.msra.mxu0 %v4546
        %5341 = vmatprep.subr.mxu0 %v4551
        %5342 = vmatpush1.msra.mxu0 %v4550
        %5343 = vmatprep.subr.mxu0 %v4555
        %5344 = vmatpush1.msra.mxu0 %v4554
        %5345 = vmatprep.subr.mxu0 %v4559
        %5346 = vmatpush1.msra.mxu0 %v4558
        %5347 = vmatprep.subr.mxu0 %v4563
        %5348 = vmatpush1.msra.mxu0 %v4562
        %5349 = vmatprep.subr.mxu0 %v4567
        %5350 = vmatpush1.msra.mxu0 %v4566
        %5351 = vmatprep.subr.mxu0 %v4571
        %5352 = vmatpush1.msra.mxu0 %v4570
        %5353 = vmatprep.subr.mxu0 %v4575
        %5354 = vmatpush1.msra.mxu0 %v4574
        %5355 = vmatprep.subr.mxu0 %v4579
        %5356 = vmatpush1.msra.mxu0 %v4578
        %5357 = vmatprep.subr.mxu0 %v4583
        %5358 = vmatpush1.msra.mxu0 %v4582
        %5359 = vmatprep.subr.mxu0 0.0
        %5360 = vmatpush1.msra.mxu0 0.0
        %5361 = vmatprep.subr.mxu0 0.0
        %5362 = vmatpush1.msra.mxu0 0.0
        %5363 = vmatprep.subr.mxu0 0.0
        %5364 = vmatpush1.msra.mxu0 0.0
        %5365 = vmatprep.subr.mxu0 0.0
        %5366 = vmatpush1.msra.mxu0 0.0
        %5367 = vmatprep.subr.mxu0 0.0
        %5368 = vmatpush1.msra.mxu0 0.0
        %5369 = vmatprep.subr.mxu0 0.0
        %5370 = vmatpush1.msra.mxu0 0.0
        %5371 = vmatprep.subr.mxu0 0.0
        %5372 = vmatpush1.msra.mxu0 0.0
        %5373 = vmatprep.subr.mxu0 0.0
        %5374 = vmatpush1.msra.mxu0 0.0
        %5375 = vmatprep.subr.mxu0 0.0
        %5376 = vmatpush1.msra.mxu0 0.0
        %5377 = vmatprep.subr.mxu0 0.0
        %5378 = vmatpush1.msra.mxu0 0.0
        %5379 = vmatprep.subr.mxu0 0.0
        %5380 = vmatpush1.msra.mxu0 0.0
        %5381 = vmatprep.subr.mxu0 0.0
        %5382 = vmatpush1.msra.mxu0 0.0
        %5383 = vmatprep.subr.mxu0 0.0
        %5384 = vmatpush1.msra.mxu0 0.0
        %5385 = vmatprep.subr.mxu0 0.0
        %5386 = vmatpush1.msra.mxu0 0.0
        %5387 = vmatprep.subr.mxu0 0.0
        %5388 = vmatpush1.msra.mxu0 0.0
        %5389 = vmatprep.subr.mxu0 0.0
        %5390 = vmatpush1.msra.mxu0 0.0
        %5391 = vmatprep.mubr.f32.mxu0 0.0
        %5392 = vmatmul.mubr.f32.gmra.mrb[0].mxu0 %v5251
        %v5393 = vpop.f32.mrb[0].mxu0
        %v5394 = vadd.f32 0.0, %v5393
        %v5395 = vpop.f32.mrb[0].mxu0
        %v5396 = vadd.f32 0.0, %v5395
        %5397 = vdwg.mxu0
        %v5398 = vadd.f32 %v5252, %v5323
        %v5399 = vadd.f32 %v5253, %v5325
        %v5400 = vadd.f32 %v5254, %v5394
        %v5401 = vadd.f32 %v5255, %v5396
        %v5402 = vmul.f32 %v5398, 0.5
        %v5403 = vtanh.pop %v5402
        %v5404 = vmul.f32 %v5403, 0.5
        %v5405 = vadd.f32 %v5404, 0.5
        %v5406 = vmul.f32 %v5399, 0.5
        %v5407 = vtanh.pop %v5406
        %v5408 = vmul.f32 %v5407, 0.5
        %v5409 = vadd.f32 %v5408, 0.5
        %v5410 = vtanh.pop %v5400
        %v5411 = vmul.f32 %v5401, 0.5
        %v5412 = vtanh.pop %v5411
        %v5413 = vmul.f32 %v5412, 0.5
        %v5414 = vadd.f32 %v5413, 0.5
        %v5415 = vmul.f32 %v5409, %v5249
        %v5416 = vmul.f32 %v5405, %v5410
        %v5417 = vadd.f32 %v5415, %v5416
        %v5418 = vtanh.pop %v5417
        %v5419 = vmul.f32 %v5414, %v5418
        %v5420 = vld [vmem:[%s2085] sm:$0xff]
        %v5421 = vld [vmem:[%s2085 + $0x8] sm:$0xff]
        %v5422 = vld [vmem:[%s2085 + $0x10] sm:$0xff]
        %v5423 = vld [vmem:[%s2085 + $0x18] sm:$0xff]
        %5424 = vmatprep.subr.mxu0 %v4521
        %5425 = vmatpush1.msra.mxu0 %v4520
        %5426 = vmatprep.subr.mxu0 %v4525
        %5427 = vmatpush1.msra.mxu0 %v4524
        %5428 = vmatprep.subr.mxu0 %v4529
        %5429 = vmatpush1.msra.mxu0 %v4528
        %5430 = vmatprep.subr.mxu0 %v4533
        %5431 = vmatpush1.msra.mxu0 %v4532
        %5432 = vmatprep.subr.mxu0 %v4537
        %5433 = vmatpush1.msra.mxu0 %v4536
        %5434 = vmatprep.subr.mxu0 %v4541
        %5435 = vmatpush1.msra.mxu0 %v4540
        %5436 = vmatprep.subr.mxu0 %v4545
        %5437 = vmatpush1.msra.mxu0 %v4544
        %5438 = vmatprep.subr.mxu0 %v4549
        %5439 = vmatpush1.msra.mxu0 %v4548
        %5440 = vmatprep.subr.mxu0 %v4553
        %5441 = vmatpush1.msra.mxu0 %v4552
        %5442 = vmatprep.subr.mxu0 %v4557
        %5443 = vmatpush1.msra.mxu0 %v4556
        %5444 = vmatprep.subr.mxu0 %v4561
        %5445 = vmatpush1.msra.mxu0 %v4560
        %5446 = vmatprep.subr.mxu0 %v4565
        %5447 = vmatpush1.msra.mxu0 %v4564
        %5448 = vmatprep.subr.mxu0 %v4569
        %5449 = vmatpush1.msra.mxu0 %v4568
        %5450 = vmatprep.subr.mxu0 %v4573
        %5451 = vmatpush1.msra.mxu0 %v4572
        %5452 = vmatprep.subr.mxu0 %v4577
        %5453 = vmatpush1.msra.mxu0 %v4576
        %5454 = vmatprep.subr.mxu0 %v4581
        %5455 = vmatpush1.msra.mxu0 %v4580
        %5456 = vmatprep.subr.mxu0 0.0
        %5457 = vmatpush1.msra.mxu0 0.0
        %5458 = vmatprep.subr.mxu0 0.0
        %5459 = vmatpush1.msra.mxu0 0.0
        %5460 = vmatprep.subr.mxu0 0.0
        %5461 = vmatpush1.msra.mxu0 0.0
        %5462 = vmatprep.subr.mxu0 0.0
        %5463 = vmatpush1.msra.mxu0 0.0
        %5464 = vmatprep.subr.mxu0 0.0
        %5465 = vmatpush1.msra.mxu0 0.0
        %5466 = vmatprep.subr.mxu0 0.0
        %5467 = vmatpush1.msra.mxu0 0.0
        %5468 = vmatprep.subr.mxu0 0.0
        %5469 = vmatpush1.msra.mxu0 0.0
        %5470 = vmatprep.subr.mxu0 0.0
        %5471 = vmatpush1.msra.mxu0 0.0
        %5472 = vmatprep.subr.mxu0 0.0
        %5473 = vmatpush1.msra.mxu0 0.0
        %5474 = vmatprep.subr.mxu0 0.0
        %5475 = vmatpush1.msra.mxu0 0.0
        %5476 = vmatprep.subr.mxu0 0.0
        %5477 = vmatpush1.msra.mxu0 0.0
        %5478 = vmatprep.subr.mxu0 0.0
        %5479 = vmatpush1.msra.mxu0 0.0
        %5480 = vmatprep.subr.mxu0 0.0
        %5481 = vmatpush1.msra.mxu0 0.0
        %5482 = vmatprep.subr.mxu0 0.0
        %5483 = vmatpush1.msra.mxu0 0.0
        %5484 = vmatprep.subr.mxu0 0.0
        %5485 = vmatpush1.msra.mxu0 0.0
        %5486 = vmatprep.subr.mxu0 0.0
        %5487 = vmatpush1.msra.mxu0 0.0
        %5488 = vmatprep.mubr.f32.mxu0 0.0
        %5489 = vmatmul.mubr.f32.gmra.mrb[0].mxu0 %v5419
        %v5490 = vpop.f32.mrb[0].mxu0
        %v5491 = vadd.f32 0.0, %v5490
        %v5492 = vpop.f32.mrb[0].mxu0
        %v5493 = vadd.f32 0.0, %v5492
        %5494 = vdwg.mxu0
        %5495 = vmatprep.subr.mxu0 %v4523
        %5496 = vmatpush1.msra.mxu0 %v4522
        %5497 = vmatprep.subr.mxu0 %v4527
        %5498 = vmatpush1.msra.mxu0 %v4526
        %5499 = vmatprep.subr.mxu0 %v4531
        %5500 = vmatpush1.msra.mxu0 %v4530
        %5501 = vmatprep.subr.mxu0 %v4535
        %5502 = vmatpush1.msra.mxu0 %v4534
        %5503 = vmatprep.subr.mxu0 %v4539
        %5504 = vmatpush1.msra.mxu0 %v4538
        %5505 = vmatprep.subr.mxu0 %v4543
        %5506 = vmatpush1.msra.mxu0 %v4542
        %5507 = vmatprep.subr.mxu0 %v4547
        %5508 = vmatpush1.msra.mxu0 %v4546
        %5509 = vmatprep.subr.mxu0 %v4551
        %5510 = vmatpush1.msra.mxu0 %v4550
        %5511 = vmatprep.subr.mxu0 %v4555
        %5512 = vmatpush1.msra.mxu0 %v4554
        %5513 = vmatprep.subr.mxu0 %v4559
        %5514 = vmatpush1.msra.mxu0 %v4558
        %5515 = vmatprep.subr.mxu0 %v4563
        %5516 = vmatpush1.msra.mxu0 %v4562
        %5517 = vmatprep.subr.mxu0 %v4567
        %5518 = vmatpush1.msra.mxu0 %v4566
        %5519 = vmatprep.subr.mxu0 %v4571
        %5520 = vmatpush1.msra.mxu0 %v4570
        %5521 = vmatprep.subr.mxu0 %v4575
        %5522 = vmatpush1.msra.mxu0 %v4574
        %5523 = vmatprep.subr.mxu0 %v4579
        %5524 = vmatpush1.msra.mxu0 %v4578
        %5525 = vmatprep.subr.mxu0 %v4583
        %5526 = vmatpush1.msra.mxu0 %v4582
        %5527 = vmatprep.subr.mxu0 0.0
        %5528 = vmatpush1.msra.mxu0 0.0
        %5529 = vmatprep.subr.mxu0 0.0
        %5530 = vmatpush1.msra.mxu0 0.0
        %5531 = vmatprep.subr.mxu0 0.0
        %5532 = vmatpush1.msra.mxu0 0.0
        %5533 = vmatprep.subr.mxu0 0.0
        %5534 = vmatpush1.msra.mxu0 0.0
        %5535 = vmatprep.subr.mxu0 0.0
        %5536 = vmatpush1.msra.mxu0 0.0
        %5537 = vmatprep.subr.mxu0 0.0
        %5538 = vmatpush1.msra.mxu0 0.0
        %5539 = vmatprep.subr.mxu0 0.0
        %5540 = vmatpush1.msra.mxu0 0.0
        %5541 = vmatprep.subr.mxu0 0.0
        %5542 = vmatpush1.msra.mxu0 0.0
        %5543 = vmatprep.subr.mxu0 0.0
        %5544 = vmatpush1.msra.mxu0 0.0
        %5545 = vmatprep.subr.mxu0 0.0
        %5546 = vmatpush1.msra.mxu0 0.0
        %5547 = vmatprep.subr.mxu0 0.0
        %5548 = vmatpush1.msra.mxu0 0.0
        %5549 = vmatprep.subr.mxu0 0.0
        %5550 = vmatpush1.msra.mxu0 0.0
        %5551 = vmatprep.subr.mxu0 0.0
        %5552 = vmatpush1.msra.mxu0 0.0
        %5553 = vmatprep.subr.mxu0 0.0
        %5554 = vmatpush1.msra.mxu0 0.0
        %5555 = vmatprep.subr.mxu0 0.0
        %5556 = vmatpush1.msra.mxu0 0.0
        %5557 = vmatprep.subr.mxu0 0.0
        %5558 = vmatpush1.msra.mxu0 0.0
        %5559 = vmatprep.mubr.f32.mxu0 0.0
        %5560 = vmatmul.mubr.f32.gmra.mrb[0].mxu0 %v5419
        %v5561 = vpop.f32.mrb[0].mxu0
        %v5562 = vadd.f32 0.0, %v5561
        %v5563 = vpop.f32.mrb[0].mxu0
        %v5564 = vadd.f32 0.0, %v5563
        %5565 = vdwg.mxu0
        %v5566 = vadd.f32 %v5420, %v5491
        %v5567 = vadd.f32 %v5421, %v5493
        %v5568 = vadd.f32 %v5422, %v5562
        %v5569 = vadd.f32 %v5423, %v5564
        %v5570 = vmul.f32 %v5566, 0.5
        %v5571 = vtanh.pop %v5570
        %v5572 = vmul.f32 %v5571, 0.5
        %v5573 = vadd.f32 %v5572, 0.5
        %v5574 = vmul.f32 %v5567, 0.5
        %v5575 = vtanh.pop %v5574
        %v5576 = vmul.f32 %v5575, 0.5
        %v5577 = vadd.f32 %v5576, 0.5
        %v5578 = vtanh.pop %v5568
        %v5579 = vmul.f32 %v5569, 0.5
        %v5580 = vtanh.pop %v5579
        %v5581 = vmul.f32 %v5580, 0.5
        %v5582 = vadd.f32 %v5581, 0.5
        %v5583 = vmul.f32 %v5577, %v5417
        %v5584 = vmul.f32 %v5573, %v5578
        %v5585 = vadd.f32 %v5583, %v5584
        %v5586 = vtanh.pop %v5585
        %v5587 = vmul.f32 %v5582, %v5586
        %v5588 = vld [vmem:[%s2102] sm:$0xff]
        %v5589 = vld [vmem:[%s2102 + $0x8] sm:$0xff]
        %v5590 = vld [vmem:[%s2102 + $0x10] sm:$0xff]
        %v5591 = vld [vmem:[%s2102 + $0x18] sm:$0xff]
        %5592 = vmatprep.subr.mxu0 %v4521
        %5593 = vmatpush1.msra.mxu0 %v4520
        %5594 = vmatprep.subr.mxu0 %v4525
        %5595 = vmatpush1.msra.mxu0 %v4524
        %5596 = vmatprep.subr.mxu0 %v4529
        %5597 = vmatpush1.msra.mxu0 %v4528
        %5598 = vmatprep.subr.mxu0 %v4533
        %5599 = vmatpush1.msra.mxu0 %v4532
        %5600 = vmatprep.subr.mxu0 %v4537
        %5601 = vmatpush1.msra.mxu0 %v4536
        %5602 = vmatprep.subr.mxu0 %v4541
        %5603 = vmatpush1.msra.mxu0 %v4540
        %5604 = vmatprep.subr.mxu0 %v4545
        %5605 = vmatpush1.msra.mxu0 %v4544
        %5606 = vmatprep.subr.mxu0 %v4549
        %5607 = vmatpush1.msra.mxu0 %v4548
        %5608 = vmatprep.subr.mxu0 %v4553
        %5609 = vmatpush1.msra.mxu0 %v4552
        %5610 = vmatprep.subr.mxu0 %v4557
        %5611 = vmatpush1.msra.mxu0 %v4556
        %5612 = vmatprep.subr.mxu0 %v4561
        %5613 = vmatpush1.msra.mxu0 %v4560
        %5614 = vmatprep.subr.mxu0 %v4565
        %5615 = vmatpush1.msra.mxu0 %v4564
        %5616 = vmatprep.subr.mxu0 %v4569
        %5617 = vmatpush1.msra.mxu0 %v4568
        %5618 = vmatprep.subr.mxu0 %v4573
        %5619 = vmatpush1.msra.mxu0 %v4572
        %5620 = vmatprep.subr.mxu0 %v4577
        %5621 = vmatpush1.msra.mxu0 %v4576
        %5622 = vmatprep.subr.mxu0 %v4581
        %5623 = vmatpush1.msra.mxu0 %v4580
        %5624 = vmatprep.subr.mxu0 0.0
        %5625 = vmatpush1.msra.mxu0 0.0
        %5626 = vmatprep.subr.mxu0 0.0
        %5627 = vmatpush1.msra.mxu0 0.0
        %5628 = vmatprep.subr.mxu0 0.0
        %5629 = vmatpush1.msra.mxu0 0.0
        %5630 = vmatprep.subr.mxu0 0.0
        %5631 = vmatpush1.msra.mxu0 0.0
        %5632 = vmatprep.subr.mxu0 0.0
        %5633 = vmatpush1.msra.mxu0 0.0
        %5634 = vmatprep.subr.mxu0 0.0
        %5635 = vmatpush1.msra.mxu0 0.0
        %5636 = vmatprep.subr.mxu0 0.0
        %5637 = vmatpush1.msra.mxu0 0.0
        %5638 = vmatprep.subr.mxu0 0.0
        %5639 = vmatpush1.msra.mxu0 0.0
        %5640 = vmatprep.subr.mxu0 0.0
        %5641 = vmatpush1.msra.mxu0 0.0
        %5642 = vmatprep.subr.mxu0 0.0
        %5643 = vmatpush1.msra.mxu0 0.0
        %5644 = vmatprep.subr.mxu0 0.0
        %5645 = vmatpush1.msra.mxu0 0.0
        %5646 = vmatprep.subr.mxu0 0.0
        %5647 = vmatpush1.msra.mxu0 0.0
        %5648 = vmatprep.subr.mxu0 0.0
        %5649 = vmatpush1.msra.mxu0 0.0
        %5650 = vmatprep.subr.mxu0 0.0
        %5651 = vmatpush1.msra.mxu0 0.0
        %5652 = vmatprep.subr.mxu0 0.0
        %5653 = vmatpush1.msra.mxu0 0.0
        %5654 = vmatprep.subr.mxu0 0.0
        %5655 = vmatpush1.msra.mxu0 0.0
        %5656 = vmatprep.mubr.f32.mxu0 0.0
        %5657 = vmatmul.mubr.f32.gmra.mrb[0].mxu0 %v5587
        %v5658 = vpop.f32.mrb[0].mxu0
        %v5659 = vadd.f32 0.0, %v5658
        %v5660 = vpop.f32.mrb[0].mxu0
        %v5661 = vadd.f32 0.0, %v5660
        %5662 = vdwg.mxu0
        %5663 = vmatprep.subr.mxu0 %v4523
        %5664 = vmatpush1.msra.mxu0 %v4522
        %5665 = vmatprep.subr.mxu0 %v4527
        %5666 = vmatpush1.msra.mxu0 %v4526
        %5667 = vmatprep.subr.mxu0 %v4531
        %5668 = vmatpush1.msra.mxu0 %v4530
        %5669 = vmatprep.subr.mxu0 %v4535
        %5670 = vmatpush1.msra.mxu0 %v4534
        %5671 = vmatprep.subr.mxu0 %v4539
        %5672 = vmatpush1.msra.mxu0 %v4538
        %5673 = vmatprep.subr.mxu0 %v4543
        %5674 = vmatpush1.msra.mxu0 %v4542
        %5675 = vmatprep.subr.mxu0 %v4547
        %5676 = vmatpush1.msra.mxu0 %v4546
        %5677 = vmatprep.subr.mxu0 %v4551
        %5678 = vmatpush1.msra.mxu0 %v4550
        %5679 = vmatprep.subr.mxu0 %v4555
        %5680 = vmatpush1.msra.mxu0 %v4554
        %5681 = vmatprep.subr.mxu0 %v4559
        %5682 = vmatpush1.msra.mxu0 %v4558
        %5683 = vmatprep.subr.mxu0 %v4563
        %5684 = vmatpush1.msra.mxu0 %v4562
        %5685 = vmatprep.subr.mxu0 %v4567
        %5686 = vmatpush1.msra.mxu0 %v4566
        %5687 = vmatprep.subr.mxu0 %v4571
        %5688 = vmatpush1.msra.mxu0 %v4570
        %5689 = vmatprep.subr.mxu0 %v4575
        %5690 = vmatpush1.msra.mxu0 %v4574
        %5691 = vmatprep.subr.mxu0 %v4579
        %5692 = vmatpush1.msra.mxu0 %v4578
        %5693 = vmatprep.subr.mxu0 %v4583
        %5694 = vmatpush1.msra.mxu0 %v4582
        %5695 = vmatprep.subr.mxu0 0.0
        %5696 = vmatpush1.msra.mxu0 0.0
        %5697 = vmatprep.subr.mxu0 0.0
        %5698 = vmatpush1.msra.mxu0 0.0
        %5699 = vmatprep.subr.mxu0 0.0
        %5700 = vmatpush1.msra.mxu0 0.0
        %5701 = vmatprep.subr.mxu0 0.0
        %5702 = vmatpush1.msra.mxu0 0.0
        %5703 = vmatprep.subr.mxu0 0.0
        %5704 = vmatpush1.msra.mxu0 0.0
        %5705 = vmatprep.subr.mxu0 0.0
        %5706 = vmatpush1.msra.mxu0 0.0
        %5707 = vmatprep.subr.mxu0 0.0
        %5708 = vmatpush1.msra.mxu0 0.0
        %5709 = vmatprep.subr.mxu0 0.0
        %5710 = vmatpush1.msra.mxu0 0.0
        %5711 = vmatprep.subr.mxu0 0.0
        %5712 = vmatpush1.msra.mxu0 0.0
        %5713 = vmatprep.subr.mxu0 0.0
        %5714 = vmatpush1.msra.mxu0 0.0
        %5715 = vmatprep.subr.mxu0 0.0
        %5716 = vmatpush1.msra.mxu0 0.0
        %5717 = vmatprep.subr.mxu0 0.0
        %5718 = vmatpush1.msra.mxu0 0.0
        %5719 = vmatprep.subr.mxu0 0.0
        %5720 = vmatpush1.msra.mxu0 0.0
        %5721 = vmatprep.subr.mxu0 0.0
        %5722 = vmatpush1.msra.mxu0 0.0
        %5723 = vmatprep.subr.mxu0 0.0
        %5724 = vmatpush1.msra.mxu0 0.0
        %5725 = vmatprep.subr.mxu0 0.0
        %5726 = vmatpush1.msra.mxu0 0.0
        %5727 = vmatprep.mubr.f32.mxu0 0.0
        %5728 = vmatmul.mubr.f32.gmra.mrb[0].mxu0 %v5587
        %v5729 = vpop.f32.mrb[0].mxu0
        %v5730 = vadd.f32 0.0, %v5729
        %v5731 = vpop.f32.mrb[0].mxu0
        %v5732 = vadd.f32 0.0, %v5731
        %5733 = vdwg.mxu0
        %v5734 = vadd.f32 %v5588, %v5659
        %v5735 = vadd.f32 %v5589, %v5661
        %v5736 = vadd.f32 %v5590, %v5730
        %v5737 = vadd.f32 %v5591, %v5732
        %v5738 = vmul.f32 %v5734, 0.5
        %v5739 = vtanh.pop %v5738
        %v5740 = vmul.f32 %v5739, 0.5
        %v5741 = vadd.f32 %v5740, 0.5
        %v5742 = vmul.f32 %v5735, 0.5
        %v5743 = vtanh.pop %v5742
        %v5744 = vmul.f32 %v5743, 0.5
        %v5745 = vadd.f32 %v5744, 0.5
        %v5746 = vtanh.pop %v5736
        %v5747 = vmul.f32 %v5737, 0.5
        %v5748 = vtanh.pop %v5747
        %v5749 = vmul.f32 %v5748, 0.5
        %v5750 = vadd.f32 %v5749, 0.5
        %v5751 = vmul.f32 %v5745, %v5585
        %v5752 = vmul.f32 %v5741, %v5746
        %v5753 = vadd.f32 %v5751, %v5752
        %v5754 = vtanh.pop %v5753
        %v5755 = vmul.f32 %v5750, %v5754
        %v5756 = vld [vmem:[%s2119] sm:$0xff]
        %v5757 = vld [vmem:[%s2119 + $0x8] sm:$0xff]
        %v5758 = vld [vmem:[%s2119 + $0x10] sm:$0xff]
        %v5759 = vld [vmem:[%s2119 + $0x18] sm:$0xff]
        %5760 = vmatprep.subr.mxu0 %v4521
        %5761 = vmatpush1.msra.mxu0 %v4520
        %5762 = vmatprep.subr.mxu0 %v4525
        %5763 = vmatpush1.msra.mxu0 %v4524
        %5764 = vmatprep.subr.mxu0 %v4529
        %5765 = vmatpush1.msra.mxu0 %v4528
        %5766 = vmatprep.subr.mxu0 %v4533
        %5767 = vmatpush1.msra.mxu0 %v4532
        %5768 = vmatprep.subr.mxu0 %v4537
        %5769 = vmatpush1.msra.mxu0 %v4536
        %5770 = vmatprep.subr.mxu0 %v4541
        %5771 = vmatpush1.msra.mxu0 %v4540
        %5772 = vmatprep.subr.mxu0 %v4545
        %5773 = vmatpush1.msra.mxu0 %v4544
        %5774 = vmatprep.subr.mxu0 %v4549
        %5775 = vmatpush1.msra.mxu0 %v4548
        %5776 = vmatprep.subr.mxu0 %v4553
        %5777 = vmatpush1.msra.mxu0 %v4552
        %5778 = vmatprep.subr.mxu0 %v4557
        %5779 = vmatpush1.msra.mxu0 %v4556
        %5780 = vmatprep.subr.mxu0 %v4561
        %5781 = vmatpush1.msra.mxu0 %v4560
        %5782 = vmatprep.subr.mxu0 %v4565
        %5783 = vmatpush1.msra.mxu0 %v4564
        %5784 = vmatprep.subr.mxu0 %v4569
        %5785 = vmatpush1.msra.mxu0 %v4568
        %5786 = vmatprep.subr.mxu0 %v4573
        %5787 = vmatpush1.msra.mxu0 %v4572
        %5788 = vmatprep.subr.mxu0 %v4577
        %5789 = vmatpush1.msra.mxu0 %v4576
        %5790 = vmatprep.subr.mxu0 %v4581
        %5791 = vmatpush1.msra.mxu0 %v4580
        %5792 = vmatprep.subr.mxu0 0.0
        %5793 = vmatpush1.msra.mxu0 0.0
        %5794 = vmatprep.subr.mxu0 0.0
        %5795 = vmatpush1.msra.mxu0 0.0
        %5796 = vmatprep.subr.mxu0 0.0
        %5797 = vmatpush1.msra.mxu0 0.0
        %5798 = vmatprep.subr.mxu0 0.0
        %5799 = vmatpush1.msra.mxu0 0.0
        %5800 = vmatprep.subr.mxu0 0.0
        %5801 = vmatpush1.msra.mxu0 0.0
        %5802 = vmatprep.subr.mxu0 0.0
        %5803 = vmatpush1.msra.mxu0 0.0
        %5804 = vmatprep.subr.mxu0 0.0
        %5805 = vmatpush1.msra.mxu0 0.0
        %5806 = vmatprep.subr.mxu0 0.0
        %5807 = vmatpush1.msra.mxu0 0.0
        %5808 = vmatprep.subr.mxu0 0.0
        %5809 = vmatpush1.msra.mxu0 0.0
        %5810 = vmatprep.subr.mxu0 0.0
        %5811 = vmatpush1.msra.mxu0 0.0
        %5812 = vmatprep.subr.mxu0 0.0
        %5813 = vmatpush1.msra.mxu0 0.0
        %5814 = vmatprep.subr.mxu0 0.0
        %5815 = vmatpush1.msra.mxu0 0.0
        %5816 = vmatprep.subr.mxu0 0.0
        %5817 = vmatpush1.msra.mxu0 0.0
        %5818 = vmatprep.subr.mxu0 0.0
        %5819 = vmatpush1.msra.mxu0 0.0
        %5820 = vmatprep.subr.mxu0 0.0
        %5821 = vmatpush1.msra.mxu0 0.0
        %5822 = vmatprep.subr.mxu0 0.0
        %5823 = vmatpush1.msra.mxu0 0.0
        %5824 = vmatprep.mubr.f32.mxu0 0.0
        %5825 = vmatmul.mubr.f32.gmra.mrb[0].mxu0 %v5755
        %v5826 = vpop.f32.mrb[0].mxu0
        %v5827 = vadd.f32 0.0, %v5826
        %v5828 = vpop.f32.mrb[0].mxu0
        %v5829 = vadd.f32 0.0, %v5828
        %5830 = vdwg.mxu0
        %5831 = vmatprep.subr.mxu0 %v4523
        %5832 = vmatpush1.msra.mxu0 %v4522
        %5833 = vmatprep.subr.mxu0 %v4527
        %5834 = vmatpush1.msra.mxu0 %v4526
        %5835 = vmatprep.subr.mxu0 %v4531
        %5836 = vmatpush1.msra.mxu0 %v4530
        %5837 = vmatprep.subr.mxu0 %v4535
        %5838 = vmatpush1.msra.mxu0 %v4534
        %5839 = vmatprep.subr.mxu0 %v4539
        %5840 = vmatpush1.msra.mxu0 %v4538
        %5841 = vmatprep.subr.mxu0 %v4543
        %5842 = vmatpush1.msra.mxu0 %v4542
        %5843 = vmatprep.subr.mxu0 %v4547
        %5844 = vmatpush1.msra.mxu0 %v4546
        %5845 = vmatprep.subr.mxu0 %v4551
        %5846 = vmatpush1.msra.mxu0 %v4550
        %5847 = vmatprep.subr.mxu0 %v4555
        %5848 = vmatpush1.msra.mxu0 %v4554
        %5849 = vmatprep.subr.mxu0 %v4559
        %5850 = vmatpush1.msra.mxu0 %v4558
        %5851 = vmatprep.subr.mxu0 %v4563
        %5852 = vmatpush1.msra.mxu0 %v4562
        %5853 = vmatprep.subr.mxu0 %v4567
        %5854 = vmatpush1.msra.mxu0 %v4566
        %5855 = vmatprep.subr.mxu0 %v4571
        %5856 = vmatpush1.msra.mxu0 %v4570
        %5857 = vmatprep.subr.mxu0 %v4575
        %5858 = vmatpush1.msra.mxu0 %v4574
        %5859 = vmatprep.subr.mxu0 %v4579
        %5860 = vmatpush1.msra.mxu0 %v4578
        %5861 = vmatprep.subr.mxu0 %v4583
        %5862 = vmatpush1.msra.mxu0 %v4582
        %5863 = vmatprep.subr.mxu0 0.0
        %5864 = vmatpush1.msra.mxu0 0.0
        %5865 = vmatprep.subr.mxu0 0.0
        %5866 = vmatpush1.msra.mxu0 0.0
        %5867 = vmatprep.subr.mxu0 0.0
        %5868 = vmatpush1.msra.mxu0 0.0
        %5869 = vmatprep.subr.mxu0 0.0
        %5870 = vmatpush1.msra.mxu0 0.0
        %5871 = vmatprep.subr.mxu0 0.0
        %5872 = vmatpush1.msra.mxu0 0.0
        %5873 = vmatprep.subr.mxu0 0.0
        %5874 = vmatpush1.msra.mxu0 0.0
        %5875 = vmatprep.subr.mxu0 0.0
        %5876 = vmatpush1.msra.mxu0 0.0
        %5877 = vmatprep.subr.mxu0 0.0
        %5878 = vmatpush1.msra.mxu0 0.0
        %5879 = vmatprep.subr.mxu0 0.0
        %5880 = vmatpush1.msra.mxu0 0.0
        %5881 = vmatprep.subr.mxu0 0.0
        %5882 = vmatpush1.msra.mxu0 0.0
        %5883 = vmatprep.subr.mxu0 0.0
        %5884 = vmatpush1.msra.mxu0 0.0
        %5885 = vmatprep.subr.mxu0 0.0
        %5886 = vmatpush1.msra.mxu0 0.0
        %5887 = vmatprep.subr.mxu0 0.0
        %5888 = vmatpush1.msra.mxu0 0.0
        %5889 = vmatprep.subr.mxu0 0.0
        %5890 = vmatpush1.msra.mxu0 0.0
        %5891 = vmatprep.subr.mxu0 0.0
        %5892 = vmatpush1.msra.mxu0 0.0
        %5893 = vmatprep.subr.mxu0 0.0
        %5894 = vmatpush1.msra.mxu0 0.0
        %5895 = vmatprep.mubr.f32.mxu0 0.0
        %5896 = vmatmul.mubr.f32.gmra.mrb[0].mxu0 %v5755
        %v5897 = vpop.f32.mrb[0].mxu0
        %v5898 = vadd.f32 0.0, %v5897
        %v5899 = vpop.f32.mrb[0].mxu0
        %v5900 = vadd.f32 0.0, %v5899
        %5901 = vdwg.mxu0
        %v5902 = vadd.f32 %v5756, %v5827
        %v5903 = vadd.f32 %v5757, %v5829
        %v5904 = vadd.f32 %v5758, %v5898
        %v5905 = vadd.f32 %v5759, %v5900
        %v5906 = vmul.f32 %v5902, 0.5
        %v5907 = vtanh.pop %v5906
        %v5908 = vmul.f32 %v5907, 0.5
        %v5909 = vadd.f32 %v5908, 0.5
        %v5910 = vmul.f32 %v5903, 0.5
        %v5911 = vtanh.pop %v5910
        %v5912 = vmul.f32 %v5911, 0.5
        %v5913 = vadd.f32 %v5912, 0.5
        %v5914 = vtanh.pop %v5904
        %v5915 = vmul.f32 %v5905, 0.5
        %v5916 = vtanh.pop %v5915
        %v5917 = vmul.f32 %v5916, 0.5
        %v5918 = vadd.f32 %v5917, 0.5
        %v5919 = vmul.f32 %v5913, %v5753
        %v5920 = vmul.f32 %v5909, %v5914
        %v5921 = vadd.f32 %v5919, %v5920
        %v5922 = vtanh.pop %v5921
        %v5923 = vmul.f32 %v5918, %v5922
        %v5924 = vmul.f32 %v4516, 0.5
        %v5925 = vtanh.pop %v5924
        %v5926 = vmul.f32 %v5925, 0.5
        %v5927 = vadd.f32 %v5926, 0.5
        %v5928 = vmul.f32 %v4517, 0.5
        %v5929 = vtanh.pop %v5928
        %v5930 = vmul.f32 %v5929, 0.5
        %v5931 = vadd.f32 %v5930, 0.5
        %v5932 = vtanh.pop %v4518
        %v5933 = vmul.f32 %v4519, 0.5
        %v5934 = vtanh.pop %v5933
        %v5935 = vmul.f32 %v5934, 0.5
        %v5936 = vadd.f32 %v5935, 0.5
        %v5937 = vmul.f32 %v5931, 0.0
        %v5938 = vmul.f32 %v5927, %v5932
        %v5939 = vadd.f32 %v5937, %v5938
        %v5940 = vtanh.pop %v5939
        %v5941 = vmul.f32 %v5936, %v5940
        %v5942 = vsel %vm3998, %v5941, %v5923
        %v5943 = vld [vmem:[%s9] sm:$0xff]
        %v5944 = vld [vmem:[%s9 + $0x8] sm:$0xff]
        %v5945 = vld [vmem:[%s9 + $0x10] sm:$0xff]
        %v5946 = vld [vmem:[%s9 + $0x18] sm:$0xff]
        %v5947 = vld [vmem:[%s9 + $0x20] sm:$0xff]
        %v5948 = vld [vmem:[%s9 + $0x28] sm:$0xff]
        %v5949 = vld [vmem:[%s9 + $0x30] sm:$0xff]
        %v5950 = vld [vmem:[%s9 + $0x38] sm:$0xff]
        %v5951 = vld [vmem:[%s9 + $0x40] sm:$0xff]
        %v5952 = vld [vmem:[%s9 + $0x48] sm:$0xff]
        %v5953 = vld [vmem:[%s9 + $0x50] sm:$0xff]
        %v5954 = vld [vmem:[%s9 + $0x58] sm:$0xff]
        %v5955 = vld [vmem:[%s9 + $0x60] sm:$0xff]
        %v5956 = vld [vmem:[%s9 + $0x68] sm:$0xff]
        %v5957 = vld [vmem:[%s9 + $0x70] sm:$0xff]
        %v5958 = vld [vmem:[%s9 + $0x78] sm:$0xff]
        %v5959 = vld [vmem:[%s10] sm:$0x1]
        %v5961 = vlaneseq
        %v5962 = vshrl.u32 %v5961, 7
        %v5963 = vsub.s32 0, %v5962
        %v5964 = vrot.slane %v5959, %v5963
        %5966 = vmatprep.subr.mxu0 0.0
        %5967 = vmatpush1.msra.mxu0 %v5943
        %5968 = vmatprep.subr.mxu0 0.0
        %5969 = vmatpush1.msra.mxu0 %v5944
        %5970 = vmatprep.subr.mxu0 0.0
        %5971 = vmatpush1.msra.mxu0 %v5945
        %5972 = vmatprep.subr.mxu0 0.0
        %5973 = vmatpush1.msra.mxu0 %v5946
        %5974 = vmatprep.subr.mxu0 0.0
        %5975 = vmatpush1.msra.mxu0 %v5947
        %5976 = vmatprep.subr.mxu0 0.0
        %5977 = vmatpush1.msra.mxu0 %v5948
        %5978 = vmatprep.subr.mxu0 0.0
        %5979 = vmatpush1.msra.mxu0 %v5949
        %5980 = vmatprep.subr.mxu0 0.0
        %5981 = vmatpush1.msra.mxu0 %v5950
        %5982 = vmatprep.subr.mxu0 0.0
        %5983 = vmatpush1.msra.mxu0 %v5951
        %5984 = vmatprep.subr.mxu0 0.0
        %5985 = vmatpush1.msra.mxu0 %v5952
        %5986 = vmatprep.subr.mxu0 0.0
        %5987 = vmatpush1.msra.mxu0 %v5953
        %5988 = vmatprep.subr.mxu0 0.0
        %5989 = vmatpush1.msra.mxu0 %v5954
        %5990 = vmatprep.subr.mxu0 0.0
        %5991 = vmatpush1.msra.mxu0 %v5955
        %5992 = vmatprep.subr.mxu0 0.0
        %5993 = vmatpush1.msra.mxu0 %v5956
        %5994 = vmatprep.subr.mxu0 0.0
        %5995 = vmatpush1.msra.mxu0 %v5957
        %5996 = vmatprep.subr.mxu0 0.0
        %5997 = vmatpush1.msra.mxu0 %v5958
        %5998 = vmatprep.subr.mxu0 0.0
        %5999 = vmatpush1.msra.mxu0 0.0
        %6000 = vmatprep.subr.mxu0 0.0
        %6001 = vmatpush1.msra.mxu0 0.0
        %6002 = vmatprep.subr.mxu0 0.0
        %6003 = vmatpush1.msra.mxu0 0.0
        %6004 = vmatprep.subr.mxu0 0.0
        %6005 = vmatpush1.msra.mxu0 0.0
        %6006 = vmatprep.subr.mxu0 0.0
        %6007 = vmatpush1.msra.mxu0 0.0
        %6008 = vmatprep.subr.mxu0 0.0
        %6009 = vmatpush1.msra.mxu0 0.0
        %6010 = vmatprep.subr.mxu0 0.0
        %6011 = vmatpush1.msra.mxu0 0.0
        %6012 = vmatprep.subr.mxu0 0.0
        %6013 = vmatpush1.msra.mxu0 0.0
        %6014 = vmatprep.subr.mxu0 0.0
        %6015 = vmatpush1.msra.mxu0 0.0
        %6016 = vmatprep.subr.mxu0 0.0
        %6017 = vmatpush1.msra.mxu0 0.0
        %6018 = vmatprep.subr.mxu0 0.0
        %6019 = vmatpush1.msra.mxu0 0.0
        %6020 = vmatprep.subr.mxu0 0.0
        %6021 = vmatpush1.msra.mxu0 0.0
        %6022 = vmatprep.subr.mxu0 0.0
        %6023 = vmatpush1.msra.mxu0 0.0
        %6024 = vmatprep.subr.mxu0 0.0
        %6025 = vmatpush1.msra.mxu0 0.0
        %6026 = vmatprep.subr.mxu0 0.0
        %6027 = vmatpush1.msra.mxu0 0.0
        %6028 = vmatprep.subr.mxu0 0.0
        %6029 = vmatpush1.msra.mxu0 0.0
        %6030 = vmatprep.mubr.f32.mxu0 0.0
        %6031 = vmatmul.mubr.f32.gmra.mrb[0].mxu0 %v5942
        %v6032 = vpop.f32.mrb[0].mxu0
        %v6033 = vadd.f32 %v5964, %v6032
        %v6034 = vpop.f32.mrb[0].mxu0
        %6035 = vdwg.mxu0
        %vm6036 = vcmp.ge.f32.partialorder %v6033, 0.0
        %v6037 = vmul.f32 %v6033, 0.01
        %v6038 = vsel %vm6036, %v6033, %v6037
        %v6039 = vld [vmem:[%s743] sm:$0xff]
        %v6040 = vld [vmem:[%s743 + $0x8] sm:$0xff]
        %v6041 = vld [vmem:[%s743 + $0x10] sm:$0xff]
        %v6042 = vld [vmem:[%s743 + $0x18] sm:$0xff]
        %v6043 = vld [vmem:[%s743 + $0x20] sm:$0xff]
        %v6044 = vld [vmem:[%s743 + $0x28] sm:$0xff]
        %v6045 = vld [vmem:[%s11] sm:$0xff]
        %v6046 = vld [vmem:[%s11 + $0x8] sm:$0xff]
        %v6047 = vld [vmem:[%s11 + $0x10] sm:$0xff]
        %v6048 = vld [vmem:[%s11 + $0x18] sm:$0xff]
        %v6049 = vld [vmem:[%s11 + $0x20] sm:$0xff]
        %v6050 = vld [vmem:[%s11 + $0x28] sm:$0xff]
        %v6051 = vld [vmem:[%s11 + $0x30] sm:$0xff]
        %v6052 = vld [vmem:[%s11 + $0x38] sm:$0xff]
        %v6053 = vld [vmem:[%s11 + $0x40] sm:$0xff]
        %v6054 = vld [vmem:[%s11 + $0x48] sm:$0xff]
        %v6055 = vld [vmem:[%s11 + $0x50] sm:$0xff]
        %v6056 = vld [vmem:[%s11 + $0x58] sm:$0xff]
        %v6057 = vld [vmem:[%s11 + $0x60] sm:$0xff]
        %v6058 = vld [vmem:[%s11 + $0x68] sm:$0xff]
        %v6059 = vld [vmem:[%s11 + $0x70] sm:$0xff]
        %v6060 = vld [vmem:[%s11 + $0x78] sm:$0xff]
        %v6061 = vld [vmem:[%s11 + $0x80] sm:$0xff]
        %v6062 = vld [vmem:[%s11 + $0x88] sm:$0xff]
        %v6063 = vld [vmem:[%s11 + $0x90] sm:$0xff]
        %v6064 = vld [vmem:[%s11 + $0x98] sm:$0xff]
        %v6065 = vld [vmem:[%s11 + $0xa0] sm:$0xff]
        %v6066 = vld [vmem:[%s11 + $0xa8] sm:$0xff]
        %v6067 = vld [vmem:[%s11 + $0xb0] sm:$0xff]
        %v6068 = vld [vmem:[%s11 + $0xb8] sm:$0xff]
        %v6069 = vld [vmem:[%s11 + $0xc0] sm:$0xff]
        %v6070 = vld [vmem:[%s11 + $0xc8] sm:$0xff]
        %v6071 = vld [vmem:[%s11 + $0xd0] sm:$0xff]
        %v6072 = vld [vmem:[%s11 + $0xd8] sm:$0xff]
        %v6073 = vld [vmem:[%s11 + $0xe0] sm:$0xff]
        %v6074 = vld [vmem:[%s11 + $0xe8] sm:$0xff]
        %v6075 = vld [vmem:[%s11 + $0xf0] sm:$0xff]
        %v6076 = vld [vmem:[%s11 + $0xf8] sm:$0xff]
        %v6077 = vld [vmem:[%s11 + $0x100] sm:$0xff]
        %v6078 = vld [vmem:[%s11 + $0x108] sm:$0xff]
        %v6079 = vld [vmem:[%s11 + $0x110] sm:$0xff]
        %v6080 = vld [vmem:[%s11 + $0x118] sm:$0xff]
        %v6081 = vld [vmem:[%s11 + $0x120] sm:$0xff]
        %v6082 = vld [vmem:[%s11 + $0x128] sm:$0xff]
        %v6083 = vld [vmem:[%s11 + $0x130] sm:$0xff]
        %v6084 = vld [vmem:[%s11 + $0x138] sm:$0xff]
        %v6085 = vld [vmem:[%s11 + $0x140] sm:$0xff]
        %v6086 = vld [vmem:[%s11 + $0x148] sm:$0xff]
        %v6087 = vld [vmem:[%s11 + $0x150] sm:$0xff]
        %v6088 = vld [vmem:[%s11 + $0x158] sm:$0xff]
        %v6089 = vld [vmem:[%s11 + $0x160] sm:$0xff]
        %v6090 = vld [vmem:[%s11 + $0x168] sm:$0xff]
        %v6091 = vld [vmem:[%s11 + $0x170] sm:$0xff]
        %v6092 = vld [vmem:[%s11 + $0x178] sm:$0xff]
        %v6093 = vld [vmem:[%s11 + $0x180] sm:$0xff]
        %v6094 = vld [vmem:[%s11 + $0x188] sm:$0xff]
        %v6095 = vld [vmem:[%s11 + $0x190] sm:$0xff]
        %v6096 = vld [vmem:[%s11 + $0x198] sm:$0xff]
        %v6097 = vld [vmem:[%s11 + $0x1a0] sm:$0xff]
        %v6098 = vld [vmem:[%s11 + $0x1a8] sm:$0xff]
        %v6099 = vld [vmem:[%s11 + $0x1b0] sm:$0xff]
        %v6100 = vld [vmem:[%s11 + $0x1b8] sm:$0xff]
        %v6101 = vld [vmem:[%s11 + $0x1c0] sm:$0xff]
        %v6102 = vld [vmem:[%s11 + $0x1c8] sm:$0xff]
        %v6103 = vld [vmem:[%s11 + $0x1d0] sm:$0xff]
        %v6104 = vld [vmem:[%s11 + $0x1d8] sm:$0xff]
        %v6105 = vld [vmem:[%s11 + $0x1e0] sm:$0xff]
        %v6106 = vld [vmem:[%s11 + $0x1e8] sm:$0xff]
        %v6107 = vld [vmem:[%s11 + $0x1f0] sm:$0xff]
        %v6108 = vld [vmem:[%s11 + $0x1f8] sm:$0xff]
        %v6109 = vld [vmem:[%s11 + $0x200] sm:$0xff]
        %v6110 = vld [vmem:[%s11 + $0x208] sm:$0xff]
        %v6111 = vld [vmem:[%s11 + $0x210] sm:$0xff]
        %v6112 = vld [vmem:[%s11 + $0x218] sm:$0xff]
        %v6113 = vld [vmem:[%s11 + $0x220] sm:$0xff]
        %v6114 = vld [vmem:[%s11 + $0x228] sm:$0xff]
        %v6115 = vld [vmem:[%s11 + $0x230] sm:$0xff]
        %v6116 = vld [vmem:[%s11 + $0x238] sm:$0xff]
        %v6117 = vld [vmem:[%s11 + $0x240] sm:$0xff]
        %v6118 = vld [vmem:[%s11 + $0x248] sm:$0xff]
        %v6119 = vld [vmem:[%s11 + $0x250] sm:$0xff]
        %v6120 = vld [vmem:[%s11 + $0x258] sm:$0xff]
        %v6121 = vld [vmem:[%s11 + $0x260] sm:$0xff]
        %v6122 = vld [vmem:[%s11 + $0x268] sm:$0xff]
        %v6123 = vld [vmem:[%s11 + $0x270] sm:$0xff]
        %v6124 = vld [vmem:[%s11 + $0x278] sm:$0xff]
        %v6125 = vld [vmem:[%s11 + $0x280] sm:$0xff]
        %v6126 = vld [vmem:[%s11 + $0x288] sm:$0xff]
        %v6127 = vld [vmem:[%s11 + $0x290] sm:$0xff]
        %v6128 = vld [vmem:[%s11 + $0x298] sm:$0xff]
        %v6129 = vld [vmem:[%s11 + $0x2a0] sm:$0xff]
        %v6130 = vld [vmem:[%s11 + $0x2a8] sm:$0xff]
        %v6131 = vld [vmem:[%s11 + $0x2b0] sm:$0xff]
        %v6132 = vld [vmem:[%s11 + $0x2b8] sm:$0xff]
        %v6133 = vld [vmem:[%s11 + $0x2c0] sm:$0xff]
        %v6134 = vld [vmem:[%s11 + $0x2c8] sm:$0xff]
        %v6135 = vld [vmem:[%s11 + $0x2d0] sm:$0xff]
        %v6136 = vld [vmem:[%s11 + $0x2d8] sm:$0xff]
        %v6137 = vld [vmem:[%s11 + $0x2e0] sm:$0xff]
        %v6138 = vld [vmem:[%s11 + $0x2e8] sm:$0xff]
        %v6139 = vld [vmem:[%s11 + $0x2f0] sm:$0xff]
        %v6140 = vld [vmem:[%s11 + $0x2f8] sm:$0xff]
        %v6141 = vld [vmem:[%s12] sm:$0x1]
        %v6143 = vlaneseq
        %v6144 = vshrl.u32 %v6143, 7
        %v6145 = vsub.s32 0, %v6144
        %v6146 = vrot.slane %v6141, %v6145
        %6148 = vmatprep.subr.mxu0 0.0
        %6149 = vmatpush1.msra.mxu0 %v6045
        %6150 = vmatprep.subr.mxu0 0.0
        %6151 = vmatpush1.msra.mxu0 %v6046
        %6152 = vmatprep.subr.mxu0 0.0
        %6153 = vmatpush1.msra.mxu0 %v6047
        %6154 = vmatprep.subr.mxu0 0.0
        %6155 = vmatpush1.msra.mxu0 %v6048
        %6156 = vmatprep.subr.mxu0 0.0
        %6157 = vmatpush1.msra.mxu0 %v6049
        %6158 = vmatprep.subr.mxu0 0.0
        %6159 = vmatpush1.msra.mxu0 %v6050
        %6160 = vmatprep.subr.mxu0 0.0
        %6161 = vmatpush1.msra.mxu0 %v6051
        %6162 = vmatprep.subr.mxu0 0.0
        %6163 = vmatpush1.msra.mxu0 %v6052
        %6164 = vmatprep.subr.mxu0 0.0
        %6165 = vmatpush1.msra.mxu0 %v6053
        %6166 = vmatprep.subr.mxu0 0.0
        %6167 = vmatpush1.msra.mxu0 %v6054
        %6168 = vmatprep.subr.mxu0 0.0
        %6169 = vmatpush1.msra.mxu0 %v6055
        %6170 = vmatprep.subr.mxu0 0.0
        %6171 = vmatpush1.msra.mxu0 %v6056
        %6172 = vmatprep.subr.mxu0 0.0
        %6173 = vmatpush1.msra.mxu0 %v6057
        %6174 = vmatprep.subr.mxu0 0.0
        %6175 = vmatpush1.msra.mxu0 %v6058
        %6176 = vmatprep.subr.mxu0 0.0
        %6177 = vmatpush1.msra.mxu0 %v6059
        %6178 = vmatprep.subr.mxu0 0.0
        %6179 = vmatpush1.msra.mxu0 %v6060
        %6180 = vmatprep.subr.mxu0 0.0
        %6181 = vmatpush1.msra.mxu0 %v6061
        %6182 = vmatprep.subr.mxu0 0.0
        %6183 = vmatpush1.msra.mxu0 %v6062
        %6184 = vmatprep.subr.mxu0 0.0
        %6185 = vmatpush1.msra.mxu0 %v6063
        %6186 = vmatprep.subr.mxu0 0.0
        %6187 = vmatpush1.msra.mxu0 %v6064
        %6188 = vmatprep.subr.mxu0 0.0
        %6189 = vmatpush1.msra.mxu0 %v6065
        %6190 = vmatprep.subr.mxu0 0.0
        %6191 = vmatpush1.msra.mxu0 %v6066
        %6192 = vmatprep.subr.mxu0 0.0
        %6193 = vmatpush1.msra.mxu0 %v6067
        %6194 = vmatprep.subr.mxu0 0.0
        %6195 = vmatpush1.msra.mxu0 %v6068
        %6196 = vmatprep.subr.mxu0 0.0
        %6197 = vmatpush1.msra.mxu0 %v6069
        %6198 = vmatprep.subr.mxu0 0.0
        %6199 = vmatpush1.msra.mxu0 %v6070
        %6200 = vmatprep.subr.mxu0 0.0
        %6201 = vmatpush1.msra.mxu0 %v6071
        %6202 = vmatprep.subr.mxu0 0.0
        %6203 = vmatpush1.msra.mxu0 %v6072
        %6204 = vmatprep.subr.mxu0 0.0
        %6205 = vmatpush1.msra.mxu0 %v6073
        %6206 = vmatprep.subr.mxu0 0.0
        %6207 = vmatpush1.msra.mxu0 %v6074
        %6208 = vmatprep.subr.mxu0 0.0
        %6209 = vmatpush1.msra.mxu0 %v6075
        %6210 = vmatprep.subr.mxu0 0.0
        %6211 = vmatpush1.msra.mxu0 %v6076
        %6212 = vmatprep.mubr.f32.mxu0 %v6040
        %6213 = vmatmul.mubr.f32.gmra.mrb[0].mxu0 %v6039
        %v6214 = vpop.f32.mrb[0].mxu0
        %v6215 = vadd.f32 %v6146, %v6214
        %v6216 = vpop.f32.mrb[0].mxu0
        %6217 = vdwg.mxu0
        %6218 = vmatprep.subr.mxu0 0.0
        %6219 = vmatpush1.msra.mxu0 %v6077
        %6220 = vmatprep.subr.mxu0 0.0
        %6221 = vmatpush1.msra.mxu0 %v6078
        %6222 = vmatprep.subr.mxu0 0.0
        %6223 = vmatpush1.msra.mxu0 %v6079
        %6224 = vmatprep.subr.mxu0 0.0
        %6225 = vmatpush1.msra.mxu0 %v6080
        %6226 = vmatprep.subr.mxu0 0.0
        %6227 = vmatpush1.msra.mxu0 %v6081
        %6228 = vmatprep.subr.mxu0 0.0
        %6229 = vmatpush1.msra.mxu0 %v6082
        %6230 = vmatprep.subr.mxu0 0.0
        %6231 = vmatpush1.msra.mxu0 %v6083
        %6232 = vmatprep.subr.mxu0 0.0
        %6233 = vmatpush1.msra.mxu0 %v6084
        %6234 = vmatprep.subr.mxu0 0.0
        %6235 = vmatpush1.msra.mxu0 %v6085
        %6236 = vmatprep.subr.mxu0 0.0
        %6237 = vmatpush1.msra.mxu0 %v6086
        %6238 = vmatprep.subr.mxu0 0.0
        %6239 = vmatpush1.msra.mxu0 %v6087
        %6240 = vmatprep.subr.mxu0 0.0
        %6241 = vmatpush1.msra.mxu0 %v6088
        %6242 = vmatprep.subr.mxu0 0.0
        %6243 = vmatpush1.msra.mxu0 %v6089
        %6244 = vmatprep.subr.mxu0 0.0
        %6245 = vmatpush1.msra.mxu0 %v6090
        %6246 = vmatprep.subr.mxu0 0.0
        %6247 = vmatpush1.msra.mxu0 %v6091
        %6248 = vmatprep.subr.mxu0 0.0
        %6249 = vmatpush1.msra.mxu0 %v6092
        %6250 = vmatprep.subr.mxu0 0.0
        %6251 = vmatpush1.msra.mxu0 %v6093
        %6252 = vmatprep.subr.mxu0 0.0
        %6253 = vmatpush1.msra.mxu0 %v6094
        %6254 = vmatprep.subr.mxu0 0.0
        %6255 = vmatpush1.msra.mxu0 %v6095
        %6256 = vmatprep.subr.mxu0 0.0
        %6257 = vmatpush1.msra.mxu0 %v6096
        %6258 = vmatprep.subr.mxu0 0.0
        %6259 = vmatpush1.msra.mxu0 %v6097
        %6260 = vmatprep.subr.mxu0 0.0
        %6261 = vmatpush1.msra.mxu0 %v6098
        %6262 = vmatprep.subr.mxu0 0.0
        %6263 = vmatpush1.msra.mxu0 %v6099
        %6264 = vmatprep.subr.mxu0 0.0
        %6265 = vmatpush1.msra.mxu0 %v6100
        %6266 = vmatprep.subr.mxu0 0.0
        %6267 = vmatpush1.msra.mxu0 %v6101
        %6268 = vmatprep.subr.mxu0 0.0
        %6269 = vmatpush1.msra.mxu0 %v6102
        %6270 = vmatprep.subr.mxu0 0.0
        %6271 = vmatpush1.msra.mxu0 %v6103
        %6272 = vmatprep.subr.mxu0 0.0
        %6273 = vmatpush1.msra.mxu0 %v6104
        %6274 = vmatprep.subr.mxu0 0.0
        %6275 = vmatpush1.msra.mxu0 %v6105
        %6276 = vmatprep.subr.mxu0 0.0
        %6277 = vmatpush1.msra.mxu0 %v6106
        %6278 = vmatprep.subr.mxu0 0.0
        %6279 = vmatpush1.msra.mxu0 %v6107
        %6280 = vmatprep.subr.mxu0 0.0
        %6281 = vmatpush1.msra.mxu0 %v6108
        %6282 = vmatprep.mubr.f32.mxu0 %v6042
        %6283 = vmatmul.mubr.f32.gmra.mrb[0].mxu0 %v6041
        %v6284 = vpop.f32.mrb[0].mxu0
        %v6285 = vadd.f32 %v6215, %v6284
        %v6286 = vpop.f32.mrb[0].mxu0
        %6287 = vdwg.mxu0
        %6288 = vmatprep.subr.mxu0 0.0
        %6289 = vmatpush1.msra.mxu0 %v6109
        %6290 = vmatprep.subr.mxu0 0.0
        %6291 = vmatpush1.msra.mxu0 %v6110
        %6292 = vmatprep.subr.mxu0 0.0
        %6293 = vmatpush1.msra.mxu0 %v6111
        %6294 = vmatprep.subr.mxu0 0.0
        %6295 = vmatpush1.msra.mxu0 %v6112
        %6296 = vmatprep.subr.mxu0 0.0
        %6297 = vmatpush1.msra.mxu0 %v6113
        %6298 = vmatprep.subr.mxu0 0.0
        %6299 = vmatpush1.msra.mxu0 %v6114
        %6300 = vmatprep.subr.mxu0 0.0
        %6301 = vmatpush1.msra.mxu0 %v6115
        %6302 = vmatprep.subr.mxu0 0.0
        %6303 = vmatpush1.msra.mxu0 %v6116
        %6304 = vmatprep.subr.mxu0 0.0
        %6305 = vmatpush1.msra.mxu0 %v6117
        %6306 = vmatprep.subr.mxu0 0.0
        %6307 = vmatpush1.msra.mxu0 %v6118
        %6308 = vmatprep.subr.mxu0 0.0
        %6309 = vmatpush1.msra.mxu0 %v6119
        %6310 = vmatprep.subr.mxu0 0.0
        %6311 = vmatpush1.msra.mxu0 %v6120
        %6312 = vmatprep.subr.mxu0 0.0
        %6313 = vmatpush1.msra.mxu0 %v6121
        %6314 = vmatprep.subr.mxu0 0.0
        %6315 = vmatpush1.msra.mxu0 %v6122
        %6316 = vmatprep.subr.mxu0 0.0
        %6317 = vmatpush1.msra.mxu0 %v6123
        %6318 = vmatprep.subr.mxu0 0.0
        %6319 = vmatpush1.msra.mxu0 %v6124
        %6320 = vmatprep.subr.mxu0 0.0
        %6321 = vmatpush1.msra.mxu0 %v6125
        %6322 = vmatprep.subr.mxu0 0.0
        %6323 = vmatpush1.msra.mxu0 %v6126
        %6324 = vmatprep.subr.mxu0 0.0
        %6325 = vmatpush1.msra.mxu0 %v6127
        %6326 = vmatprep.subr.mxu0 0.0
        %6327 = vmatpush1.msra.mxu0 %v6128
        %6328 = vmatprep.subr.mxu0 0.0
        %6329 = vmatpush1.msra.mxu0 %v6129
        %6330 = vmatprep.subr.mxu0 0.0
        %6331 = vmatpush1.msra.mxu0 %v6130
        %6332 = vmatprep.subr.mxu0 0.0
        %6333 = vmatpush1.msra.mxu0 %v6131
        %6334 = vmatprep.subr.mxu0 0.0
        %6335 = vmatpush1.msra.mxu0 %v6132
        %6336 = vmatprep.subr.mxu0 0.0
        %6337 = vmatpush1.msra.mxu0 %v6133
        %6338 = vmatprep.subr.mxu0 0.0
        %6339 = vmatpush1.msra.mxu0 %v6134
        %6340 = vmatprep.subr.mxu0 0.0
        %6341 = vmatpush1.msra.mxu0 %v6135
        %6342 = vmatprep.subr.mxu0 0.0
        %6343 = vmatpush1.msra.mxu0 %v6136
        %6344 = vmatprep.subr.mxu0 0.0
        %6345 = vmatpush1.msra.mxu0 %v6137
        %6346 = vmatprep.subr.mxu0 0.0
        %6347 = vmatpush1.msra.mxu0 %v6138
        %6348 = vmatprep.subr.mxu0 0.0
        %6349 = vmatpush1.msra.mxu0 %v6139
        %6350 = vmatprep.subr.mxu0 0.0
        %6351 = vmatpush1.msra.mxu0 %v6140
        %6352 = vmatprep.mubr.f32.mxu0 %v6044
        %6353 = vmatmul.mubr.f32.gmra.mrb[0].mxu0 %v6043
        %v6354 = vpop.f32.mrb[0].mxu0
        %v6355 = vadd.f32 %v6285, %v6354
        %v6356 = vpop.f32.mrb[0].mxu0
        %6357 = vdwg.mxu0
        %vm6358 = vcmp.ge.f32.partialorder %v6355, 0.0
        %v6359 = vmul.f32 %v6355, 0.01
        %v6360 = vsel %vm6358, %v6355, %v6359
        %v6361 = vld [vmem:[%s747] sm:$0xff]
        %v6362 = vld [vmem:[%s13] sm:$0xff]
        %v6363 = vld [vmem:[%s13 + $0x8] sm:$0x3]
        %v6364 = vld [vmem:[%s14] sm:$0x1]
        %v6366 = vlaneseq
        %v6367 = vshrl.u32 %v6366, 7
        %v6368 = vsub.s32 0, %v6367
        %v6369 = vrot.slane %v6364, %v6368
        %vm6371 = vcmask 80896
        %v6373 = vsel %vm6371, %v6361, 0
        %vm6375 = vcmask 1041408
        %v6377 = vsel %vm6375, %v6363, 0
        %6379 = vmatprep.subr.mxu0 0.0
        %6380 = vmatpush1.msra.mxu0 %v6362
        %6381 = vmatprep.subr.mxu0 0.0
        %6382 = vmatpush1.msra.mxu0 %v6377
        %6383 = vmatprep.subr.mxu0 0.0
        %6384 = vmatpush1.msra.mxu0 0.0
        %6385 = vmatprep.subr.mxu0 0.0
        %6386 = vmatpush1.msra.mxu0 0.0
        %6387 = vmatprep.subr.mxu0 0.0
        %6388 = vmatpush1.msra.mxu0 0.0
        %6389 = vmatprep.subr.mxu0 0.0
        %6390 = vmatpush1.msra.mxu0 0.0
        %6391 = vmatprep.subr.mxu0 0.0
        %6392 = vmatpush1.msra.mxu0 0.0
        %6393 = vmatprep.subr.mxu0 0.0
        %6394 = vmatpush1.msra.mxu0 0.0
        %6395 = vmatprep.subr.mxu0 0.0
        %6396 = vmatpush1.msra.mxu0 0.0
        %6397 = vmatprep.subr.mxu0 0.0
        %6398 = vmatpush1.msra.mxu0 0.0
        %6399 = vmatprep.subr.mxu0 0.0
        %6400 = vmatpush1.msra.mxu0 0.0
        %6401 = vmatprep.subr.mxu0 0.0
        %6402 = vmatpush1.msra.mxu0 0.0
        %6403 = vmatprep.subr.mxu0 0.0
        %6404 = vmatpush1.msra.mxu0 0.0
        %6405 = vmatprep.subr.mxu0 0.0
        %6406 = vmatpush1.msra.mxu0 0.0
        %6407 = vmatprep.subr.mxu0 0.0
        %6408 = vmatpush1.msra.mxu0 0.0
        %6409 = vmatprep.subr.mxu0 0.0
        %6410 = vmatpush1.msra.mxu0 0.0
        %6411 = vmatprep.subr.mxu0 0.0
        %6412 = vmatpush1.msra.mxu0 0.0
        %6413 = vmatprep.subr.mxu0 0.0
        %6414 = vmatpush1.msra.mxu0 0.0
        %6415 = vmatprep.subr.mxu0 0.0
        %6416 = vmatpush1.msra.mxu0 0.0
        %6417 = vmatprep.subr.mxu0 0.0
        %6418 = vmatpush1.msra.mxu0 0.0
        %6419 = vmatprep.subr.mxu0 0.0
        %6420 = vmatpush1.msra.mxu0 0.0
        %6421 = vmatprep.subr.mxu0 0.0
        %6422 = vmatpush1.msra.mxu0 0.0
        %6423 = vmatprep.subr.mxu0 0.0
        %6424 = vmatpush1.msra.mxu0 0.0
        %6425 = vmatprep.subr.mxu0 0.0
        %6426 = vmatpush1.msra.mxu0 0.0
        %6427 = vmatprep.subr.mxu0 0.0
        %6428 = vmatpush1.msra.mxu0 0.0
        %6429 = vmatprep.subr.mxu0 0.0
        %6430 = vmatpush1.msra.mxu0 0.0
        %6431 = vmatprep.subr.mxu0 0.0
        %6432 = vmatpush1.msra.mxu0 0.0
        %6433 = vmatprep.subr.mxu0 0.0
        %6434 = vmatpush1.msra.mxu0 0.0
        %6435 = vmatprep.subr.mxu0 0.0
        %6436 = vmatpush1.msra.mxu0 0.0
        %6437 = vmatprep.subr.mxu0 0.0
        %6438 = vmatpush1.msra.mxu0 0.0
        %6439 = vmatprep.subr.mxu0 0.0
        %6440 = vmatpush1.msra.mxu0 0.0
        %6441 = vmatprep.subr.mxu0 0.0
        %6442 = vmatpush1.msra.mxu0 0.0
        %6443 = vmatprep.mubr.f32.mxu0 0.0
        %6444 = vmatmul.mubr.f32.gmra.mrb[0].mxu0 %v6373
        %v6445 = vpop.f32.mrb[0].mxu0
        %v6446 = vadd.f32 %v6369, %v6445
        %v6447 = vpop.f32.mrb[0].mxu0
        %6448 = vdwg.mxu0
        %vm6449 = vcmp.ge.f32.partialorder %v6446, 0.0
        %v6450 = vmul.f32 %v6446, 0.01
        %v6451 = vsel %vm6449, %v6446, %v6450
        %v6452 = vld [vmem:[%s15] sm:$0xff]
        %v6453 = vld [vmem:[%s16] sm:$0xff]
        %vm6454 = vcmask 64512
        %v6456 = vsel %vm6454, %v6360, 0
        %6458 = vmatprep.subr.mxu0 0.0
        %6459 = vmatpush1.msra.mxu0 %v6453
        %6460 = vmatprep.subr.mxu0 0.0
        %6461 = vmatpush1.msra.mxu0 0.0
        %6462 = vmatprep.subr.mxu0 0.0
        %6463 = vmatpush1.msra.mxu0 0.0
        %6464 = vmatprep.subr.mxu0 0.0
        %6465 = vmatpush1.msra.mxu0 0.0
        %6466 = vmatprep.subr.mxu0 0.0
        %6467 = vmatpush1.msra.mxu0 0.0
        %6468 = vmatprep.subr.mxu0 0.0
        %6469 = vmatpush1.msra.mxu0 0.0
        %6470 = vmatprep.subr.mxu0 0.0
        %6471 = vmatpush1.msra.mxu0 0.0
        %6472 = vmatprep.subr.mxu0 0.0
        %6473 = vmatpush1.msra.mxu0 0.0
        %6474 = vmatprep.subr.mxu0 0.0
        %6475 = vmatpush1.msra.mxu0 0.0
        %6476 = vmatprep.subr.mxu0 0.0
        %6477 = vmatpush1.msra.mxu0 0.0
        %6478 = vmatprep.subr.mxu0 0.0
        %6479 = vmatpush1.msra.mxu0 0.0
        %6480 = vmatprep.subr.mxu0 0.0
        %6481 = vmatpush1.msra.mxu0 0.0
        %6482 = vmatprep.subr.mxu0 0.0
        %6483 = vmatpush1.msra.mxu0 0.0
        %6484 = vmatprep.subr.mxu0 0.0
        %6485 = vmatpush1.msra.mxu0 0.0
        %6486 = vmatprep.subr.mxu0 0.0
        %6487 = vmatpush1.msra.mxu0 0.0
        %6488 = vmatprep.subr.mxu0 0.0
        %6489 = vmatpush1.msra.mxu0 0.0
        %6490 = vmatprep.subr.mxu0 0.0
        %6491 = vmatpush1.msra.mxu0 0.0
        %6492 = vmatprep.subr.mxu0 0.0
        %6493 = vmatpush1.msra.mxu0 0.0
        %6494 = vmatprep.subr.mxu0 0.0
        %6495 = vmatpush1.msra.mxu0 0.0
        %6496 = vmatprep.subr.mxu0 0.0
        %6497 = vmatpush1.msra.mxu0 0.0
        %6498 = vmatprep.subr.mxu0 0.0
        %6499 = vmatpush1.msra.mxu0 0.0
        %6500 = vmatprep.subr.mxu0 0.0
        %6501 = vmatpush1.msra.mxu0 0.0
        %6502 = vmatprep.subr.mxu0 0.0
        %6503 = vmatpush1.msra.mxu0 0.0
        %6504 = vmatprep.subr.mxu0 0.0
        %6505 = vmatpush1.msra.mxu0 0.0
        %6506 = vmatprep.subr.mxu0 0.0
        %6507 = vmatpush1.msra.mxu0 0.0
        %6508 = vmatprep.subr.mxu0 0.0
        %6509 = vmatpush1.msra.mxu0 0.0
        %6510 = vmatprep.subr.mxu0 0.0
        %6511 = vmatpush1.msra.mxu0 0.0
        %6512 = vmatprep.subr.mxu0 0.0
        %6513 = vmatpush1.msra.mxu0 0.0
        %6514 = vmatprep.subr.mxu0 0.0
        %6515 = vmatpush1.msra.mxu0 0.0
        %6516 = vmatprep.subr.mxu0 0.0
        %6517 = vmatpush1.msra.mxu0 0.0
        %6518 = vmatprep.subr.mxu0 0.0
        %6519 = vmatpush1.msra.mxu0 0.0
        %6520 = vmatprep.subr.mxu0 0.0
        %6521 = vmatpush1.msra.mxu0 0.0
        %6522 = vmatprep.mubr.f32.mxu0 0.0
        %6523 = vmatmul.mubr.f32.gmra.mrb[0].mxu0 %v6456
        %v6524 = vpop.f32.mrb[0].mxu0
        %v6525 = vadd.f32 0.0, %v6524
        %v6526 = vpop.f32.mrb[0].mxu0
        %6527 = vdwg.mxu0
        %v6529 = vsel %vm6454, %v6038, 0
        %6531 = vmatprep.subr.mxu0 0.0
        %6532 = vmatpush1.msra.mxu0 %v6452
        %6533 = vmatprep.subr.mxu0 0.0
        %6534 = vmatpush1.msra.mxu0 0.0
        %6535 = vmatprep.subr.mxu0 0.0
        %6536 = vmatpush1.msra.mxu0 0.0
        %6537 = vmatprep.subr.mxu0 0.0
        %6538 = vmatpush1.msra.mxu0 0.0
        %6539 = vmatprep.subr.mxu0 0.0
        %6540 = vmatpush1.msra.mxu0 0.0
        %6541 = vmatprep.subr.mxu0 0.0
        %6542 = vmatpush1.msra.mxu0 0.0
        %6543 = vmatprep.subr.mxu0 0.0
        %6544 = vmatpush1.msra.mxu0 0.0
        %6545 = vmatprep.subr.mxu0 0.0
        %6546 = vmatpush1.msra.mxu0 0.0
        %6547 = vmatprep.subr.mxu0 0.0
        %6548 = vmatpush1.msra.mxu0 0.0
        %6549 = vmatprep.subr.mxu0 0.0
        %6550 = vmatpush1.msra.mxu0 0.0
        %6551 = vmatprep.subr.mxu0 0.0
        %6552 = vmatpush1.msra.mxu0 0.0
        %6553 = vmatprep.subr.mxu0 0.0
        %6554 = vmatpush1.msra.mxu0 0.0
        %6555 = vmatprep.subr.mxu0 0.0
        %6556 = vmatpush1.msra.mxu0 0.0
        %6557 = vmatprep.subr.mxu0 0.0
        %6558 = vmatpush1.msra.mxu0 0.0
        %6559 = vmatprep.subr.mxu0 0.0
        %6560 = vmatpush1.msra.mxu0 0.0
        %6561 = vmatprep.subr.mxu0 0.0
        %6562 = vmatpush1.msra.mxu0 0.0
        %6563 = vmatprep.subr.mxu0 0.0
        %6564 = vmatpush1.msra.mxu0 0.0
        %6565 = vmatprep.subr.mxu0 0.0
        %6566 = vmatpush1.msra.mxu0 0.0
        %6567 = vmatprep.subr.mxu0 0.0
        %6568 = vmatpush1.msra.mxu0 0.0
        %6569 = vmatprep.subr.mxu0 0.0
        %6570 = vmatpush1.msra.mxu0 0.0
        %6571 = vmatprep.subr.mxu0 0.0
        %6572 = vmatpush1.msra.mxu0 0.0
        %6573 = vmatprep.subr.mxu0 0.0
        %6574 = vmatpush1.msra.mxu0 0.0
        %6575 = vmatprep.subr.mxu0 0.0
        %6576 = vmatpush1.msra.mxu0 0.0
        %6577 = vmatprep.subr.mxu0 0.0
        %6578 = vmatpush1.msra.mxu0 0.0
        %6579 = vmatprep.subr.mxu0 0.0
        %6580 = vmatpush1.msra.mxu0 0.0
        %6581 = vmatprep.subr.mxu0 0.0
        %6582 = vmatpush1.msra.mxu0 0.0
        %6583 = vmatprep.subr.mxu0 0.0
        %6584 = vmatpush1.msra.mxu0 0.0
        %6585 = vmatprep.subr.mxu0 0.0
        %6586 = vmatpush1.msra.mxu0 0.0
        %6587 = vmatprep.subr.mxu0 0.0
        %6588 = vmatpush1.msra.mxu0 0.0
        %6589 = vmatprep.subr.mxu0 0.0
        %6590 = vmatpush1.msra.mxu0 0.0
        %6591 = vmatprep.subr.mxu0 0.0
        %6592 = vmatpush1.msra.mxu0 0.0
        %6593 = vmatprep.subr.mxu0 0.0
        %6594 = vmatpush1.msra.mxu0 0.0
        %6595 = vmatprep.mubr.f32.mxu0 0.0
        %6596 = vmatmul.mubr.f32.gmra.mrb[0].mxu0 %v6529
        %v6597 = vpop.f32.mrb[0].mxu0
        %v6598 = vadd.f32 %v6525, %v6597
        %v6599 = vpop.f32.mrb[0].mxu0
        %6600 = vdwg.mxu0
        %v6601 = vld [vmem:[%s17] sm:$0xff]
        %v6603 = vsel %vm6454, %v6451, 0
        %6605 = vmatprep.subr.mxu0 0.0
        %6606 = vmatpush1.msra.mxu0 %v6601
        %6607 = vmatprep.subr.mxu0 0.0
        %6608 = vmatpush1.msra.mxu0 0.0
        %6609 = vmatprep.subr.mxu0 0.0
        %6610 = vmatpush1.msra.mxu0 0.0
        %6611 = vmatprep.subr.mxu0 0.0
        %6612 = vmatpush1.msra.mxu0 0.0
        %6613 = vmatprep.subr.mxu0 0.0
        %6614 = vmatpush1.msra.mxu0 0.0
        %6615 = vmatprep.subr.mxu0 0.0
        %6616 = vmatpush1.msra.mxu0 0.0
        %6617 = vmatprep.subr.mxu0 0.0
        %6618 = vmatpush1.msra.mxu0 0.0
        %6619 = vmatprep.subr.mxu0 0.0
        %6620 = vmatpush1.msra.mxu0 0.0
        %6621 = vmatprep.subr.mxu0 0.0
        %6622 = vmatpush1.msra.mxu0 0.0
        %6623 = vmatprep.subr.mxu0 0.0
        %6624 = vmatpush1.msra.mxu0 0.0
        %6625 = vmatprep.subr.mxu0 0.0
        %6626 = vmatpush1.msra.mxu0 0.0
        %6627 = vmatprep.subr.mxu0 0.0
        %6628 = vmatpush1.msra.mxu0 0.0
        %6629 = vmatprep.subr.mxu0 0.0
        %6630 = vmatpush1.msra.mxu0 0.0
        %6631 = vmatprep.subr.mxu0 0.0
        %6632 = vmatpush1.msra.mxu0 0.0
        %6633 = vmatprep.subr.mxu0 0.0
        %6634 = vmatpush1.msra.mxu0 0.0
        %6635 = vmatprep.subr.mxu0 0.0
        %6636 = vmatpush1.msra.mxu0 0.0
        %6637 = vmatprep.subr.mxu0 0.0
        %6638 = vmatpush1.msra.mxu0 0.0
        %6639 = vmatprep.subr.mxu0 0.0
        %6640 = vmatpush1.msra.mxu0 0.0
        %6641 = vmatprep.subr.mxu0 0.0
        %6642 = vmatpush1.msra.mxu0 0.0
        %6643 = vmatprep.subr.mxu0 0.0
        %6644 = vmatpush1.msra.mxu0 0.0
        %6645 = vmatprep.subr.mxu0 0.0
        %6646 = vmatpush1.msra.mxu0 0.0
        %6647 = vmatprep.subr.mxu0 0.0
        %6648 = vmatpush1.msra.mxu0 0.0
        %6649 = vmatprep.subr.mxu0 0.0
        %6650 = vmatpush1.msra.mxu0 0.0
        %6651 = vmatprep.subr.mxu0 0.0
        %6652 = vmatpush1.msra.mxu0 0.0
        %6653 = vmatprep.subr.mxu0 0.0
        %6654 = vmatpush1.msra.mxu0 0.0
        %6655 = vmatprep.subr.mxu0 0.0
        %6656 = vmatpush1.msra.mxu0 0.0
        %6657 = vmatprep.subr.mxu0 0.0
        %6658 = vmatpush1.msra.mxu0 0.0
        %6659 = vmatprep.subr.mxu0 0.0
        %6660 = vmatpush1.msra.mxu0 0.0
        %6661 = vmatprep.subr.mxu0 0.0
        %6662 = vmatpush1.msra.mxu0 0.0
        %6663 = vmatprep.subr.mxu0 0.0
        %6664 = vmatpush1.msra.mxu0 0.0
        %6665 = vmatprep.subr.mxu0 0.0
        %6666 = vmatpush1.msra.mxu0 0.0
        %6667 = vmatprep.subr.mxu0 0.0
        %6668 = vmatpush1.msra.mxu0 0.0
        %6669 = vmatprep.mubr.f32.mxu0 0.0
        %6670 = vmatmul.mubr.f32.gmra.mrb[0].mxu0 %v6603
        %v6671 = vpop.f32.mrb[0].mxu0
        %v6672 = vadd.f32 0.0, %v6671
        %v6673 = vpop.f32.mrb[0].mxu0
        %6674 = vdwg.mxu0
        %v6675 = vadd.f32 %v6598, %v6672
        %v6676 = vld [vmem:[%s18] sm:$0x1]
        %v6678 = vlaneseq
        %v6679 = vshrl.u32 %v6678, 7
        %v6680 = vsub.s32 0, %v6679
        %v6681 = vrot.slane %v6676, %v6680
        %v6683 = vadd.f32 %v6675, %v6681
        %v6684 = vmul.f32 %v6683, 0.5
        %v6685 = vtanh.pop %v6684
        %v6686 = vmul.f32 %v6685, 0.5
        %v6687 = vadd.f32 %v6686, 0.5
        %vm6688 = vcmask 15360
        %6689 = vst.msk [vmem:[%s751] sm:$0xff] %vm6688, %v6687
        %p6690 = scmp.lt.s32.totalorder %s30, 1
        %s6691 = scalar_select %p6690, %s30, 1
        %s6692 = smul.addr %s6691, 8
        %s6693 = scalar_lea.vmem %s19, %s6692
        // Predicated region
        $region120: #{robot_classify_pallas.1} parent=114 // pred_check
          %p6694 = pneg %p462
        $region121: #{robot_classify_pallas.1} parent=114 // pred_check_branch
          %6696 = sbr.rel (%p6694) target = $region123
        $region122: #{robot_classify_pallas.1} parent=114 // pred_region
          _
        $region123: #{robot_classify_pallas.1} parent=114 // pred_fallthru
          _
      $region115: #{robot_classify_pallas.1} parent=5 // pred_fallthru
        _
      %p6697 = scmp.le.s32.totalorder 2, %s25
      // Predicated region
      $region124: #{robot_classify_pallas.1} parent=5 // pred_check
        %p6698 = pneg %p6697
      $region125: #{robot_classify_pallas.1} parent=5 // pred_check_branch
        %6700 = sbr.rel (%p6698) target = $region127
      $region126: #{robot_classify_pallas.1} parent=5 // pred_region
        %s6701 = ssub.s32 %s25, 2
        // Predicated region
        $region128: #{robot_classify_pallas.1} parent=126 // pred_check
          %p6702 = pneg %p468
        $region129: #{robot_classify_pallas.1} parent=126 // pred_check_branch
          %6704 = sbr.rel (%p6702) target = $region131
        $region130: #{robot_classify_pallas.1} parent=126 // pred_region
          %p6705 = scmp.lt.s32.totalorder %s31, 1
          %s6706 = scalar_select %p6705, %s31, 1
          %s6707 = smul.addr %s6706, 8
          %s6708 = scalar_lea.vmem %s19, %s6707
        $region131: #{robot_classify_pallas.1} parent=126 // pred_fallthru
          _
      $region127: #{robot_classify_pallas.1} parent=5 // pred_fallthru
        _
    $region6: #{robot_classify_pallas.1} parent=1 // loop_footer
      %s29 = sadd.s32 1, %s25
    $region7: #{robot_classify_pallas.1} parent=1 // loop_footer_branch
      %24 = sbr.rel target = $region3
    $region8: #{robot_classify_pallas.1} parent=1 // loop_exit
      _

</llo_original>
